<compile_context>
chip_gen: v5e
topology: v5e:2x2
jax: 0.10.0
libtpu: 0.0.40
codegen_flags: <defaults>
</compile_context>

<pallas_src>
import functools

import numpy as np
import jax
import jax.numpy as jnp
from jax.experimental import pallas as pl
from jax.experimental.pallas import tpu as pltpu


def _down2_kernel(x_ref, w1_ref, b1_ref, w2_ref, b2_ref, w3_ref, b3_ref,
                  o_ref,
                  xp1_ref, xp2_ref, xp3_ref, p_ref, a3_ref, mp_ref,
                  *, H, W):
    """One batch element per grid step; all intermediates stay VMEM-resident."""

    def conv_relu(xp_ref, w_ref, b_ref, KH, KW, Cin, Cout):
        # xp_ref: (Hp, Wp, Cin) f32 zero-padded activation (VMEM scratch),
        #         Hp = H + KH - 1, Wp = W + KW - 1.
        # w_ref : (KH, KW*Cin, Cout) bf16,  b_ref: (1, Cout) f32.
        Hp = H + KH - 1
        K = KW * Cin
        # Build the im2col patch ONCE for all Hp rows:
        #   P[hp, w, kw*Cin + ci] = xp[hp, w + kw, ci]   (bf16)
        # Cast at the (Hp, W, Cin) slice level -> KW x less convert work than
        # casting the expanded (H*W, K) patch per kh.
        for kw in range(KW):
            p_ref[pl.ds(0, Hp), :, pl.ds(kw * Cin, Cin)] = (
                xp_ref[pl.ds(0, Hp), pl.ds(kw, W), :].astype(jnp.bfloat16))
        # KH shifted dots, accumulated in f32:
        #   out[h, w, :] += P[h + kh, w, :] @ w_ref[kh]
        acc = jnp.zeros((H * W, Cout), jnp.float32)
        for kh in range(KH):
            patch = p_ref[pl.ds(kh, H), :, pl.ds(0, K)].reshape(H * W, K)
            acc = acc + jnp.dot(patch, w_ref[kh],
                                preferred_element_type=jnp.float32)
        return jnp.maximum(acc + b_ref[...], 0.0)           # (H*W, Cout) f32

    # Zero the padded buffers every grid step (borders must be zero; interiors
    # are fully overwritten below).  Cheap (~140 masked vst at these sizes) and
    # stays correct when the "parallel" batch axis is sharded across TensorCores.
    xp1_ref[...] = jnp.zeros(xp1_ref.shape, xp1_ref.dtype)
    xp2_ref[...] = jnp.zeros(xp2_ref.shape, xp2_ref.dtype)
    xp3_ref[...] = jnp.zeros(xp3_ref.shape, xp3_ref.dtype)

    # Stage the input into the pad-2 buffer (in-kernel padding).
    xp1_ref[pl.ds(2, H), pl.ds(2, W), :] = x_ref[0]

    # l1 Conv2d(16,16,5x5,pad2) + l2 ReLU
    # TODO(synk): l3/l6/l9 nn.Dropout2d are identity here (eval mode); training-
    # mode random channel dropout is not modeled.
    a1 = conv_relu(xp1_ref, w1_ref, b1_ref, 5, 5, 16, 16)            # (H*W, 16)
    xp2_ref[pl.ds(1, H), pl.ds(1, W), :] = a1.reshape(H, W, 16)

    # l4 Conv2d(16,32,3x3,pad1) + l5 ReLU
    a2 = conv_relu(xp2_ref, w2_ref, b2_ref, 3, 3, 16, 32)            # (H*W, 32)
    xp3_ref[pl.ds(2, H), pl.ds(2, W), :] = a2.reshape(H, W, 32)

    # l7 Conv2d(32,32,5x5,pad2) + l8 ReLU
    a3_ref[...] = conv_relu(xp3_ref, w3_ref, b3_ref, 5, 5, 32, 32)   # (H*W, 32)

    # l10 MaxPool2d(2x2), stride 2.
    Ho, Wo = H // 2, W // 2
    hw2 = (H * W) // 2
    # pool over W: flat rows 2k / 2k+1 are horizontally adjacent pixels
    m1 = jnp.maximum(a3_ref[pl.ds(0, hw2, stride=2), :],
                     a3_ref[pl.ds(1, hw2, stride=2), :])             # (H*Wo, 32)
    mp_ref[...] = m1.reshape(H, Wo, 32)
    # pool over H: even vs odd rows of the (H, Wo, C) buffer (major-dim stride)
    o_ref[0] = jnp.maximum(mp_ref[pl.ds(0, Ho, stride=2), :, :],
                           mp_ref[pl.ds(1, Ho, stride=2), :, :])     # (Ho, Wo, 32)


def init_params(key):
    """PyTorch-style Conv2d init; weights pre-laid-out as (KH, KW*Cin, Cout) bf16."""
    def conv_init(wk, bk, cin, cout, k):
        fan_in = cin * k * k
        bound = 1.0 / np.sqrt(fan_in)
        w = jax.random.uniform(wk, (cout, cin, k, k), jnp.float32, -bound, bound)  # OIHW
        b = jax.random.uniform(bk, (cout,), jnp.float32, -bound, bound)
        # OIHW -> (KH, KW, Cin, Cout) -> (KH, KW*Cin, Cout): matches the in-kernel
        # patch layout P[..., kw*Cin + ci].
        w_taps = jnp.transpose(w, (2, 3, 1, 0)).reshape(k, k * cin, cout)
        return w_taps.astype(jnp.bfloat16), b.reshape(1, cout)

    ks = jax.random.split(key, 6)
    w1, b1 = conv_init(ks[0], ks[1], 16, 16, 5)
    w2, b2 = conv_init(ks[2], ks[3], 16, 32, 3)
    w3, b3 = conv_init(ks[4], ks[5], 32, 32, 5)
    return (w1, b1, w2, b2, w3, b3)


def down2_forward(x_nchw, params):
    w1, b1, w2, b2, w3, b3 = params
    N, Cin, H, W = x_nchw.shape
    assert Cin == 16 and H % 2 == 0 and W % 2 == 0
    Ho, Wo = H // 2, W // 2
    x = jnp.transpose(x_nchw, (0, 2, 3, 1)).astype(jnp.float32)      # NCHW -> NHWC

    kern = functools.partial(_down2_kernel, H=H, W=W)
    out = pl.pallas_call(
        kern,
        grid=(N,),
        in_specs=[
            pl.BlockSpec((1, H, W, 16), lambda n: (n, 0, 0, 0)),
            pl.BlockSpec((5, 5 * 16, 16), lambda n: (0, 0, 0)),
            pl.BlockSpec((1, 16), lambda n: (0, 0)),
            pl.BlockSpec((3, 3 * 16, 32), lambda n: (0, 0, 0)),
            pl.BlockSpec((1, 32), lambda n: (0, 0)),
            pl.BlockSpec((5, 5 * 32, 32), lambda n: (0, 0, 0)),
            pl.BlockSpec((1, 32), lambda n: (0, 0)),
        ],
        out_specs=pl.BlockSpec((1, Ho, Wo, 32), lambda n: (n, 0, 0, 0)),
        out_shape=jax.ShapeDtypeStruct((N, Ho, Wo, 32), jnp.float32),
        scratch_shapes=[
            pltpu.VMEM((H + 4, W + 4, 16), jnp.float32),    # pad-2 input to conv1
            pltpu.VMEM((H + 2, W + 2, 16), jnp.float32),    # pad-1 input to conv2
            pltpu.VMEM((H + 4, W + 4, 32), jnp.float32),    # pad-2 input to conv3
            pltpu.VMEM((H + 4, W, 5 * 32), jnp.bfloat16),   # shared im2col patch (max K=160)
            pltpu.VMEM((H * W, 32), jnp.float32),           # conv3 output (flat)
            pltpu.VMEM((H, W // 2, 32), jnp.float32),       # W-pooled rows
        ],
        compiler_params=pltpu.CompilerParams(
            dimension_semantics=("parallel",)),
    )(x, w1, b1, w2, b2, w3, b3)

    return jnp.transpose(out, (0, 3, 1, 2))                 # NHWC -> NCHW


if __name__ == "__main__":
    key = jax.random.PRNGKey(0)
    xk, pk = jax.random.split(key)
    # Down2 requires 16 input channels; small spatial 16x16 -> output 8x8.
    x = jax.random.normal(xk, (2, 16, 16, 16), dtype=jnp.float32)    # NCHW
    params = init_params(pk)

    out = jax.jit(down2_forward)(x, params)
    out = jax.block_until_ready(out)

    assert out.shape == (2, 32, 8, 8), out.shape
    assert out.dtype == jnp.float32
    assert bool(jnp.all(jnp.isfinite(out)))
    assert bool(jnp.all(out >= 0))   # ReLU before the pool -> non-negative
    print("KERNEL_OK")
</pallas_src>

<mosaic_0001>
module attributes {stable_mosaic.version = 11 : i64} {
  func.func @_down2_kernel(%arg0: i32, %arg1: memref<1x16x16x16xf32, #tpu.memory_space<vmem>>, %arg2: memref<5x80x16xbf16, #tpu.memory_space<vmem>>, %arg3: memref<1x16xf32, #tpu.memory_space<vmem>>, %arg4: memref<3x48x32xbf16, #tpu.memory_space<vmem>>, %arg5: memref<1x32xf32, #tpu.memory_space<vmem>>, %arg6: memref<5x160x32xbf16, #tpu.memory_space<vmem>>, %arg7: memref<1x32xf32, #tpu.memory_space<vmem>>, %arg8: memref<1x8x8x32xf32, #tpu.memory_space<vmem>>, %arg9: memref<20x20x16xf32, #tpu.memory_space<vmem>>, %arg10: memref<18x18x16xf32, #tpu.memory_space<vmem>>, %arg11: memref<20x20x32xf32, #tpu.memory_space<vmem>>, %arg12: memref<20x16x160xbf16, #tpu.memory_space<vmem>>, %arg13: memref<256x32xf32, #tpu.memory_space<vmem>>, %arg14: memref<16x8x32xf32, #tpu.memory_space<vmem>>) attributes {dimension_semantics = [#tpu.dimension_semantics<parallel>], iteration_bounds = array<i64: 2>, scalar_prefetch = 0 : i64, scratch_operands = 6 : i64, tpu.core_type = #tpu.core_type<tc>, window_params = [{transform_indices = @transform_0, window_bounds = array<i64: 1, 16, 16, 16>}, {pipeline_mode = #tpu.pipeline_mode<synchronous>, transform_indices = @transform_1, window_bounds = array<i64: 5, 80, 16>}, {pipeline_mode = #tpu.pipeline_mode<synchronous>, transform_indices = @transform_2, window_bounds = array<i64: 1, 16>}, {pipeline_mode = #tpu.pipeline_mode<synchronous>, transform_indices = @transform_3, window_bounds = array<i64: 3, 48, 32>}, {pipeline_mode = #tpu.pipeline_mode<synchronous>, transform_indices = @transform_4, window_bounds = array<i64: 1, 32>}, {pipeline_mode = #tpu.pipeline_mode<synchronous>, transform_indices = @transform_5, window_bounds = array<i64: 5, 160, 32>}, {pipeline_mode = #tpu.pipeline_mode<synchronous>, transform_indices = @transform_6, window_bounds = array<i64: 1, 32>}, {transform_indices = @transform_7, window_bounds = array<i64: 1, 8, 8, 32>}]} {
    %cst = arith.constant 0.000000e+00 : f32
    %0 = vector.broadcast %cst : f32 to vector<20x20x16xf32>
    %c0 = arith.constant 0 : index
    %c0_0 = arith.constant 0 : index
    %c0_1 = arith.constant 0 : index
    %1 = vector.load %arg9[%c0, %c0_0, %c0_1] : memref<20x20x16xf32, #tpu.memory_space<vmem>>, vector<20x20x16xf32>
    tpu.vector_store %arg9[%c0, %c0_0, %c0_1], %0 {strides = array<i32>} : memref<20x20x16xf32, #tpu.memory_space<vmem>>, vector<20x20x16xf32>,
    %cst_2 = arith.constant 0.000000e+00 : f32
    %2 = vector.broadcast %cst_2 : f32 to vector<18x18x16xf32>
    %c0_3 = arith.constant 0 : index
    %c0_4 = arith.constant 0 : index
    %c0_5 = arith.constant 0 : index
    %3 = vector.load %arg10[%c0_3, %c0_4, %c0_5] : memref<18x18x16xf32, #tpu.memory_space<vmem>>, vector<18x18x16xf32>
    tpu.vector_store %arg10[%c0_3, %c0_4, %c0_5], %2 {strides = array<i32>} : memref<18x18x16xf32, #tpu.memory_space<vmem>>, vector<18x18x16xf32>,
    %cst_6 = arith.constant 0.000000e+00 : f32
    %4 = vector.broadcast %cst_6 : f32 to vector<20x20x32xf32>
    %c0_7 = arith.constant 0 : index
    %c0_8 = arith.constant 0 : index
    %c0_9 = arith.constant 0 : index
    %5 = vector.load %arg11[%c0_7, %c0_8, %c0_9] : memref<20x20x32xf32, #tpu.memory_space<vmem>>, vector<20x20x32xf32>
    tpu.vector_store %arg11[%c0_7, %c0_8, %c0_9], %4 {strides = array<i32>} : memref<20x20x32xf32, #tpu.memory_space<vmem>>, vector<20x20x32xf32>,
    %c0_10 = arith.constant 0 : index
    %c0_11 = arith.constant 0 : index
    %c0_12 = arith.constant 0 : index
    %c0_13 = arith.constant 0 : index
    %6 = vector.load %arg1[%c0_10, %c0_11, %c0_12, %c0_13] : memref<1x16x16x16xf32, #tpu.memory_space<vmem>>, vector<1x16x16x16xf32>
    %7 = vector.shape_cast %6 : vector<1x16x16x16xf32> to vector<16x16x16xf32>
    %c2 = arith.constant 2 : index
    %c2_14 = arith.constant 2 : index
    %c0_15 = arith.constant 0 : index
    %8 = vector.load %arg9[%c2, %c2_14, %c0_15] : memref<20x20x16xf32, #tpu.memory_space<vmem>>, vector<16x16x16xf32>
    tpu.vector_store %arg9[%c2, %c2_14, %c0_15], %7 {strides = array<i32>} : memref<20x20x16xf32, #tpu.memory_space<vmem>>, vector<16x16x16xf32>,
    %c0_16 = arith.constant 0 : index
    %c0_17 = arith.constant 0 : index
    %c0_18 = arith.constant 0 : index
    %9 = vector.load %arg9[%c0_16, %c0_17, %c0_18] : memref<20x20x16xf32, #tpu.memory_space<vmem>>, vector<20x16x16xf32>
    %10 = arith.truncf %9 : vector<20x16x16xf32> to vector<20x16x16xbf16>
    %c0_19 = arith.constant 0 : index
    %c0_20 = arith.constant 0 : index
    %c0_21 = arith.constant 0 : index
    %11 = vector.load %arg12[%c0_19, %c0_20, %c0_21] : memref<20x16x160xbf16, #tpu.memory_space<vmem>>, vector<20x16x16xbf16>
    tpu.vector_store %arg12[%c0_19, %c0_20, %c0_21], %10 {strides = array<i32>} : memref<20x16x160xbf16, #tpu.memory_space<vmem>>, vector<20x16x16xbf16>,
    %c0_22 = arith.constant 0 : index
    %c1 = arith.constant 1 : index
    %c0_23 = arith.constant 0 : index
    %12 = vector.load %arg9[%c0_22, %c1, %c0_23] : memref<20x20x16xf32, #tpu.memory_space<vmem>>, vector<20x16x16xf32>
    %13 = arith.truncf %12 : vector<20x16x16xf32> to vector<20x16x16xbf16>
    %c0_24 = arith.constant 0 : index
    %c0_25 = arith.constant 0 : index
    %c16 = arith.constant 16 : index
    %14 = vector.load %arg12[%c0_24, %c0_25, %c16] : memref<20x16x160xbf16, #tpu.memory_space<vmem>>, vector<20x16x16xbf16>
    tpu.vector_store %arg12[%c0_24, %c0_25, %c16], %13 {strides = array<i32>} : memref<20x16x160xbf16, #tpu.memory_space<vmem>>, vector<20x16x16xbf16>,
    %c0_26 = arith.constant 0 : index
    %c2_27 = arith.constant 2 : index
    %c0_28 = arith.constant 0 : index
    %15 = vector.load %arg9[%c0_26, %c2_27, %c0_28] : memref<20x20x16xf32, #tpu.memory_space<vmem>>, vector<20x16x16xf32>
    %16 = arith.truncf %15 : vector<20x16x16xf32> to vector<20x16x16xbf16>
    %c0_29 = arith.constant 0 : index
    %c0_30 = arith.constant 0 : index
    %c32 = arith.constant 32 : index
    %17 = vector.load %arg12[%c0_29, %c0_30, %c32] : memref<20x16x160xbf16, #tpu.memory_space<vmem>>, vector<20x16x16xbf16>
    tpu.vector_store %arg12[%c0_29, %c0_30, %c32], %16 {strides = array<i32>} : memref<20x16x160xbf16, #tpu.memory_space<vmem>>, vector<20x16x16xbf16>,
    %c0_31 = arith.constant 0 : index
    %c3 = arith.constant 3 : index
    %c0_32 = arith.constant 0 : index
    %18 = vector.load %arg9[%c0_31, %c3, %c0_32] : memref<20x20x16xf32, #tpu.memory_space<vmem>>, vector<20x16x16xf32>
    %19 = arith.truncf %18 : vector<20x16x16xf32> to vector<20x16x16xbf16>
    %c0_33 = arith.constant 0 : index
    %c0_34 = arith.constant 0 : index
    %c48 = arith.constant 48 : index
    %20 = vector.load %arg12[%c0_33, %c0_34, %c48] : memref<20x16x160xbf16, #tpu.memory_space<vmem>>, vector<20x16x16xbf16>
    tpu.vector_store %arg12[%c0_33, %c0_34, %c48], %19 {strides = array<i32>} : memref<20x16x160xbf16, #tpu.memory_space<vmem>>, vector<20x16x16xbf16>,
    %c0_35 = arith.constant 0 : index
    %c4 = arith.constant 4 : index
    %c0_36 = arith.constant 0 : index
    %21 = vector.load %arg9[%c0_35, %c4, %c0_36] : memref<20x20x16xf32, #tpu.memory_space<vmem>>, vector<20x16x16xf32>
    %22 = arith.truncf %21 : vector<20x16x16xf32> to vector<20x16x16xbf16>
    %c0_37 = arith.constant 0 : index
    %c0_38 = arith.constant 0 : index
    %c64 = arith.constant 64 : index
    %23 = vector.load %arg12[%c0_37, %c0_38, %c64] : memref<20x16x160xbf16, #tpu.memory_space<vmem>>, vector<20x16x16xbf16>
    tpu.vector_store %arg12[%c0_37, %c0_38, %c64], %22 {strides = array<i32>} : memref<20x16x160xbf16, #tpu.memory_space<vmem>>, vector<20x16x16xbf16>,
    %cst_39 = arith.constant 0.000000e+00 : f32
    %24 = vector.broadcast %cst_39 : f32 to vector<256x16xf32>
    %c0_40 = arith.constant 0 : index
    %c0_41 = arith.constant 0 : index
    %c0_42 = arith.constant 0 : index
    %25 = vector.load %arg12[%c0_40, %c0_41, %c0_42] : memref<20x16x160xbf16, #tpu.memory_space<vmem>>, vector<16x16x80xbf16>
    %26 = vector.shape_cast %25 : vector<16x16x80xbf16> to vector<256x80xbf16>
    %c0_43 = arith.constant 0 : index
    %c0_44 = arith.constant 0 : index
    %c0_45 = arith.constant 0 : index
    %27 = vector.load %arg2[%c0_43, %c0_44, %c0_45] : memref<5x80x16xbf16, #tpu.memory_space<vmem>>, vector<1x80x16xbf16>
    %28 = vector.shape_cast %27 : vector<1x80x16xbf16> to vector<80x16xbf16>
    %cst_46 = arith.constant dense<0.000000e+00> : vector<256x16xf32>
    %29 = tpu.matmul %26, %28, %cst_46 {dimension_numbers = #tpu.dot_dimension_numbers<[1], [0], [0], [1], [0, 0, 1, 1], [], []>} : vector<256x80xbf16>, vector<80x16xbf16>, vector<256x16xf32> -> vector<256x16xf32>
    %30 = arith.addf %24, %29 : vector<256x16xf32>
    %c1_47 = arith.constant 1 : index
    %c0_48 = arith.constant 0 : index
    %c0_49 = arith.constant 0 : index
    %31 = vector.load %arg12[%c1_47, %c0_48, %c0_49] : memref<20x16x160xbf16, #tpu.memory_space<vmem>>, vector<16x16x80xbf16>
    %32 = vector.shape_cast %31 : vector<16x16x80xbf16> to vector<256x80xbf16>
    %c1_50 = arith.constant 1 : index
    %c0_51 = arith.constant 0 : index
    %c0_52 = arith.constant 0 : index
    %33 = vector.load %arg2[%c1_50, %c0_51, %c0_52] : memref<5x80x16xbf16, #tpu.memory_space<vmem>>, vector<1x80x16xbf16>
    %34 = vector.shape_cast %33 : vector<1x80x16xbf16> to vector<80x16xbf16>
    %cst_53 = arith.constant dense<0.000000e+00> : vector<256x16xf32>
    %35 = tpu.matmul %32, %34, %cst_53 {dimension_numbers = #tpu.dot_dimension_numbers<[1], [0], [0], [1], [0, 0, 1, 1], [], []>} : vector<256x80xbf16>, vector<80x16xbf16>, vector<256x16xf32> -> vector<256x16xf32>
    %36 = arith.addf %30, %35 : vector<256x16xf32>
    %c2_54 = arith.constant 2 : index
    %c0_55 = arith.constant 0 : index
    %c0_56 = arith.constant 0 : index
    %37 = vector.load %arg12[%c2_54, %c0_55, %c0_56] : memref<20x16x160xbf16, #tpu.memory_space<vmem>>, vector<16x16x80xbf16>
    %38 = vector.shape_cast %37 : vector<16x16x80xbf16> to vector<256x80xbf16>
    %c2_57 = arith.constant 2 : index
    %c0_58 = arith.constant 0 : index
    %c0_59 = arith.constant 0 : index
    %39 = vector.load %arg2[%c2_57, %c0_58, %c0_59] : memref<5x80x16xbf16, #tpu.memory_space<vmem>>, vector<1x80x16xbf16>
    %40 = vector.shape_cast %39 : vector<1x80x16xbf16> to vector<80x16xbf16>
    %cst_60 = arith.constant dense<0.000000e+00> : vector<256x16xf32>
    %41 = tpu.matmul %38, %40, %cst_60 {dimension_numbers = #tpu.dot_dimension_numbers<[1], [0], [0], [1], [0, 0, 1, 1], [], []>} : vector<256x80xbf16>, vector<80x16xbf16>, vector<256x16xf32> -> vector<256x16xf32>
    %42 = arith.addf %36, %41 : vector<256x16xf32>
    %c3_61 = arith.constant 3 : index
    %c0_62 = arith.constant 0 : index
    %c0_63 = arith.constant 0 : index
    %43 = vector.load %arg12[%c3_61, %c0_62, %c0_63] : memref<20x16x160xbf16, #tpu.memory_space<vmem>>, vector<16x16x80xbf16>
    %44 = vector.shape_cast %43 : vector<16x16x80xbf16> to vector<256x80xbf16>
    %c3_64 = arith.constant 3 : index
    %c0_65 = arith.constant 0 : index
    %c0_66 = arith.constant 0 : index
    %45 = vector.load %arg2[%c3_64, %c0_65, %c0_66] : memref<5x80x16xbf16, #tpu.memory_space<vmem>>, vector<1x80x16xbf16>
    %46 = vector.shape_cast %45 : vector<1x80x16xbf16> to vector<80x16xbf16>
    %cst_67 = arith.constant dense<0.000000e+00> : vector<256x16xf32>
    %47 = tpu.matmul %44, %46, %cst_67 {dimension_numbers = #tpu.dot_dimension_numbers<[1], [0], [0], [1], [0, 0, 1, 1], [], []>} : vector<256x80xbf16>, vector<80x16xbf16>, vector<256x16xf32> -> vector<256x16xf32>
    %48 = arith.addf %42, %47 : vector<256x16xf32>
    %c4_68 = arith.constant 4 : index
    %c0_69 = arith.constant 0 : index
    %c0_70 = arith.constant 0 : index
    %49 = vector.load %arg12[%c4_68, %c0_69, %c0_70] : memref<20x16x160xbf16, #tpu.memory_space<vmem>>, vector<16x16x80xbf16>
    %50 = vector.shape_cast %49 : vector<16x16x80xbf16> to vector<256x80xbf16>
    %c4_71 = arith.constant 4 : index
    %c0_72 = arith.constant 0 : index
    %c0_73 = arith.constant 0 : index
    %51 = vector.load %arg2[%c4_71, %c0_72, %c0_73] : memref<5x80x16xbf16, #tpu.memory_space<vmem>>, vector<1x80x16xbf16>
    %52 = vector.shape_cast %51 : vector<1x80x16xbf16> to vector<80x16xbf16>
    %cst_74 = arith.constant dense<0.000000e+00> : vector<256x16xf32>
    %53 = tpu.matmul %50, %52, %cst_74 {dimension_numbers = #tpu.dot_dimension_numbers<[1], [0], [0], [1], [0, 0, 1, 1], [], []>} : vector<256x80xbf16>, vector<80x16xbf16>, vector<256x16xf32> -> vector<256x16xf32>
    %54 = arith.addf %48, %53 : vector<256x16xf32>
    %c0_75 = arith.constant 0 : index
    %c0_76 = arith.constant 0 : index
    %55 = vector.load %arg3[%c0_75, %c0_76] : memref<1x16xf32, #tpu.memory_space<vmem>>, vector<1x16xf32>
    %56 = vector.broadcast %55 : vector<1x16xf32> to vector<256x16xf32>
    %57 = arith.addf %54, %56 : vector<256x16xf32>
    %cst_77 = arith.constant 0.000000e+00 : f32
    %58 = vector.broadcast %cst_77 : f32 to vector<256x16xf32>
    %59 = arith.maximumf %57, %58 : vector<256x16xf32>
    %60 = vector.shape_cast %59 : vector<256x16xf32> to vector<16x16x16xf32>
    %c1_78 = arith.constant 1 : index
    %c1_79 = arith.constant 1 : index
    %c0_80 = arith.constant 0 : index
    %61 = vector.load %arg10[%c1_78, %c1_79, %c0_80] : memref<18x18x16xf32, #tpu.memory_space<vmem>>, vector<16x16x16xf32>
    tpu.vector_store %arg10[%c1_78, %c1_79, %c0_80], %60 {strides = array<i32>} : memref<18x18x16xf32, #tpu.memory_space<vmem>>, vector<16x16x16xf32>,
    %c0_81 = arith.constant 0 : index
    %c0_82 = arith.constant 0 : index
    %c0_83 = arith.constant 0 : index
    %62 = vector.load %arg10[%c0_81, %c0_82, %c0_83] : memref<18x18x16xf32, #tpu.memory_space<vmem>>, vector<18x16x16xf32>
    %63 = arith.truncf %62 : vector<18x16x16xf32> to vector<18x16x16xbf16>
    %c0_84 = arith.constant 0 : index
    %c0_85 = arith.constant 0 : index
    %c0_86 = arith.constant 0 : index
    %64 = vector.load %arg12[%c0_84, %c0_85, %c0_86] : memref<20x16x160xbf16, #tpu.memory_space<vmem>>, vector<18x16x16xbf16>
    tpu.vector_store %arg12[%c0_84, %c0_85, %c0_86], %63 {strides = array<i32>} : memref<20x16x160xbf16, #tpu.memory_space<vmem>>, vector<18x16x16xbf16>,
    %c0_87 = arith.constant 0 : index
    %c1_88 = arith.constant 1 : index
    %c0_89 = arith.constant 0 : index
    %65 = vector.load %arg10[%c0_87, %c1_88, %c0_89] : memref<18x18x16xf32, #tpu.memory_space<vmem>>, vector<18x16x16xf32>
    %66 = arith.truncf %65 : vector<18x16x16xf32> to vector<18x16x16xbf16>
    %c0_90 = arith.constant 0 : index
    %c0_91 = arith.constant 0 : index
    %c16_92 = arith.constant 16 : index
    %67 = vector.load %arg12[%c0_90, %c0_91, %c16_92] : memref<20x16x160xbf16, #tpu.memory_space<vmem>>, vector<18x16x16xbf16>
    tpu.vector_store %arg12[%c0_90, %c0_91, %c16_92], %66 {strides = array<i32>} : memref<20x16x160xbf16, #tpu.memory_space<vmem>>, vector<18x16x16xbf16>,
    %c0_93 = arith.constant 0 : index
    %c2_94 = arith.constant 2 : index
    %c0_95 = arith.constant 0 : index
    %68 = vector.load %arg10[%c0_93, %c2_94, %c0_95] : memref<18x18x16xf32, #tpu.memory_space<vmem>>, vector<18x16x16xf32>
    %69 = arith.truncf %68 : vector<18x16x16xf32> to vector<18x16x16xbf16>
    %c0_96 = arith.constant 0 : index
    %c0_97 = arith.constant 0 : index
    %c32_98 = arith.constant 32 : index
    %70 = vector.load %arg12[%c0_96, %c0_97, %c32_98] : memref<20x16x160xbf16, #tpu.memory_space<vmem>>, vector<18x16x16xbf16>
    tpu.vector_store %arg12[%c0_96, %c0_97, %c32_98], %69 {strides = array<i32>} : memref<20x16x160xbf16, #tpu.memory_space<vmem>>, vector<18x16x16xbf16>,
    %cst_99 = arith.constant 0.000000e+00 : f32
    %71 = vector.broadcast %cst_99 : f32 to vector<256x32xf32>
    %c0_100 = arith.constant 0 : index
    %c0_101 = arith.constant 0 : index
    %c0_102 = arith.constant 0 : index
    %72 = vector.load %arg12[%c0_100, %c0_101, %c0_102] : memref<20x16x160xbf16, #tpu.memory_space<vmem>>, vector<16x16x48xbf16>
    %73 = vector.shape_cast %72 : vector<16x16x48xbf16> to vector<256x48xbf16>
    %c0_103 = arith.constant 0 : index
    %c0_104 = arith.constant 0 : index
    %c0_105 = arith.constant 0 : index
    %74 = vector.load %arg4[%c0_103, %c0_104, %c0_105] : memref<3x48x32xbf16, #tpu.memory_space<vmem>>, vector<1x48x32xbf16>
    %75 = vector.shape_cast %74 : vector<1x48x32xbf16> to vector<48x32xbf16>
    %cst_106 = arith.constant dense<0.000000e+00> : vector<256x32xf32>
    %76 = tpu.matmul %73, %75, %cst_106 {dimension_numbers = #tpu.dot_dimension_numbers<[1], [0], [0], [1], [0, 0, 1, 1], [], []>} : vector<256x48xbf16>, vector<48x32xbf16>, vector<256x32xf32> -> vector<256x32xf32>
    %77 = arith.addf %71, %76 : vector<256x32xf32>
    %c1_107 = arith.constant 1 : index
    %c0_108 = arith.constant 0 : index
    %c0_109 = arith.constant 0 : index
    %78 = vector.load %arg12[%c1_107, %c0_108, %c0_109] : memref<20x16x160xbf16, #tpu.memory_space<vmem>>, vector<16x16x48xbf16>
    %79 = vector.shape_cast %78 : vector<16x16x48xbf16> to vector<256x48xbf16>
    %c1_110 = arith.constant 1 : index
    %c0_111 = arith.constant 0 : index
    %c0_112 = arith.constant 0 : index
    %80 = vector.load %arg4[%c1_110, %c0_111, %c0_112] : memref<3x48x32xbf16, #tpu.memory_space<vmem>>, vector<1x48x32xbf16>
    %81 = vector.shape_cast %80 : vector<1x48x32xbf16> to vector<48x32xbf16>
    %cst_113 = arith.constant dense<0.000000e+00> : vector<256x32xf32>
    %82 = tpu.matmul %79, %81, %cst_113 {dimension_numbers = #tpu.dot_dimension_numbers<[1], [0], [0], [1], [0, 0, 1, 1], [], []>} : vector<256x48xbf16>, vector<48x32xbf16>, vector<256x32xf32> -> vector<256x32xf32>
    %83 = arith.addf %77, %82 : vector<256x32xf32>
    %c2_114 = arith.constant 2 : index
    %c0_115 = arith.constant 0 : index
    %c0_116 = arith.constant 0 : index
    %84 = vector.load %arg12[%c2_114, %c0_115, %c0_116] : memref<20x16x160xbf16, #tpu.memory_space<vmem>>, vector<16x16x48xbf16>
    %85 = vector.shape_cast %84 : vector<16x16x48xbf16> to vector<256x48xbf16>
    %c2_117 = arith.constant 2 : index
    %c0_118 = arith.constant 0 : index
    %c0_119 = arith.constant 0 : index
    %86 = vector.load %arg4[%c2_117, %c0_118, %c0_119] : memref<3x48x32xbf16, #tpu.memory_space<vmem>>, vector<1x48x32xbf16>
    %87 = vector.shape_cast %86 : vector<1x48x32xbf16> to vector<48x32xbf16>
    %cst_120 = arith.constant dense<0.000000e+00> : vector<256x32xf32>
    %88 = tpu.matmul %85, %87, %cst_120 {dimension_numbers = #tpu.dot_dimension_numbers<[1], [0], [0], [1], [0, 0, 1, 1], [], []>} : vector<256x48xbf16>, vector<48x32xbf16>, vector<256x32xf32> -> vector<256x32xf32>
    %89 = arith.addf %83, %88 : vector<256x32xf32>
    %c0_121 = arith.constant 0 : index
    %c0_122 = arith.constant 0 : index
    %90 = vector.load %arg5[%c0_121, %c0_122] : memref<1x32xf32, #tpu.memory_space<vmem>>, vector<1x32xf32>
    %91 = vector.broadcast %90 : vector<1x32xf32> to vector<256x32xf32>
    %92 = arith.addf %89, %91 : vector<256x32xf32>
    %cst_123 = arith.constant 0.000000e+00 : f32
    %93 = vector.broadcast %cst_123 : f32 to vector<256x32xf32>
    %94 = arith.maximumf %92, %93 : vector<256x32xf32>
    %95 = vector.shape_cast %94 : vector<256x32xf32> to vector<16x16x32xf32>
    %c2_124 = arith.constant 2 : index
    %c2_125 = arith.constant 2 : index
    %c0_126 = arith.constant 0 : index
    %96 = vector.load %arg11[%c2_124, %c2_125, %c0_126] : memref<20x20x32xf32, #tpu.memory_space<vmem>>, vector<16x16x32xf32>
    tpu.vector_store %arg11[%c2_124, %c2_125, %c0_126], %95 {strides = array<i32>} : memref<20x20x32xf32, #tpu.memory_space<vmem>>, vector<16x16x32xf32>,
    %c0_127 = arith.constant 0 : index
    %c0_128 = arith.constant 0 : index
    %c0_129 = arith.constant 0 : index
    %97 = vector.load %arg11[%c0_127, %c0_128, %c0_129] : memref<20x20x32xf32, #tpu.memory_space<vmem>>, vector<20x16x32xf32>
    %98 = arith.truncf %97 : vector<20x16x32xf32> to vector<20x16x32xbf16>
    %c0_130 = arith.constant 0 : index
    %c0_131 = arith.constant 0 : index
    %c0_132 = arith.constant 0 : index
    %99 = vector.load %arg12[%c0_130, %c0_131, %c0_132] : memref<20x16x160xbf16, #tpu.memory_space<vmem>>, vector<20x16x32xbf16>
    tpu.vector_store %arg12[%c0_130, %c0_131, %c0_132], %98 {strides = array<i32>} : memref<20x16x160xbf16, #tpu.memory_space<vmem>>, vector<20x16x32xbf16>,
    %c0_133 = arith.constant 0 : index
    %c1_134 = arith.constant 1 : index
    %c0_135 = arith.constant 0 : index
    %100 = vector.load %arg11[%c0_133, %c1_134, %c0_135] : memref<20x20x32xf32, #tpu.memory_space<vmem>>, vector<20x16x32xf32>
    %101 = arith.truncf %100 : vector<20x16x32xf32> to vector<20x16x32xbf16>
    %c0_136 = arith.constant 0 : index
    %c0_137 = arith.constant 0 : index
    %c32_138 = arith.constant 32 : index
    %102 = vector.load %arg12[%c0_136, %c0_137, %c32_138] : memref<20x16x160xbf16, #tpu.memory_space<vmem>>, vector<20x16x32xbf16>
    tpu.vector_store %arg12[%c0_136, %c0_137, %c32_138], %101 {strides = array<i32>} : memref<20x16x160xbf16, #tpu.memory_space<vmem>>, vector<20x16x32xbf16>,
    %c0_139 = arith.constant 0 : index
    %c2_140 = arith.constant 2 : index
    %c0_141 = arith.constant 0 : index
    %103 = vector.load %arg11[%c0_139, %c2_140, %c0_141] : memref<20x20x32xf32, #tpu.memory_space<vmem>>, vector<20x16x32xf32>
    %104 = arith.truncf %103 : vector<20x16x32xf32> to vector<20x16x32xbf16>
    %c0_142 = arith.constant 0 : index
    %c0_143 = arith.constant 0 : index
    %c64_144 = arith.constant 64 : index
    %105 = vector.load %arg12[%c0_142, %c0_143, %c64_144] : memref<20x16x160xbf16, #tpu.memory_space<vmem>>, vector<20x16x32xbf16>
    tpu.vector_store %arg12[%c0_142, %c0_143, %c64_144], %104 {strides = array<i32>} : memref<20x16x160xbf16, #tpu.memory_space<vmem>>, vector<20x16x32xbf16>,
    %c0_145 = arith.constant 0 : index
    %c3_146 = arith.constant 3 : index
    %c0_147 = arith.constant 0 : index
    %106 = vector.load %arg11[%c0_145, %c3_146, %c0_147] : memref<20x20x32xf32, #tpu.memory_space<vmem>>, vector<20x16x32xf32>
    %107 = arith.truncf %106 : vector<20x16x32xf32> to vector<20x16x32xbf16>
    %c0_148 = arith.constant 0 : index
    %c0_149 = arith.constant 0 : index
    %c96 = arith.constant 96 : index
    %108 = vector.load %arg12[%c0_148, %c0_149, %c96] : memref<20x16x160xbf16, #tpu.memory_space<vmem>>, vector<20x16x32xbf16>
    tpu.vector_store %arg12[%c0_148, %c0_149, %c96], %107 {strides = array<i32>} : memref<20x16x160xbf16, #tpu.memory_space<vmem>>, vector<20x16x32xbf16>,
    %c0_150 = arith.constant 0 : index
    %c4_151 = arith.constant 4 : index
    %c0_152 = arith.constant 0 : index
    %109 = vector.load %arg11[%c0_150, %c4_151, %c0_152] : memref<20x20x32xf32, #tpu.memory_space<vmem>>, vector<20x16x32xf32>
    %110 = arith.truncf %109 : vector<20x16x32xf32> to vector<20x16x32xbf16>
    %c0_153 = arith.constant 0 : index
    %c0_154 = arith.constant 0 : index
    %c128 = arith.constant 128 : index
    %111 = vector.load %arg12[%c0_153, %c0_154, %c128] : memref<20x16x160xbf16, #tpu.memory_space<vmem>>, vector<20x16x32xbf16>
    tpu.vector_store %arg12[%c0_153, %c0_154, %c128], %110 {strides = array<i32>} : memref<20x16x160xbf16, #tpu.memory_space<vmem>>, vector<20x16x32xbf16>,
    %cst_155 = arith.constant 0.000000e+00 : f32
    %112 = vector.broadcast %cst_155 : f32 to vector<256x32xf32>
    %c0_156 = arith.constant 0 : index
    %c0_157 = arith.constant 0 : index
    %c0_158 = arith.constant 0 : index
    %113 = vector.load %arg12[%c0_156, %c0_157, %c0_158] : memref<20x16x160xbf16, #tpu.memory_space<vmem>>, vector<16x16x160xbf16>
    %114 = vector.shape_cast %113 : vector<16x16x160xbf16> to vector<256x160xbf16>
    %c0_159 = arith.constant 0 : index
    %c0_160 = arith.constant 0 : index
    %c0_161 = arith.constant 0 : index
    %115 = vector.load %arg6[%c0_159, %c0_160, %c0_161] : memref<5x160x32xbf16, #tpu.memory_space<vmem>>, vector<1x160x32xbf16>
    %116 = vector.shape_cast %115 : vector<1x160x32xbf16> to vector<160x32xbf16>
    %cst_162 = arith.constant dense<0.000000e+00> : vector<256x32xf32>
    %117 = tpu.matmul %114, %116, %cst_162 {dimension_numbers = #tpu.dot_dimension_numbers<[1], [0], [0], [1], [0, 0, 1, 1], [], []>} : vector<256x160xbf16>, vector<160x32xbf16>, vector<256x32xf32> -> vector<256x32xf32>
    %118 = arith.addf %112, %117 : vector<256x32xf32>
    %c1_163 = arith.constant 1 : index
    %c0_164 = arith.constant 0 : index
    %c0_165 = arith.constant 0 : index
    %119 = vector.load %arg12[%c1_163, %c0_164, %c0_165] : memref<20x16x160xbf16, #tpu.memory_space<vmem>>, vector<16x16x160xbf16>
    %120 = vector.shape_cast %119 : vector<16x16x160xbf16> to vector<256x160xbf16>
    %c1_166 = arith.constant 1 : index
    %c0_167 = arith.constant 0 : index
    %c0_168 = arith.constant 0 : index
    %121 = vector.load %arg6[%c1_166, %c0_167, %c0_168] : memref<5x160x32xbf16, #tpu.memory_space<vmem>>, vector<1x160x32xbf16>
    %122 = vector.shape_cast %121 : vector<1x160x32xbf16> to vector<160x32xbf16>
    %cst_169 = arith.constant dense<0.000000e+00> : vector<256x32xf32>
    %123 = tpu.matmul %120, %122, %cst_169 {dimension_numbers = #tpu.dot_dimension_numbers<[1], [0], [0], [1], [0, 0, 1, 1], [], []>} : vector<256x160xbf16>, vector<160x32xbf16>, vector<256x32xf32> -> vector<256x32xf32>
    %124 = arith.addf %118, %123 : vector<256x32xf32>
    %c2_170 = arith.constant 2 : index
    %c0_171 = arith.constant 0 : index
    %c0_172 = arith.constant 0 : index
    %125 = vector.load %arg12[%c2_170, %c0_171, %c0_172] : memref<20x16x160xbf16, #tpu.memory_space<vmem>>, vector<16x16x160xbf16>
    %126 = vector.shape_cast %125 : vector<16x16x160xbf16> to vector<256x160xbf16>
    %c2_173 = arith.constant 2 : index
    %c0_174 = arith.constant 0 : index
    %c0_175 = arith.constant 0 : index
    %127 = vector.load %arg6[%c2_173, %c0_174, %c0_175] : memref<5x160x32xbf16, #tpu.memory_space<vmem>>, vector<1x160x32xbf16>
    %128 = vector.shape_cast %127 : vector<1x160x32xbf16> to vector<160x32xbf16>
    %cst_176 = arith.constant dense<0.000000e+00> : vector<256x32xf32>
    %129 = tpu.matmul %126, %128, %cst_176 {dimension_numbers = #tpu.dot_dimension_numbers<[1], [0], [0], [1], [0, 0, 1, 1], [], []>} : vector<256x160xbf16>, vector<160x32xbf16>, vector<256x32xf32> -> vector<256x32xf32>
    %130 = arith.addf %124, %129 : vector<256x32xf32>
    %c3_177 = arith.constant 3 : index
    %c0_178 = arith.constant 0 : index
    %c0_179 = arith.constant 0 : index
    %131 = vector.load %arg12[%c3_177, %c0_178, %c0_179] : memref<20x16x160xbf16, #tpu.memory_space<vmem>>, vector<16x16x160xbf16>
    %132 = vector.shape_cast %131 : vector<16x16x160xbf16> to vector<256x160xbf16>
    %c3_180 = arith.constant 3 : index
    %c0_181 = arith.constant 0 : index
    %c0_182 = arith.constant 0 : index
    %133 = vector.load %arg6[%c3_180, %c0_181, %c0_182] : memref<5x160x32xbf16, #tpu.memory_space<vmem>>, vector<1x160x32xbf16>
    %134 = vector.shape_cast %133 : vector<1x160x32xbf16> to vector<160x32xbf16>
    %cst_183 = arith.constant dense<0.000000e+00> : vector<256x32xf32>
    %135 = tpu.matmul %132, %134, %cst_183 {dimension_numbers = #tpu.dot_dimension_numbers<[1], [0], [0], [1], [0, 0, 1, 1], [], []>} : vector<256x160xbf16>, vector<160x32xbf16>, vector<256x32xf32> -> vector<256x32xf32>
    %136 = arith.addf %130, %135 : vector<256x32xf32>
    %c4_184 = arith.constant 4 : index
    %c0_185 = arith.constant 0 : index
    %c0_186 = arith.constant 0 : index
    %137 = vector.load %arg12[%c4_184, %c0_185, %c0_186] : memref<20x16x160xbf16, #tpu.memory_space<vmem>>, vector<16x16x160xbf16>
    %138 = vector.shape_cast %137 : vector<16x16x160xbf16> to vector<256x160xbf16>
    %c4_187 = arith.constant 4 : index
    %c0_188 = arith.constant 0 : index
    %c0_189 = arith.constant 0 : index
    %139 = vector.load %arg6[%c4_187, %c0_188, %c0_189] : memref<5x160x32xbf16, #tpu.memory_space<vmem>>, vector<1x160x32xbf16>
    %140 = vector.shape_cast %139 : vector<1x160x32xbf16> to vector<160x32xbf16>
    %cst_190 = arith.constant dense<0.000000e+00> : vector<256x32xf32>
    %141 = tpu.matmul %138, %140, %cst_190 {dimension_numbers = #tpu.dot_dimension_numbers<[1], [0], [0], [1], [0, 0, 1, 1], [], []>} : vector<256x160xbf16>, vector<160x32xbf16>, vector<256x32xf32> -> vector<256x32xf32>
    %142 = arith.addf %136, %141 : vector<256x32xf32>
    %c0_191 = arith.constant 0 : index
    %c0_192 = arith.constant 0 : index
    %143 = vector.load %arg7[%c0_191, %c0_192] : memref<1x32xf32, #tpu.memory_space<vmem>>, vector<1x32xf32>
    %144 = vector.broadcast %143 : vector<1x32xf32> to vector<256x32xf32>
    %145 = arith.addf %142, %144 : vector<256x32xf32>
    %cst_193 = arith.constant 0.000000e+00 : f32
    %146 = vector.broadcast %cst_193 : f32 to vector<256x32xf32>
    %147 = arith.maximumf %145, %146 : vector<256x32xf32>
    %c0_194 = arith.constant 0 : index
    %c0_195 = arith.constant 0 : index
    %148 = vector.load %arg13[%c0_194, %c0_195] : memref<256x32xf32, #tpu.memory_space<vmem>>, vector<256x32xf32>
    tpu.vector_store %arg13[%c0_194, %c0_195], %147 {strides = array<i32>} : memref<256x32xf32, #tpu.memory_space<vmem>>, vector<256x32xf32>,
    %c0_196 = arith.constant 0 : index
    %c0_197 = arith.constant 0 : index
    %149 = tpu.strided_load %arg13[%c0_196, %c0_197] {strides = array<i32: 2, 1>} : memref<256x32xf32, #tpu.memory_space<vmem>>, vector<128x32xf32>
    %c1_198 = arith.constant 1 : index
    %c0_199 = arith.constant 0 : index
    %150 = tpu.strided_load %arg13[%c1_198, %c0_199] {strides = array<i32: 2, 1>} : memref<256x32xf32, #tpu.memory_space<vmem>>, vector<128x32xf32>
    %151 = arith.maximumf %149, %150 : vector<128x32xf32>
    %152 = vector.shape_cast %151 : vector<128x32xf32> to vector<16x8x32xf32>
    %c0_200 = arith.constant 0 : index
    %c0_201 = arith.constant 0 : index
    %c0_202 = arith.constant 0 : index
    %153 = vector.load %arg14[%c0_200, %c0_201, %c0_202] : memref<16x8x32xf32, #tpu.memory_space<vmem>>, vector<16x8x32xf32>
    tpu.vector_store %arg14[%c0_200, %c0_201, %c0_202], %152 {strides = array<i32>} : memref<16x8x32xf32, #tpu.memory_space<vmem>>, vector<16x8x32xf32>,
    %c0_203 = arith.constant 0 : index
    %c0_204 = arith.constant 0 : index
    %c0_205 = arith.constant 0 : index
    %154 = tpu.strided_load %arg14[%c0_203, %c0_204, %c0_205] {strides = array<i32: 2, 1, 1>} : memref<16x8x32xf32, #tpu.memory_space<vmem>>, vector<8x8x32xf32>
    %c1_206 = arith.constant 1 : index
    %c0_207 = arith.constant 0 : index
    %c0_208 = arith.constant 0 : index
    %155 = tpu.strided_load %arg14[%c1_206, %c0_207, %c0_208] {strides = array<i32: 2, 1, 1>} : memref<16x8x32xf32, #tpu.memory_space<vmem>>, vector<8x8x32xf32>
    %156 = arith.maximumf %154, %155 : vector<8x8x32xf32>
    %c0_209 = arith.constant 0 : index
    %c0_210 = arith.constant 0 : index
    %c0_211 = arith.constant 0 : index
    %c0_212 = arith.constant 0 : index
    %157 = vector.load %arg8[%c0_209, %c0_210, %c0_211, %c0_212] : memref<1x8x8x32xf32, #tpu.memory_space<vmem>>, vector<1x8x8x32xf32>
    %158 = vector.shape_cast %157 : vector<1x8x8x32xf32> to vector<8x8x32xf32>
    %159 = vector.shape_cast %156 : vector<8x8x32xf32> to vector<1x8x8x32xf32>
    tpu.vector_store %arg8[%c0_209, %c0_210, %c0_211, %c0_212], %159 {strides = array<i32>} : memref<1x8x8x32xf32, #tpu.memory_space<vmem>>, vector<1x8x8x32xf32>,
    return
  }
  func.func @transform_0(%arg0: i32) -> (i32, i32, i32, i32) {
    %c0_i32 = arith.constant 0 : i32
    %c0_i32_0 = arith.constant 0 : i32
    %c0_i32_1 = arith.constant 0 : i32
    %c0_i32_2 = arith.constant 0 : i32
    return %arg0, %c0_i32, %c0_i32_0, %c0_i32_1 : i32, i32, i32, i32
  }
  func.func @transform_1(%arg0: i32) -> (i32, i32, i32) {
    %c0_i32 = arith.constant 0 : i32
    %c0_i32_0 = arith.constant 0 : i32
    %c0_i32_1 = arith.constant 0 : i32
    %c0_i32_2 = arith.constant 0 : i32
    return %c0_i32, %c0_i32_0, %c0_i32_1 : i32, i32, i32
  }
  func.func @transform_2(%arg0: i32) -> (i32, i32) {
    %c0_i32 = arith.constant 0 : i32
    %c0_i32_0 = arith.constant 0 : i32
    %c0_i32_1 = arith.constant 0 : i32
    return %c0_i32, %c0_i32_0 : i32, i32
  }
  func.func @transform_3(%arg0: i32) -> (i32, i32, i32) {
    %c0_i32 = arith.constant 0 : i32
    %c0_i32_0 = arith.constant 0 : i32
    %c0_i32_1 = arith.constant 0 : i32
    %c0_i32_2 = arith.constant 0 : i32
    return %c0_i32, %c0_i32_0, %c0_i32_1 : i32, i32, i32
  }
  func.func @transform_4(%arg0: i32) -> (i32, i32) {
    %c0_i32 = arith.constant 0 : i32
    %c0_i32_0 = arith.constant 0 : i32
    %c0_i32_1 = arith.constant 0 : i32
    return %c0_i32, %c0_i32_0 : i32, i32
  }
  func.func @transform_5(%arg0: i32) -> (i32, i32, i32) {
    %c0_i32 = arith.constant 0 : i32
    %c0_i32_0 = arith.constant 0 : i32
    %c0_i32_1 = arith.constant 0 : i32
    %c0_i32_2 = arith.constant 0 : i32
    return %c0_i32, %c0_i32_0, %c0_i32_1 : i32, i32, i32
  }
  func.func @transform_6(%arg0: i32) -> (i32, i32) {
    %c0_i32 = arith.constant 0 : i32
    %c0_i32_0 = arith.constant 0 : i32
    %c0_i32_1 = arith.constant 0 : i32
    return %c0_i32, %c0_i32_0 : i32, i32
  }
  func.func @transform_7(%arg0: i32) -> (i32, i32, i32, i32) {
    %c0_i32 = arith.constant 0 : i32
    %c0_i32_0 = arith.constant 0 : i32
    %c0_i32_1 = arith.constant 0 : i32
    %c0_i32_2 = arith.constant 0 : i32
    return %arg0, %c0_i32, %c0_i32_0, %c0_i32_1 : i32, i32, i32, i32
  }
}

</mosaic_0001>

<llo_original>
// kernel: down2_forward.1
$region0: #{down2_forward.1}
  #allocation0 [shape = 'u32[]', space=smem, size = 0x4, offset = 0x4, fixed_abs, tag = 'smem constant byte address 0x4 - core index']
  #allocation1 [shape = 'u32[72,128]{1,0:T(1,128)}', space=vmem, size = 0x9000, scoped, tag = 'internal scratch']
  #allocation2 [shape = 'f32[20,20,16]{2,1,0:T(8,128)}', space=vmem, size = 0x3c000, scoped, tag = 'scratch operand']
  #allocation3 [shape = 'f32[18,18,16]{2,1,0:T(8,128)}', space=vmem, size = 0x36000, scoped, tag = 'scratch operand']
  #allocation4 [shape = 'f32[20,20,32]{2,1,0:T(8,128)}', space=vmem, size = 0x3c000, scoped, tag = 'scratch operand']
  #allocation5 [shape = 'bf16[20,16,160]{2,1,0:T(8,128)(2,1)}', space=vmem, size = 0x28000, scoped, tag = 'scratch operand']
  #allocation6 [shape = 'f32[256,32]{1,0:T(8,128)}', space=vmem, size = 0x20000, scoped, tag = 'scratch operand']
  #allocation7 [shape = 'f32[16,8,32]{2,1,0:T(8,128)}', space=vmem, size = 0x10000, scoped, tag = 'scratch operand']
  %s0 = inlined_call_operand.vmem [shape: f32[2,16,16,16], index: 0, kind: input, shape index: {}]
  %s1 = inlined_call_operand.vmem [shape: bf16[5,80,16], index: 1, kind: input, shape index: {}]
  %s2 = inlined_call_operand.vmem [shape: f32[1,16], index: 2, kind: input, shape index: {}]
  %s3 = inlined_call_operand.vmem [shape: bf16[3,48,32], index: 3, kind: input, shape index: {}]
  %s4 = inlined_call_operand.vmem [shape: f32[1,32], index: 4, kind: input, shape index: {}]
  %s5 = inlined_call_operand.vmem [shape: bf16[5,160,32], index: 5, kind: input, shape index: {}]
  %s6 = inlined_call_operand.vmem [shape: f32[1,32], index: 6, kind: input, shape index: {}]
  %s7 = inlined_call_operand.hbm [shape: f32[2,8,8,32], index: 7, kind: output, shape index: {}]
  %s8 = sld [smem:[#allocation0]]
  $region61: #{down2_forward.1} parent=0
    _
  %s10 = ssub.s32 1, %s8
  %s11 = scalar_select 0, %s10, %s8
  $region1: #{down2_forward.1} parent=0
    #allocation8 [shape = 'u8[65536]{0}', space=vmem, size = 0x10000, scoped, tag = 'output window, operand 0']
    #allocation9 [shape = 's32[2]{0}', space=sflag, size = 0x8, scoped, tag = 'scoped memory for down2_forward.1']
    %12 = vsyncpa [#allocation9], 0
    %s13 = scalar_lea.sflag [#allocation9], 1
    %14 = vsyncpa %s13, 0
    loop: start=0, step=1, limit=4
    $region2: #{down2_forward.1} parent=1 // loop_pre_header
      _
    $region3: #{down2_forward.1} parent=1 // loop_header
      %s16 = sphi 0, %s20
      %p17 = scmp.ge.s32.totalorder %s16, 4
      %s26 = sphi 0, %s28
      %s29 = sphi 0, %s26
      %s30 = sphi 0, %s29
      %s46 = sphi 0, %s30
      %s50 = sphi 0, %s50
      %s52 = sphi 0, %s50
      %s53 = sphi 0, %s52
      %s67 = sphi 0, %s53
      %s71 = sphi 0, %s71
      %s73 = sphi 0, %s71
      %s74 = sphi 0, %s73
      %s88 = sphi 0, %s74
      %s92 = sphi 0, %s92
      %s94 = sphi 0, %s92
      %s95 = sphi 0, %s94
      %s109 = sphi 0, %s95
      %s113 = sphi 0, %s113
      %s115 = sphi 0, %s113
      %s116 = sphi 0, %s115
      %s130 = sphi 0, %s116
      %s134 = sphi 0, %s134
      %s136 = sphi 0, %s134
      %s137 = sphi 0, %s136
      %s151 = sphi 0, %s137
      %s155 = sphi 0, %s155
      %s157 = sphi 0, %s155
      %s158 = sphi 0, %s157
      %s172 = sphi 0, %s158
      %s178 = sphi 0, %s180
      %s181 = sphi 0, %s178
      %s182 = sphi 0, %s181
      %s198 = sphi 0, %s182
    $region4: #{down2_forward.1} parent=1 // loop_header_branch
      %19 = sbr.rel (%p17) target = $region8
    $region5: #{down2_forward.1} parent=1 // loop_body
      %s21 = ssub.s32 %s16, 1
      %s22 = ssub.s32 %s16, 2
      %s23 = sadd.s32 %s16, 1
      %s24 = ssub.s32 %s16, %s23
      %p25 = scmp.eq.s32.totalorder %s24, 0
      %s27 = sadd.s32 %s26, 1
      %s28 = scalar_select %p25, %s26, %s27
      %p31 = pneg %p25
      %p32 = scmp.eq.s32.totalorder %s16, 1
      %p33 = por %p31, %p32
      %p34 = scmp.ne.s32.totalorder %s26, %s29
      %p35 = scmp.eq.s32.totalorder %s16, 0
      %p36 = por %p34, %p35
      %p37 = scmp.ne.s32.totalorder %s26, %s29
      %p38 = scmp.eq.s32.totalorder %s21, 1
      %p39 = por %p37, %p38
      %p40 = scmp.ne.s32.totalorder %s29, %s30
      %p41 = scmp.eq.s32.totalorder %s21, 0
      %p42 = por %p40, %p41
      %p43 = scmp.ne.s32.totalorder %s29, %s30
      %p44 = scmp.eq.s32.totalorder %s22, 1
      %p45 = por %p43, %p44
      %p47 = scmp.ne.s32.totalorder %s30, %s46
      %p48 = scmp.eq.s32.totalorder %s22, 0
      %p49 = por %p47, %p48
      %s51 = sadd.s32 %s50, 1
      %p54 = scmp.eq.s32.totalorder %s16, 1
      %p55 = scmp.ne.s32.totalorder %s50, %s52
      %p56 = scmp.eq.s32.totalorder %s16, 0
      %p57 = por %p55, %p56
      %p58 = scmp.ne.s32.totalorder %s50, %s52
      %p59 = scmp.eq.s32.totalorder %s21, 1
      %p60 = por %p58, %p59
      %p61 = scmp.ne.s32.totalorder %s52, %s53
      %p62 = scmp.eq.s32.totalorder %s21, 0
      %p63 = por %p61, %p62
      %p64 = scmp.ne.s32.totalorder %s52, %s53
      %p65 = scmp.eq.s32.totalorder %s22, 1
      %p66 = por %p64, %p65
      %p68 = scmp.ne.s32.totalorder %s53, %s67
      %p69 = scmp.eq.s32.totalorder %s22, 0
      %p70 = por %p68, %p69
      %s72 = sadd.s32 %s71, 1
      %p75 = scmp.eq.s32.totalorder %s16, 1
      %p76 = scmp.ne.s32.totalorder %s71, %s73
      %p77 = scmp.eq.s32.totalorder %s16, 0
      %p78 = por %p76, %p77
      %p79 = scmp.ne.s32.totalorder %s71, %s73
      %p80 = scmp.eq.s32.totalorder %s21, 1
      %p81 = por %p79, %p80
      %p82 = scmp.ne.s32.totalorder %s73, %s74
      %p83 = scmp.eq.s32.totalorder %s21, 0
      %p84 = por %p82, %p83
      %p85 = scmp.ne.s32.totalorder %s73, %s74
      %p86 = scmp.eq.s32.totalorder %s22, 1
      %p87 = por %p85, %p86
      %p89 = scmp.ne.s32.totalorder %s74, %s88
      %p90 = scmp.eq.s32.totalorder %s22, 0
      %p91 = por %p89, %p90
      %s93 = sadd.s32 %s92, 1
      %p96 = scmp.eq.s32.totalorder %s16, 1
      %p97 = scmp.ne.s32.totalorder %s92, %s94
      %p98 = scmp.eq.s32.totalorder %s16, 0
      %p99 = por %p97, %p98
      %p100 = scmp.ne.s32.totalorder %s92, %s94
      %p101 = scmp.eq.s32.totalorder %s21, 1
      %p102 = por %p100, %p101
      %p103 = scmp.ne.s32.totalorder %s94, %s95
      %p104 = scmp.eq.s32.totalorder %s21, 0
      %p105 = por %p103, %p104
      %p106 = scmp.ne.s32.totalorder %s94, %s95
      %p107 = scmp.eq.s32.totalorder %s22, 1
      %p108 = por %p106, %p107
      %p110 = scmp.ne.s32.totalorder %s95, %s109
      %p111 = scmp.eq.s32.totalorder %s22, 0
      %p112 = por %p110, %p111
      %s114 = sadd.s32 %s113, 1
      %p117 = scmp.eq.s32.totalorder %s16, 1
      %p118 = scmp.ne.s32.totalorder %s113, %s115
      %p119 = scmp.eq.s32.totalorder %s16, 0
      %p120 = por %p118, %p119
      %p121 = scmp.ne.s32.totalorder %s113, %s115
      %p122 = scmp.eq.s32.totalorder %s21, 1
      %p123 = por %p121, %p122
      %p124 = scmp.ne.s32.totalorder %s115, %s116
      %p125 = scmp.eq.s32.totalorder %s21, 0
      %p126 = por %p124, %p125
      %p127 = scmp.ne.s32.totalorder %s115, %s116
      %p128 = scmp.eq.s32.totalorder %s22, 1
      %p129 = por %p127, %p128
      %p131 = scmp.ne.s32.totalorder %s116, %s130
      %p132 = scmp.eq.s32.totalorder %s22, 0
      %p133 = por %p131, %p132
      %s135 = sadd.s32 %s134, 1
      %p138 = scmp.eq.s32.totalorder %s16, 1
      %p139 = scmp.ne.s32.totalorder %s134, %s136
      %p140 = scmp.eq.s32.totalorder %s16, 0
      %p141 = por %p139, %p140
      %p142 = scmp.ne.s32.totalorder %s134, %s136
      %p143 = scmp.eq.s32.totalorder %s21, 1
      %p144 = por %p142, %p143
      %p145 = scmp.ne.s32.totalorder %s136, %s137
      %p146 = scmp.eq.s32.totalorder %s21, 0
      %p147 = por %p145, %p146
      %p148 = scmp.ne.s32.totalorder %s136, %s137
      %p149 = scmp.eq.s32.totalorder %s22, 1
      %p150 = por %p148, %p149
      %p152 = scmp.ne.s32.totalorder %s137, %s151
      %p153 = scmp.eq.s32.totalorder %s22, 0
      %p154 = por %p152, %p153
      %s156 = sadd.s32 %s155, 1
      %p159 = scmp.eq.s32.totalorder %s16, 1
      %p160 = scmp.ne.s32.totalorder %s155, %s157
      %p161 = scmp.eq.s32.totalorder %s16, 0
      %p162 = por %p160, %p161
      %p163 = scmp.ne.s32.totalorder %s155, %s157
      %p164 = scmp.eq.s32.totalorder %s21, 1
      %p165 = por %p163, %p164
      %p166 = scmp.ne.s32.totalorder %s157, %s158
      %p167 = scmp.eq.s32.totalorder %s21, 0
      %p168 = por %p166, %p167
      %p169 = scmp.ne.s32.totalorder %s157, %s158
      %p170 = scmp.eq.s32.totalorder %s22, 1
      %p171 = por %p169, %p170
      %p173 = scmp.ne.s32.totalorder %s158, %s172
      %p174 = scmp.eq.s32.totalorder %s22, 0
      %p175 = por %p173, %p174
      %s176 = ssub.s32 %s16, %s23
      %p177 = scmp.eq.s32.totalorder %s176, 0
      %s179 = sadd.s32 %s178, 1
      %s180 = scalar_select %p177, %s178, %s179
      %p183 = pneg %p177
      %p184 = scmp.eq.s32.totalorder %s16, 1
      %p185 = por %p183, %p184
      %p186 = scmp.ne.s32.totalorder %s178, %s181
      %p187 = scmp.eq.s32.totalorder %s16, 0
      %p188 = por %p186, %p187
      %p189 = scmp.ne.s32.totalorder %s178, %s181
      %p190 = scmp.eq.s32.totalorder %s21, 1
      %p191 = por %p189, %p190
      %p192 = scmp.ne.s32.totalorder %s181, %s182
      %p193 = scmp.eq.s32.totalorder %s21, 0
      %p194 = por %p192, %p193
      %p195 = scmp.ne.s32.totalorder %s181, %s182
      %p196 = scmp.eq.s32.totalorder %s22, 1
      %p197 = por %p195, %p196
      %p199 = scmp.ne.s32.totalorder %s182, %s198
      %p200 = scmp.eq.s32.totalorder %s22, 0
      %p201 = por %p199, %p200
      %p202 = scmp.le.s32.totalorder 1, %s16
      %p203 = scmp.lt.s32.totalorder %s16, 3
      %p204 = pnand %p202, %p203
      %p205 = pneg %p204
      // Predicated region
      $region9: #{down2_forward.1} parent=5 // pred_check
        _
      $region10: #{down2_forward.1} parent=5 // pred_check_branch
        %207 = sbr.rel (%p204) target = $region12
      $region11: #{down2_forward.1} parent=5 // pred_region
        %s208 = ssub.s32 %s16, 1
        // Predicated region
        $region13: #{down2_forward.1} parent=11 // pred_check
          %p209 = pneg %p63
        $region14: #{down2_forward.1} parent=11 // pred_check_branch
          %211 = sbr.rel (%p209) target = $region16
        $region15: #{down2_forward.1} parent=11 // pred_region
          _
        $region16: #{down2_forward.1} parent=11 // pred_fallthru
          _
        // Predicated region
        $region17: #{down2_forward.1} parent=11 // pred_check
          %p212 = pneg %p84
        $region18: #{down2_forward.1} parent=11 // pred_check_branch
          %214 = sbr.rel (%p212) target = $region20
        $region19: #{down2_forward.1} parent=11 // pred_region
          _
        $region20: #{down2_forward.1} parent=11 // pred_fallthru
          _
        // Predicated region
        $region21: #{down2_forward.1} parent=11 // pred_check
          %p215 = pneg %p105
        $region22: #{down2_forward.1} parent=11 // pred_check_branch
          %217 = sbr.rel (%p215) target = $region24
        $region23: #{down2_forward.1} parent=11 // pred_region
          _
        $region24: #{down2_forward.1} parent=11 // pred_fallthru
          _
        // Predicated region
        $region25: #{down2_forward.1} parent=11 // pred_check
          %p218 = pneg %p126
        $region26: #{down2_forward.1} parent=11 // pred_check_branch
          %220 = sbr.rel (%p218) target = $region28
        $region27: #{down2_forward.1} parent=11 // pred_region
          _
        $region28: #{down2_forward.1} parent=11 // pred_fallthru
          _
        // Predicated region
        $region29: #{down2_forward.1} parent=11 // pred_check
          %p221 = pneg %p147
        $region30: #{down2_forward.1} parent=11 // pred_check_branch
          %223 = sbr.rel (%p221) target = $region32
        $region31: #{down2_forward.1} parent=11 // pred_region
          _
        $region32: #{down2_forward.1} parent=11 // pred_fallthru
          _
        // Predicated region
        $region33: #{down2_forward.1} parent=11 // pred_check
          %p224 = pneg %p168
        $region34: #{down2_forward.1} parent=11 // pred_check_branch
          %226 = sbr.rel (%p224) target = $region36
        $region35: #{down2_forward.1} parent=11 // pred_region
          _
        $region36: #{down2_forward.1} parent=11 // pred_fallthru
          _
      $region12: #{down2_forward.1} parent=5 // pred_fallthru
        _
      %p227 = scmp.lt.s32.totalorder %s16, 2
      // Predicated region
      $region37: #{down2_forward.1} parent=5 // pred_check
        %p228 = pneg %p227
      $region38: #{down2_forward.1} parent=5 // pred_check_branch
        %230 = sbr.rel (%p228) target = $region40
      $region39: #{down2_forward.1} parent=5 // pred_region
        // Predicated region
        $region41: #{down2_forward.1} parent=39 // pred_check
          %p231 = pneg %p36
        $region42: #{down2_forward.1} parent=39 // pred_check_branch
          %233 = sbr.rel (%p231) target = $region44
        $region43: #{down2_forward.1} parent=39 // pred_region
          %p234 = scmp.lt.s32.totalorder %s16, 1
          %s235 = scalar_select %p234, %s16, 1
          %s236 = smul.addr %s235, 32
          %s237 = smul.addr %s236, 8
          %s238 = scalar_lea.vmem %s0, %s237
        $region44: #{down2_forward.1} parent=39 // pred_fallthru
          _
      $region40: #{down2_forward.1} parent=5 // pred_fallthru
        _
      %p239 = scmp.le.s32.totalorder 1, %s16
      %p240 = scmp.lt.s32.totalorder %s16, 3
      %p241 = pnand %p239, %p240
      %p242 = pneg %p241
      // Predicated region
      $region45: #{down2_forward.1} parent=5 // pred_check
        _
      $region46: #{down2_forward.1} parent=5 // pred_check_branch
        %244 = sbr.rel (%p241) target = $region48
      $region47: #{down2_forward.1} parent=5 // pred_region
        %s245 = ssub.s32 %s16, 1
        %p246 = scmp.lt.s32.totalorder %s21, 1
        %s247 = scalar_select %p246, %s21, 1
        %s248 = smul.addr %s247, 32
        %s249 = smul.addr %s248, 8
        %s250 = scalar_lea.vmem %s0, %s249
        %p251 = pneg %p42
        %p252 = pneg %p39
        %p253 = pneg %p63
        %p254 = pneg %p60
        %p255 = pneg %p84
        %p256 = pneg %p81
        %p257 = pneg %p105
        %p258 = pneg %p102
        %p259 = pneg %p126
        %p260 = pneg %p123
        %p261 = pneg %p147
        %p262 = pneg %p144
        %p263 = pneg %p168
        %p264 = pneg %p165
        %p265 = pneg %p194
        %p266 = pneg %p191
        %s267 = sand.u32 %s181, 1
        %s268 = scalar_lea.sflag [#allocation9], %s267
        %s269 = sand.u32 %s181, 1
        %s270 = smul.addr %s269, 64
        %s271 = scalar_lea.vmem [#allocation8], %s270
        %p272 = scmp.lt.s32.totalorder %s21, 1
        %s273 = scalar_select %p272, %s21, 1
        %s274 = smul.addr %s273, 32
        %s275 = smul.addr %s274, 8
        %s276 = scalar_lea.vmem %s0, %s275
        %vm278 = vcmask 130048
        %279 = vst.msk [vmem:[#allocation2] sm:$0xff] %vm278, 0.0
        %280 = vst.msk [vmem:[#allocation2 + $0x8] sm:$0xff] %vm278, 0.0
        %vm281 = vcmask 125952
        %282 = vst.msk [vmem:[#allocation2 + $0x10] sm:$0xf] %vm281, 0.0
        %283 = vst.msk [vmem:[#allocation2 + $0x18] sm:$0xff] %vm278, 0.0
        %284 = vst.msk [vmem:[#allocation2 + $0x20] sm:$0xff] %vm278, 0.0
        %285 = vst.msk [vmem:[#allocation2 + $0x28] sm:$0xf] %vm281, 0.0
        %286 = vst.msk [vmem:[#allocation2 + $0x30] sm:$0xff] %vm278, 0.0
        %287 = vst.msk [vmem:[#allocation2 + $0x38] sm:$0xff] %vm278, 0.0
        %288 = vst.msk [vmem:[#allocation2 + $0x40] sm:$0xf] %vm281, 0.0
        %289 = vst.msk [vmem:[#allocation2 + $0x48] sm:$0xff] %vm278, 0.0
        %290 = vst.msk [vmem:[#allocation2 + $0x50] sm:$0xff] %vm278, 0.0
        %291 = vst.msk [vmem:[#allocation2 + $0x58] sm:$0xf] %vm281, 0.0
        %292 = vst.msk [vmem:[#allocation2 + $0x60] sm:$0xff] %vm278, 0.0
        %293 = vst.msk [vmem:[#allocation2 + $0x68] sm:$0xff] %vm278, 0.0
        %294 = vst.msk [vmem:[#allocation2 + $0x70] sm:$0xf] %vm281, 0.0
        %295 = vst.msk [vmem:[#allocation2 + $0x78] sm:$0xff] %vm278, 0.0
        %296 = vst.msk [vmem:[#allocation2 + $0x80] sm:$0xff] %vm278, 0.0
        %297 = vst.msk [vmem:[#allocation2 + $0x88] sm:$0xf] %vm281, 0.0
        %298 = vst.msk [vmem:[#allocation2 + $0x90] sm:$0xff] %vm278, 0.0
        %299 = vst.msk [vmem:[#allocation2 + $0x98] sm:$0xff] %vm278, 0.0
        %300 = vst.msk [vmem:[#allocation2 + $0xa0] sm:$0xf] %vm281, 0.0
        %301 = vst.msk [vmem:[#allocation2 + $0xa8] sm:$0xff] %vm278, 0.0
        %302 = vst.msk [vmem:[#allocation2 + $0xb0] sm:$0xff] %vm278, 0.0
        %303 = vst.msk [vmem:[#allocation2 + $0xb8] sm:$0xf] %vm281, 0.0
        %304 = vst.msk [vmem:[#allocation2 + $0xc0] sm:$0xff] %vm278, 0.0
        %305 = vst.msk [vmem:[#allocation2 + $0xc8] sm:$0xff] %vm278, 0.0
        %306 = vst.msk [vmem:[#allocation2 + $0xd0] sm:$0xf] %vm281, 0.0
        %307 = vst.msk [vmem:[#allocation2 + $0xd8] sm:$0xff] %vm278, 0.0
        %308 = vst.msk [vmem:[#allocation2 + $0xe0] sm:$0xff] %vm278, 0.0
        %309 = vst.msk [vmem:[#allocation2 + $0xe8] sm:$0xf] %vm281, 0.0
        %310 = vst.msk [vmem:[#allocation2 + $0xf0] sm:$0xff] %vm278, 0.0
        %311 = vst.msk [vmem:[#allocation2 + $0xf8] sm:$0xff] %vm278, 0.0
        %312 = vst.msk [vmem:[#allocation2 + $0x100] sm:$0xf] %vm281, 0.0
        %313 = vst.msk [vmem:[#allocation2 + $0x108] sm:$0xff] %vm278, 0.0
        %314 = vst.msk [vmem:[#allocation2 + $0x110] sm:$0xff] %vm278, 0.0
        %315 = vst.msk [vmem:[#allocation2 + $0x118] sm:$0xf] %vm281, 0.0
        %316 = vst.msk [vmem:[#allocation2 + $0x120] sm:$0xff] %vm278, 0.0
        %317 = vst.msk [vmem:[#allocation2 + $0x128] sm:$0xff] %vm278, 0.0
        %318 = vst.msk [vmem:[#allocation2 + $0x130] sm:$0xf] %vm281, 0.0
        %319 = vst.msk [vmem:[#allocation2 + $0x138] sm:$0xff] %vm278, 0.0
        %320 = vst.msk [vmem:[#allocation2 + $0x140] sm:$0xff] %vm278, 0.0
        %321 = vst.msk [vmem:[#allocation2 + $0x148] sm:$0xf] %vm281, 0.0
        %322 = vst.msk [vmem:[#allocation2 + $0x150] sm:$0xff] %vm278, 0.0
        %323 = vst.msk [vmem:[#allocation2 + $0x158] sm:$0xff] %vm278, 0.0
        %324 = vst.msk [vmem:[#allocation2 + $0x160] sm:$0xf] %vm281, 0.0
        %325 = vst.msk [vmem:[#allocation2 + $0x168] sm:$0xff] %vm278, 0.0
        %326 = vst.msk [vmem:[#allocation2 + $0x170] sm:$0xff] %vm278, 0.0
        %327 = vst.msk [vmem:[#allocation2 + $0x178] sm:$0xf] %vm281, 0.0
        %328 = vst.msk [vmem:[#allocation2 + $0x180] sm:$0xff] %vm278, 0.0
        %329 = vst.msk [vmem:[#allocation2 + $0x188] sm:$0xff] %vm278, 0.0
        %330 = vst.msk [vmem:[#allocation2 + $0x190] sm:$0xf] %vm281, 0.0
        %331 = vst.msk [vmem:[#allocation2 + $0x198] sm:$0xff] %vm278, 0.0
        %332 = vst.msk [vmem:[#allocation2 + $0x1a0] sm:$0xff] %vm278, 0.0
        %333 = vst.msk [vmem:[#allocation2 + $0x1a8] sm:$0xf] %vm281, 0.0
        %334 = vst.msk [vmem:[#allocation2 + $0x1b0] sm:$0xff] %vm278, 0.0
        %335 = vst.msk [vmem:[#allocation2 + $0x1b8] sm:$0xff] %vm278, 0.0
        %336 = vst.msk [vmem:[#allocation2 + $0x1c0] sm:$0xf] %vm281, 0.0
        %337 = vst.msk [vmem:[#allocation2 + $0x1c8] sm:$0xff] %vm278, 0.0
        %338 = vst.msk [vmem:[#allocation2 + $0x1d0] sm:$0xff] %vm278, 0.0
        %339 = vst.msk [vmem:[#allocation2 + $0x1d8] sm:$0xf] %vm281, 0.0
        %340 = vst.msk [vmem:[#allocation3] sm:$0xff] %vm278, 0.0
        %341 = vst.msk [vmem:[#allocation3 + $0x8] sm:$0xff] %vm278, 0.0
        %vm342 = vcmask 123904
        %343 = vst.msk [vmem:[#allocation3 + $0x10] sm:$0x3] %vm342, 0.0
        %344 = vst.msk [vmem:[#allocation3 + $0x18] sm:$0xff] %vm278, 0.0
        %345 = vst.msk [vmem:[#allocation3 + $0x20] sm:$0xff] %vm278, 0.0
        %346 = vst.msk [vmem:[#allocation3 + $0x28] sm:$0x3] %vm342, 0.0
        %347 = vst.msk [vmem:[#allocation3 + $0x30] sm:$0xff] %vm278, 0.0
        %348 = vst.msk [vmem:[#allocation3 + $0x38] sm:$0xff] %vm278, 0.0
        %349 = vst.msk [vmem:[#allocation3 + $0x40] sm:$0x3] %vm342, 0.0
        %350 = vst.msk [vmem:[#allocation3 + $0x48] sm:$0xff] %vm278, 0.0
        %351 = vst.msk [vmem:[#allocation3 + $0x50] sm:$0xff] %vm278, 0.0
        %352 = vst.msk [vmem:[#allocation3 + $0x58] sm:$0x3] %vm342, 0.0
        %353 = vst.msk [vmem:[#allocation3 + $0x60] sm:$0xff] %vm278, 0.0
        %354 = vst.msk [vmem:[#allocation3 + $0x68] sm:$0xff] %vm278, 0.0
        %355 = vst.msk [vmem:[#allocation3 + $0x70] sm:$0x3] %vm342, 0.0
        %356 = vst.msk [vmem:[#allocation3 + $0x78] sm:$0xff] %vm278, 0.0
        %357 = vst.msk [vmem:[#allocation3 + $0x80] sm:$0xff] %vm278, 0.0
        %358 = vst.msk [vmem:[#allocation3 + $0x88] sm:$0x3] %vm342, 0.0
        %359 = vst.msk [vmem:[#allocation3 + $0x90] sm:$0xff] %vm278, 0.0
        %360 = vst.msk [vmem:[#allocation3 + $0x98] sm:$0xff] %vm278, 0.0
        %361 = vst.msk [vmem:[#allocation3 + $0xa0] sm:$0x3] %vm342, 0.0
        %362 = vst.msk [vmem:[#allocation3 + $0xa8] sm:$0xff] %vm278, 0.0
        %363 = vst.msk [vmem:[#allocation3 + $0xb0] sm:$0xff] %vm278, 0.0
        %364 = vst.msk [vmem:[#allocation3 + $0xb8] sm:$0x3] %vm342, 0.0
        %365 = vst.msk [vmem:[#allocation3 + $0xc0] sm:$0xff] %vm278, 0.0
        %366 = vst.msk [vmem:[#allocation3 + $0xc8] sm:$0xff] %vm278, 0.0
        %367 = vst.msk [vmem:[#allocation3 + $0xd0] sm:$0x3] %vm342, 0.0
        %368 = vst.msk [vmem:[#allocation3 + $0xd8] sm:$0xff] %vm278, 0.0
        %369 = vst.msk [vmem:[#allocation3 + $0xe0] sm:$0xff] %vm278, 0.0
        %370 = vst.msk [vmem:[#allocation3 + $0xe8] sm:$0x3] %vm342, 0.0
        %371 = vst.msk [vmem:[#allocation3 + $0xf0] sm:$0xff] %vm278, 0.0
        %372 = vst.msk [vmem:[#allocation3 + $0xf8] sm:$0xff] %vm278, 0.0
        %373 = vst.msk [vmem:[#allocation3 + $0x100] sm:$0x3] %vm342, 0.0
        %374 = vst.msk [vmem:[#allocation3 + $0x108] sm:$0xff] %vm278, 0.0
        %375 = vst.msk [vmem:[#allocation3 + $0x110] sm:$0xff] %vm278, 0.0
        %376 = vst.msk [vmem:[#allocation3 + $0x118] sm:$0x3] %vm342, 0.0
        %377 = vst.msk [vmem:[#allocation3 + $0x120] sm:$0xff] %vm278, 0.0
        %378 = vst.msk [vmem:[#allocation3 + $0x128] sm:$0xff] %vm278, 0.0
        %379 = vst.msk [vmem:[#allocation3 + $0x130] sm:$0x3] %vm342, 0.0
        %380 = vst.msk [vmem:[#allocation3 + $0x138] sm:$0xff] %vm278, 0.0
        %381 = vst.msk [vmem:[#allocation3 + $0x140] sm:$0xff] %vm278, 0.0
        %382 = vst.msk [vmem:[#allocation3 + $0x148] sm:$0x3] %vm342, 0.0
        %383 = vst.msk [vmem:[#allocation3 + $0x150] sm:$0xff] %vm278, 0.0
        %384 = vst.msk [vmem:[#allocation3 + $0x158] sm:$0xff] %vm278, 0.0
        %385 = vst.msk [vmem:[#allocation3 + $0x160] sm:$0x3] %vm342, 0.0
        %386 = vst.msk [vmem:[#allocation3 + $0x168] sm:$0xff] %vm278, 0.0
        %387 = vst.msk [vmem:[#allocation3 + $0x170] sm:$0xff] %vm278, 0.0
        %388 = vst.msk [vmem:[#allocation3 + $0x178] sm:$0x3] %vm342, 0.0
        %389 = vst.msk [vmem:[#allocation3 + $0x180] sm:$0xff] %vm278, 0.0
        %390 = vst.msk [vmem:[#allocation3 + $0x188] sm:$0xff] %vm278, 0.0
        %391 = vst.msk [vmem:[#allocation3 + $0x190] sm:$0x3] %vm342, 0.0
        %392 = vst.msk [vmem:[#allocation3 + $0x198] sm:$0xff] %vm278, 0.0
        %393 = vst.msk [vmem:[#allocation3 + $0x1a0] sm:$0xff] %vm278, 0.0
        %394 = vst.msk [vmem:[#allocation3 + $0x1a8] sm:$0x3] %vm342, 0.0
        %vm395 = vcmask 261120
        %396 = vst.msk [vmem:[#allocation4] sm:$0xff] %vm395, 0.0
        %397 = vst.msk [vmem:[#allocation4 + $0x8] sm:$0xff] %vm395, 0.0
        %vm398 = vcmask 257024
        %399 = vst.msk [vmem:[#allocation4 + $0x10] sm:$0xf] %vm398, 0.0
        %400 = vst.msk [vmem:[#allocation4 + $0x18] sm:$0xff] %vm395, 0.0
        %401 = vst.msk [vmem:[#allocation4 + $0x20] sm:$0xff] %vm395, 0.0
        %402 = vst.msk [vmem:[#allocation4 + $0x28] sm:$0xf] %vm398, 0.0
        %403 = vst.msk [vmem:[#allocation4 + $0x30] sm:$0xff] %vm395, 0.0
        %404 = vst.msk [vmem:[#allocation4 + $0x38] sm:$0xff] %vm395, 0.0
        %405 = vst.msk [vmem:[#allocation4 + $0x40] sm:$0xf] %vm398, 0.0
        %406 = vst.msk [vmem:[#allocation4 + $0x48] sm:$0xff] %vm395, 0.0
        %407 = vst.msk [vmem:[#allocation4 + $0x50] sm:$0xff] %vm395, 0.0
        %408 = vst.msk [vmem:[#allocation4 + $0x58] sm:$0xf] %vm398, 0.0
        %409 = vst.msk [vmem:[#allocation4 + $0x60] sm:$0xff] %vm395, 0.0
        %410 = vst.msk [vmem:[#allocation4 + $0x68] sm:$0xff] %vm395, 0.0
        %411 = vst.msk [vmem:[#allocation4 + $0x70] sm:$0xf] %vm398, 0.0
        %412 = vst.msk [vmem:[#allocation4 + $0x78] sm:$0xff] %vm395, 0.0
        %413 = vst.msk [vmem:[#allocation4 + $0x80] sm:$0xff] %vm395, 0.0
        %414 = vst.msk [vmem:[#allocation4 + $0x88] sm:$0xf] %vm398, 0.0
        %415 = vst.msk [vmem:[#allocation4 + $0x90] sm:$0xff] %vm395, 0.0
        %416 = vst.msk [vmem:[#allocation4 + $0x98] sm:$0xff] %vm395, 0.0
        %417 = vst.msk [vmem:[#allocation4 + $0xa0] sm:$0xf] %vm398, 0.0
        %418 = vst.msk [vmem:[#allocation4 + $0xa8] sm:$0xff] %vm395, 0.0
        %419 = vst.msk [vmem:[#allocation4 + $0xb0] sm:$0xff] %vm395, 0.0
        %420 = vst.msk [vmem:[#allocation4 + $0xb8] sm:$0xf] %vm398, 0.0
        %421 = vst.msk [vmem:[#allocation4 + $0xc0] sm:$0xff] %vm395, 0.0
        %422 = vst.msk [vmem:[#allocation4 + $0xc8] sm:$0xff] %vm395, 0.0
        %423 = vst.msk [vmem:[#allocation4 + $0xd0] sm:$0xf] %vm398, 0.0
        %424 = vst.msk [vmem:[#allocation4 + $0xd8] sm:$0xff] %vm395, 0.0
        %425 = vst.msk [vmem:[#allocation4 + $0xe0] sm:$0xff] %vm395, 0.0
        %426 = vst.msk [vmem:[#allocation4 + $0xe8] sm:$0xf] %vm398, 0.0
        %427 = vst.msk [vmem:[#allocation4 + $0xf0] sm:$0xff] %vm395, 0.0
        %428 = vst.msk [vmem:[#allocation4 + $0xf8] sm:$0xff] %vm395, 0.0
        %429 = vst.msk [vmem:[#allocation4 + $0x100] sm:$0xf] %vm398, 0.0
        %430 = vst.msk [vmem:[#allocation4 + $0x108] sm:$0xff] %vm395, 0.0
        %431 = vst.msk [vmem:[#allocation4 + $0x110] sm:$0xff] %vm395, 0.0
        %432 = vst.msk [vmem:[#allocation4 + $0x118] sm:$0xf] %vm398, 0.0
        %433 = vst.msk [vmem:[#allocation4 + $0x120] sm:$0xff] %vm395, 0.0
        %434 = vst.msk [vmem:[#allocation4 + $0x128] sm:$0xff] %vm395, 0.0
        %435 = vst.msk [vmem:[#allocation4 + $0x130] sm:$0xf] %vm398, 0.0
        %436 = vst.msk [vmem:[#allocation4 + $0x138] sm:$0xff] %vm395, 0.0
        %437 = vst.msk [vmem:[#allocation4 + $0x140] sm:$0xff] %vm395, 0.0
        %438 = vst.msk [vmem:[#allocation4 + $0x148] sm:$0xf] %vm398, 0.0
        %439 = vst.msk [vmem:[#allocation4 + $0x150] sm:$0xff] %vm395, 0.0
        %440 = vst.msk [vmem:[#allocation4 + $0x158] sm:$0xff] %vm395, 0.0
        %441 = vst.msk [vmem:[#allocation4 + $0x160] sm:$0xf] %vm398, 0.0
        %442 = vst.msk [vmem:[#allocation4 + $0x168] sm:$0xff] %vm395, 0.0
        %443 = vst.msk [vmem:[#allocation4 + $0x170] sm:$0xff] %vm395, 0.0
        %444 = vst.msk [vmem:[#allocation4 + $0x178] sm:$0xf] %vm398, 0.0
        %445 = vst.msk [vmem:[#allocation4 + $0x180] sm:$0xff] %vm395, 0.0
        %446 = vst.msk [vmem:[#allocation4 + $0x188] sm:$0xff] %vm395, 0.0
        %447 = vst.msk [vmem:[#allocation4 + $0x190] sm:$0xf] %vm398, 0.0
        %448 = vst.msk [vmem:[#allocation4 + $0x198] sm:$0xff] %vm395, 0.0
        %449 = vst.msk [vmem:[#allocation4 + $0x1a0] sm:$0xff] %vm395, 0.0
        %450 = vst.msk [vmem:[#allocation4 + $0x1a8] sm:$0xf] %vm398, 0.0
        %451 = vst.msk [vmem:[#allocation4 + $0x1b0] sm:$0xff] %vm395, 0.0
        %452 = vst.msk [vmem:[#allocation4 + $0x1b8] sm:$0xff] %vm395, 0.0
        %453 = vst.msk [vmem:[#allocation4 + $0x1c0] sm:$0xf] %vm398, 0.0
        %454 = vst.msk [vmem:[#allocation4 + $0x1c8] sm:$0xff] %vm395, 0.0
        %455 = vst.msk [vmem:[#allocation4 + $0x1d0] sm:$0xff] %vm395, 0.0
        %456 = vst.msk [vmem:[#allocation4 + $0x1d8] sm:$0xf] %vm398, 0.0
        %v457 = vld [vmem:[%s276] sm:$0xff]
        %v458 = vld [vmem:[%s276 + $0x8] sm:$0xff]
        %v459 = vld [vmem:[%s276 + $0x10] sm:$0xff]
        %v460 = vld [vmem:[%s276 + $0x18] sm:$0xff]
        %v461 = vld [vmem:[%s276 + $0x20] sm:$0xff]
        %v462 = vld [vmem:[%s276 + $0x28] sm:$0xff]
        %v463 = vld [vmem:[%s276 + $0x30] sm:$0xff]
        %v464 = vld [vmem:[%s276 + $0x38] sm:$0xff]
        %v465 = vld [vmem:[%s276 + $0x40] sm:$0xff]
        %v466 = vld [vmem:[%s276 + $0x48] sm:$0xff]
        %v467 = vld [vmem:[%s276 + $0x50] sm:$0xff]
        %v468 = vld [vmem:[%s276 + $0x58] sm:$0xff]
        %v469 = vld [vmem:[%s276 + $0x60] sm:$0xff]
        %v470 = vld [vmem:[%s276 + $0x68] sm:$0xff]
        %v471 = vld [vmem:[%s276 + $0x70] sm:$0xff]
        %v472 = vld [vmem:[%s276 + $0x78] sm:$0xff]
        %v473 = vld [vmem:[%s276 + $0x80] sm:$0xff]
        %v474 = vld [vmem:[%s276 + $0x88] sm:$0xff]
        %v475 = vld [vmem:[%s276 + $0x90] sm:$0xff]
        %v476 = vld [vmem:[%s276 + $0x98] sm:$0xff]
        %v477 = vld [vmem:[%s276 + $0xa0] sm:$0xff]
        %v478 = vld [vmem:[%s276 + $0xa8] sm:$0xff]
        %v479 = vld [vmem:[%s276 + $0xb0] sm:$0xff]
        %v480 = vld [vmem:[%s276 + $0xb8] sm:$0xff]
        %v481 = vld [vmem:[%s276 + $0xc0] sm:$0xff]
        %v482 = vld [vmem:[%s276 + $0xc8] sm:$0xff]
        %v483 = vld [vmem:[%s276 + $0xd0] sm:$0xff]
        %v484 = vld [vmem:[%s276 + $0xd8] sm:$0xff]
        %v485 = vld [vmem:[%s276 + $0xe0] sm:$0xff]
        %v486 = vld [vmem:[%s276 + $0xe8] sm:$0xff]
        %v487 = vld [vmem:[%s276 + $0xf0] sm:$0xff]
        %v488 = vld [vmem:[%s276 + $0xf8] sm:$0xff]
        %s489 = scalar_lea.vmem [#allocation2], 48
        %490 = vst.msk [vmem:[%s489 + $0x2] sm:$0xff] %vm278, %v457
        %491 = vst.msk [vmem:[%s489 + $0xa] sm:$0xff] %vm278, %v458
        %492 = vst.msk [vmem:[%s489 + $0x1a] sm:$0xff] %vm278, %v459
        %493 = vst.msk [vmem:[%s489 + $0x22] sm:$0xff] %vm278, %v460
        %494 = vst.msk [vmem:[%s489 + $0x32] sm:$0xff] %vm278, %v461
        %495 = vst.msk [vmem:[%s489 + $0x3a] sm:$0xff] %vm278, %v462
        %496 = vst.msk [vmem:[%s489 + $0x4a] sm:$0xff] %vm278, %v463
        %497 = vst.msk [vmem:[%s489 + $0x52] sm:$0xff] %vm278, %v464
        %498 = vst.msk [vmem:[%s489 + $0x62] sm:$0xff] %vm278, %v465
        %499 = vst.msk [vmem:[%s489 + $0x6a] sm:$0xff] %vm278, %v466
        %500 = vst.msk [vmem:[%s489 + $0x7a] sm:$0xff] %vm278, %v467
        %501 = vst.msk [vmem:[%s489 + $0x82] sm:$0xff] %vm278, %v468
        %502 = vst.msk [vmem:[%s489 + $0x92] sm:$0xff] %vm278, %v469
        %503 = vst.msk [vmem:[%s489 + $0x9a] sm:$0xff] %vm278, %v470
        %504 = vst.msk [vmem:[%s489 + $0xaa] sm:$0xff] %vm278, %v471
        %505 = vst.msk [vmem:[%s489 + $0xb2] sm:$0xff] %vm278, %v472
        %506 = vst.msk [vmem:[%s489 + $0xc2] sm:$0xff] %vm278, %v473
        %507 = vst.msk [vmem:[%s489 + $0xca] sm:$0xff] %vm278, %v474
        %508 = vst.msk [vmem:[%s489 + $0xda] sm:$0xff] %vm278, %v475
        %509 = vst.msk [vmem:[%s489 + $0xe2] sm:$0xff] %vm278, %v476
        %510 = vst.msk [vmem:[%s489 + $0xf2] sm:$0xff] %vm278, %v477
        %511 = vst.msk [vmem:[%s489 + $0xfa] sm:$0xff] %vm278, %v478
        %512 = vst.msk [vmem:[%s489 + $0x10a] sm:$0xff] %vm278, %v479
        %513 = vst.msk [vmem:[%s489 + $0x112] sm:$0xff] %vm278, %v480
        %514 = vst.msk [vmem:[%s489 + $0x122] sm:$0xff] %vm278, %v481
        %515 = vst.msk [vmem:[%s489 + $0x12a] sm:$0xff] %vm278, %v482
        %516 = vst.msk [vmem:[%s489 + $0x13a] sm:$0xff] %vm278, %v483
        %517 = vst.msk [vmem:[%s489 + $0x142] sm:$0xff] %vm278, %v484
        %518 = vst.msk [vmem:[%s489 + $0x152] sm:$0xff] %vm278, %v485
        %519 = vst.msk [vmem:[%s489 + $0x15a] sm:$0xff] %vm278, %v486
        %520 = vst.msk [vmem:[%s489 + $0x16a] sm:$0xff] %vm278, %v487
        %521 = vst.msk [vmem:[%s489 + $0x172] sm:$0xff] %vm278, %v488
        %v522 = vld [vmem:[#allocation2] sm:$0xff]
        %v523 = vld [vmem:[#allocation2 + $0x8] sm:$0xff]
        %v524 = vld [vmem:[#allocation2 + $0x18] sm:$0xff]
        %v525 = vld [vmem:[#allocation2 + $0x20] sm:$0xff]
        %v526 = vld [vmem:[#allocation2 + $0x30] sm:$0xff]
        %v527 = vld [vmem:[#allocation2 + $0x38] sm:$0xff]
        %v528 = vld [vmem:[#allocation2 + $0x48] sm:$0xff]
        %v529 = vld [vmem:[#allocation2 + $0x50] sm:$0xff]
        %v530 = vld [vmem:[#allocation2 + $0x60] sm:$0xff]
        %v531 = vld [vmem:[#allocation2 + $0x68] sm:$0xff]
        %v532 = vld [vmem:[#allocation2 + $0x78] sm:$0xff]
        %v533 = vld [vmem:[#allocation2 + $0x80] sm:$0xff]
        %v534 = vld [vmem:[#allocation2 + $0x90] sm:$0xff]
        %v535 = vld [vmem:[#allocation2 + $0x98] sm:$0xff]
        %v536 = vld [vmem:[#allocation2 + $0xa8] sm:$0xff]
        %v537 = vld [vmem:[#allocation2 + $0xb0] sm:$0xff]
        %v538 = vld [vmem:[#allocation2 + $0xc0] sm:$0xff]
        %v539 = vld [vmem:[#allocation2 + $0xc8] sm:$0xff]
        %v540 = vld [vmem:[#allocation2 + $0xd8] sm:$0xff]
        %v541 = vld [vmem:[#allocation2 + $0xe0] sm:$0xff]
        %v542 = vld [vmem:[#allocation2 + $0xf0] sm:$0xff]
        %v543 = vld [vmem:[#allocation2 + $0xf8] sm:$0xff]
        %v544 = vld [vmem:[#allocation2 + $0x108] sm:$0xff]
        %v545 = vld [vmem:[#allocation2 + $0x110] sm:$0xff]
        %v546 = vld [vmem:[#allocation2 + $0x120] sm:$0xff]
        %v547 = vld [vmem:[#allocation2 + $0x128] sm:$0xff]
        %v548 = vld [vmem:[#allocation2 + $0x138] sm:$0xff]
        %v549 = vld [vmem:[#allocation2 + $0x140] sm:$0xff]
        %v550 = vld [vmem:[#allocation2 + $0x150] sm:$0xff]
        %v551 = vld [vmem:[#allocation2 + $0x158] sm:$0xff]
        %v552 = vld [vmem:[#allocation2 + $0x168] sm:$0xff]
        %v553 = vld [vmem:[#allocation2 + $0x170] sm:$0xff]
        %v554 = vld [vmem:[#allocation2 + $0x180] sm:$0xff]
        %v555 = vld [vmem:[#allocation2 + $0x188] sm:$0xff]
        %v556 = vld [vmem:[#allocation2 + $0x198] sm:$0xff]
        %v557 = vld [vmem:[#allocation2 + $0x1a0] sm:$0xff]
        %v558 = vld [vmem:[#allocation2 + $0x1b0] sm:$0xff]
        %v559 = vld [vmem:[#allocation2 + $0x1b8] sm:$0xff]
        %v560 = vld [vmem:[#allocation2 + $0x1c8] sm:$0xff]
        %v561 = vld [vmem:[#allocation2 + $0x1d0] sm:$0xff]
        %v562 = vpack.c.bf16 %v522, %v522
        %v563 = vpack.c.bf16 %v523, %v523
        %v564 = vpack.c.bf16 %v524, %v524
        %v565 = vpack.c.bf16 %v525, %v525
        %v566 = vpack.c.bf16 %v526, %v526
        %v567 = vpack.c.bf16 %v527, %v527
        %v568 = vpack.c.bf16 %v528, %v528
        %v569 = vpack.c.bf16 %v529, %v529
        %v570 = vpack.c.bf16 %v530, %v530
        %v571 = vpack.c.bf16 %v531, %v531
        %v572 = vpack.c.bf16 %v532, %v532
        %v573 = vpack.c.bf16 %v533, %v533
        %v574 = vpack.c.bf16 %v534, %v534
        %v575 = vpack.c.bf16 %v535, %v535
        %v576 = vpack.c.bf16 %v536, %v536
        %v577 = vpack.c.bf16 %v537, %v537
        %v578 = vpack.c.bf16 %v538, %v538
        %v579 = vpack.c.bf16 %v539, %v539
        %v580 = vpack.c.bf16 %v540, %v540
        %v581 = vpack.c.bf16 %v541, %v541
        %v582 = vpack.c.bf16 %v542, %v542
        %v583 = vpack.c.bf16 %v543, %v543
        %v584 = vpack.c.bf16 %v544, %v544
        %v585 = vpack.c.bf16 %v545, %v545
        %v586 = vpack.c.bf16 %v546, %v546
        %v587 = vpack.c.bf16 %v547, %v547
        %v588 = vpack.c.bf16 %v548, %v548
        %v589 = vpack.c.bf16 %v549, %v549
        %v590 = vpack.c.bf16 %v550, %v550
        %v591 = vpack.c.bf16 %v551, %v551
        %v592 = vpack.c.bf16 %v552, %v552
        %v593 = vpack.c.bf16 %v553, %v553
        %v594 = vpack.c.bf16 %v554, %v554
        %v595 = vpack.c.bf16 %v555, %v555
        %v596 = vpack.c.bf16 %v556, %v556
        %v597 = vpack.c.bf16 %v557, %v557
        %v598 = vpack.c.bf16 %v558, %v558
        %v599 = vpack.c.bf16 %v559, %v559
        %v600 = vpack.c.bf16 %v560, %v560
        %v601 = vpack.c.bf16 %v561, %v561
        %602 = vst.msk [vmem:[#allocation5] sm:$0xf] %vm281, %v562
        %603 = vst.msk [vmem:[#allocation5 + $0x8] sm:$0xf] %vm281, %v563
        %604 = vst.msk [vmem:[#allocation5 + $0x10] sm:$0xf] %vm281, %v564
        %605 = vst.msk [vmem:[#allocation5 + $0x18] sm:$0xf] %vm281, %v565
        %606 = vst.msk [vmem:[#allocation5 + $0x20] sm:$0xf] %vm281, %v566
        %607 = vst.msk [vmem:[#allocation5 + $0x28] sm:$0xf] %vm281, %v567
        %608 = vst.msk [vmem:[#allocation5 + $0x30] sm:$0xf] %vm281, %v568
        %609 = vst.msk [vmem:[#allocation5 + $0x38] sm:$0xf] %vm281, %v569
        %610 = vst.msk [vmem:[#allocation5 + $0x40] sm:$0xf] %vm281, %v570
        %611 = vst.msk [vmem:[#allocation5 + $0x48] sm:$0xf] %vm281, %v571
        %612 = vst.msk [vmem:[#allocation5 + $0x50] sm:$0xf] %vm281, %v572
        %613 = vst.msk [vmem:[#allocation5 + $0x58] sm:$0xf] %vm281, %v573
        %614 = vst.msk [vmem:[#allocation5 + $0x60] sm:$0xf] %vm281, %v574
        %615 = vst.msk [vmem:[#allocation5 + $0x68] sm:$0xf] %vm281, %v575
        %616 = vst.msk [vmem:[#allocation5 + $0x70] sm:$0xf] %vm281, %v576
        %617 = vst.msk [vmem:[#allocation5 + $0x78] sm:$0xf] %vm281, %v577
        %618 = vst.msk [vmem:[#allocation5 + $0x80] sm:$0xf] %vm281, %v578
        %619 = vst.msk [vmem:[#allocation5 + $0x88] sm:$0xf] %vm281, %v579
        %620 = vst.msk [vmem:[#allocation5 + $0x90] sm:$0xf] %vm281, %v580
        %621 = vst.msk [vmem:[#allocation5 + $0x98] sm:$0xf] %vm281, %v581
        %622 = vst.msk [vmem:[#allocation5 + $0xa0] sm:$0xf] %vm281, %v582
        %623 = vst.msk [vmem:[#allocation5 + $0xa8] sm:$0xf] %vm281, %v583
        %624 = vst.msk [vmem:[#allocation5 + $0xb0] sm:$0xf] %vm281, %v584
        %625 = vst.msk [vmem:[#allocation5 + $0xb8] sm:$0xf] %vm281, %v585
        %626 = vst.msk [vmem:[#allocation5 + $0xc0] sm:$0xf] %vm281, %v586
        %627 = vst.msk [vmem:[#allocation5 + $0xc8] sm:$0xf] %vm281, %v587
        %628 = vst.msk [vmem:[#allocation5 + $0xd0] sm:$0xf] %vm281, %v588
        %629 = vst.msk [vmem:[#allocation5 + $0xd8] sm:$0xf] %vm281, %v589
        %630 = vst.msk [vmem:[#allocation5 + $0xe0] sm:$0xf] %vm281, %v590
        %631 = vst.msk [vmem:[#allocation5 + $0xe8] sm:$0xf] %vm281, %v591
        %632 = vst.msk [vmem:[#allocation5 + $0xf0] sm:$0xf] %vm281, %v592
        %633 = vst.msk [vmem:[#allocation5 + $0xf8] sm:$0xf] %vm281, %v593
        %634 = vst.msk [vmem:[#allocation5 + $0x100] sm:$0xf] %vm281, %v594
        %635 = vst.msk [vmem:[#allocation5 + $0x108] sm:$0xf] %vm281, %v595
        %636 = vst.msk [vmem:[#allocation5 + $0x110] sm:$0xf] %vm281, %v596
        %637 = vst.msk [vmem:[#allocation5 + $0x118] sm:$0xf] %vm281, %v597
        %638 = vst.msk [vmem:[#allocation5 + $0x120] sm:$0xf] %vm281, %v598
        %639 = vst.msk [vmem:[#allocation5 + $0x128] sm:$0xf] %vm281, %v599
        %640 = vst.msk [vmem:[#allocation5 + $0x130] sm:$0xf] %vm281, %v600
        %641 = vst.msk [vmem:[#allocation5 + $0x138] sm:$0xf] %vm281, %v601
        %v642 = vld [vmem:[#allocation2 + $0x1] sm:$0xff]
        %v643 = vld [vmem:[#allocation2 + $0x9] sm:$0xff]
        %v644 = vld [vmem:[#allocation2 + $0x19] sm:$0xff]
        %v645 = vld [vmem:[#allocation2 + $0x21] sm:$0xff]
        %v646 = vld [vmem:[#allocation2 + $0x31] sm:$0xff]
        %v647 = vld [vmem:[#allocation2 + $0x39] sm:$0xff]
        %v648 = vld [vmem:[#allocation2 + $0x49] sm:$0xff]
        %v649 = vld [vmem:[#allocation2 + $0x51] sm:$0xff]
        %v650 = vld [vmem:[#allocation2 + $0x61] sm:$0xff]
        %v651 = vld [vmem:[#allocation2 + $0x69] sm:$0xff]
        %v652 = vld [vmem:[#allocation2 + $0x79] sm:$0xff]
        %v653 = vld [vmem:[#allocation2 + $0x81] sm:$0xff]
        %v654 = vld [vmem:[#allocation2 + $0x91] sm:$0xff]
        %v655 = vld [vmem:[#allocation2 + $0x99] sm:$0xff]
        %v656 = vld [vmem:[#allocation2 + $0xa9] sm:$0xff]
        %v657 = vld [vmem:[#allocation2 + $0xb1] sm:$0xff]
        %v658 = vld [vmem:[#allocation2 + $0xc1] sm:$0xff]
        %v659 = vld [vmem:[#allocation2 + $0xc9] sm:$0xff]
        %v660 = vld [vmem:[#allocation2 + $0xd9] sm:$0xff]
        %v661 = vld [vmem:[#allocation2 + $0xe1] sm:$0xff]
        %v662 = vld [vmem:[#allocation2 + $0xf1] sm:$0xff]
        %v663 = vld [vmem:[#allocation2 + $0xf9] sm:$0xff]
        %v664 = vld [vmem:[#allocation2 + $0x109] sm:$0xff]
        %v665 = vld [vmem:[#allocation2 + $0x111] sm:$0xff]
        %v666 = vld [vmem:[#allocation2 + $0x121] sm:$0xff]
        %v667 = vld [vmem:[#allocation2 + $0x129] sm:$0xff]
        %v668 = vld [vmem:[#allocation2 + $0x139] sm:$0xff]
        %v669 = vld [vmem:[#allocation2 + $0x141] sm:$0xff]
        %v670 = vld [vmem:[#allocation2 + $0x151] sm:$0xff]
        %v671 = vld [vmem:[#allocation2 + $0x159] sm:$0xff]
        %v672 = vld [vmem:[#allocation2 + $0x169] sm:$0xff]
        %v673 = vld [vmem:[#allocation2 + $0x171] sm:$0xff]
        %v674 = vld [vmem:[#allocation2 + $0x181] sm:$0xff]
        %v675 = vld [vmem:[#allocation2 + $0x189] sm:$0xff]
        %v676 = vld [vmem:[#allocation2 + $0x199] sm:$0xff]
        %v677 = vld [vmem:[#allocation2 + $0x1a1] sm:$0xff]
        %v678 = vld [vmem:[#allocation2 + $0x1b1] sm:$0xff]
        %v679 = vld [vmem:[#allocation2 + $0x1b9] sm:$0xff]
        %v680 = vld [vmem:[#allocation2 + $0x1c9] sm:$0xff]
        %v681 = vld [vmem:[#allocation2 + $0x1d1] sm:$0xff]
        %v682 = vpack.c.bf16 %v642, %v642
        %v683 = vpack.c.bf16 %v643, %v643
        %v684 = vpack.c.bf16 %v644, %v644
        %v685 = vpack.c.bf16 %v645, %v645
        %v686 = vpack.c.bf16 %v646, %v646
        %v687 = vpack.c.bf16 %v647, %v647
        %v688 = vpack.c.bf16 %v648, %v648
        %v689 = vpack.c.bf16 %v649, %v649
        %v690 = vpack.c.bf16 %v650, %v650
        %v691 = vpack.c.bf16 %v651, %v651
        %v692 = vpack.c.bf16 %v652, %v652
        %v693 = vpack.c.bf16 %v653, %v653
        %v694 = vpack.c.bf16 %v654, %v654
        %v695 = vpack.c.bf16 %v655, %v655
        %v696 = vpack.c.bf16 %v656, %v656
        %v697 = vpack.c.bf16 %v657, %v657
        %v698 = vpack.c.bf16 %v658, %v658
        %v699 = vpack.c.bf16 %v659, %v659
        %v700 = vpack.c.bf16 %v660, %v660
        %v701 = vpack.c.bf16 %v661, %v661
        %v702 = vpack.c.bf16 %v662, %v662
        %v703 = vpack.c.bf16 %v663, %v663
        %v704 = vpack.c.bf16 %v664, %v664
        %v705 = vpack.c.bf16 %v665, %v665
        %v706 = vpack.c.bf16 %v666, %v666
        %v707 = vpack.c.bf16 %v667, %v667
        %v708 = vpack.c.bf16 %v668, %v668
        %v709 = vpack.c.bf16 %v669, %v669
        %v710 = vpack.c.bf16 %v670, %v670
        %v711 = vpack.c.bf16 %v671, %v671
        %v712 = vpack.c.bf16 %v672, %v672
        %v713 = vpack.c.bf16 %v673, %v673
        %v714 = vpack.c.bf16 %v674, %v674
        %v715 = vpack.c.bf16 %v675, %v675
        %v716 = vpack.c.bf16 %v676, %v676
        %v717 = vpack.c.bf16 %v677, %v677
        %v718 = vpack.c.bf16 %v678, %v678
        %v719 = vpack.c.bf16 %v679, %v679
        %v720 = vpack.c.bf16 %v680, %v680
        %v721 = vpack.c.bf16 %v681, %v681
        %762 = vrot.lane.b32.xlu0 %v682, 16
        %v763 = vpop.permute.xlu0 %762
        %764 = vrot.lane.b32.xlu0 %v683, 16
        %v765 = vpop.permute.xlu0 %764
        %766 = vrot.lane.b32.xlu0 %v684, 16
        %v767 = vpop.permute.xlu0 %766
        %768 = vrot.lane.b32.xlu0 %v685, 16
        %v769 = vpop.permute.xlu0 %768
        %770 = vrot.lane.b32.xlu0 %v686, 16
        %v771 = vpop.permute.xlu0 %770
        %772 = vrot.lane.b32.xlu0 %v687, 16
        %v773 = vpop.permute.xlu0 %772
        %774 = vrot.lane.b32.xlu0 %v688, 16
        %v775 = vpop.permute.xlu0 %774
        %776 = vrot.lane.b32.xlu0 %v689, 16
        %v777 = vpop.permute.xlu0 %776
        %778 = vrot.lane.b32.xlu0 %v690, 16
        %v779 = vpop.permute.xlu0 %778
        %780 = vrot.lane.b32.xlu0 %v691, 16
        %v781 = vpop.permute.xlu0 %780
        %782 = vrot.lane.b32.xlu0 %v692, 16
        %v783 = vpop.permute.xlu0 %782
        %784 = vrot.lane.b32.xlu0 %v693, 16
        %v785 = vpop.permute.xlu0 %784
        %786 = vrot.lane.b32.xlu0 %v694, 16
        %v787 = vpop.permute.xlu0 %786
        %788 = vrot.lane.b32.xlu0 %v695, 16
        %v789 = vpop.permute.xlu0 %788
        %790 = vrot.lane.b32.xlu0 %v696, 16
        %v791 = vpop.permute.xlu0 %790
        %792 = vrot.lane.b32.xlu0 %v697, 16
        %v793 = vpop.permute.xlu0 %792
        %794 = vrot.lane.b32.xlu0 %v698, 16
        %v795 = vpop.permute.xlu0 %794
        %796 = vrot.lane.b32.xlu0 %v699, 16
        %v797 = vpop.permute.xlu0 %796
        %798 = vrot.lane.b32.xlu0 %v700, 16
        %v799 = vpop.permute.xlu0 %798
        %800 = vrot.lane.b32.xlu0 %v701, 16
        %v801 = vpop.permute.xlu0 %800
        %802 = vrot.lane.b32.xlu0 %v702, 16
        %v803 = vpop.permute.xlu0 %802
        %804 = vrot.lane.b32.xlu0 %v703, 16
        %v805 = vpop.permute.xlu0 %804
        %806 = vrot.lane.b32.xlu0 %v704, 16
        %v807 = vpop.permute.xlu0 %806
        %808 = vrot.lane.b32.xlu0 %v705, 16
        %v809 = vpop.permute.xlu0 %808
        %810 = vrot.lane.b32.xlu0 %v706, 16
        %v811 = vpop.permute.xlu0 %810
        %812 = vrot.lane.b32.xlu0 %v707, 16
        %v813 = vpop.permute.xlu0 %812
        %814 = vrot.lane.b32.xlu0 %v708, 16
        %v815 = vpop.permute.xlu0 %814
        %816 = vrot.lane.b32.xlu0 %v709, 16
        %v817 = vpop.permute.xlu0 %816
        %818 = vrot.lane.b32.xlu0 %v710, 16
        %v819 = vpop.permute.xlu0 %818
        %820 = vrot.lane.b32.xlu0 %v711, 16
        %v821 = vpop.permute.xlu0 %820
        %822 = vrot.lane.b32.xlu0 %v712, 16
        %v823 = vpop.permute.xlu0 %822
        %824 = vrot.lane.b32.xlu0 %v713, 16
        %v825 = vpop.permute.xlu0 %824
        %826 = vrot.lane.b32.xlu0 %v714, 16
        %v827 = vpop.permute.xlu0 %826
        %828 = vrot.lane.b32.xlu0 %v715, 16
        %v829 = vpop.permute.xlu0 %828
        %830 = vrot.lane.b32.xlu0 %v716, 16
        %v831 = vpop.permute.xlu0 %830
        %832 = vrot.lane.b32.xlu0 %v717, 16
        %v833 = vpop.permute.xlu0 %832
        %834 = vrot.lane.b32.xlu0 %v718, 16
        %v835 = vpop.permute.xlu0 %834
        %836 = vrot.lane.b32.xlu0 %v719, 16
        %v837 = vpop.permute.xlu0 %836
        %838 = vrot.lane.b32.xlu0 %v720, 16
        %v839 = vpop.permute.xlu0 %838
        %840 = vrot.lane.b32.xlu0 %v721, 16
        %v841 = vpop.permute.xlu0 %840
        %vm882 = vcmask 257152
        %883 = vst.msk [vmem:[#allocation5] sm:$0xf] %vm882, %v763
        %884 = vst.msk [vmem:[#allocation5 + $0x8] sm:$0xf] %vm882, %v765
        %885 = vst.msk [vmem:[#allocation5 + $0x10] sm:$0xf] %vm882, %v767
        %886 = vst.msk [vmem:[#allocation5 + $0x18] sm:$0xf] %vm882, %v769
        %887 = vst.msk [vmem:[#allocation5 + $0x20] sm:$0xf] %vm882, %v771
        %888 = vst.msk [vmem:[#allocation5 + $0x28] sm:$0xf] %vm882, %v773
        %889 = vst.msk [vmem:[#allocation5 + $0x30] sm:$0xf] %vm882, %v775
        %890 = vst.msk [vmem:[#allocation5 + $0x38] sm:$0xf] %vm882, %v777
        %891 = vst.msk [vmem:[#allocation5 + $0x40] sm:$0xf] %vm882, %v779
        %892 = vst.msk [vmem:[#allocation5 + $0x48] sm:$0xf] %vm882, %v781
        %893 = vst.msk [vmem:[#allocation5 + $0x50] sm:$0xf] %vm882, %v783
        %894 = vst.msk [vmem:[#allocation5 + $0x58] sm:$0xf] %vm882, %v785
        %895 = vst.msk [vmem:[#allocation5 + $0x60] sm:$0xf] %vm882, %v787
        %896 = vst.msk [vmem:[#allocation5 + $0x68] sm:$0xf] %vm882, %v789
        %897 = vst.msk [vmem:[#allocation5 + $0x70] sm:$0xf] %vm882, %v791
        %898 = vst.msk [vmem:[#allocation5 + $0x78] sm:$0xf] %vm882, %v793
        %899 = vst.msk [vmem:[#allocation5 + $0x80] sm:$0xf] %vm882, %v795
        %900 = vst.msk [vmem:[#allocation5 + $0x88] sm:$0xf] %vm882, %v797
        %901 = vst.msk [vmem:[#allocation5 + $0x90] sm:$0xf] %vm882, %v799
        %902 = vst.msk [vmem:[#allocation5 + $0x98] sm:$0xf] %vm882, %v801
        %903 = vst.msk [vmem:[#allocation5 + $0xa0] sm:$0xf] %vm882, %v803
        %904 = vst.msk [vmem:[#allocation5 + $0xa8] sm:$0xf] %vm882, %v805
        %905 = vst.msk [vmem:[#allocation5 + $0xb0] sm:$0xf] %vm882, %v807
        %906 = vst.msk [vmem:[#allocation5 + $0xb8] sm:$0xf] %vm882, %v809
        %907 = vst.msk [vmem:[#allocation5 + $0xc0] sm:$0xf] %vm882, %v811
        %908 = vst.msk [vmem:[#allocation5 + $0xc8] sm:$0xf] %vm882, %v813
        %909 = vst.msk [vmem:[#allocation5 + $0xd0] sm:$0xf] %vm882, %v815
        %910 = vst.msk [vmem:[#allocation5 + $0xd8] sm:$0xf] %vm882, %v817
        %911 = vst.msk [vmem:[#allocation5 + $0xe0] sm:$0xf] %vm882, %v819
        %912 = vst.msk [vmem:[#allocation5 + $0xe8] sm:$0xf] %vm882, %v821
        %913 = vst.msk [vmem:[#allocation5 + $0xf0] sm:$0xf] %vm882, %v823
        %914 = vst.msk [vmem:[#allocation5 + $0xf8] sm:$0xf] %vm882, %v825
        %915 = vst.msk [vmem:[#allocation5 + $0x100] sm:$0xf] %vm882, %v827
        %916 = vst.msk [vmem:[#allocation5 + $0x108] sm:$0xf] %vm882, %v829
        %917 = vst.msk [vmem:[#allocation5 + $0x110] sm:$0xf] %vm882, %v831
        %918 = vst.msk [vmem:[#allocation5 + $0x118] sm:$0xf] %vm882, %v833
        %919 = vst.msk [vmem:[#allocation5 + $0x120] sm:$0xf] %vm882, %v835
        %920 = vst.msk [vmem:[#allocation5 + $0x128] sm:$0xf] %vm882, %v837
        %921 = vst.msk [vmem:[#allocation5 + $0x130] sm:$0xf] %vm882, %v839
        %922 = vst.msk [vmem:[#allocation5 + $0x138] sm:$0xf] %vm882, %v841
        %v923 = vld [vmem:[#allocation2 + $0x2] sm:$0xff]
        %v924 = vld [vmem:[#allocation2 + $0xa] sm:$0xff]
        %v925 = vld [vmem:[#allocation2 + $0x1a] sm:$0xff]
        %v926 = vld [vmem:[#allocation2 + $0x22] sm:$0xff]
        %v927 = vld [vmem:[#allocation2 + $0x32] sm:$0xff]
        %v928 = vld [vmem:[#allocation2 + $0x3a] sm:$0xff]
        %v929 = vld [vmem:[#allocation2 + $0x4a] sm:$0xff]
        %v930 = vld [vmem:[#allocation2 + $0x52] sm:$0xff]
        %v931 = vld [vmem:[#allocation2 + $0x62] sm:$0xff]
        %v932 = vld [vmem:[#allocation2 + $0x6a] sm:$0xff]
        %v933 = vld [vmem:[#allocation2 + $0x7a] sm:$0xff]
        %v934 = vld [vmem:[#allocation2 + $0x82] sm:$0xff]
        %v935 = vld [vmem:[#allocation2 + $0x92] sm:$0xff]
        %v936 = vld [vmem:[#allocation2 + $0x9a] sm:$0xff]
        %v937 = vld [vmem:[#allocation2 + $0xaa] sm:$0xff]
        %v938 = vld [vmem:[#allocation2 + $0xb2] sm:$0xff]
        %v939 = vld [vmem:[#allocation2 + $0xc2] sm:$0xff]
        %v940 = vld [vmem:[#allocation2 + $0xca] sm:$0xff]
        %v941 = vld [vmem:[#allocation2 + $0xda] sm:$0xff]
        %v942 = vld [vmem:[#allocation2 + $0xe2] sm:$0xff]
        %v943 = vld [vmem:[#allocation2 + $0xf2] sm:$0xff]
        %v944 = vld [vmem:[#allocation2 + $0xfa] sm:$0xff]
        %v945 = vld [vmem:[#allocation2 + $0x10a] sm:$0xff]
        %v946 = vld [vmem:[#allocation2 + $0x112] sm:$0xff]
        %v947 = vld [vmem:[#allocation2 + $0x122] sm:$0xff]
        %v948 = vld [vmem:[#allocation2 + $0x12a] sm:$0xff]
        %v949 = vld [vmem:[#allocation2 + $0x13a] sm:$0xff]
        %v950 = vld [vmem:[#allocation2 + $0x142] sm:$0xff]
        %v951 = vld [vmem:[#allocation2 + $0x152] sm:$0xff]
        %v952 = vld [vmem:[#allocation2 + $0x15a] sm:$0xff]
        %v953 = vld [vmem:[#allocation2 + $0x16a] sm:$0xff]
        %v954 = vld [vmem:[#allocation2 + $0x172] sm:$0xff]
        %v955 = vld [vmem:[#allocation2 + $0x182] sm:$0xff]
        %v956 = vld [vmem:[#allocation2 + $0x18a] sm:$0xff]
        %v957 = vld [vmem:[#allocation2 + $0x19a] sm:$0xff]
        %v958 = vld [vmem:[#allocation2 + $0x1a2] sm:$0xff]
        %v959 = vld [vmem:[#allocation2 + $0x1b2] sm:$0xff]
        %v960 = vld [vmem:[#allocation2 + $0x1ba] sm:$0xff]
        %v961 = vld [vmem:[#allocation2 + $0x1ca] sm:$0xff]
        %v962 = vld [vmem:[#allocation2 + $0x1d2] sm:$0xff]
        %v963 = vpack.c.bf16 %v923, %v923
        %v964 = vpack.c.bf16 %v924, %v924
        %v965 = vpack.c.bf16 %v925, %v925
        %v966 = vpack.c.bf16 %v926, %v926
        %v967 = vpack.c.bf16 %v927, %v927
        %v968 = vpack.c.bf16 %v928, %v928
        %v969 = vpack.c.bf16 %v929, %v929
        %v970 = vpack.c.bf16 %v930, %v930
        %v971 = vpack.c.bf16 %v931, %v931
        %v972 = vpack.c.bf16 %v932, %v932
        %v973 = vpack.c.bf16 %v933, %v933
        %v974 = vpack.c.bf16 %v934, %v934
        %v975 = vpack.c.bf16 %v935, %v935
        %v976 = vpack.c.bf16 %v936, %v936
        %v977 = vpack.c.bf16 %v937, %v937
        %v978 = vpack.c.bf16 %v938, %v938
        %v979 = vpack.c.bf16 %v939, %v939
        %v980 = vpack.c.bf16 %v940, %v940
        %v981 = vpack.c.bf16 %v941, %v941
        %v982 = vpack.c.bf16 %v942, %v942
        %v983 = vpack.c.bf16 %v943, %v943
        %v984 = vpack.c.bf16 %v944, %v944
        %v985 = vpack.c.bf16 %v945, %v945
        %v986 = vpack.c.bf16 %v946, %v946
        %v987 = vpack.c.bf16 %v947, %v947
        %v988 = vpack.c.bf16 %v948, %v948
        %v989 = vpack.c.bf16 %v949, %v949
        %v990 = vpack.c.bf16 %v950, %v950
        %v991 = vpack.c.bf16 %v951, %v951
        %v992 = vpack.c.bf16 %v952, %v952
        %v993 = vpack.c.bf16 %v953, %v953
        %v994 = vpack.c.bf16 %v954, %v954
        %v995 = vpack.c.bf16 %v955, %v955
        %v996 = vpack.c.bf16 %v956, %v956
        %v997 = vpack.c.bf16 %v957, %v957
        %v998 = vpack.c.bf16 %v958, %v958
        %v999 = vpack.c.bf16 %v959, %v959
        %v1000 = vpack.c.bf16 %v960, %v960
        %v1001 = vpack.c.bf16 %v961, %v961
        %v1002 = vpack.c.bf16 %v962, %v962
        %1043 = vrot.lane.b32.xlu0 %v963, 32
        %v1044 = vpop.permute.xlu0 %1043
        %1045 = vrot.lane.b32.xlu0 %v964, 32
        %v1046 = vpop.permute.xlu0 %1045
        %1047 = vrot.lane.b32.xlu0 %v965, 32
        %v1048 = vpop.permute.xlu0 %1047
        %1049 = vrot.lane.b32.xlu0 %v966, 32
        %v1050 = vpop.permute.xlu0 %1049
        %1051 = vrot.lane.b32.xlu0 %v967, 32
        %v1052 = vpop.permute.xlu0 %1051
        %1053 = vrot.lane.b32.xlu0 %v968, 32
        %v1054 = vpop.permute.xlu0 %1053
        %1055 = vrot.lane.b32.xlu0 %v969, 32
        %v1056 = vpop.permute.xlu0 %1055
        %1057 = vrot.lane.b32.xlu0 %v970, 32
        %v1058 = vpop.permute.xlu0 %1057
        %1059 = vrot.lane.b32.xlu0 %v971, 32
        %v1060 = vpop.permute.xlu0 %1059
        %1061 = vrot.lane.b32.xlu0 %v972, 32
        %v1062 = vpop.permute.xlu0 %1061
        %1063 = vrot.lane.b32.xlu0 %v973, 32
        %v1064 = vpop.permute.xlu0 %1063
        %1065 = vrot.lane.b32.xlu0 %v974, 32
        %v1066 = vpop.permute.xlu0 %1065
        %1067 = vrot.lane.b32.xlu0 %v975, 32
        %v1068 = vpop.permute.xlu0 %1067
        %1069 = vrot.lane.b32.xlu0 %v976, 32
        %v1070 = vpop.permute.xlu0 %1069
        %1071 = vrot.lane.b32.xlu0 %v977, 32
        %v1072 = vpop.permute.xlu0 %1071
        %1073 = vrot.lane.b32.xlu0 %v978, 32
        %v1074 = vpop.permute.xlu0 %1073
        %1075 = vrot.lane.b32.xlu0 %v979, 32
        %v1076 = vpop.permute.xlu0 %1075
        %1077 = vrot.lane.b32.xlu0 %v980, 32
        %v1078 = vpop.permute.xlu0 %1077
        %1079 = vrot.lane.b32.xlu0 %v981, 32
        %v1080 = vpop.permute.xlu0 %1079
        %1081 = vrot.lane.b32.xlu0 %v982, 32
        %v1082 = vpop.permute.xlu0 %1081
        %1083 = vrot.lane.b32.xlu0 %v983, 32
        %v1084 = vpop.permute.xlu0 %1083
        %1085 = vrot.lane.b32.xlu0 %v984, 32
        %v1086 = vpop.permute.xlu0 %1085
        %1087 = vrot.lane.b32.xlu0 %v985, 32
        %v1088 = vpop.permute.xlu0 %1087
        %1089 = vrot.lane.b32.xlu0 %v986, 32
        %v1090 = vpop.permute.xlu0 %1089
        %1091 = vrot.lane.b32.xlu0 %v987, 32
        %v1092 = vpop.permute.xlu0 %1091
        %1093 = vrot.lane.b32.xlu0 %v988, 32
        %v1094 = vpop.permute.xlu0 %1093
        %1095 = vrot.lane.b32.xlu0 %v989, 32
        %v1096 = vpop.permute.xlu0 %1095
        %1097 = vrot.lane.b32.xlu0 %v990, 32
        %v1098 = vpop.permute.xlu0 %1097
        %1099 = vrot.lane.b32.xlu0 %v991, 32
        %v1100 = vpop.permute.xlu0 %1099
        %1101 = vrot.lane.b32.xlu0 %v992, 32
        %v1102 = vpop.permute.xlu0 %1101
        %1103 = vrot.lane.b32.xlu0 %v993, 32
        %v1104 = vpop.permute.xlu0 %1103
        %1105 = vrot.lane.b32.xlu0 %v994, 32
        %v1106 = vpop.permute.xlu0 %1105
        %1107 = vrot.lane.b32.xlu0 %v995, 32
        %v1108 = vpop.permute.xlu0 %1107
        %1109 = vrot.lane.b32.xlu0 %v996, 32
        %v1110 = vpop.permute.xlu0 %1109
        %1111 = vrot.lane.b32.xlu0 %v997, 32
        %v1112 = vpop.permute.xlu0 %1111
        %1113 = vrot.lane.b32.xlu0 %v998, 32
        %v1114 = vpop.permute.xlu0 %1113
        %1115 = vrot.lane.b32.xlu0 %v999, 32
        %v1116 = vpop.permute.xlu0 %1115
        %1117 = vrot.lane.b32.xlu0 %v1000, 32
        %v1118 = vpop.permute.xlu0 %1117
        %1119 = vrot.lane.b32.xlu0 %v1001, 32
        %v1120 = vpop.permute.xlu0 %1119
        %1121 = vrot.lane.b32.xlu0 %v1002, 32
        %v1122 = vpop.permute.xlu0 %1121
        %vm1163 = vcmask 388352
        %1164 = vst.msk [vmem:[#allocation5] sm:$0xf] %vm1163, %v1044
        %1165 = vst.msk [vmem:[#allocation5 + $0x8] sm:$0xf] %vm1163, %v1046
        %1166 = vst.msk [vmem:[#allocation5 + $0x10] sm:$0xf] %vm1163, %v1048
        %1167 = vst.msk [vmem:[#allocation5 + $0x18] sm:$0xf] %vm1163, %v1050
        %1168 = vst.msk [vmem:[#allocation5 + $0x20] sm:$0xf] %vm1163, %v1052
        %1169 = vst.msk [vmem:[#allocation5 + $0x28] sm:$0xf] %vm1163, %v1054
        %1170 = vst.msk [vmem:[#allocation5 + $0x30] sm:$0xf] %vm1163, %v1056
        %1171 = vst.msk [vmem:[#allocation5 + $0x38] sm:$0xf] %vm1163, %v1058
        %1172 = vst.msk [vmem:[#allocation5 + $0x40] sm:$0xf] %vm1163, %v1060
        %1173 = vst.msk [vmem:[#allocation5 + $0x48] sm:$0xf] %vm1163, %v1062
        %1174 = vst.msk [vmem:[#allocation5 + $0x50] sm:$0xf] %vm1163, %v1064
        %1175 = vst.msk [vmem:[#allocation5 + $0x58] sm:$0xf] %vm1163, %v1066
        %1176 = vst.msk [vmem:[#allocation5 + $0x60] sm:$0xf] %vm1163, %v1068
        %1177 = vst.msk [vmem:[#allocation5 + $0x68] sm:$0xf] %vm1163, %v1070
        %1178 = vst.msk [vmem:[#allocation5 + $0x70] sm:$0xf] %vm1163, %v1072
        %1179 = vst.msk [vmem:[#allocation5 + $0x78] sm:$0xf] %vm1163, %v1074
        %1180 = vst.msk [vmem:[#allocation5 + $0x80] sm:$0xf] %vm1163, %v1076
        %1181 = vst.msk [vmem:[#allocation5 + $0x88] sm:$0xf] %vm1163, %v1078
        %1182 = vst.msk [vmem:[#allocation5 + $0x90] sm:$0xf] %vm1163, %v1080
        %1183 = vst.msk [vmem:[#allocation5 + $0x98] sm:$0xf] %vm1163, %v1082
        %1184 = vst.msk [vmem:[#allocation5 + $0xa0] sm:$0xf] %vm1163, %v1084
        %1185 = vst.msk [vmem:[#allocation5 + $0xa8] sm:$0xf] %vm1163, %v1086
        %1186 = vst.msk [vmem:[#allocation5 + $0xb0] sm:$0xf] %vm1163, %v1088
        %1187 = vst.msk [vmem:[#allocation5 + $0xb8] sm:$0xf] %vm1163, %v1090
        %1188 = vst.msk [vmem:[#allocation5 + $0xc0] sm:$0xf] %vm1163, %v1092
        %1189 = vst.msk [vmem:[#allocation5 + $0xc8] sm:$0xf] %vm1163, %v1094
        %1190 = vst.msk [vmem:[#allocation5 + $0xd0] sm:$0xf] %vm1163, %v1096
        %1191 = vst.msk [vmem:[#allocation5 + $0xd8] sm:$0xf] %vm1163, %v1098
        %1192 = vst.msk [vmem:[#allocation5 + $0xe0] sm:$0xf] %vm1163, %v1100
        %1193 = vst.msk [vmem:[#allocation5 + $0xe8] sm:$0xf] %vm1163, %v1102
        %1194 = vst.msk [vmem:[#allocation5 + $0xf0] sm:$0xf] %vm1163, %v1104
        %1195 = vst.msk [vmem:[#allocation5 + $0xf8] sm:$0xf] %vm1163, %v1106
        %1196 = vst.msk [vmem:[#allocation5 + $0x100] sm:$0xf] %vm1163, %v1108
        %1197 = vst.msk [vmem:[#allocation5 + $0x108] sm:$0xf] %vm1163, %v1110
        %1198 = vst.msk [vmem:[#allocation5 + $0x110] sm:$0xf] %vm1163, %v1112
        %1199 = vst.msk [vmem:[#allocation5 + $0x118] sm:$0xf] %vm1163, %v1114
        %1200 = vst.msk [vmem:[#allocation5 + $0x120] sm:$0xf] %vm1163, %v1116
        %1201 = vst.msk [vmem:[#allocation5 + $0x128] sm:$0xf] %vm1163, %v1118
        %1202 = vst.msk [vmem:[#allocation5 + $0x130] sm:$0xf] %vm1163, %v1120
        %1203 = vst.msk [vmem:[#allocation5 + $0x138] sm:$0xf] %vm1163, %v1122
        %v1204 = vld [vmem:[#allocation2 + $0x3] sm:$0xff]
        %v1205 = vld [vmem:[#allocation2 + $0xb] sm:$0xff]
        %v1206 = vld [vmem:[#allocation2 + $0x1b] sm:$0xff]
        %v1207 = vld [vmem:[#allocation2 + $0x23] sm:$0xff]
        %v1208 = vld [vmem:[#allocation2 + $0x33] sm:$0xff]
        %v1209 = vld [vmem:[#allocation2 + $0x3b] sm:$0xff]
        %v1210 = vld [vmem:[#allocation2 + $0x4b] sm:$0xff]
        %v1211 = vld [vmem:[#allocation2 + $0x53] sm:$0xff]
        %v1212 = vld [vmem:[#allocation2 + $0x63] sm:$0xff]
        %v1213 = vld [vmem:[#allocation2 + $0x6b] sm:$0xff]
        %v1214 = vld [vmem:[#allocation2 + $0x7b] sm:$0xff]
        %v1215 = vld [vmem:[#allocation2 + $0x83] sm:$0xff]
        %v1216 = vld [vmem:[#allocation2 + $0x93] sm:$0xff]
        %v1217 = vld [vmem:[#allocation2 + $0x9b] sm:$0xff]
        %v1218 = vld [vmem:[#allocation2 + $0xab] sm:$0xff]
        %v1219 = vld [vmem:[#allocation2 + $0xb3] sm:$0xff]
        %v1220 = vld [vmem:[#allocation2 + $0xc3] sm:$0xff]
        %v1221 = vld [vmem:[#allocation2 + $0xcb] sm:$0xff]
        %v1222 = vld [vmem:[#allocation2 + $0xdb] sm:$0xff]
        %v1223 = vld [vmem:[#allocation2 + $0xe3] sm:$0xff]
        %v1224 = vld [vmem:[#allocation2 + $0xf3] sm:$0xff]
        %v1225 = vld [vmem:[#allocation2 + $0xfb] sm:$0xff]
        %v1226 = vld [vmem:[#allocation2 + $0x10b] sm:$0xff]
        %v1227 = vld [vmem:[#allocation2 + $0x113] sm:$0xff]
        %v1228 = vld [vmem:[#allocation2 + $0x123] sm:$0xff]
        %v1229 = vld [vmem:[#allocation2 + $0x12b] sm:$0xff]
        %v1230 = vld [vmem:[#allocation2 + $0x13b] sm:$0xff]
        %v1231 = vld [vmem:[#allocation2 + $0x143] sm:$0xff]
        %v1232 = vld [vmem:[#allocation2 + $0x153] sm:$0xff]
        %v1233 = vld [vmem:[#allocation2 + $0x15b] sm:$0xff]
        %v1234 = vld [vmem:[#allocation2 + $0x16b] sm:$0xff]
        %v1235 = vld [vmem:[#allocation2 + $0x173] sm:$0xff]
        %v1236 = vld [vmem:[#allocation2 + $0x183] sm:$0xff]
        %v1237 = vld [vmem:[#allocation2 + $0x18b] sm:$0xff]
        %v1238 = vld [vmem:[#allocation2 + $0x19b] sm:$0xff]
        %v1239 = vld [vmem:[#allocation2 + $0x1a3] sm:$0xff]
        %v1240 = vld [vmem:[#allocation2 + $0x1b3] sm:$0xff]
        %v1241 = vld [vmem:[#allocation2 + $0x1bb] sm:$0xff]
        %v1242 = vld [vmem:[#allocation2 + $0x1cb] sm:$0xff]
        %v1243 = vld [vmem:[#allocation2 + $0x1d3] sm:$0xff]
        %v1244 = vpack.c.bf16 %v1204, %v1204
        %v1245 = vpack.c.bf16 %v1205, %v1205
        %v1246 = vpack.c.bf16 %v1206, %v1206
        %v1247 = vpack.c.bf16 %v1207, %v1207
        %v1248 = vpack.c.bf16 %v1208, %v1208
        %v1249 = vpack.c.bf16 %v1209, %v1209
        %v1250 = vpack.c.bf16 %v1210, %v1210
        %v1251 = vpack.c.bf16 %v1211, %v1211
        %v1252 = vpack.c.bf16 %v1212, %v1212
        %v1253 = vpack.c.bf16 %v1213, %v1213
        %v1254 = vpack.c.bf16 %v1214, %v1214
        %v1255 = vpack.c.bf16 %v1215, %v1215
        %v1256 = vpack.c.bf16 %v1216, %v1216
        %v1257 = vpack.c.bf16 %v1217, %v1217
        %v1258 = vpack.c.bf16 %v1218, %v1218
        %v1259 = vpack.c.bf16 %v1219, %v1219
        %v1260 = vpack.c.bf16 %v1220, %v1220
        %v1261 = vpack.c.bf16 %v1221, %v1221
        %v1262 = vpack.c.bf16 %v1222, %v1222
        %v1263 = vpack.c.bf16 %v1223, %v1223
        %v1264 = vpack.c.bf16 %v1224, %v1224
        %v1265 = vpack.c.bf16 %v1225, %v1225
        %v1266 = vpack.c.bf16 %v1226, %v1226
        %v1267 = vpack.c.bf16 %v1227, %v1227
        %v1268 = vpack.c.bf16 %v1228, %v1228
        %v1269 = vpack.c.bf16 %v1229, %v1229
        %v1270 = vpack.c.bf16 %v1230, %v1230
        %v1271 = vpack.c.bf16 %v1231, %v1231
        %v1272 = vpack.c.bf16 %v1232, %v1232
        %v1273 = vpack.c.bf16 %v1233, %v1233
        %v1274 = vpack.c.bf16 %v1234, %v1234
        %v1275 = vpack.c.bf16 %v1235, %v1235
        %v1276 = vpack.c.bf16 %v1236, %v1236
        %v1277 = vpack.c.bf16 %v1237, %v1237
        %v1278 = vpack.c.bf16 %v1238, %v1238
        %v1279 = vpack.c.bf16 %v1239, %v1239
        %v1280 = vpack.c.bf16 %v1240, %v1240
        %v1281 = vpack.c.bf16 %v1241, %v1241
        %v1282 = vpack.c.bf16 %v1242, %v1242
        %v1283 = vpack.c.bf16 %v1243, %v1243
        %1324 = vrot.lane.b32.xlu0 %v1244, 48
        %v1325 = vpop.permute.xlu0 %1324
        %1326 = vrot.lane.b32.xlu0 %v1245, 48
        %v1327 = vpop.permute.xlu0 %1326
        %1328 = vrot.lane.b32.xlu0 %v1246, 48
        %v1329 = vpop.permute.xlu0 %1328
        %1330 = vrot.lane.b32.xlu0 %v1247, 48
        %v1331 = vpop.permute.xlu0 %1330
        %1332 = vrot.lane.b32.xlu0 %v1248, 48
        %v1333 = vpop.permute.xlu0 %1332
        %1334 = vrot.lane.b32.xlu0 %v1249, 48
        %v1335 = vpop.permute.xlu0 %1334
        %1336 = vrot.lane.b32.xlu0 %v1250, 48
        %v1337 = vpop.permute.xlu0 %1336
        %1338 = vrot.lane.b32.xlu0 %v1251, 48
        %v1339 = vpop.permute.xlu0 %1338
        %1340 = vrot.lane.b32.xlu0 %v1252, 48
        %v1341 = vpop.permute.xlu0 %1340
        %1342 = vrot.lane.b32.xlu0 %v1253, 48
        %v1343 = vpop.permute.xlu0 %1342
        %1344 = vrot.lane.b32.xlu0 %v1254, 48
        %v1345 = vpop.permute.xlu0 %1344
        %1346 = vrot.lane.b32.xlu0 %v1255, 48
        %v1347 = vpop.permute.xlu0 %1346
        %1348 = vrot.lane.b32.xlu0 %v1256, 48
        %v1349 = vpop.permute.xlu0 %1348
        %1350 = vrot.lane.b32.xlu0 %v1257, 48
        %v1351 = vpop.permute.xlu0 %1350
        %1352 = vrot.lane.b32.xlu0 %v1258, 48
        %v1353 = vpop.permute.xlu0 %1352
        %1354 = vrot.lane.b32.xlu0 %v1259, 48
        %v1355 = vpop.permute.xlu0 %1354
        %1356 = vrot.lane.b32.xlu0 %v1260, 48
        %v1357 = vpop.permute.xlu0 %1356
        %1358 = vrot.lane.b32.xlu0 %v1261, 48
        %v1359 = vpop.permute.xlu0 %1358
        %1360 = vrot.lane.b32.xlu0 %v1262, 48
        %v1361 = vpop.permute.xlu0 %1360
        %1362 = vrot.lane.b32.xlu0 %v1263, 48
        %v1363 = vpop.permute.xlu0 %1362
        %1364 = vrot.lane.b32.xlu0 %v1264, 48
        %v1365 = vpop.permute.xlu0 %1364
        %1366 = vrot.lane.b32.xlu0 %v1265, 48
        %v1367 = vpop.permute.xlu0 %1366
        %1368 = vrot.lane.b32.xlu0 %v1266, 48
        %v1369 = vpop.permute.xlu0 %1368
        %1370 = vrot.lane.b32.xlu0 %v1267, 48
        %v1371 = vpop.permute.xlu0 %1370
        %1372 = vrot.lane.b32.xlu0 %v1268, 48
        %v1373 = vpop.permute.xlu0 %1372
        %1374 = vrot.lane.b32.xlu0 %v1269, 48
        %v1375 = vpop.permute.xlu0 %1374
        %1376 = vrot.lane.b32.xlu0 %v1270, 48
        %v1377 = vpop.permute.xlu0 %1376
        %1378 = vrot.lane.b32.xlu0 %v1271, 48
        %v1379 = vpop.permute.xlu0 %1378
        %1380 = vrot.lane.b32.xlu0 %v1272, 48
        %v1381 = vpop.permute.xlu0 %1380
        %1382 = vrot.lane.b32.xlu0 %v1273, 48
        %v1383 = vpop.permute.xlu0 %1382
        %1384 = vrot.lane.b32.xlu0 %v1274, 48
        %v1385 = vpop.permute.xlu0 %1384
        %1386 = vrot.lane.b32.xlu0 %v1275, 48
        %v1387 = vpop.permute.xlu0 %1386
        %1388 = vrot.lane.b32.xlu0 %v1276, 48
        %v1389 = vpop.permute.xlu0 %1388
        %1390 = vrot.lane.b32.xlu0 %v1277, 48
        %v1391 = vpop.permute.xlu0 %1390
        %1392 = vrot.lane.b32.xlu0 %v1278, 48
        %v1393 = vpop.permute.xlu0 %1392
        %1394 = vrot.lane.b32.xlu0 %v1279, 48
        %v1395 = vpop.permute.xlu0 %1394
        %1396 = vrot.lane.b32.xlu0 %v1280, 48
        %v1397 = vpop.permute.xlu0 %1396
        %1398 = vrot.lane.b32.xlu0 %v1281, 48
        %v1399 = vpop.permute.xlu0 %1398
        %1400 = vrot.lane.b32.xlu0 %v1282, 48
        %v1401 = vpop.permute.xlu0 %1400
        %1402 = vrot.lane.b32.xlu0 %v1283, 48
        %v1403 = vpop.permute.xlu0 %1402
        %vm1444 = vcmask 519552
        %1445 = vst.msk [vmem:[#allocation5] sm:$0xf] %vm1444, %v1325
        %1446 = vst.msk [vmem:[#allocation5 + $0x8] sm:$0xf] %vm1444, %v1327
        %1447 = vst.msk [vmem:[#allocation5 + $0x10] sm:$0xf] %vm1444, %v1329
        %1448 = vst.msk [vmem:[#allocation5 + $0x18] sm:$0xf] %vm1444, %v1331
        %1449 = vst.msk [vmem:[#allocation5 + $0x20] sm:$0xf] %vm1444, %v1333
        %1450 = vst.msk [vmem:[#allocation5 + $0x28] sm:$0xf] %vm1444, %v1335
        %1451 = vst.msk [vmem:[#allocation5 + $0x30] sm:$0xf] %vm1444, %v1337
        %1452 = vst.msk [vmem:[#allocation5 + $0x38] sm:$0xf] %vm1444, %v1339
        %1453 = vst.msk [vmem:[#allocation5 + $0x40] sm:$0xf] %vm1444, %v1341
        %1454 = vst.msk [vmem:[#allocation5 + $0x48] sm:$0xf] %vm1444, %v1343
        %1455 = vst.msk [vmem:[#allocation5 + $0x50] sm:$0xf] %vm1444, %v1345
        %1456 = vst.msk [vmem:[#allocation5 + $0x58] sm:$0xf] %vm1444, %v1347
        %1457 = vst.msk [vmem:[#allocation5 + $0x60] sm:$0xf] %vm1444, %v1349
        %1458 = vst.msk [vmem:[#allocation5 + $0x68] sm:$0xf] %vm1444, %v1351
        %1459 = vst.msk [vmem:[#allocation5 + $0x70] sm:$0xf] %vm1444, %v1353
        %1460 = vst.msk [vmem:[#allocation5 + $0x78] sm:$0xf] %vm1444, %v1355
        %1461 = vst.msk [vmem:[#allocation5 + $0x80] sm:$0xf] %vm1444, %v1357
        %1462 = vst.msk [vmem:[#allocation5 + $0x88] sm:$0xf] %vm1444, %v1359
        %1463 = vst.msk [vmem:[#allocation5 + $0x90] sm:$0xf] %vm1444, %v1361
        %1464 = vst.msk [vmem:[#allocation5 + $0x98] sm:$0xf] %vm1444, %v1363
        %1465 = vst.msk [vmem:[#allocation5 + $0xa0] sm:$0xf] %vm1444, %v1365
        %1466 = vst.msk [vmem:[#allocation5 + $0xa8] sm:$0xf] %vm1444, %v1367
        %1467 = vst.msk [vmem:[#allocation5 + $0xb0] sm:$0xf] %vm1444, %v1369
        %1468 = vst.msk [vmem:[#allocation5 + $0xb8] sm:$0xf] %vm1444, %v1371
        %1469 = vst.msk [vmem:[#allocation5 + $0xc0] sm:$0xf] %vm1444, %v1373
        %1470 = vst.msk [vmem:[#allocation5 + $0xc8] sm:$0xf] %vm1444, %v1375
        %1471 = vst.msk [vmem:[#allocation5 + $0xd0] sm:$0xf] %vm1444, %v1377
        %1472 = vst.msk [vmem:[#allocation5 + $0xd8] sm:$0xf] %vm1444, %v1379
        %1473 = vst.msk [vmem:[#allocation5 + $0xe0] sm:$0xf] %vm1444, %v1381
        %1474 = vst.msk [vmem:[#allocation5 + $0xe8] sm:$0xf] %vm1444, %v1383
        %1475 = vst.msk [vmem:[#allocation5 + $0xf0] sm:$0xf] %vm1444, %v1385
        %1476 = vst.msk [vmem:[#allocation5 + $0xf8] sm:$0xf] %vm1444, %v1387
        %1477 = vst.msk [vmem:[#allocation5 + $0x100] sm:$0xf] %vm1444, %v1389
        %1478 = vst.msk [vmem:[#allocation5 + $0x108] sm:$0xf] %vm1444, %v1391
        %1479 = vst.msk [vmem:[#allocation5 + $0x110] sm:$0xf] %vm1444, %v1393
        %1480 = vst.msk [vmem:[#allocation5 + $0x118] sm:$0xf] %vm1444, %v1395
        %1481 = vst.msk [vmem:[#allocation5 + $0x120] sm:$0xf] %vm1444, %v1397
        %1482 = vst.msk [vmem:[#allocation5 + $0x128] sm:$0xf] %vm1444, %v1399
        %1483 = vst.msk [vmem:[#allocation5 + $0x130] sm:$0xf] %vm1444, %v1401
        %1484 = vst.msk [vmem:[#allocation5 + $0x138] sm:$0xf] %vm1444, %v1403
        %v1485 = vld [vmem:[#allocation2 + $0x4] sm:$0xff]
        %v1486 = vld [vmem:[#allocation2 + $0xc] sm:$0xff]
        %v1487 = vld [vmem:[#allocation2 + $0x1c] sm:$0xff]
        %v1488 = vld [vmem:[#allocation2 + $0x24] sm:$0xff]
        %v1489 = vld [vmem:[#allocation2 + $0x34] sm:$0xff]
        %v1490 = vld [vmem:[#allocation2 + $0x3c] sm:$0xff]
        %v1491 = vld [vmem:[#allocation2 + $0x4c] sm:$0xff]
        %v1492 = vld [vmem:[#allocation2 + $0x54] sm:$0xff]
        %v1493 = vld [vmem:[#allocation2 + $0x64] sm:$0xff]
        %v1494 = vld [vmem:[#allocation2 + $0x6c] sm:$0xff]
        %v1495 = vld [vmem:[#allocation2 + $0x7c] sm:$0xff]
        %v1496 = vld [vmem:[#allocation2 + $0x84] sm:$0xff]
        %v1497 = vld [vmem:[#allocation2 + $0x94] sm:$0xff]
        %v1498 = vld [vmem:[#allocation2 + $0x9c] sm:$0xff]
        %v1499 = vld [vmem:[#allocation2 + $0xac] sm:$0xff]
        %v1500 = vld [vmem:[#allocation2 + $0xb4] sm:$0xff]
        %v1501 = vld [vmem:[#allocation2 + $0xc4] sm:$0xff]
        %v1502 = vld [vmem:[#allocation2 + $0xcc] sm:$0xff]
        %v1503 = vld [vmem:[#allocation2 + $0xdc] sm:$0xff]
        %v1504 = vld [vmem:[#allocation2 + $0xe4] sm:$0xff]
        %v1505 = vld [vmem:[#allocation2 + $0xf4] sm:$0xff]
        %v1506 = vld [vmem:[#allocation2 + $0xfc] sm:$0xff]
        %v1507 = vld [vmem:[#allocation2 + $0x10c] sm:$0xff]
        %v1508 = vld [vmem:[#allocation2 + $0x114] sm:$0xff]
        %v1509 = vld [vmem:[#allocation2 + $0x124] sm:$0xff]
        %v1510 = vld [vmem:[#allocation2 + $0x12c] sm:$0xff]
        %v1511 = vld [vmem:[#allocation2 + $0x13c] sm:$0xff]
        %v1512 = vld [vmem:[#allocation2 + $0x144] sm:$0xff]
        %v1513 = vld [vmem:[#allocation2 + $0x154] sm:$0xff]
        %v1514 = vld [vmem:[#allocation2 + $0x15c] sm:$0xff]
        %v1515 = vld [vmem:[#allocation2 + $0x16c] sm:$0xff]
        %v1516 = vld [vmem:[#allocation2 + $0x174] sm:$0xff]
        %v1517 = vld [vmem:[#allocation2 + $0x184] sm:$0xff]
        %v1518 = vld [vmem:[#allocation2 + $0x18c] sm:$0xff]
        %v1519 = vld [vmem:[#allocation2 + $0x19c] sm:$0xff]
        %v1520 = vld [vmem:[#allocation2 + $0x1a4] sm:$0xff]
        %v1521 = vld [vmem:[#allocation2 + $0x1b4] sm:$0xff]
        %v1522 = vld [vmem:[#allocation2 + $0x1bc] sm:$0xff]
        %v1523 = vld [vmem:[#allocation2 + $0x1cc] sm:$0xff]
        %v1524 = vld [vmem:[#allocation2 + $0x1d4] sm:$0xff]
        %v1525 = vpack.c.bf16 %v1485, %v1485
        %v1526 = vpack.c.bf16 %v1486, %v1486
        %v1527 = vpack.c.bf16 %v1487, %v1487
        %v1528 = vpack.c.bf16 %v1488, %v1488
        %v1529 = vpack.c.bf16 %v1489, %v1489
        %v1530 = vpack.c.bf16 %v1490, %v1490
        %v1531 = vpack.c.bf16 %v1491, %v1491
        %v1532 = vpack.c.bf16 %v1492, %v1492
        %v1533 = vpack.c.bf16 %v1493, %v1493
        %v1534 = vpack.c.bf16 %v1494, %v1494
        %v1535 = vpack.c.bf16 %v1495, %v1495
        %v1536 = vpack.c.bf16 %v1496, %v1496
        %v1537 = vpack.c.bf16 %v1497, %v1497
        %v1538 = vpack.c.bf16 %v1498, %v1498
        %v1539 = vpack.c.bf16 %v1499, %v1499
        %v1540 = vpack.c.bf16 %v1500, %v1500
        %v1541 = vpack.c.bf16 %v1501, %v1501
        %v1542 = vpack.c.bf16 %v1502, %v1502
        %v1543 = vpack.c.bf16 %v1503, %v1503
        %v1544 = vpack.c.bf16 %v1504, %v1504
        %v1545 = vpack.c.bf16 %v1505, %v1505
        %v1546 = vpack.c.bf16 %v1506, %v1506
        %v1547 = vpack.c.bf16 %v1507, %v1507
        %v1548 = vpack.c.bf16 %v1508, %v1508
        %v1549 = vpack.c.bf16 %v1509, %v1509
        %v1550 = vpack.c.bf16 %v1510, %v1510
        %v1551 = vpack.c.bf16 %v1511, %v1511
        %v1552 = vpack.c.bf16 %v1512, %v1512
        %v1553 = vpack.c.bf16 %v1513, %v1513
        %v1554 = vpack.c.bf16 %v1514, %v1514
        %v1555 = vpack.c.bf16 %v1515, %v1515
        %v1556 = vpack.c.bf16 %v1516, %v1516
        %v1557 = vpack.c.bf16 %v1517, %v1517
        %v1558 = vpack.c.bf16 %v1518, %v1518
        %v1559 = vpack.c.bf16 %v1519, %v1519
        %v1560 = vpack.c.bf16 %v1520, %v1520
        %v1561 = vpack.c.bf16 %v1521, %v1521
        %v1562 = vpack.c.bf16 %v1522, %v1522
        %v1563 = vpack.c.bf16 %v1523, %v1523
        %v1564 = vpack.c.bf16 %v1524, %v1524
        %1605 = vrot.lane.b32.xlu0 %v1525, 64
        %v1606 = vpop.permute.xlu0 %1605
        %1607 = vrot.lane.b32.xlu0 %v1526, 64
        %v1608 = vpop.permute.xlu0 %1607
        %1609 = vrot.lane.b32.xlu0 %v1527, 64
        %v1610 = vpop.permute.xlu0 %1609
        %1611 = vrot.lane.b32.xlu0 %v1528, 64
        %v1612 = vpop.permute.xlu0 %1611
        %1613 = vrot.lane.b32.xlu0 %v1529, 64
        %v1614 = vpop.permute.xlu0 %1613
        %1615 = vrot.lane.b32.xlu0 %v1530, 64
        %v1616 = vpop.permute.xlu0 %1615
        %1617 = vrot.lane.b32.xlu0 %v1531, 64
        %v1618 = vpop.permute.xlu0 %1617
        %1619 = vrot.lane.b32.xlu0 %v1532, 64
        %v1620 = vpop.permute.xlu0 %1619
        %1621 = vrot.lane.b32.xlu0 %v1533, 64
        %v1622 = vpop.permute.xlu0 %1621
        %1623 = vrot.lane.b32.xlu0 %v1534, 64
        %v1624 = vpop.permute.xlu0 %1623
        %1625 = vrot.lane.b32.xlu0 %v1535, 64
        %v1626 = vpop.permute.xlu0 %1625
        %1627 = vrot.lane.b32.xlu0 %v1536, 64
        %v1628 = vpop.permute.xlu0 %1627
        %1629 = vrot.lane.b32.xlu0 %v1537, 64
        %v1630 = vpop.permute.xlu0 %1629
        %1631 = vrot.lane.b32.xlu0 %v1538, 64
        %v1632 = vpop.permute.xlu0 %1631
        %1633 = vrot.lane.b32.xlu0 %v1539, 64
        %v1634 = vpop.permute.xlu0 %1633
        %1635 = vrot.lane.b32.xlu0 %v1540, 64
        %v1636 = vpop.permute.xlu0 %1635
        %1637 = vrot.lane.b32.xlu0 %v1541, 64
        %v1638 = vpop.permute.xlu0 %1637
        %1639 = vrot.lane.b32.xlu0 %v1542, 64
        %v1640 = vpop.permute.xlu0 %1639
        %1641 = vrot.lane.b32.xlu0 %v1543, 64
        %v1642 = vpop.permute.xlu0 %1641
        %1643 = vrot.lane.b32.xlu0 %v1544, 64
        %v1644 = vpop.permute.xlu0 %1643
        %1645 = vrot.lane.b32.xlu0 %v1545, 64
        %v1646 = vpop.permute.xlu0 %1645
        %1647 = vrot.lane.b32.xlu0 %v1546, 64
        %v1648 = vpop.permute.xlu0 %1647
        %1649 = vrot.lane.b32.xlu0 %v1547, 64
        %v1650 = vpop.permute.xlu0 %1649
        %1651 = vrot.lane.b32.xlu0 %v1548, 64
        %v1652 = vpop.permute.xlu0 %1651
        %1653 = vrot.lane.b32.xlu0 %v1549, 64
        %v1654 = vpop.permute.xlu0 %1653
        %1655 = vrot.lane.b32.xlu0 %v1550, 64
        %v1656 = vpop.permute.xlu0 %1655
        %1657 = vrot.lane.b32.xlu0 %v1551, 64
        %v1658 = vpop.permute.xlu0 %1657
        %1659 = vrot.lane.b32.xlu0 %v1552, 64
        %v1660 = vpop.permute.xlu0 %1659
        %1661 = vrot.lane.b32.xlu0 %v1553, 64
        %v1662 = vpop.permute.xlu0 %1661
        %1663 = vrot.lane.b32.xlu0 %v1554, 64
        %v1664 = vpop.permute.xlu0 %1663
        %1665 = vrot.lane.b32.xlu0 %v1555, 64
        %v1666 = vpop.permute.xlu0 %1665
        %1667 = vrot.lane.b32.xlu0 %v1556, 64
        %v1668 = vpop.permute.xlu0 %1667
        %1669 = vrot.lane.b32.xlu0 %v1557, 64
        %v1670 = vpop.permute.xlu0 %1669
        %1671 = vrot.lane.b32.xlu0 %v1558, 64
        %v1672 = vpop.permute.xlu0 %1671
        %1673 = vrot.lane.b32.xlu0 %v1559, 64
        %v1674 = vpop.permute.xlu0 %1673
        %1675 = vrot.lane.b32.xlu0 %v1560, 64
        %v1676 = vpop.permute.xlu0 %1675
        %1677 = vrot.lane.b32.xlu0 %v1561, 64
        %v1678 = vpop.permute.xlu0 %1677
        %1679 = vrot.lane.b32.xlu0 %v1562, 64
        %v1680 = vpop.permute.xlu0 %1679
        %1681 = vrot.lane.b32.xlu0 %v1563, 64
        %v1682 = vpop.permute.xlu0 %1681
        %1683 = vrot.lane.b32.xlu0 %v1564, 64
        %v1684 = vpop.permute.xlu0 %1683
        %vm1725 = vcmask 650752
        %1726 = vst.msk [vmem:[#allocation5] sm:$0xf] %vm1725, %v1606
        %1727 = vst.msk [vmem:[#allocation5 + $0x8] sm:$0xf] %vm1725, %v1608
        %1728 = vst.msk [vmem:[#allocation5 + $0x10] sm:$0xf] %vm1725, %v1610
        %1729 = vst.msk [vmem:[#allocation5 + $0x18] sm:$0xf] %vm1725, %v1612
        %1730 = vst.msk [vmem:[#allocation5 + $0x20] sm:$0xf] %vm1725, %v1614
        %1731 = vst.msk [vmem:[#allocation5 + $0x28] sm:$0xf] %vm1725, %v1616
        %1732 = vst.msk [vmem:[#allocation5 + $0x30] sm:$0xf] %vm1725, %v1618
        %1733 = vst.msk [vmem:[#allocation5 + $0x38] sm:$0xf] %vm1725, %v1620
        %1734 = vst.msk [vmem:[#allocation5 + $0x40] sm:$0xf] %vm1725, %v1622
        %1735 = vst.msk [vmem:[#allocation5 + $0x48] sm:$0xf] %vm1725, %v1624
        %1736 = vst.msk [vmem:[#allocation5 + $0x50] sm:$0xf] %vm1725, %v1626
        %1737 = vst.msk [vmem:[#allocation5 + $0x58] sm:$0xf] %vm1725, %v1628
        %1738 = vst.msk [vmem:[#allocation5 + $0x60] sm:$0xf] %vm1725, %v1630
        %1739 = vst.msk [vmem:[#allocation5 + $0x68] sm:$0xf] %vm1725, %v1632
        %1740 = vst.msk [vmem:[#allocation5 + $0x70] sm:$0xf] %vm1725, %v1634
        %1741 = vst.msk [vmem:[#allocation5 + $0x78] sm:$0xf] %vm1725, %v1636
        %1742 = vst.msk [vmem:[#allocation5 + $0x80] sm:$0xf] %vm1725, %v1638
        %1743 = vst.msk [vmem:[#allocation5 + $0x88] sm:$0xf] %vm1725, %v1640
        %1744 = vst.msk [vmem:[#allocation5 + $0x90] sm:$0xf] %vm1725, %v1642
        %1745 = vst.msk [vmem:[#allocation5 + $0x98] sm:$0xf] %vm1725, %v1644
        %1746 = vst.msk [vmem:[#allocation5 + $0xa0] sm:$0xf] %vm1725, %v1646
        %1747 = vst.msk [vmem:[#allocation5 + $0xa8] sm:$0xf] %vm1725, %v1648
        %1748 = vst.msk [vmem:[#allocation5 + $0xb0] sm:$0xf] %vm1725, %v1650
        %1749 = vst.msk [vmem:[#allocation5 + $0xb8] sm:$0xf] %vm1725, %v1652
        %1750 = vst.msk [vmem:[#allocation5 + $0xc0] sm:$0xf] %vm1725, %v1654
        %1751 = vst.msk [vmem:[#allocation5 + $0xc8] sm:$0xf] %vm1725, %v1656
        %1752 = vst.msk [vmem:[#allocation5 + $0xd0] sm:$0xf] %vm1725, %v1658
        %1753 = vst.msk [vmem:[#allocation5 + $0xd8] sm:$0xf] %vm1725, %v1660
        %1754 = vst.msk [vmem:[#allocation5 + $0xe0] sm:$0xf] %vm1725, %v1662
        %1755 = vst.msk [vmem:[#allocation5 + $0xe8] sm:$0xf] %vm1725, %v1664
        %1756 = vst.msk [vmem:[#allocation5 + $0xf0] sm:$0xf] %vm1725, %v1666
        %1757 = vst.msk [vmem:[#allocation5 + $0xf8] sm:$0xf] %vm1725, %v1668
        %1758 = vst.msk [vmem:[#allocation5 + $0x100] sm:$0xf] %vm1725, %v1670
        %1759 = vst.msk [vmem:[#allocation5 + $0x108] sm:$0xf] %vm1725, %v1672
        %1760 = vst.msk [vmem:[#allocation5 + $0x110] sm:$0xf] %vm1725, %v1674
        %1761 = vst.msk [vmem:[#allocation5 + $0x118] sm:$0xf] %vm1725, %v1676
        %1762 = vst.msk [vmem:[#allocation5 + $0x120] sm:$0xf] %vm1725, %v1678
        %1763 = vst.msk [vmem:[#allocation5 + $0x128] sm:$0xf] %vm1725, %v1680
        %1764 = vst.msk [vmem:[#allocation5 + $0x130] sm:$0xf] %vm1725, %v1682
        %1765 = vst.msk [vmem:[#allocation5 + $0x138] sm:$0xf] %vm1725, %v1684
        %v1766 = vld [vmem:[#allocation5] sm:$0xf]
        %v1767 = vld [vmem:[#allocation5 + $0x8] sm:$0xf]
        %v1768 = vld [vmem:[#allocation5 + $0x10] sm:$0xf]
        %v1769 = vld [vmem:[#allocation5 + $0x18] sm:$0xf]
        %v1770 = vld [vmem:[#allocation5 + $0x20] sm:$0xf]
        %v1771 = vld [vmem:[#allocation5 + $0x28] sm:$0xf]
        %v1772 = vld [vmem:[#allocation5 + $0x30] sm:$0xf]
        %v1773 = vld [vmem:[#allocation5 + $0x38] sm:$0xf]
        %v1774 = vld [vmem:[#allocation5 + $0x40] sm:$0xf]
        %v1775 = vld [vmem:[#allocation5 + $0x48] sm:$0xf]
        %v1776 = vld [vmem:[#allocation5 + $0x50] sm:$0xf]
        %v1777 = vld [vmem:[#allocation5 + $0x58] sm:$0xf]
        %v1778 = vld [vmem:[#allocation5 + $0x60] sm:$0xf]
        %v1779 = vld [vmem:[#allocation5 + $0x68] sm:$0xf]
        %v1780 = vld [vmem:[#allocation5 + $0x70] sm:$0xf]
        %v1781 = vld [vmem:[#allocation5 + $0x78] sm:$0xf]
        %v1782 = vld [vmem:[#allocation5 + $0x80] sm:$0xf]
        %v1783 = vld [vmem:[#allocation5 + $0x88] sm:$0xf]
        %v1784 = vld [vmem:[#allocation5 + $0x90] sm:$0xf]
        %v1785 = vld [vmem:[#allocation5 + $0x98] sm:$0xf]
        %v1786 = vld [vmem:[#allocation5 + $0xa0] sm:$0xf]
        %v1787 = vld [vmem:[#allocation5 + $0xa8] sm:$0xf]
        %v1788 = vld [vmem:[#allocation5 + $0xb0] sm:$0xf]
        %v1789 = vld [vmem:[#allocation5 + $0xb8] sm:$0xf]
        %v1790 = vld [vmem:[#allocation5 + $0xc0] sm:$0xf]
        %v1791 = vld [vmem:[#allocation5 + $0xc8] sm:$0xf]
        %v1792 = vld [vmem:[#allocation5 + $0xd0] sm:$0xf]
        %v1793 = vld [vmem:[#allocation5 + $0xd8] sm:$0xf]
        %v1794 = vld [vmem:[#allocation5 + $0xe0] sm:$0xf]
        %v1795 = vld [vmem:[#allocation5 + $0xe8] sm:$0xf]
        %v1796 = vld [vmem:[#allocation5 + $0xf0] sm:$0xf]
        %v1797 = vld [vmem:[#allocation5 + $0xf8] sm:$0xf]
        %v1798 = vld [vmem:[%s1] sm:$0xf]
        %v1799 = vld [vmem:[%s1 + $0x4] sm:$0xf]
        %v1800 = vld [vmem:[%s1 + $0x8] sm:$0xf]
        %v1801 = vld [vmem:[%s1 + $0xc] sm:$0xf]
        %v1802 = vld [vmem:[%s1 + $0x10] sm:$0xf]
        %v1803 = vld [vmem:[%s1 + $0x14] sm:$0xf]
        %v1804 = vld [vmem:[%s1 + $0x18] sm:$0xf]
        %v1805 = vld [vmem:[%s1 + $0x1c] sm:$0xf]
        %v1806 = vld [vmem:[%s1 + $0x20] sm:$0xf]
        %v1807 = vld [vmem:[%s1 + $0x24] sm:$0xf]
        %s1808 = scalar_lea.vmem [#allocation5], 16
        %v1809 = vld [vmem:[%s1808] sm:$0xf]
        %v1810 = vld [vmem:[%s1808 + $0x8] sm:$0xf]
        %v1811 = vld [vmem:[%s1808 + $0x10] sm:$0xf]
        %v1812 = vld [vmem:[%s1808 + $0x18] sm:$0xf]
        %v1813 = vld [vmem:[%s1808 + $0x20] sm:$0xf]
        %v1814 = vld [vmem:[%s1808 + $0x28] sm:$0xf]
        %v1815 = vld [vmem:[%s1808 + $0x30] sm:$0xf]
        %v1816 = vld [vmem:[%s1808 + $0x38] sm:$0xf]
        %v1817 = vld [vmem:[%s1808 + $0x40] sm:$0xf]
        %v1818 = vld [vmem:[%s1808 + $0x48] sm:$0xf]
        %v1819 = vld [vmem:[%s1808 + $0x50] sm:$0xf]
        %v1820 = vld [vmem:[%s1808 + $0x58] sm:$0xf]
        %v1821 = vld [vmem:[%s1808 + $0x60] sm:$0xf]
        %v1822 = vld [vmem:[%s1808 + $0x68] sm:$0xf]
        %v1823 = vld [vmem:[%s1808 + $0x70] sm:$0xf]
        %v1824 = vld [vmem:[%s1808 + $0x78] sm:$0xf]
        %v1825 = vld [vmem:[%s1808 + $0x80] sm:$0xf]
        %v1826 = vld [vmem:[%s1808 + $0x88] sm:$0xf]
        %v1827 = vld [vmem:[%s1808 + $0x90] sm:$0xf]
        %v1828 = vld [vmem:[%s1808 + $0x98] sm:$0xf]
        %v1829 = vld [vmem:[%s1808 + $0xa0] sm:$0xf]
        %v1830 = vld [vmem:[%s1808 + $0xa8] sm:$0xf]
        %v1831 = vld [vmem:[%s1808 + $0xb0] sm:$0xf]
        %v1832 = vld [vmem:[%s1808 + $0xb8] sm:$0xf]
        %v1833 = vld [vmem:[%s1808 + $0xc0] sm:$0xf]
        %v1834 = vld [vmem:[%s1808 + $0xc8] sm:$0xf]
        %v1835 = vld [vmem:[%s1808 + $0xd0] sm:$0xf]
        %v1836 = vld [vmem:[%s1808 + $0xd8] sm:$0xf]
        %v1837 = vld [vmem:[%s1808 + $0xe0] sm:$0xf]
        %v1838 = vld [vmem:[%s1808 + $0xe8] sm:$0xf]
        %v1839 = vld [vmem:[%s1808 + $0xf0] sm:$0xf]
        %v1840 = vld [vmem:[%s1808 + $0xf8] sm:$0xf]
        %s1841 = scalar_lea.vmem %s1, 40
        %v1842 = vld [vmem:[%s1841] sm:$0xf]
        %v1843 = vld [vmem:[%s1841 + $0x4] sm:$0xf]
        %v1844 = vld [vmem:[%s1841 + $0x8] sm:$0xf]
        %v1845 = vld [vmem:[%s1841 + $0xc] sm:$0xf]
        %v1846 = vld [vmem:[%s1841 + $0x10] sm:$0xf]
        %v1847 = vld [vmem:[%s1841 + $0x14] sm:$0xf]
        %v1848 = vld [vmem:[%s1841 + $0x18] sm:$0xf]
        %v1849 = vld [vmem:[%s1841 + $0x1c] sm:$0xf]
        %v1850 = vld [vmem:[%s1841 + $0x20] sm:$0xf]
        %v1851 = vld [vmem:[%s1841 + $0x24] sm:$0xf]
        %v1884 = vunpack.c.l.b16 %v1809
        %v1885 = vunpack.c.l.b16 %v1810
        %v1886 = vunpack.c.l.b16 %v1811
        %v1887 = vunpack.c.l.b16 %v1812
        %v1888 = vunpack.c.l.b16 %v1813
        %v1889 = vunpack.c.l.b16 %v1814
        %v1890 = vunpack.c.l.b16 %v1815
        %v1891 = vunpack.c.l.b16 %v1816
        %v1892 = vunpack.c.l.b16 %v1817
        %v1893 = vunpack.c.l.b16 %v1818
        %v1894 = vunpack.c.l.b16 %v1819
        %v1895 = vunpack.c.l.b16 %v1820
        %v1896 = vunpack.c.l.b16 %v1821
        %v1897 = vunpack.c.l.b16 %v1822
        %v1898 = vunpack.c.l.b16 %v1823
        %v1899 = vunpack.c.l.b16 %v1824
        %v1900 = vunpack.c.l.b16 %v1825
        %v1901 = vunpack.c.l.b16 %v1826
        %v1902 = vunpack.c.l.b16 %v1827
        %v1903 = vunpack.c.l.b16 %v1828
        %v1904 = vunpack.c.l.b16 %v1829
        %v1905 = vunpack.c.l.b16 %v1830
        %v1906 = vunpack.c.l.b16 %v1831
        %v1907 = vunpack.c.l.b16 %v1832
        %v1908 = vunpack.c.l.b16 %v1833
        %v1909 = vunpack.c.l.b16 %v1834
        %v1910 = vunpack.c.l.b16 %v1835
        %v1911 = vunpack.c.l.b16 %v1836
        %v1912 = vunpack.c.l.b16 %v1837
        %v1913 = vunpack.c.l.b16 %v1838
        %v1914 = vunpack.c.l.b16 %v1839
        %v1915 = vunpack.c.l.b16 %v1840
        %v1916 = vpack.c.b16 %v1885, %v1884
        %v1917 = vpack.c.b16 %v1887, %v1886
        %v1918 = vpack.c.b16 %v1889, %v1888
        %v1919 = vpack.c.b16 %v1891, %v1890
        %v1920 = vpack.c.b16 %v1893, %v1892
        %v1921 = vpack.c.b16 %v1895, %v1894
        %v1922 = vpack.c.b16 %v1897, %v1896
        %v1923 = vpack.c.b16 %v1899, %v1898
        %v1924 = vpack.c.b16 %v1901, %v1900
        %v1925 = vpack.c.b16 %v1903, %v1902
        %v1926 = vpack.c.b16 %v1905, %v1904
        %v1927 = vpack.c.b16 %v1907, %v1906
        %v1928 = vpack.c.b16 %v1909, %v1908
        %v1929 = vpack.c.b16 %v1911, %v1910
        %v1930 = vpack.c.b16 %v1913, %v1912
        %v1931 = vpack.c.b16 %v1915, %v1914
        %v1942 = vunpack.c.l.b16 %v1842
        %v1943 = vunpack.c.l.b16 %v1843
        %v1944 = vunpack.c.l.b16 %v1844
        %v1945 = vunpack.c.l.b16 %v1845
        %v1946 = vunpack.c.l.b16 %v1846
        %v1947 = vunpack.c.l.b16 %v1847
        %v1948 = vunpack.c.l.b16 %v1848
        %v1949 = vunpack.c.l.b16 %v1849
        %v1950 = vunpack.c.l.b16 %v1850
        %v1951 = vunpack.c.l.b16 %v1851
        %v1952 = vpack.c.b16 %v1943, %v1942
        %v1953 = vpack.c.b16 %v1945, %v1944
        %v1954 = vpack.c.b16 %v1947, %v1946
        %v1955 = vpack.c.b16 %v1949, %v1948
        %v1956 = vpack.c.b16 %v1951, %v1950
        %vm1962 = vcmask 654336
        %v1964 = vsel %vm1962, %v1916, 0
        %v1967 = vsel %vm1962, %v1917, 0
        %v1970 = vsel %vm1962, %v1918, 0
        %v1973 = vsel %vm1962, %v1919, 0
        %v1976 = vsel %vm1962, %v1920, 0
        %v1979 = vsel %vm1962, %v1921, 0
        %v1982 = vsel %vm1962, %v1922, 0
        %v1985 = vsel %vm1962, %v1923, 0
        %v1988 = vsel %vm1962, %v1924, 0
        %v1991 = vsel %vm1962, %v1925, 0
        %v1994 = vsel %vm1962, %v1926, 0
        %v1997 = vsel %vm1962, %v1927, 0
        %v2000 = vsel %vm1962, %v1928, 0
        %v2003 = vsel %vm1962, %v1929, 0
        %v2006 = vsel %vm1962, %v1930, 0
        %v2009 = vsel %vm1962, %v1931, 0
        %2011 = vmatpush.bf16.msra.mxu0 0
        %2012 = vmatpush.bf16.msra.mxu0 0
        %2013 = vmatpush.bf16.msra.mxu0 0
        %2014 = vmatpush.bf16.msra.mxu0 %v1956
        %2015 = vmatpush.bf16.msra.mxu0 %v1955
        %2016 = vmatpush.bf16.msra.mxu0 %v1954
        %2017 = vmatpush.bf16.msra.mxu0 %v1953
        %2018 = vmatpush.bf16.msra.mxu0 %v1952
        %2019 = vmatmul.bf16.gmra.mxu0 %v1964
        %v2020 = vpop.f32.mrf.mxu0
        %v2021 = vadd.f32 0.0, %v2020
        %v2022 = vpop.f32.mrf.mxu0
        %v2023 = vadd.f32 0.0, %v2022
        %2024 = vmatmul.bf16.gmra.mxu0 %v1967
        %v2025 = vpop.f32.mrf.mxu0
        %v2026 = vadd.f32 0.0, %v2025
        %v2027 = vpop.f32.mrf.mxu0
        %v2028 = vadd.f32 0.0, %v2027
        %2029 = vmatmul.bf16.gmra.mxu0 %v1970
        %v2030 = vpop.f32.mrf.mxu0
        %v2031 = vadd.f32 0.0, %v2030
        %v2032 = vpop.f32.mrf.mxu0
        %v2033 = vadd.f32 0.0, %v2032
        %2034 = vmatmul.bf16.gmra.mxu0 %v1973
        %v2035 = vpop.f32.mrf.mxu0
        %v2036 = vadd.f32 0.0, %v2035
        %v2037 = vpop.f32.mrf.mxu0
        %v2038 = vadd.f32 0.0, %v2037
        %2039 = vmatmul.bf16.gmra.mxu0 %v1976
        %v2040 = vpop.f32.mrf.mxu0
        %v2041 = vadd.f32 0.0, %v2040
        %v2042 = vpop.f32.mrf.mxu0
        %v2043 = vadd.f32 0.0, %v2042
        %2044 = vmatmul.bf16.gmra.mxu0 %v1979
        %v2045 = vpop.f32.mrf.mxu0
        %v2046 = vadd.f32 0.0, %v2045
        %v2047 = vpop.f32.mrf.mxu0
        %v2048 = vadd.f32 0.0, %v2047
        %2049 = vmatmul.bf16.gmra.mxu0 %v1982
        %v2050 = vpop.f32.mrf.mxu0
        %v2051 = vadd.f32 0.0, %v2050
        %v2052 = vpop.f32.mrf.mxu0
        %v2053 = vadd.f32 0.0, %v2052
        %2054 = vmatmul.bf16.gmra.mxu0 %v1985
        %v2055 = vpop.f32.mrf.mxu0
        %v2056 = vadd.f32 0.0, %v2055
        %v2057 = vpop.f32.mrf.mxu0
        %v2058 = vadd.f32 0.0, %v2057
        %2059 = vmatmul.bf16.gmra.mxu0 %v1988
        %v2060 = vpop.f32.mrf.mxu0
        %v2061 = vadd.f32 0.0, %v2060
        %v2062 = vpop.f32.mrf.mxu0
        %v2063 = vadd.f32 0.0, %v2062
        %2064 = vmatmul.bf16.gmra.mxu0 %v1991
        %v2065 = vpop.f32.mrf.mxu0
        %v2066 = vadd.f32 0.0, %v2065
        %v2067 = vpop.f32.mrf.mxu0
        %v2068 = vadd.f32 0.0, %v2067
        %2069 = vmatmul.bf16.gmra.mxu0 %v1994
        %v2070 = vpop.f32.mrf.mxu0
        %v2071 = vadd.f32 0.0, %v2070
        %v2072 = vpop.f32.mrf.mxu0
        %v2073 = vadd.f32 0.0, %v2072
        %2074 = vmatmul.bf16.gmra.mxu0 %v1997
        %v2075 = vpop.f32.mrf.mxu0
        %v2076 = vadd.f32 0.0, %v2075
        %v2077 = vpop.f32.mrf.mxu0
        %v2078 = vadd.f32 0.0, %v2077
        %2079 = vmatmul.bf16.gmra.mxu0 %v2000
        %v2080 = vpop.f32.mrf.mxu0
        %v2081 = vadd.f32 0.0, %v2080
        %v2082 = vpop.f32.mrf.mxu0
        %v2083 = vadd.f32 0.0, %v2082
        %2084 = vmatmul.bf16.gmra.mxu0 %v2003
        %v2085 = vpop.f32.mrf.mxu0
        %v2086 = vadd.f32 0.0, %v2085
        %v2087 = vpop.f32.mrf.mxu0
        %v2088 = vadd.f32 0.0, %v2087
        %2089 = vmatmul.bf16.gmra.mxu0 %v2006
        %v2090 = vpop.f32.mrf.mxu0
        %v2091 = vadd.f32 0.0, %v2090
        %v2092 = vpop.f32.mrf.mxu0
        %v2093 = vadd.f32 0.0, %v2092
        %2094 = vmatmul.bf16.gmra.mxu0 %v2009
        %v2095 = vpop.f32.mrf.mxu0
        %v2096 = vadd.f32 0.0, %v2095
        %v2097 = vpop.f32.mrf.mxu0
        %v2098 = vadd.f32 0.0, %v2097
        %2099 = vdwg.mxu0
        %v2132 = vunpack.c.l.b16 %v1766
        %v2133 = vunpack.c.l.b16 %v1767
        %v2134 = vunpack.c.l.b16 %v1768
        %v2135 = vunpack.c.l.b16 %v1769
        %v2136 = vunpack.c.l.b16 %v1770
        %v2137 = vunpack.c.l.b16 %v1771
        %v2138 = vunpack.c.l.b16 %v1772
        %v2139 = vunpack.c.l.b16 %v1773
        %v2140 = vunpack.c.l.b16 %v1774
        %v2141 = vunpack.c.l.b16 %v1775
        %v2142 = vunpack.c.l.b16 %v1776
        %v2143 = vunpack.c.l.b16 %v1777
        %v2144 = vunpack.c.l.b16 %v1778
        %v2145 = vunpack.c.l.b16 %v1779
        %v2146 = vunpack.c.l.b16 %v1780
        %v2147 = vunpack.c.l.b16 %v1781
        %v2148 = vunpack.c.l.b16 %v1782
        %v2149 = vunpack.c.l.b16 %v1783
        %v2150 = vunpack.c.l.b16 %v1784
        %v2151 = vunpack.c.l.b16 %v1785
        %v2152 = vunpack.c.l.b16 %v1786
        %v2153 = vunpack.c.l.b16 %v1787
        %v2154 = vunpack.c.l.b16 %v1788
        %v2155 = vunpack.c.l.b16 %v1789
        %v2156 = vunpack.c.l.b16 %v1790
        %v2157 = vunpack.c.l.b16 %v1791
        %v2158 = vunpack.c.l.b16 %v1792
        %v2159 = vunpack.c.l.b16 %v1793
        %v2160 = vunpack.c.l.b16 %v1794
        %v2161 = vunpack.c.l.b16 %v1795
        %v2162 = vunpack.c.l.b16 %v1796
        %v2163 = vunpack.c.l.b16 %v1797
        %v2164 = vpack.c.b16 %v2133, %v2132
        %v2165 = vpack.c.b16 %v2135, %v2134
        %v2166 = vpack.c.b16 %v2137, %v2136
        %v2167 = vpack.c.b16 %v2139, %v2138
        %v2168 = vpack.c.b16 %v2141, %v2140
        %v2169 = vpack.c.b16 %v2143, %v2142
        %v2170 = vpack.c.b16 %v2145, %v2144
        %v2171 = vpack.c.b16 %v2147, %v2146
        %v2172 = vpack.c.b16 %v2149, %v2148
        %v2173 = vpack.c.b16 %v2151, %v2150
        %v2174 = vpack.c.b16 %v2153, %v2152
        %v2175 = vpack.c.b16 %v2155, %v2154
        %v2176 = vpack.c.b16 %v2157, %v2156
        %v2177 = vpack.c.b16 %v2159, %v2158
        %v2178 = vpack.c.b16 %v2161, %v2160
        %v2179 = vpack.c.b16 %v2163, %v2162
        %v2190 = vunpack.c.l.b16 %v1798
        %v2191 = vunpack.c.l.b16 %v1799
        %v2192 = vunpack.c.l.b16 %v1800
        %v2193 = vunpack.c.l.b16 %v1801
        %v2194 = vunpack.c.l.b16 %v1802
        %v2195 = vunpack.c.l.b16 %v1803
        %v2196 = vunpack.c.l.b16 %v1804
        %v2197 = vunpack.c.l.b16 %v1805
        %v2198 = vunpack.c.l.b16 %v1806
        %v2199 = vunpack.c.l.b16 %v1807
        %v2200 = vpack.c.b16 %v2191, %v2190
        %v2201 = vpack.c.b16 %v2193, %v2192
        %v2202 = vpack.c.b16 %v2195, %v2194
        %v2203 = vpack.c.b16 %v2197, %v2196
        %v2204 = vpack.c.b16 %v2199, %v2198
        %v2211 = vsel %vm1962, %v2164, 0
        %v2214 = vsel %vm1962, %v2165, 0
        %v2217 = vsel %vm1962, %v2166, 0
        %v2220 = vsel %vm1962, %v2167, 0
        %v2223 = vsel %vm1962, %v2168, 0
        %v2226 = vsel %vm1962, %v2169, 0
        %v2229 = vsel %vm1962, %v2170, 0
        %v2232 = vsel %vm1962, %v2171, 0
        %v2235 = vsel %vm1962, %v2172, 0
        %v2238 = vsel %vm1962, %v2173, 0
        %v2241 = vsel %vm1962, %v2174, 0
        %v2244 = vsel %vm1962, %v2175, 0
        %v2247 = vsel %vm1962, %v2176, 0
        %v2250 = vsel %vm1962, %v2177, 0
        %v2253 = vsel %vm1962, %v2178, 0
        %v2256 = vsel %vm1962, %v2179, 0
        %2258 = vmatpush.bf16.msra.mxu0 0
        %2259 = vmatpush.bf16.msra.mxu0 0
        %2260 = vmatpush.bf16.msra.mxu0 0
        %2261 = vmatpush.bf16.msra.mxu0 %v2204
        %2262 = vmatpush.bf16.msra.mxu0 %v2203
        %2263 = vmatpush.bf16.msra.mxu0 %v2202
        %2264 = vmatpush.bf16.msra.mxu0 %v2201
        %2265 = vmatpush.bf16.msra.mxu0 %v2200
        %2266 = vmatmul.bf16.gmra.mxu0 %v2211
        %v2267 = vpop.f32.mrf.mxu0
        %v2268 = vadd.f32 %v2021, %v2267
        %v2269 = vpop.f32.mrf.mxu0
        %v2270 = vadd.f32 %v2023, %v2269
        %2271 = vmatmul.bf16.gmra.mxu0 %v2214
        %v2272 = vpop.f32.mrf.mxu0
        %v2273 = vadd.f32 %v2026, %v2272
        %v2274 = vpop.f32.mrf.mxu0
        %v2275 = vadd.f32 %v2028, %v2274
        %2276 = vmatmul.bf16.gmra.mxu0 %v2217
        %v2277 = vpop.f32.mrf.mxu0
        %v2278 = vadd.f32 %v2031, %v2277
        %v2279 = vpop.f32.mrf.mxu0
        %v2280 = vadd.f32 %v2033, %v2279
        %2281 = vmatmul.bf16.gmra.mxu0 %v2220
        %v2282 = vpop.f32.mrf.mxu0
        %v2283 = vadd.f32 %v2036, %v2282
        %v2284 = vpop.f32.mrf.mxu0
        %v2285 = vadd.f32 %v2038, %v2284
        %2286 = vmatmul.bf16.gmra.mxu0 %v2223
        %v2287 = vpop.f32.mrf.mxu0
        %v2288 = vadd.f32 %v2041, %v2287
        %v2289 = vpop.f32.mrf.mxu0
        %v2290 = vadd.f32 %v2043, %v2289
        %2291 = vmatmul.bf16.gmra.mxu0 %v2226
        %v2292 = vpop.f32.mrf.mxu0
        %v2293 = vadd.f32 %v2046, %v2292
        %v2294 = vpop.f32.mrf.mxu0
        %v2295 = vadd.f32 %v2048, %v2294
        %2296 = vmatmul.bf16.gmra.mxu0 %v2229
        %v2297 = vpop.f32.mrf.mxu0
        %v2298 = vadd.f32 %v2051, %v2297
        %v2299 = vpop.f32.mrf.mxu0
        %v2300 = vadd.f32 %v2053, %v2299
        %2301 = vmatmul.bf16.gmra.mxu0 %v2232
        %v2302 = vpop.f32.mrf.mxu0
        %v2303 = vadd.f32 %v2056, %v2302
        %v2304 = vpop.f32.mrf.mxu0
        %v2305 = vadd.f32 %v2058, %v2304
        %2306 = vmatmul.bf16.gmra.mxu0 %v2235
        %v2307 = vpop.f32.mrf.mxu0
        %v2308 = vadd.f32 %v2061, %v2307
        %v2309 = vpop.f32.mrf.mxu0
        %v2310 = vadd.f32 %v2063, %v2309
        %2311 = vmatmul.bf16.gmra.mxu0 %v2238
        %v2312 = vpop.f32.mrf.mxu0
        %v2313 = vadd.f32 %v2066, %v2312
        %v2314 = vpop.f32.mrf.mxu0
        %v2315 = vadd.f32 %v2068, %v2314
        %2316 = vmatmul.bf16.gmra.mxu0 %v2241
        %v2317 = vpop.f32.mrf.mxu0
        %v2318 = vadd.f32 %v2071, %v2317
        %v2319 = vpop.f32.mrf.mxu0
        %v2320 = vadd.f32 %v2073, %v2319
        %2321 = vmatmul.bf16.gmra.mxu0 %v2244
        %v2322 = vpop.f32.mrf.mxu0
        %v2323 = vadd.f32 %v2076, %v2322
        %v2324 = vpop.f32.mrf.mxu0
        %v2325 = vadd.f32 %v2078, %v2324
        %2326 = vmatmul.bf16.gmra.mxu0 %v2247
        %v2327 = vpop.f32.mrf.mxu0
        %v2328 = vadd.f32 %v2081, %v2327
        %v2329 = vpop.f32.mrf.mxu0
        %v2330 = vadd.f32 %v2083, %v2329
        %2331 = vmatmul.bf16.gmra.mxu0 %v2250
        %v2332 = vpop.f32.mrf.mxu0
        %v2333 = vadd.f32 %v2086, %v2332
        %v2334 = vpop.f32.mrf.mxu0
        %v2335 = vadd.f32 %v2088, %v2334
        %2336 = vmatmul.bf16.gmra.mxu0 %v2253
        %v2337 = vpop.f32.mrf.mxu0
        %v2338 = vadd.f32 %v2091, %v2337
        %v2339 = vpop.f32.mrf.mxu0
        %v2340 = vadd.f32 %v2093, %v2339
        %2341 = vmatmul.bf16.gmra.mxu0 %v2256
        %v2342 = vpop.f32.mrf.mxu0
        %v2343 = vadd.f32 %v2096, %v2342
        %v2344 = vpop.f32.mrf.mxu0
        %v2345 = vadd.f32 %v2098, %v2344
        %2346 = vdwg.mxu0
        %s2347 = scalar_lea.vmem [#allocation5], 32
        %v2348 = vld [vmem:[%s2347] sm:$0xf]
        %v2349 = vld [vmem:[%s2347 + $0x8] sm:$0xf]
        %v2350 = vld [vmem:[%s2347 + $0x10] sm:$0xf]
        %v2351 = vld [vmem:[%s2347 + $0x18] sm:$0xf]
        %v2352 = vld [vmem:[%s2347 + $0x20] sm:$0xf]
        %v2353 = vld [vmem:[%s2347 + $0x28] sm:$0xf]
        %v2354 = vld [vmem:[%s2347 + $0x30] sm:$0xf]
        %v2355 = vld [vmem:[%s2347 + $0x38] sm:$0xf]
        %v2356 = vld [vmem:[%s2347 + $0x40] sm:$0xf]
        %v2357 = vld [vmem:[%s2347 + $0x48] sm:$0xf]
        %v2358 = vld [vmem:[%s2347 + $0x50] sm:$0xf]
        %v2359 = vld [vmem:[%s2347 + $0x58] sm:$0xf]
        %v2360 = vld [vmem:[%s2347 + $0x60] sm:$0xf]
        %v2361 = vld [vmem:[%s2347 + $0x68] sm:$0xf]
        %v2362 = vld [vmem:[%s2347 + $0x70] sm:$0xf]
        %v2363 = vld [vmem:[%s2347 + $0x78] sm:$0xf]
        %v2364 = vld [vmem:[%s2347 + $0x80] sm:$0xf]
        %v2365 = vld [vmem:[%s2347 + $0x88] sm:$0xf]
        %v2366 = vld [vmem:[%s2347 + $0x90] sm:$0xf]
        %v2367 = vld [vmem:[%s2347 + $0x98] sm:$0xf]
        %v2368 = vld [vmem:[%s2347 + $0xa0] sm:$0xf]
        %v2369 = vld [vmem:[%s2347 + $0xa8] sm:$0xf]
        %v2370 = vld [vmem:[%s2347 + $0xb0] sm:$0xf]
        %v2371 = vld [vmem:[%s2347 + $0xb8] sm:$0xf]
        %v2372 = vld [vmem:[%s2347 + $0xc0] sm:$0xf]
        %v2373 = vld [vmem:[%s2347 + $0xc8] sm:$0xf]
        %v2374 = vld [vmem:[%s2347 + $0xd0] sm:$0xf]
        %v2375 = vld [vmem:[%s2347 + $0xd8] sm:$0xf]
        %v2376 = vld [vmem:[%s2347 + $0xe0] sm:$0xf]
        %v2377 = vld [vmem:[%s2347 + $0xe8] sm:$0xf]
        %v2378 = vld [vmem:[%s2347 + $0xf0] sm:$0xf]
        %v2379 = vld [vmem:[%s2347 + $0xf8] sm:$0xf]
        %s2380 = scalar_lea.vmem %s1, 80
        %v2381 = vld [vmem:[%s2380] sm:$0xf]
        %v2382 = vld [vmem:[%s2380 + $0x4] sm:$0xf]
        %v2383 = vld [vmem:[%s2380 + $0x8] sm:$0xf]
        %v2384 = vld [vmem:[%s2380 + $0xc] sm:$0xf]
        %v2385 = vld [vmem:[%s2380 + $0x10] sm:$0xf]
        %v2386 = vld [vmem:[%s2380 + $0x14] sm:$0xf]
        %v2387 = vld [vmem:[%s2380 + $0x18] sm:$0xf]
        %v2388 = vld [vmem:[%s2380 + $0x1c] sm:$0xf]
        %v2389 = vld [vmem:[%s2380 + $0x20] sm:$0xf]
        %v2390 = vld [vmem:[%s2380 + $0x24] sm:$0xf]
        %v2423 = vunpack.c.l.b16 %v2348
        %v2424 = vunpack.c.l.b16 %v2349
        %v2425 = vunpack.c.l.b16 %v2350
        %v2426 = vunpack.c.l.b16 %v2351
        %v2427 = vunpack.c.l.b16 %v2352
        %v2428 = vunpack.c.l.b16 %v2353
        %v2429 = vunpack.c.l.b16 %v2354
        %v2430 = vunpack.c.l.b16 %v2355
        %v2431 = vunpack.c.l.b16 %v2356
        %v2432 = vunpack.c.l.b16 %v2357
        %v2433 = vunpack.c.l.b16 %v2358
        %v2434 = vunpack.c.l.b16 %v2359
        %v2435 = vunpack.c.l.b16 %v2360
        %v2436 = vunpack.c.l.b16 %v2361
        %v2437 = vunpack.c.l.b16 %v2362
        %v2438 = vunpack.c.l.b16 %v2363
        %v2439 = vunpack.c.l.b16 %v2364
        %v2440 = vunpack.c.l.b16 %v2365
        %v2441 = vunpack.c.l.b16 %v2366
        %v2442 = vunpack.c.l.b16 %v2367
        %v2443 = vunpack.c.l.b16 %v2368
        %v2444 = vunpack.c.l.b16 %v2369
        %v2445 = vunpack.c.l.b16 %v2370
        %v2446 = vunpack.c.l.b16 %v2371
        %v2447 = vunpack.c.l.b16 %v2372
        %v2448 = vunpack.c.l.b16 %v2373
        %v2449 = vunpack.c.l.b16 %v2374
        %v2450 = vunpack.c.l.b16 %v2375
        %v2451 = vunpack.c.l.b16 %v2376
        %v2452 = vunpack.c.l.b16 %v2377
        %v2453 = vunpack.c.l.b16 %v2378
        %v2454 = vunpack.c.l.b16 %v2379
        %v2455 = vpack.c.b16 %v2424, %v2423
        %v2456 = vpack.c.b16 %v2426, %v2425
        %v2457 = vpack.c.b16 %v2428, %v2427
        %v2458 = vpack.c.b16 %v2430, %v2429
        %v2459 = vpack.c.b16 %v2432, %v2431
        %v2460 = vpack.c.b16 %v2434, %v2433
        %v2461 = vpack.c.b16 %v2436, %v2435
        %v2462 = vpack.c.b16 %v2438, %v2437
        %v2463 = vpack.c.b16 %v2440, %v2439
        %v2464 = vpack.c.b16 %v2442, %v2441
        %v2465 = vpack.c.b16 %v2444, %v2443
        %v2466 = vpack.c.b16 %v2446, %v2445
        %v2467 = vpack.c.b16 %v2448, %v2447
        %v2468 = vpack.c.b16 %v2450, %v2449
        %v2469 = vpack.c.b16 %v2452, %v2451
        %v2470 = vpack.c.b16 %v2454, %v2453
        %v2481 = vunpack.c.l.b16 %v2381
        %v2482 = vunpack.c.l.b16 %v2382
        %v2483 = vunpack.c.l.b16 %v2383
        %v2484 = vunpack.c.l.b16 %v2384
        %v2485 = vunpack.c.l.b16 %v2385
        %v2486 = vunpack.c.l.b16 %v2386
        %v2487 = vunpack.c.l.b16 %v2387
        %v2488 = vunpack.c.l.b16 %v2388
        %v2489 = vunpack.c.l.b16 %v2389
        %v2490 = vunpack.c.l.b16 %v2390
        %v2491 = vpack.c.b16 %v2482, %v2481
        %v2492 = vpack.c.b16 %v2484, %v2483
        %v2493 = vpack.c.b16 %v2486, %v2485
        %v2494 = vpack.c.b16 %v2488, %v2487
        %v2495 = vpack.c.b16 %v2490, %v2489
        %v2502 = vsel %vm1962, %v2455, 0
        %v2505 = vsel %vm1962, %v2456, 0
        %v2508 = vsel %vm1962, %v2457, 0
        %v2511 = vsel %vm1962, %v2458, 0
        %v2514 = vsel %vm1962, %v2459, 0
        %v2517 = vsel %vm1962, %v2460, 0
        %v2520 = vsel %vm1962, %v2461, 0
        %v2523 = vsel %vm1962, %v2462, 0
        %v2526 = vsel %vm1962, %v2463, 0
        %v2529 = vsel %vm1962, %v2464, 0
        %v2532 = vsel %vm1962, %v2465, 0
        %v2535 = vsel %vm1962, %v2466, 0
        %v2538 = vsel %vm1962, %v2467, 0
        %v2541 = vsel %vm1962, %v2468, 0
        %v2544 = vsel %vm1962, %v2469, 0
        %v2547 = vsel %vm1962, %v2470, 0
        %2549 = vmatpush.bf16.msra.mxu0 0
        %2550 = vmatpush.bf16.msra.mxu0 0
        %2551 = vmatpush.bf16.msra.mxu0 0
        %2552 = vmatpush.bf16.msra.mxu0 %v2495
        %2553 = vmatpush.bf16.msra.mxu0 %v2494
        %2554 = vmatpush.bf16.msra.mxu0 %v2493
        %2555 = vmatpush.bf16.msra.mxu0 %v2492
        %2556 = vmatpush.bf16.msra.mxu0 %v2491
        %2557 = vmatmul.bf16.gmra.mxu0 %v2502
        %v2558 = vpop.f32.mrf.mxu0
        %v2559 = vadd.f32 0.0, %v2558
        %v2560 = vpop.f32.mrf.mxu0
        %v2561 = vadd.f32 0.0, %v2560
        %2562 = vmatmul.bf16.gmra.mxu0 %v2505
        %v2563 = vpop.f32.mrf.mxu0
        %v2564 = vadd.f32 0.0, %v2563
        %v2565 = vpop.f32.mrf.mxu0
        %v2566 = vadd.f32 0.0, %v2565
        %2567 = vmatmul.bf16.gmra.mxu0 %v2508
        %v2568 = vpop.f32.mrf.mxu0
        %v2569 = vadd.f32 0.0, %v2568
        %v2570 = vpop.f32.mrf.mxu0
        %v2571 = vadd.f32 0.0, %v2570
        %2572 = vmatmul.bf16.gmra.mxu0 %v2511
        %v2573 = vpop.f32.mrf.mxu0
        %v2574 = vadd.f32 0.0, %v2573
        %v2575 = vpop.f32.mrf.mxu0
        %v2576 = vadd.f32 0.0, %v2575
        %2577 = vmatmul.bf16.gmra.mxu0 %v2514
        %v2578 = vpop.f32.mrf.mxu0
        %v2579 = vadd.f32 0.0, %v2578
        %v2580 = vpop.f32.mrf.mxu0
        %v2581 = vadd.f32 0.0, %v2580
        %2582 = vmatmul.bf16.gmra.mxu0 %v2517
        %v2583 = vpop.f32.mrf.mxu0
        %v2584 = vadd.f32 0.0, %v2583
        %v2585 = vpop.f32.mrf.mxu0
        %v2586 = vadd.f32 0.0, %v2585
        %2587 = vmatmul.bf16.gmra.mxu0 %v2520
        %v2588 = vpop.f32.mrf.mxu0
        %v2589 = vadd.f32 0.0, %v2588
        %v2590 = vpop.f32.mrf.mxu0
        %v2591 = vadd.f32 0.0, %v2590
        %2592 = vmatmul.bf16.gmra.mxu0 %v2523
        %v2593 = vpop.f32.mrf.mxu0
        %v2594 = vadd.f32 0.0, %v2593
        %v2595 = vpop.f32.mrf.mxu0
        %v2596 = vadd.f32 0.0, %v2595
        %2597 = vmatmul.bf16.gmra.mxu0 %v2526
        %v2598 = vpop.f32.mrf.mxu0
        %v2599 = vadd.f32 0.0, %v2598
        %v2600 = vpop.f32.mrf.mxu0
        %v2601 = vadd.f32 0.0, %v2600
        %2602 = vmatmul.bf16.gmra.mxu0 %v2529
        %v2603 = vpop.f32.mrf.mxu0
        %v2604 = vadd.f32 0.0, %v2603
        %v2605 = vpop.f32.mrf.mxu0
        %v2606 = vadd.f32 0.0, %v2605
        %2607 = vmatmul.bf16.gmra.mxu0 %v2532
        %v2608 = vpop.f32.mrf.mxu0
        %v2609 = vadd.f32 0.0, %v2608
        %v2610 = vpop.f32.mrf.mxu0
        %v2611 = vadd.f32 0.0, %v2610
        %2612 = vmatmul.bf16.gmra.mxu0 %v2535
        %v2613 = vpop.f32.mrf.mxu0
        %v2614 = vadd.f32 0.0, %v2613
        %v2615 = vpop.f32.mrf.mxu0
        %v2616 = vadd.f32 0.0, %v2615
        %2617 = vmatmul.bf16.gmra.mxu0 %v2538
        %v2618 = vpop.f32.mrf.mxu0
        %v2619 = vadd.f32 0.0, %v2618
        %v2620 = vpop.f32.mrf.mxu0
        %v2621 = vadd.f32 0.0, %v2620
        %2622 = vmatmul.bf16.gmra.mxu0 %v2541
        %v2623 = vpop.f32.mrf.mxu0
        %v2624 = vadd.f32 0.0, %v2623
        %v2625 = vpop.f32.mrf.mxu0
        %v2626 = vadd.f32 0.0, %v2625
        %2627 = vmatmul.bf16.gmra.mxu0 %v2544
        %v2628 = vpop.f32.mrf.mxu0
        %v2629 = vadd.f32 0.0, %v2628
        %v2630 = vpop.f32.mrf.mxu0
        %v2631 = vadd.f32 0.0, %v2630
        %2632 = vmatmul.bf16.gmra.mxu0 %v2547
        %v2633 = vpop.f32.mrf.mxu0
        %v2634 = vadd.f32 0.0, %v2633
        %v2635 = vpop.f32.mrf.mxu0
        %v2636 = vadd.f32 0.0, %v2635
        %2637 = vdwg.mxu0
        %v2638 = vadd.f32 %v2268, %v2559
        %v2639 = vadd.f32 %v2270, %v2561
        %v2640 = vadd.f32 %v2273, %v2564
        %v2641 = vadd.f32 %v2275, %v2566
        %v2642 = vadd.f32 %v2278, %v2569
        %v2643 = vadd.f32 %v2280, %v2571
        %v2644 = vadd.f32 %v2283, %v2574
        %v2645 = vadd.f32 %v2285, %v2576
        %v2646 = vadd.f32 %v2288, %v2579
        %v2647 = vadd.f32 %v2290, %v2581
        %v2648 = vadd.f32 %v2293, %v2584
        %v2649 = vadd.f32 %v2295, %v2586
        %v2650 = vadd.f32 %v2298, %v2589
        %v2651 = vadd.f32 %v2300, %v2591
        %v2652 = vadd.f32 %v2303, %v2594
        %v2653 = vadd.f32 %v2305, %v2596
        %v2654 = vadd.f32 %v2308, %v2599
        %v2655 = vadd.f32 %v2310, %v2601
        %v2656 = vadd.f32 %v2313, %v2604
        %v2657 = vadd.f32 %v2315, %v2606
        %v2658 = vadd.f32 %v2318, %v2609
        %v2659 = vadd.f32 %v2320, %v2611
        %v2660 = vadd.f32 %v2323, %v2614
        %v2661 = vadd.f32 %v2325, %v2616
        %v2662 = vadd.f32 %v2328, %v2619
        %v2663 = vadd.f32 %v2330, %v2621
        %v2664 = vadd.f32 %v2333, %v2624
        %v2665 = vadd.f32 %v2335, %v2626
        %v2666 = vadd.f32 %v2338, %v2629
        %v2667 = vadd.f32 %v2340, %v2631
        %v2668 = vadd.f32 %v2343, %v2634
        %v2669 = vadd.f32 %v2345, %v2636
        %s2670 = scalar_lea.vmem [#allocation5], 48
        %v2671 = vld [vmem:[%s2670] sm:$0xf]
        %v2672 = vld [vmem:[%s2670 + $0x8] sm:$0xf]
        %v2673 = vld [vmem:[%s2670 + $0x10] sm:$0xf]
        %v2674 = vld [vmem:[%s2670 + $0x18] sm:$0xf]
        %v2675 = vld [vmem:[%s2670 + $0x20] sm:$0xf]
        %v2676 = vld [vmem:[%s2670 + $0x28] sm:$0xf]
        %v2677 = vld [vmem:[%s2670 + $0x30] sm:$0xf]
        %v2678 = vld [vmem:[%s2670 + $0x38] sm:$0xf]
        %v2679 = vld [vmem:[%s2670 + $0x40] sm:$0xf]
        %v2680 = vld [vmem:[%s2670 + $0x48] sm:$0xf]
        %v2681 = vld [vmem:[%s2670 + $0x50] sm:$0xf]
        %v2682 = vld [vmem:[%s2670 + $0x58] sm:$0xf]
        %v2683 = vld [vmem:[%s2670 + $0x60] sm:$0xf]
        %v2684 = vld [vmem:[%s2670 + $0x68] sm:$0xf]
        %v2685 = vld [vmem:[%s2670 + $0x70] sm:$0xf]
        %v2686 = vld [vmem:[%s2670 + $0x78] sm:$0xf]
        %v2687 = vld [vmem:[%s2670 + $0x80] sm:$0xf]
        %v2688 = vld [vmem:[%s2670 + $0x88] sm:$0xf]
        %v2689 = vld [vmem:[%s2670 + $0x90] sm:$0xf]
        %v2690 = vld [vmem:[%s2670 + $0x98] sm:$0xf]
        %v2691 = vld [vmem:[%s2670 + $0xa0] sm:$0xf]
        %v2692 = vld [vmem:[%s2670 + $0xa8] sm:$0xf]
        %v2693 = vld [vmem:[%s2670 + $0xb0] sm:$0xf]
        %v2694 = vld [vmem:[%s2670 + $0xb8] sm:$0xf]
        %v2695 = vld [vmem:[%s2670 + $0xc0] sm:$0xf]
        %v2696 = vld [vmem:[%s2670 + $0xc8] sm:$0xf]
        %v2697 = vld [vmem:[%s2670 + $0xd0] sm:$0xf]
        %v2698 = vld [vmem:[%s2670 + $0xd8] sm:$0xf]
        %v2699 = vld [vmem:[%s2670 + $0xe0] sm:$0xf]
        %v2700 = vld [vmem:[%s2670 + $0xe8] sm:$0xf]
        %v2701 = vld [vmem:[%s2670 + $0xf0] sm:$0xf]
        %v2702 = vld [vmem:[%s2670 + $0xf8] sm:$0xf]
        %s2703 = scalar_lea.vmem %s1, 120
        %v2704 = vld [vmem:[%s2703] sm:$0xf]
        %v2705 = vld [vmem:[%s2703 + $0x4] sm:$0xf]
        %v2706 = vld [vmem:[%s2703 + $0x8] sm:$0xf]
        %v2707 = vld [vmem:[%s2703 + $0xc] sm:$0xf]
        %v2708 = vld [vmem:[%s2703 + $0x10] sm:$0xf]
        %v2709 = vld [vmem:[%s2703 + $0x14] sm:$0xf]
        %v2710 = vld [vmem:[%s2703 + $0x18] sm:$0xf]
        %v2711 = vld [vmem:[%s2703 + $0x1c] sm:$0xf]
        %v2712 = vld [vmem:[%s2703 + $0x20] sm:$0xf]
        %v2713 = vld [vmem:[%s2703 + $0x24] sm:$0xf]
        %v2746 = vunpack.c.l.b16 %v2671
        %v2747 = vunpack.c.l.b16 %v2672
        %v2748 = vunpack.c.l.b16 %v2673
        %v2749 = vunpack.c.l.b16 %v2674
        %v2750 = vunpack.c.l.b16 %v2675
        %v2751 = vunpack.c.l.b16 %v2676
        %v2752 = vunpack.c.l.b16 %v2677
        %v2753 = vunpack.c.l.b16 %v2678
        %v2754 = vunpack.c.l.b16 %v2679
        %v2755 = vunpack.c.l.b16 %v2680
        %v2756 = vunpack.c.l.b16 %v2681
        %v2757 = vunpack.c.l.b16 %v2682
        %v2758 = vunpack.c.l.b16 %v2683
        %v2759 = vunpack.c.l.b16 %v2684
        %v2760 = vunpack.c.l.b16 %v2685
        %v2761 = vunpack.c.l.b16 %v2686
        %v2762 = vunpack.c.l.b16 %v2687
        %v2763 = vunpack.c.l.b16 %v2688
        %v2764 = vunpack.c.l.b16 %v2689
        %v2765 = vunpack.c.l.b16 %v2690
        %v2766 = vunpack.c.l.b16 %v2691
        %v2767 = vunpack.c.l.b16 %v2692
        %v2768 = vunpack.c.l.b16 %v2693
        %v2769 = vunpack.c.l.b16 %v2694
        %v2770 = vunpack.c.l.b16 %v2695
        %v2771 = vunpack.c.l.b16 %v2696
        %v2772 = vunpack.c.l.b16 %v2697
        %v2773 = vunpack.c.l.b16 %v2698
        %v2774 = vunpack.c.l.b16 %v2699
        %v2775 = vunpack.c.l.b16 %v2700
        %v2776 = vunpack.c.l.b16 %v2701
        %v2777 = vunpack.c.l.b16 %v2702
        %v2778 = vpack.c.b16 %v2747, %v2746
        %v2779 = vpack.c.b16 %v2749, %v2748
        %v2780 = vpack.c.b16 %v2751, %v2750
        %v2781 = vpack.c.b16 %v2753, %v2752
        %v2782 = vpack.c.b16 %v2755, %v2754
        %v2783 = vpack.c.b16 %v2757, %v2756
        %v2784 = vpack.c.b16 %v2759, %v2758
        %v2785 = vpack.c.b16 %v2761, %v2760
        %v2786 = vpack.c.b16 %v2763, %v2762
        %v2787 = vpack.c.b16 %v2765, %v2764
        %v2788 = vpack.c.b16 %v2767, %v2766
        %v2789 = vpack.c.b16 %v2769, %v2768
        %v2790 = vpack.c.b16 %v2771, %v2770
        %v2791 = vpack.c.b16 %v2773, %v2772
        %v2792 = vpack.c.b16 %v2775, %v2774
        %v2793 = vpack.c.b16 %v2777, %v2776
        %v2804 = vunpack.c.l.b16 %v2704
        %v2805 = vunpack.c.l.b16 %v2705
        %v2806 = vunpack.c.l.b16 %v2706
        %v2807 = vunpack.c.l.b16 %v2707
        %v2808 = vunpack.c.l.b16 %v2708
        %v2809 = vunpack.c.l.b16 %v2709
        %v2810 = vunpack.c.l.b16 %v2710
        %v2811 = vunpack.c.l.b16 %v2711
        %v2812 = vunpack.c.l.b16 %v2712
        %v2813 = vunpack.c.l.b16 %v2713
        %v2814 = vpack.c.b16 %v2805, %v2804
        %v2815 = vpack.c.b16 %v2807, %v2806
        %v2816 = vpack.c.b16 %v2809, %v2808
        %v2817 = vpack.c.b16 %v2811, %v2810
        %v2818 = vpack.c.b16 %v2813, %v2812
        %v2825 = vsel %vm1962, %v2778, 0
        %v2828 = vsel %vm1962, %v2779, 0
        %v2831 = vsel %vm1962, %v2780, 0
        %v2834 = vsel %vm1962, %v2781, 0
        %v2837 = vsel %vm1962, %v2782, 0
        %v2840 = vsel %vm1962, %v2783, 0
        %v2843 = vsel %vm1962, %v2784, 0
        %v2846 = vsel %vm1962, %v2785, 0
        %v2849 = vsel %vm1962, %v2786, 0
        %v2852 = vsel %vm1962, %v2787, 0
        %v2855 = vsel %vm1962, %v2788, 0
        %v2858 = vsel %vm1962, %v2789, 0
        %v2861 = vsel %vm1962, %v2790, 0
        %v2864 = vsel %vm1962, %v2791, 0
        %v2867 = vsel %vm1962, %v2792, 0
        %v2870 = vsel %vm1962, %v2793, 0
        %2872 = vmatpush.bf16.msra.mxu0 0
        %2873 = vmatpush.bf16.msra.mxu0 0
        %2874 = vmatpush.bf16.msra.mxu0 0
        %2875 = vmatpush.bf16.msra.mxu0 %v2818
        %2876 = vmatpush.bf16.msra.mxu0 %v2817
        %2877 = vmatpush.bf16.msra.mxu0 %v2816
        %2878 = vmatpush.bf16.msra.mxu0 %v2815
        %2879 = vmatpush.bf16.msra.mxu0 %v2814
        %2880 = vmatmul.bf16.gmra.mxu0 %v2825
        %v2881 = vpop.f32.mrf.mxu0
        %v2882 = vadd.f32 0.0, %v2881
        %v2883 = vpop.f32.mrf.mxu0
        %v2884 = vadd.f32 0.0, %v2883
        %2885 = vmatmul.bf16.gmra.mxu0 %v2828
        %v2886 = vpop.f32.mrf.mxu0
        %v2887 = vadd.f32 0.0, %v2886
        %v2888 = vpop.f32.mrf.mxu0
        %v2889 = vadd.f32 0.0, %v2888
        %2890 = vmatmul.bf16.gmra.mxu0 %v2831
        %v2891 = vpop.f32.mrf.mxu0
        %v2892 = vadd.f32 0.0, %v2891
        %v2893 = vpop.f32.mrf.mxu0
        %v2894 = vadd.f32 0.0, %v2893
        %2895 = vmatmul.bf16.gmra.mxu0 %v2834
        %v2896 = vpop.f32.mrf.mxu0
        %v2897 = vadd.f32 0.0, %v2896
        %v2898 = vpop.f32.mrf.mxu0
        %v2899 = vadd.f32 0.0, %v2898
        %2900 = vmatmul.bf16.gmra.mxu0 %v2837
        %v2901 = vpop.f32.mrf.mxu0
        %v2902 = vadd.f32 0.0, %v2901
        %v2903 = vpop.f32.mrf.mxu0
        %v2904 = vadd.f32 0.0, %v2903
        %2905 = vmatmul.bf16.gmra.mxu0 %v2840
        %v2906 = vpop.f32.mrf.mxu0
        %v2907 = vadd.f32 0.0, %v2906
        %v2908 = vpop.f32.mrf.mxu0
        %v2909 = vadd.f32 0.0, %v2908
        %2910 = vmatmul.bf16.gmra.mxu0 %v2843
        %v2911 = vpop.f32.mrf.mxu0
        %v2912 = vadd.f32 0.0, %v2911
        %v2913 = vpop.f32.mrf.mxu0
        %v2914 = vadd.f32 0.0, %v2913
        %2915 = vmatmul.bf16.gmra.mxu0 %v2846
        %v2916 = vpop.f32.mrf.mxu0
        %v2917 = vadd.f32 0.0, %v2916
        %v2918 = vpop.f32.mrf.mxu0
        %v2919 = vadd.f32 0.0, %v2918
        %2920 = vmatmul.bf16.gmra.mxu0 %v2849
        %v2921 = vpop.f32.mrf.mxu0
        %v2922 = vadd.f32 0.0, %v2921
        %v2923 = vpop.f32.mrf.mxu0
        %v2924 = vadd.f32 0.0, %v2923
        %2925 = vmatmul.bf16.gmra.mxu0 %v2852
        %v2926 = vpop.f32.mrf.mxu0
        %v2927 = vadd.f32 0.0, %v2926
        %v2928 = vpop.f32.mrf.mxu0
        %v2929 = vadd.f32 0.0, %v2928
        %2930 = vmatmul.bf16.gmra.mxu0 %v2855
        %v2931 = vpop.f32.mrf.mxu0
        %v2932 = vadd.f32 0.0, %v2931
        %v2933 = vpop.f32.mrf.mxu0
        %v2934 = vadd.f32 0.0, %v2933
        %2935 = vmatmul.bf16.gmra.mxu0 %v2858
        %v2936 = vpop.f32.mrf.mxu0
        %v2937 = vadd.f32 0.0, %v2936
        %v2938 = vpop.f32.mrf.mxu0
        %v2939 = vadd.f32 0.0, %v2938
        %2940 = vmatmul.bf16.gmra.mxu0 %v2861
        %v2941 = vpop.f32.mrf.mxu0
        %v2942 = vadd.f32 0.0, %v2941
        %v2943 = vpop.f32.mrf.mxu0
        %v2944 = vadd.f32 0.0, %v2943
        %2945 = vmatmul.bf16.gmra.mxu0 %v2864
        %v2946 = vpop.f32.mrf.mxu0
        %v2947 = vadd.f32 0.0, %v2946
        %v2948 = vpop.f32.mrf.mxu0
        %v2949 = vadd.f32 0.0, %v2948
        %2950 = vmatmul.bf16.gmra.mxu0 %v2867
        %v2951 = vpop.f32.mrf.mxu0
        %v2952 = vadd.f32 0.0, %v2951
        %v2953 = vpop.f32.mrf.mxu0
        %v2954 = vadd.f32 0.0, %v2953
        %2955 = vmatmul.bf16.gmra.mxu0 %v2870
        %v2956 = vpop.f32.mrf.mxu0
        %v2957 = vadd.f32 0.0, %v2956
        %v2958 = vpop.f32.mrf.mxu0
        %v2959 = vadd.f32 0.0, %v2958
        %2960 = vdwg.mxu0
        %v2961 = vadd.f32 %v2638, %v2882
        %v2962 = vadd.f32 %v2639, %v2884
        %v2963 = vadd.f32 %v2640, %v2887
        %v2964 = vadd.f32 %v2641, %v2889
        %v2965 = vadd.f32 %v2642, %v2892
        %v2966 = vadd.f32 %v2643, %v2894
        %v2967 = vadd.f32 %v2644, %v2897
        %v2968 = vadd.f32 %v2645, %v2899
        %v2969 = vadd.f32 %v2646, %v2902
        %v2970 = vadd.f32 %v2647, %v2904
        %v2971 = vadd.f32 %v2648, %v2907
        %v2972 = vadd.f32 %v2649, %v2909
        %v2973 = vadd.f32 %v2650, %v2912
        %v2974 = vadd.f32 %v2651, %v2914
        %v2975 = vadd.f32 %v2652, %v2917
        %v2976 = vadd.f32 %v2653, %v2919
        %v2977 = vadd.f32 %v2654, %v2922
        %v2978 = vadd.f32 %v2655, %v2924
        %v2979 = vadd.f32 %v2656, %v2927
        %v2980 = vadd.f32 %v2657, %v2929
        %v2981 = vadd.f32 %v2658, %v2932
        %v2982 = vadd.f32 %v2659, %v2934
        %v2983 = vadd.f32 %v2660, %v2937
        %v2984 = vadd.f32 %v2661, %v2939
        %v2985 = vadd.f32 %v2662, %v2942
        %v2986 = vadd.f32 %v2663, %v2944
        %v2987 = vadd.f32 %v2664, %v2947
        %v2988 = vadd.f32 %v2665, %v2949
        %v2989 = vadd.f32 %v2666, %v2952
        %v2990 = vadd.f32 %v2667, %v2954
        %v2991 = vadd.f32 %v2668, %v2957
        %v2992 = vadd.f32 %v2669, %v2959
        %s2993 = scalar_lea.vmem [#allocation5], 64
        %v2994 = vld [vmem:[%s2993] sm:$0xf]
        %v2995 = vld [vmem:[%s2993 + $0x8] sm:$0xf]
        %v2996 = vld [vmem:[%s2993 + $0x10] sm:$0xf]
        %v2997 = vld [vmem:[%s2993 + $0x18] sm:$0xf]
        %v2998 = vld [vmem:[%s2993 + $0x20] sm:$0xf]
        %v2999 = vld [vmem:[%s2993 + $0x28] sm:$0xf]
        %v3000 = vld [vmem:[%s2993 + $0x30] sm:$0xf]
        %v3001 = vld [vmem:[%s2993 + $0x38] sm:$0xf]
        %v3002 = vld [vmem:[%s2993 + $0x40] sm:$0xf]
        %v3003 = vld [vmem:[%s2993 + $0x48] sm:$0xf]
        %v3004 = vld [vmem:[%s2993 + $0x50] sm:$0xf]
        %v3005 = vld [vmem:[%s2993 + $0x58] sm:$0xf]
        %v3006 = vld [vmem:[%s2993 + $0x60] sm:$0xf]
        %v3007 = vld [vmem:[%s2993 + $0x68] sm:$0xf]
        %v3008 = vld [vmem:[%s2993 + $0x70] sm:$0xf]
        %v3009 = vld [vmem:[%s2993 + $0x78] sm:$0xf]
        %v3010 = vld [vmem:[%s2993 + $0x80] sm:$0xf]
        %v3011 = vld [vmem:[%s2993 + $0x88] sm:$0xf]
        %v3012 = vld [vmem:[%s2993 + $0x90] sm:$0xf]
        %v3013 = vld [vmem:[%s2993 + $0x98] sm:$0xf]
        %v3014 = vld [vmem:[%s2993 + $0xa0] sm:$0xf]
        %v3015 = vld [vmem:[%s2993 + $0xa8] sm:$0xf]
        %v3016 = vld [vmem:[%s2993 + $0xb0] sm:$0xf]
        %v3017 = vld [vmem:[%s2993 + $0xb8] sm:$0xf]
        %v3018 = vld [vmem:[%s2993 + $0xc0] sm:$0xf]
        %v3019 = vld [vmem:[%s2993 + $0xc8] sm:$0xf]
        %v3020 = vld [vmem:[%s2993 + $0xd0] sm:$0xf]
        %v3021 = vld [vmem:[%s2993 + $0xd8] sm:$0xf]
        %v3022 = vld [vmem:[%s2993 + $0xe0] sm:$0xf]
        %v3023 = vld [vmem:[%s2993 + $0xe8] sm:$0xf]
        %v3024 = vld [vmem:[%s2993 + $0xf0] sm:$0xf]
        %v3025 = vld [vmem:[%s2993 + $0xf8] sm:$0xf]
        %s3026 = scalar_lea.vmem %s1, 160
        %v3027 = vld [vmem:[%s3026] sm:$0xf]
        %v3028 = vld [vmem:[%s3026 + $0x4] sm:$0xf]
        %v3029 = vld [vmem:[%s3026 + $0x8] sm:$0xf]
        %v3030 = vld [vmem:[%s3026 + $0xc] sm:$0xf]
        %v3031 = vld [vmem:[%s3026 + $0x10] sm:$0xf]
        %v3032 = vld [vmem:[%s3026 + $0x14] sm:$0xf]
        %v3033 = vld [vmem:[%s3026 + $0x18] sm:$0xf]
        %v3034 = vld [vmem:[%s3026 + $0x1c] sm:$0xf]
        %v3035 = vld [vmem:[%s3026 + $0x20] sm:$0xf]
        %v3036 = vld [vmem:[%s3026 + $0x24] sm:$0xf]
        %v3069 = vunpack.c.l.b16 %v2994
        %v3070 = vunpack.c.l.b16 %v2995
        %v3071 = vunpack.c.l.b16 %v2996
        %v3072 = vunpack.c.l.b16 %v2997
        %v3073 = vunpack.c.l.b16 %v2998
        %v3074 = vunpack.c.l.b16 %v2999
        %v3075 = vunpack.c.l.b16 %v3000
        %v3076 = vunpack.c.l.b16 %v3001
        %v3077 = vunpack.c.l.b16 %v3002
        %v3078 = vunpack.c.l.b16 %v3003
        %v3079 = vunpack.c.l.b16 %v3004
        %v3080 = vunpack.c.l.b16 %v3005
        %v3081 = vunpack.c.l.b16 %v3006
        %v3082 = vunpack.c.l.b16 %v3007
        %v3083 = vunpack.c.l.b16 %v3008
        %v3084 = vunpack.c.l.b16 %v3009
        %v3085 = vunpack.c.l.b16 %v3010
        %v3086 = vunpack.c.l.b16 %v3011
        %v3087 = vunpack.c.l.b16 %v3012
        %v3088 = vunpack.c.l.b16 %v3013
        %v3089 = vunpack.c.l.b16 %v3014
        %v3090 = vunpack.c.l.b16 %v3015
        %v3091 = vunpack.c.l.b16 %v3016
        %v3092 = vunpack.c.l.b16 %v3017
        %v3093 = vunpack.c.l.b16 %v3018
        %v3094 = vunpack.c.l.b16 %v3019
        %v3095 = vunpack.c.l.b16 %v3020
        %v3096 = vunpack.c.l.b16 %v3021
        %v3097 = vunpack.c.l.b16 %v3022
        %v3098 = vunpack.c.l.b16 %v3023
        %v3099 = vunpack.c.l.b16 %v3024
        %v3100 = vunpack.c.l.b16 %v3025
        %v3101 = vpack.c.b16 %v3070, %v3069
        %v3102 = vpack.c.b16 %v3072, %v3071
        %v3103 = vpack.c.b16 %v3074, %v3073
        %v3104 = vpack.c.b16 %v3076, %v3075
        %v3105 = vpack.c.b16 %v3078, %v3077
        %v3106 = vpack.c.b16 %v3080, %v3079
        %v3107 = vpack.c.b16 %v3082, %v3081
        %v3108 = vpack.c.b16 %v3084, %v3083
        %v3109 = vpack.c.b16 %v3086, %v3085
        %v3110 = vpack.c.b16 %v3088, %v3087
        %v3111 = vpack.c.b16 %v3090, %v3089
        %v3112 = vpack.c.b16 %v3092, %v3091
        %v3113 = vpack.c.b16 %v3094, %v3093
        %v3114 = vpack.c.b16 %v3096, %v3095
        %v3115 = vpack.c.b16 %v3098, %v3097
        %v3116 = vpack.c.b16 %v3100, %v3099
        %v3127 = vunpack.c.l.b16 %v3027
        %v3128 = vunpack.c.l.b16 %v3028
        %v3129 = vunpack.c.l.b16 %v3029
        %v3130 = vunpack.c.l.b16 %v3030
        %v3131 = vunpack.c.l.b16 %v3031
        %v3132 = vunpack.c.l.b16 %v3032
        %v3133 = vunpack.c.l.b16 %v3033
        %v3134 = vunpack.c.l.b16 %v3034
        %v3135 = vunpack.c.l.b16 %v3035
        %v3136 = vunpack.c.l.b16 %v3036
        %v3137 = vpack.c.b16 %v3128, %v3127
        %v3138 = vpack.c.b16 %v3130, %v3129
        %v3139 = vpack.c.b16 %v3132, %v3131
        %v3140 = vpack.c.b16 %v3134, %v3133
        %v3141 = vpack.c.b16 %v3136, %v3135
        %v3148 = vsel %vm1962, %v3101, 0
        %v3151 = vsel %vm1962, %v3102, 0
        %v3154 = vsel %vm1962, %v3103, 0
        %v3157 = vsel %vm1962, %v3104, 0
        %v3160 = vsel %vm1962, %v3105, 0
        %v3163 = vsel %vm1962, %v3106, 0
        %v3166 = vsel %vm1962, %v3107, 0
        %v3169 = vsel %vm1962, %v3108, 0
        %v3172 = vsel %vm1962, %v3109, 0
        %v3175 = vsel %vm1962, %v3110, 0
        %v3178 = vsel %vm1962, %v3111, 0
        %v3181 = vsel %vm1962, %v3112, 0
        %v3184 = vsel %vm1962, %v3113, 0
        %v3187 = vsel %vm1962, %v3114, 0
        %v3190 = vsel %vm1962, %v3115, 0
        %v3193 = vsel %vm1962, %v3116, 0
        %3195 = vmatpush.bf16.msra.mxu0 0
        %3196 = vmatpush.bf16.msra.mxu0 0
        %3197 = vmatpush.bf16.msra.mxu0 0
        %3198 = vmatpush.bf16.msra.mxu0 %v3141
        %3199 = vmatpush.bf16.msra.mxu0 %v3140
        %3200 = vmatpush.bf16.msra.mxu0 %v3139
        %3201 = vmatpush.bf16.msra.mxu0 %v3138
        %3202 = vmatpush.bf16.msra.mxu0 %v3137
        %3203 = vmatmul.bf16.gmra.mxu0 %v3148
        %v3204 = vpop.f32.mrf.mxu0
        %v3205 = vadd.f32 0.0, %v3204
        %v3206 = vpop.f32.mrf.mxu0
        %v3207 = vadd.f32 0.0, %v3206
        %3208 = vmatmul.bf16.gmra.mxu0 %v3151
        %v3209 = vpop.f32.mrf.mxu0
        %v3210 = vadd.f32 0.0, %v3209
        %v3211 = vpop.f32.mrf.mxu0
        %v3212 = vadd.f32 0.0, %v3211
        %3213 = vmatmul.bf16.gmra.mxu0 %v3154
        %v3214 = vpop.f32.mrf.mxu0
        %v3215 = vadd.f32 0.0, %v3214
        %v3216 = vpop.f32.mrf.mxu0
        %v3217 = vadd.f32 0.0, %v3216
        %3218 = vmatmul.bf16.gmra.mxu0 %v3157
        %v3219 = vpop.f32.mrf.mxu0
        %v3220 = vadd.f32 0.0, %v3219
        %v3221 = vpop.f32.mrf.mxu0
        %v3222 = vadd.f32 0.0, %v3221
        %3223 = vmatmul.bf16.gmra.mxu0 %v3160
        %v3224 = vpop.f32.mrf.mxu0
        %v3225 = vadd.f32 0.0, %v3224
        %v3226 = vpop.f32.mrf.mxu0
        %v3227 = vadd.f32 0.0, %v3226
        %3228 = vmatmul.bf16.gmra.mxu0 %v3163
        %v3229 = vpop.f32.mrf.mxu0
        %v3230 = vadd.f32 0.0, %v3229
        %v3231 = vpop.f32.mrf.mxu0
        %v3232 = vadd.f32 0.0, %v3231
        %3233 = vmatmul.bf16.gmra.mxu0 %v3166
        %v3234 = vpop.f32.mrf.mxu0
        %v3235 = vadd.f32 0.0, %v3234
        %v3236 = vpop.f32.mrf.mxu0
        %v3237 = vadd.f32 0.0, %v3236
        %3238 = vmatmul.bf16.gmra.mxu0 %v3169
        %v3239 = vpop.f32.mrf.mxu0
        %v3240 = vadd.f32 0.0, %v3239
        %v3241 = vpop.f32.mrf.mxu0
        %v3242 = vadd.f32 0.0, %v3241
        %3243 = vmatmul.bf16.gmra.mxu0 %v3172
        %v3244 = vpop.f32.mrf.mxu0
        %v3245 = vadd.f32 0.0, %v3244
        %v3246 = vpop.f32.mrf.mxu0
        %v3247 = vadd.f32 0.0, %v3246
        %3248 = vmatmul.bf16.gmra.mxu0 %v3175
        %v3249 = vpop.f32.mrf.mxu0
        %v3250 = vadd.f32 0.0, %v3249
        %v3251 = vpop.f32.mrf.mxu0
        %v3252 = vadd.f32 0.0, %v3251
        %3253 = vmatmul.bf16.gmra.mxu0 %v3178
        %v3254 = vpop.f32.mrf.mxu0
        %v3255 = vadd.f32 0.0, %v3254
        %v3256 = vpop.f32.mrf.mxu0
        %v3257 = vadd.f32 0.0, %v3256
        %3258 = vmatmul.bf16.gmra.mxu0 %v3181
        %v3259 = vpop.f32.mrf.mxu0
        %v3260 = vadd.f32 0.0, %v3259
        %v3261 = vpop.f32.mrf.mxu0
        %v3262 = vadd.f32 0.0, %v3261
        %3263 = vmatmul.bf16.gmra.mxu0 %v3184
        %v3264 = vpop.f32.mrf.mxu0
        %v3265 = vadd.f32 0.0, %v3264
        %v3266 = vpop.f32.mrf.mxu0
        %v3267 = vadd.f32 0.0, %v3266
        %3268 = vmatmul.bf16.gmra.mxu0 %v3187
        %v3269 = vpop.f32.mrf.mxu0
        %v3270 = vadd.f32 0.0, %v3269
        %v3271 = vpop.f32.mrf.mxu0
        %v3272 = vadd.f32 0.0, %v3271
        %3273 = vmatmul.bf16.gmra.mxu0 %v3190
        %v3274 = vpop.f32.mrf.mxu0
        %v3275 = vadd.f32 0.0, %v3274
        %v3276 = vpop.f32.mrf.mxu0
        %v3277 = vadd.f32 0.0, %v3276
        %3278 = vmatmul.bf16.gmra.mxu0 %v3193
        %v3279 = vpop.f32.mrf.mxu0
        %v3280 = vadd.f32 0.0, %v3279
        %v3281 = vpop.f32.mrf.mxu0
        %v3282 = vadd.f32 0.0, %v3281
        %3283 = vdwg.mxu0
        %v3284 = vadd.f32 %v2961, %v3205
        %v3285 = vadd.f32 %v2962, %v3207
        %v3286 = vadd.f32 %v2963, %v3210
        %v3287 = vadd.f32 %v2964, %v3212
        %v3288 = vadd.f32 %v2965, %v3215
        %v3289 = vadd.f32 %v2966, %v3217
        %v3290 = vadd.f32 %v2967, %v3220
        %v3291 = vadd.f32 %v2968, %v3222
        %v3292 = vadd.f32 %v2969, %v3225
        %v3293 = vadd.f32 %v2970, %v3227
        %v3294 = vadd.f32 %v2971, %v3230
        %v3295 = vadd.f32 %v2972, %v3232
        %v3296 = vadd.f32 %v2973, %v3235
        %v3297 = vadd.f32 %v2974, %v3237
        %v3298 = vadd.f32 %v2975, %v3240
        %v3299 = vadd.f32 %v2976, %v3242
        %v3300 = vadd.f32 %v2977, %v3245
        %v3301 = vadd.f32 %v2978, %v3247
        %v3302 = vadd.f32 %v2979, %v3250
        %v3303 = vadd.f32 %v2980, %v3252
        %v3304 = vadd.f32 %v2981, %v3255
        %v3305 = vadd.f32 %v2982, %v3257
        %v3306 = vadd.f32 %v2983, %v3260
        %v3307 = vadd.f32 %v2984, %v3262
        %v3308 = vadd.f32 %v2985, %v3265
        %v3309 = vadd.f32 %v2986, %v3267
        %v3310 = vadd.f32 %v2987, %v3270
        %v3311 = vadd.f32 %v2988, %v3272
        %v3312 = vadd.f32 %v2989, %v3275
        %v3313 = vadd.f32 %v2990, %v3277
        %v3314 = vadd.f32 %v2991, %v3280
        %v3315 = vadd.f32 %v2992, %v3282
        %v3316 = vld [vmem:[%s2] sm:$0x1]
        %v3318 = vperm.slane %v3316, 0
        %v3320 = vadd.f32 %v3284, %v3318
        %v3321 = vadd.f32 %v3285, %v3318
        %v3322 = vadd.f32 %v3286, %v3318
        %v3323 = vadd.f32 %v3287, %v3318
        %v3324 = vadd.f32 %v3288, %v3318
        %v3325 = vadd.f32 %v3289, %v3318
        %v3326 = vadd.f32 %v3290, %v3318
        %v3327 = vadd.f32 %v3291, %v3318
        %v3328 = vadd.f32 %v3292, %v3318
        %v3329 = vadd.f32 %v3293, %v3318
        %v3330 = vadd.f32 %v3294, %v3318
        %v3331 = vadd.f32 %v3295, %v3318
        %v3332 = vadd.f32 %v3296, %v3318
        %v3333 = vadd.f32 %v3297, %v3318
        %v3334 = vadd.f32 %v3298, %v3318
        %v3335 = vadd.f32 %v3299, %v3318
        %v3336 = vadd.f32 %v3300, %v3318
        %v3337 = vadd.f32 %v3301, %v3318
        %v3338 = vadd.f32 %v3302, %v3318
        %v3339 = vadd.f32 %v3303, %v3318
        %v3340 = vadd.f32 %v3304, %v3318
        %v3341 = vadd.f32 %v3305, %v3318
        %v3342 = vadd.f32 %v3306, %v3318
        %v3343 = vadd.f32 %v3307, %v3318
        %v3344 = vadd.f32 %v3308, %v3318
        %v3345 = vadd.f32 %v3309, %v3318
        %v3346 = vadd.f32 %v3310, %v3318
        %v3347 = vadd.f32 %v3311, %v3318
        %v3348 = vadd.f32 %v3312, %v3318
        %v3349 = vadd.f32 %v3313, %v3318
        %v3350 = vadd.f32 %v3314, %v3318
        %v3351 = vadd.f32 %v3315, %v3318
        %v3352 = vmax.f32 %v3320, 0.0
        %v3353 = vmax.f32 %v3321, 0.0
        %v3354 = vmax.f32 %v3322, 0.0
        %v3355 = vmax.f32 %v3323, 0.0
        %v3356 = vmax.f32 %v3324, 0.0
        %v3357 = vmax.f32 %v3325, 0.0
        %v3358 = vmax.f32 %v3326, 0.0
        %v3359 = vmax.f32 %v3327, 0.0
        %v3360 = vmax.f32 %v3328, 0.0
        %v3361 = vmax.f32 %v3329, 0.0
        %v3362 = vmax.f32 %v3330, 0.0
        %v3363 = vmax.f32 %v3331, 0.0
        %v3364 = vmax.f32 %v3332, 0.0
        %v3365 = vmax.f32 %v3333, 0.0
        %v3366 = vmax.f32 %v3334, 0.0
        %v3367 = vmax.f32 %v3335, 0.0
        %v3368 = vmax.f32 %v3336, 0.0
        %v3369 = vmax.f32 %v3337, 0.0
        %v3370 = vmax.f32 %v3338, 0.0
        %v3371 = vmax.f32 %v3339, 0.0
        %v3372 = vmax.f32 %v3340, 0.0
        %v3373 = vmax.f32 %v3341, 0.0
        %v3374 = vmax.f32 %v3342, 0.0
        %v3375 = vmax.f32 %v3343, 0.0
        %v3376 = vmax.f32 %v3344, 0.0
        %v3377 = vmax.f32 %v3345, 0.0
        %v3378 = vmax.f32 %v3346, 0.0
        %v3379 = vmax.f32 %v3347, 0.0
        %v3380 = vmax.f32 %v3348, 0.0
        %v3381 = vmax.f32 %v3349, 0.0
        %v3382 = vmax.f32 %v3350, 0.0
        %v3383 = vmax.f32 %v3351, 0.0
        %s3384 = scalar_lea.vmem [#allocation3], 24
        %3385 = vst.msk [vmem:[%s3384 + $0x1] sm:$0xff] %vm278, %v3352
        %3386 = vst.msk [vmem:[%s3384 + $0x9] sm:$0xff] %vm278, %v3353
        %3387 = vst.msk [vmem:[%s3384 + $0x19] sm:$0xff] %vm278, %v3354
        %3388 = vst.msk [vmem:[%s3384 + $0x21] sm:$0xff] %vm278, %v3355
        %3389 = vst.msk [vmem:[%s3384 + $0x31] sm:$0xff] %vm278, %v3356
        %3390 = vst.msk [vmem:[%s3384 + $0x39] sm:$0xff] %vm278, %v3357
        %3391 = vst.msk [vmem:[%s3384 + $0x49] sm:$0xff] %vm278, %v3358
        %3392 = vst.msk [vmem:[%s3384 + $0x51] sm:$0xff] %vm278, %v3359
        %3393 = vst.msk [vmem:[%s3384 + $0x61] sm:$0xff] %vm278, %v3360
        %3394 = vst.msk [vmem:[%s3384 + $0x69] sm:$0xff] %vm278, %v3361
        %3395 = vst.msk [vmem:[%s3384 + $0x79] sm:$0xff] %vm278, %v3362
        %3396 = vst.msk [vmem:[%s3384 + $0x81] sm:$0xff] %vm278, %v3363
        %3397 = vst.msk [vmem:[%s3384 + $0x91] sm:$0xff] %vm278, %v3364
        %3398 = vst.msk [vmem:[%s3384 + $0x99] sm:$0xff] %vm278, %v3365
        %3399 = vst.msk [vmem:[%s3384 + $0xa9] sm:$0xff] %vm278, %v3366
        %3400 = vst.msk [vmem:[%s3384 + $0xb1] sm:$0xff] %vm278, %v3367
        %3401 = vst.msk [vmem:[%s3384 + $0xc1] sm:$0xff] %vm278, %v3368
        %3402 = vst.msk [vmem:[%s3384 + $0xc9] sm:$0xff] %vm278, %v3369
        %3403 = vst.msk [vmem:[%s3384 + $0xd9] sm:$0xff] %vm278, %v3370
        %3404 = vst.msk [vmem:[%s3384 + $0xe1] sm:$0xff] %vm278, %v3371
        %3405 = vst.msk [vmem:[%s3384 + $0xf1] sm:$0xff] %vm278, %v3372
        %3406 = vst.msk [vmem:[%s3384 + $0xf9] sm:$0xff] %vm278, %v3373
        %3407 = vst.msk [vmem:[%s3384 + $0x109] sm:$0xff] %vm278, %v3374
        %3408 = vst.msk [vmem:[%s3384 + $0x111] sm:$0xff] %vm278, %v3375
        %3409 = vst.msk [vmem:[%s3384 + $0x121] sm:$0xff] %vm278, %v3376
        %3410 = vst.msk [vmem:[%s3384 + $0x129] sm:$0xff] %vm278, %v3377
        %3411 = vst.msk [vmem:[%s3384 + $0x139] sm:$0xff] %vm278, %v3378
        %3412 = vst.msk [vmem:[%s3384 + $0x141] sm:$0xff] %vm278, %v3379
        %3413 = vst.msk [vmem:[%s3384 + $0x151] sm:$0xff] %vm278, %v3380
        %3414 = vst.msk [vmem:[%s3384 + $0x159] sm:$0xff] %vm278, %v3381
        %3415 = vst.msk [vmem:[%s3384 + $0x169] sm:$0xff] %vm278, %v3382
        %3416 = vst.msk [vmem:[%s3384 + $0x171] sm:$0xff] %vm278, %v3383
        %v3417 = vld [vmem:[#allocation3] sm:$0xff]
        %v3418 = vld [vmem:[#allocation3 + $0x8] sm:$0xff]
        %v3419 = vld [vmem:[#allocation3 + $0x18] sm:$0xff]
        %v3420 = vld [vmem:[#allocation3 + $0x20] sm:$0xff]
        %v3421 = vld [vmem:[#allocation3 + $0x30] sm:$0xff]
        %v3422 = vld [vmem:[#allocation3 + $0x38] sm:$0xff]
        %v3423 = vld [vmem:[#allocation3 + $0x48] sm:$0xff]
        %v3424 = vld [vmem:[#allocation3 + $0x50] sm:$0xff]
        %v3425 = vld [vmem:[#allocation3 + $0x60] sm:$0xff]
        %v3426 = vld [vmem:[#allocation3 + $0x68] sm:$0xff]
        %v3427 = vld [vmem:[#allocation3 + $0x78] sm:$0xff]
        %v3428 = vld [vmem:[#allocation3 + $0x80] sm:$0xff]
        %v3429 = vld [vmem:[#allocation3 + $0x90] sm:$0xff]
        %v3430 = vld [vmem:[#allocation3 + $0x98] sm:$0xff]
        %v3431 = vld [vmem:[#allocation3 + $0xa8] sm:$0xff]
        %v3432 = vld [vmem:[#allocation3 + $0xb0] sm:$0xff]
        %v3433 = vld [vmem:[#allocation3 + $0xc0] sm:$0xff]
        %v3434 = vld [vmem:[#allocation3 + $0xc8] sm:$0xff]
        %v3435 = vld [vmem:[#allocation3 + $0xd8] sm:$0xff]
        %v3436 = vld [vmem:[#allocation3 + $0xe0] sm:$0xff]
        %v3437 = vld [vmem:[#allocation3 + $0xf0] sm:$0xff]
        %v3438 = vld [vmem:[#allocation3 + $0xf8] sm:$0xff]
        %v3439 = vld [vmem:[#allocation3 + $0x108] sm:$0xff]
        %v3440 = vld [vmem:[#allocation3 + $0x110] sm:$0xff]
        %v3441 = vld [vmem:[#allocation3 + $0x120] sm:$0xff]
        %v3442 = vld [vmem:[#allocation3 + $0x128] sm:$0xff]
        %v3443 = vld [vmem:[#allocation3 + $0x138] sm:$0xff]
        %v3444 = vld [vmem:[#allocation3 + $0x140] sm:$0xff]
        %v3445 = vld [vmem:[#allocation3 + $0x150] sm:$0xff]
        %v3446 = vld [vmem:[#allocation3 + $0x158] sm:$0xff]
        %v3447 = vld [vmem:[#allocation3 + $0x168] sm:$0xff]
        %v3448 = vld [vmem:[#allocation3 + $0x170] sm:$0xff]
        %v3449 = vld [vmem:[#allocation3 + $0x180] sm:$0xff]
        %v3450 = vld [vmem:[#allocation3 + $0x188] sm:$0xff]
        %v3451 = vld [vmem:[#allocation3 + $0x198] sm:$0xff]
        %v3452 = vld [vmem:[#allocation3 + $0x1a0] sm:$0xff]
        %v3453 = vpack.c.bf16 %v3417, %v3417
        %v3454 = vpack.c.bf16 %v3418, %v3418
        %v3455 = vpack.c.bf16 %v3419, %v3419
        %v3456 = vpack.c.bf16 %v3420, %v3420
        %v3457 = vpack.c.bf16 %v3421, %v3421
        %v3458 = vpack.c.bf16 %v3422, %v3422
        %v3459 = vpack.c.bf16 %v3423, %v3423
        %v3460 = vpack.c.bf16 %v3424, %v3424
        %v3461 = vpack.c.bf16 %v3425, %v3425
        %v3462 = vpack.c.bf16 %v3426, %v3426
        %v3463 = vpack.c.bf16 %v3427, %v3427
        %v3464 = vpack.c.bf16 %v3428, %v3428
        %v3465 = vpack.c.bf16 %v3429, %v3429
        %v3466 = vpack.c.bf16 %v3430, %v3430
        %v3467 = vpack.c.bf16 %v3431, %v3431
        %v3468 = vpack.c.bf16 %v3432, %v3432
        %v3469 = vpack.c.bf16 %v3433, %v3433
        %v3470 = vpack.c.bf16 %v3434, %v3434
        %v3471 = vpack.c.bf16 %v3435, %v3435
        %v3472 = vpack.c.bf16 %v3436, %v3436
        %v3473 = vpack.c.bf16 %v3437, %v3437
        %v3474 = vpack.c.bf16 %v3438, %v3438
        %v3475 = vpack.c.bf16 %v3439, %v3439
        %v3476 = vpack.c.bf16 %v3440, %v3440
        %v3477 = vpack.c.bf16 %v3441, %v3441
        %v3478 = vpack.c.bf16 %v3442, %v3442
        %v3479 = vpack.c.bf16 %v3443, %v3443
        %v3480 = vpack.c.bf16 %v3444, %v3444
        %v3481 = vpack.c.bf16 %v3445, %v3445
        %v3482 = vpack.c.bf16 %v3446, %v3446
        %v3483 = vpack.c.bf16 %v3447, %v3447
        %v3484 = vpack.c.bf16 %v3448, %v3448
        %v3485 = vpack.c.bf16 %v3449, %v3449
        %v3486 = vpack.c.bf16 %v3450, %v3450
        %v3487 = vpack.c.bf16 %v3451, %v3451
        %v3488 = vpack.c.bf16 %v3452, %v3452
        %3489 = vst.msk [vmem:[#allocation5] sm:$0xf] %vm281, %v3453
        %3490 = vst.msk [vmem:[#allocation5 + $0x8] sm:$0xf] %vm281, %v3454
        %3491 = vst.msk [vmem:[#allocation5 + $0x10] sm:$0xf] %vm281, %v3455
        %3492 = vst.msk [vmem:[#allocation5 + $0x18] sm:$0xf] %vm281, %v3456
        %3493 = vst.msk [vmem:[#allocation5 + $0x20] sm:$0xf] %vm281, %v3457
        %3494 = vst.msk [vmem:[#allocation5 + $0x28] sm:$0xf] %vm281, %v3458
        %3495 = vst.msk [vmem:[#allocation5 + $0x30] sm:$0xf] %vm281, %v3459
        %3496 = vst.msk [vmem:[#allocation5 + $0x38] sm:$0xf] %vm281, %v3460
        %3497 = vst.msk [vmem:[#allocation5 + $0x40] sm:$0xf] %vm281, %v3461
        %3498 = vst.msk [vmem:[#allocation5 + $0x48] sm:$0xf] %vm281, %v3462
        %3499 = vst.msk [vmem:[#allocation5 + $0x50] sm:$0xf] %vm281, %v3463
        %3500 = vst.msk [vmem:[#allocation5 + $0x58] sm:$0xf] %vm281, %v3464
        %3501 = vst.msk [vmem:[#allocation5 + $0x60] sm:$0xf] %vm281, %v3465
        %3502 = vst.msk [vmem:[#allocation5 + $0x68] sm:$0xf] %vm281, %v3466
        %3503 = vst.msk [vmem:[#allocation5 + $0x70] sm:$0xf] %vm281, %v3467
        %3504 = vst.msk [vmem:[#allocation5 + $0x78] sm:$0xf] %vm281, %v3468
        %3505 = vst.msk [vmem:[#allocation5 + $0x80] sm:$0xf] %vm281, %v3469
        %3506 = vst.msk [vmem:[#allocation5 + $0x88] sm:$0xf] %vm281, %v3470
        %3507 = vst.msk [vmem:[#allocation5 + $0x90] sm:$0xf] %vm281, %v3471
        %3508 = vst.msk [vmem:[#allocation5 + $0x98] sm:$0xf] %vm281, %v3472
        %3509 = vst.msk [vmem:[#allocation5 + $0xa0] sm:$0xf] %vm281, %v3473
        %3510 = vst.msk [vmem:[#allocation5 + $0xa8] sm:$0xf] %vm281, %v3474
        %3511 = vst.msk [vmem:[#allocation5 + $0xb0] sm:$0xf] %vm281, %v3475
        %3512 = vst.msk [vmem:[#allocation5 + $0xb8] sm:$0xf] %vm281, %v3476
        %3513 = vst.msk [vmem:[#allocation5 + $0xc0] sm:$0xf] %vm281, %v3477
        %3514 = vst.msk [vmem:[#allocation5 + $0xc8] sm:$0xf] %vm281, %v3478
        %3515 = vst.msk [vmem:[#allocation5 + $0xd0] sm:$0xf] %vm281, %v3479
        %3516 = vst.msk [vmem:[#allocation5 + $0xd8] sm:$0xf] %vm281, %v3480
        %3517 = vst.msk [vmem:[#allocation5 + $0xe0] sm:$0xf] %vm281, %v3481
        %3518 = vst.msk [vmem:[#allocation5 + $0xe8] sm:$0xf] %vm281, %v3482
        %3519 = vst.msk [vmem:[#allocation5 + $0xf0] sm:$0xf] %vm281, %v3483
        %3520 = vst.msk [vmem:[#allocation5 + $0xf8] sm:$0xf] %vm281, %v3484
        %3521 = vst.msk [vmem:[#allocation5 + $0x100] sm:$0xf] %vm281, %v3485
        %3522 = vst.msk [vmem:[#allocation5 + $0x108] sm:$0xf] %vm281, %v3486
        %3523 = vst.msk [vmem:[#allocation5 + $0x110] sm:$0xf] %vm281, %v3487
        %3524 = vst.msk [vmem:[#allocation5 + $0x118] sm:$0xf] %vm281, %v3488
        %v3525 = vld [vmem:[#allocation3 + $0x1] sm:$0xff]
        %v3526 = vld [vmem:[#allocation3 + $0x9] sm:$0xff]
        %v3527 = vld [vmem:[#allocation3 + $0x19] sm:$0xff]
        %v3528 = vld [vmem:[#allocation3 + $0x21] sm:$0xff]
        %v3529 = vld [vmem:[#allocation3 + $0x31] sm:$0xff]
        %v3530 = vld [vmem:[#allocation3 + $0x39] sm:$0xff]
        %v3531 = vld [vmem:[#allocation3 + $0x49] sm:$0xff]
        %v3532 = vld [vmem:[#allocation3 + $0x51] sm:$0xff]
        %v3533 = vld [vmem:[#allocation3 + $0x61] sm:$0xff]
        %v3534 = vld [vmem:[#allocation3 + $0x69] sm:$0xff]
        %v3535 = vld [vmem:[#allocation3 + $0x79] sm:$0xff]
        %v3536 = vld [vmem:[#allocation3 + $0x81] sm:$0xff]
        %v3537 = vld [vmem:[#allocation3 + $0x91] sm:$0xff]
        %v3538 = vld [vmem:[#allocation3 + $0x99] sm:$0xff]
        %v3539 = vld [vmem:[#allocation3 + $0xa9] sm:$0xff]
        %v3540 = vld [vmem:[#allocation3 + $0xb1] sm:$0xff]
        %v3541 = vld [vmem:[#allocation3 + $0xc1] sm:$0xff]
        %v3542 = vld [vmem:[#allocation3 + $0xc9] sm:$0xff]
        %v3543 = vld [vmem:[#allocation3 + $0xd9] sm:$0xff]
        %v3544 = vld [vmem:[#allocation3 + $0xe1] sm:$0xff]
        %v3545 = vld [vmem:[#allocation3 + $0xf1] sm:$0xff]
        %v3546 = vld [vmem:[#allocation3 + $0xf9] sm:$0xff]
        %v3547 = vld [vmem:[#allocation3 + $0x109] sm:$0xff]
        %v3548 = vld [vmem:[#allocation3 + $0x111] sm:$0xff]
        %v3549 = vld [vmem:[#allocation3 + $0x121] sm:$0xff]
        %v3550 = vld [vmem:[#allocation3 + $0x129] sm:$0xff]
        %v3551 = vld [vmem:[#allocation3 + $0x139] sm:$0xff]
        %v3552 = vld [vmem:[#allocation3 + $0x141] sm:$0xff]
        %v3553 = vld [vmem:[#allocation3 + $0x151] sm:$0xff]
        %v3554 = vld [vmem:[#allocation3 + $0x159] sm:$0xff]
        %v3555 = vld [vmem:[#allocation3 + $0x169] sm:$0xff]
        %v3556 = vld [vmem:[#allocation3 + $0x171] sm:$0xff]
        %v3557 = vld [vmem:[#allocation3 + $0x181] sm:$0xff]
        %v3558 = vld [vmem:[#allocation3 + $0x189] sm:$0xff]
        %v3559 = vld [vmem:[#allocation3 + $0x199] sm:$0xff]
        %v3560 = vld [vmem:[#allocation3 + $0x1a1] sm:$0xff]
        %v3561 = vpack.c.bf16 %v3525, %v3525
        %v3562 = vpack.c.bf16 %v3526, %v3526
        %v3563 = vpack.c.bf16 %v3527, %v3527
        %v3564 = vpack.c.bf16 %v3528, %v3528
        %v3565 = vpack.c.bf16 %v3529, %v3529
        %v3566 = vpack.c.bf16 %v3530, %v3530
        %v3567 = vpack.c.bf16 %v3531, %v3531
        %v3568 = vpack.c.bf16 %v3532, %v3532
        %v3569 = vpack.c.bf16 %v3533, %v3533
        %v3570 = vpack.c.bf16 %v3534, %v3534
        %v3571 = vpack.c.bf16 %v3535, %v3535
        %v3572 = vpack.c.bf16 %v3536, %v3536
        %v3573 = vpack.c.bf16 %v3537, %v3537
        %v3574 = vpack.c.bf16 %v3538, %v3538
        %v3575 = vpack.c.bf16 %v3539, %v3539
        %v3576 = vpack.c.bf16 %v3540, %v3540
        %v3577 = vpack.c.bf16 %v3541, %v3541
        %v3578 = vpack.c.bf16 %v3542, %v3542
        %v3579 = vpack.c.bf16 %v3543, %v3543
        %v3580 = vpack.c.bf16 %v3544, %v3544
        %v3581 = vpack.c.bf16 %v3545, %v3545
        %v3582 = vpack.c.bf16 %v3546, %v3546
        %v3583 = vpack.c.bf16 %v3547, %v3547
        %v3584 = vpack.c.bf16 %v3548, %v3548
        %v3585 = vpack.c.bf16 %v3549, %v3549
        %v3586 = vpack.c.bf16 %v3550, %v3550
        %v3587 = vpack.c.bf16 %v3551, %v3551
        %v3588 = vpack.c.bf16 %v3552, %v3552
        %v3589 = vpack.c.bf16 %v3553, %v3553
        %v3590 = vpack.c.bf16 %v3554, %v3554
        %v3591 = vpack.c.bf16 %v3555, %v3555
        %v3592 = vpack.c.bf16 %v3556, %v3556
        %v3593 = vpack.c.bf16 %v3557, %v3557
        %v3594 = vpack.c.bf16 %v3558, %v3558
        %v3595 = vpack.c.bf16 %v3559, %v3559
        %v3596 = vpack.c.bf16 %v3560, %v3560
        %3633 = vrot.lane.b32.xlu0 %v3561, 16
        %v3634 = vpop.permute.xlu0 %3633
        %3635 = vrot.lane.b32.xlu0 %v3562, 16
        %v3636 = vpop.permute.xlu0 %3635
        %3637 = vrot.lane.b32.xlu0 %v3563, 16
        %v3638 = vpop.permute.xlu0 %3637
        %3639 = vrot.lane.b32.xlu0 %v3564, 16
        %v3640 = vpop.permute.xlu0 %3639
        %3641 = vrot.lane.b32.xlu0 %v3565, 16
        %v3642 = vpop.permute.xlu0 %3641
        %3643 = vrot.lane.b32.xlu0 %v3566, 16
        %v3644 = vpop.permute.xlu0 %3643
        %3645 = vrot.lane.b32.xlu0 %v3567, 16
        %v3646 = vpop.permute.xlu0 %3645
        %3647 = vrot.lane.b32.xlu0 %v3568, 16
        %v3648 = vpop.permute.xlu0 %3647
        %3649 = vrot.lane.b32.xlu0 %v3569, 16
        %v3650 = vpop.permute.xlu0 %3649
        %3651 = vrot.lane.b32.xlu0 %v3570, 16
        %v3652 = vpop.permute.xlu0 %3651
        %3653 = vrot.lane.b32.xlu0 %v3571, 16
        %v3654 = vpop.permute.xlu0 %3653
        %3655 = vrot.lane.b32.xlu0 %v3572, 16
        %v3656 = vpop.permute.xlu0 %3655
        %3657 = vrot.lane.b32.xlu0 %v3573, 16
        %v3658 = vpop.permute.xlu0 %3657
        %3659 = vrot.lane.b32.xlu0 %v3574, 16
        %v3660 = vpop.permute.xlu0 %3659
        %3661 = vrot.lane.b32.xlu0 %v3575, 16
        %v3662 = vpop.permute.xlu0 %3661
        %3663 = vrot.lane.b32.xlu0 %v3576, 16
        %v3664 = vpop.permute.xlu0 %3663
        %3665 = vrot.lane.b32.xlu0 %v3577, 16
        %v3666 = vpop.permute.xlu0 %3665
        %3667 = vrot.lane.b32.xlu0 %v3578, 16
        %v3668 = vpop.permute.xlu0 %3667
        %3669 = vrot.lane.b32.xlu0 %v3579, 16
        %v3670 = vpop.permute.xlu0 %3669
        %3671 = vrot.lane.b32.xlu0 %v3580, 16
        %v3672 = vpop.permute.xlu0 %3671
        %3673 = vrot.lane.b32.xlu0 %v3581, 16
        %v3674 = vpop.permute.xlu0 %3673
        %3675 = vrot.lane.b32.xlu0 %v3582, 16
        %v3676 = vpop.permute.xlu0 %3675
        %3677 = vrot.lane.b32.xlu0 %v3583, 16
        %v3678 = vpop.permute.xlu0 %3677
        %3679 = vrot.lane.b32.xlu0 %v3584, 16
        %v3680 = vpop.permute.xlu0 %3679
        %3681 = vrot.lane.b32.xlu0 %v3585, 16
        %v3682 = vpop.permute.xlu0 %3681
        %3683 = vrot.lane.b32.xlu0 %v3586, 16
        %v3684 = vpop.permute.xlu0 %3683
        %3685 = vrot.lane.b32.xlu0 %v3587, 16
        %v3686 = vpop.permute.xlu0 %3685
        %3687 = vrot.lane.b32.xlu0 %v3588, 16
        %v3688 = vpop.permute.xlu0 %3687
        %3689 = vrot.lane.b32.xlu0 %v3589, 16
        %v3690 = vpop.permute.xlu0 %3689
        %3691 = vrot.lane.b32.xlu0 %v3590, 16
        %v3692 = vpop.permute.xlu0 %3691
        %3693 = vrot.lane.b32.xlu0 %v3591, 16
        %v3694 = vpop.permute.xlu0 %3693
        %3695 = vrot.lane.b32.xlu0 %v3592, 16
        %v3696 = vpop.permute.xlu0 %3695
        %3697 = vrot.lane.b32.xlu0 %v3593, 16
        %v3698 = vpop.permute.xlu0 %3697
        %3699 = vrot.lane.b32.xlu0 %v3594, 16
        %v3700 = vpop.permute.xlu0 %3699
        %3701 = vrot.lane.b32.xlu0 %v3595, 16
        %v3702 = vpop.permute.xlu0 %3701
        %3703 = vrot.lane.b32.xlu0 %v3596, 16
        %v3704 = vpop.permute.xlu0 %3703
        %3741 = vst.msk [vmem:[#allocation5] sm:$0xf] %vm882, %v3634
        %3742 = vst.msk [vmem:[#allocation5 + $0x8] sm:$0xf] %vm882, %v3636
        %3743 = vst.msk [vmem:[#allocation5 + $0x10] sm:$0xf] %vm882, %v3638
        %3744 = vst.msk [vmem:[#allocation5 + $0x18] sm:$0xf] %vm882, %v3640
        %3745 = vst.msk [vmem:[#allocation5 + $0x20] sm:$0xf] %vm882, %v3642
        %3746 = vst.msk [vmem:[#allocation5 + $0x28] sm:$0xf] %vm882, %v3644
        %3747 = vst.msk [vmem:[#allocation5 + $0x30] sm:$0xf] %vm882, %v3646
        %3748 = vst.msk [vmem:[#allocation5 + $0x38] sm:$0xf] %vm882, %v3648
        %3749 = vst.msk [vmem:[#allocation5 + $0x40] sm:$0xf] %vm882, %v3650
        %3750 = vst.msk [vmem:[#allocation5 + $0x48] sm:$0xf] %vm882, %v3652
        %3751 = vst.msk [vmem:[#allocation5 + $0x50] sm:$0xf] %vm882, %v3654
        %3752 = vst.msk [vmem:[#allocation5 + $0x58] sm:$0xf] %vm882, %v3656
        %3753 = vst.msk [vmem:[#allocation5 + $0x60] sm:$0xf] %vm882, %v3658
        %3754 = vst.msk [vmem:[#allocation5 + $0x68] sm:$0xf] %vm882, %v3660
        %3755 = vst.msk [vmem:[#allocation5 + $0x70] sm:$0xf] %vm882, %v3662
        %3756 = vst.msk [vmem:[#allocation5 + $0x78] sm:$0xf] %vm882, %v3664
        %3757 = vst.msk [vmem:[#allocation5 + $0x80] sm:$0xf] %vm882, %v3666
        %3758 = vst.msk [vmem:[#allocation5 + $0x88] sm:$0xf] %vm882, %v3668
        %3759 = vst.msk [vmem:[#allocation5 + $0x90] sm:$0xf] %vm882, %v3670
        %3760 = vst.msk [vmem:[#allocation5 + $0x98] sm:$0xf] %vm882, %v3672
        %3761 = vst.msk [vmem:[#allocation5 + $0xa0] sm:$0xf] %vm882, %v3674
        %3762 = vst.msk [vmem:[#allocation5 + $0xa8] sm:$0xf] %vm882, %v3676
        %3763 = vst.msk [vmem:[#allocation5 + $0xb0] sm:$0xf] %vm882, %v3678
        %3764 = vst.msk [vmem:[#allocation5 + $0xb8] sm:$0xf] %vm882, %v3680
        %3765 = vst.msk [vmem:[#allocation5 + $0xc0] sm:$0xf] %vm882, %v3682
        %3766 = vst.msk [vmem:[#allocation5 + $0xc8] sm:$0xf] %vm882, %v3684
        %3767 = vst.msk [vmem:[#allocation5 + $0xd0] sm:$0xf] %vm882, %v3686
        %3768 = vst.msk [vmem:[#allocation5 + $0xd8] sm:$0xf] %vm882, %v3688
        %3769 = vst.msk [vmem:[#allocation5 + $0xe0] sm:$0xf] %vm882, %v3690
        %3770 = vst.msk [vmem:[#allocation5 + $0xe8] sm:$0xf] %vm882, %v3692
        %3771 = vst.msk [vmem:[#allocation5 + $0xf0] sm:$0xf] %vm882, %v3694
        %3772 = vst.msk [vmem:[#allocation5 + $0xf8] sm:$0xf] %vm882, %v3696
        %3773 = vst.msk [vmem:[#allocation5 + $0x100] sm:$0xf] %vm882, %v3698
        %3774 = vst.msk [vmem:[#allocation5 + $0x108] sm:$0xf] %vm882, %v3700
        %3775 = vst.msk [vmem:[#allocation5 + $0x110] sm:$0xf] %vm882, %v3702
        %3776 = vst.msk [vmem:[#allocation5 + $0x118] sm:$0xf] %vm882, %v3704
        %v3777 = vld [vmem:[#allocation3 + $0x2] sm:$0xff]
        %v3778 = vld [vmem:[#allocation3 + $0xa] sm:$0xff]
        %v3779 = vld [vmem:[#allocation3 + $0x1a] sm:$0xff]
        %v3780 = vld [vmem:[#allocation3 + $0x22] sm:$0xff]
        %v3781 = vld [vmem:[#allocation3 + $0x32] sm:$0xff]
        %v3782 = vld [vmem:[#allocation3 + $0x3a] sm:$0xff]
        %v3783 = vld [vmem:[#allocation3 + $0x4a] sm:$0xff]
        %v3784 = vld [vmem:[#allocation3 + $0x52] sm:$0xff]
        %v3785 = vld [vmem:[#allocation3 + $0x62] sm:$0xff]
        %v3786 = vld [vmem:[#allocation3 + $0x6a] sm:$0xff]
        %v3787 = vld [vmem:[#allocation3 + $0x7a] sm:$0xff]
        %v3788 = vld [vmem:[#allocation3 + $0x82] sm:$0xff]
        %v3789 = vld [vmem:[#allocation3 + $0x92] sm:$0xff]
        %v3790 = vld [vmem:[#allocation3 + $0x9a] sm:$0xff]
        %v3791 = vld [vmem:[#allocation3 + $0xaa] sm:$0xff]
        %v3792 = vld [vmem:[#allocation3 + $0xb2] sm:$0xff]
        %v3793 = vld [vmem:[#allocation3 + $0xc2] sm:$0xff]
        %v3794 = vld [vmem:[#allocation3 + $0xca] sm:$0xff]
        %v3795 = vld [vmem:[#allocation3 + $0xda] sm:$0xff]
        %v3796 = vld [vmem:[#allocation3 + $0xe2] sm:$0xff]
        %v3797 = vld [vmem:[#allocation3 + $0xf2] sm:$0xff]
        %v3798 = vld [vmem:[#allocation3 + $0xfa] sm:$0xff]
        %v3799 = vld [vmem:[#allocation3 + $0x10a] sm:$0xff]
        %v3800 = vld [vmem:[#allocation3 + $0x112] sm:$0xff]
        %v3801 = vld [vmem:[#allocation3 + $0x122] sm:$0xff]
        %v3802 = vld [vmem:[#allocation3 + $0x12a] sm:$0xff]
        %v3803 = vld [vmem:[#allocation3 + $0x13a] sm:$0xff]
        %v3804 = vld [vmem:[#allocation3 + $0x142] sm:$0xff]
        %v3805 = vld [vmem:[#allocation3 + $0x152] sm:$0xff]
        %v3806 = vld [vmem:[#allocation3 + $0x15a] sm:$0xff]
        %v3807 = vld [vmem:[#allocation3 + $0x16a] sm:$0xff]
        %v3808 = vld [vmem:[#allocation3 + $0x172] sm:$0xff]
        %v3809 = vld [vmem:[#allocation3 + $0x182] sm:$0xff]
        %v3810 = vld [vmem:[#allocation3 + $0x18a] sm:$0xff]
        %v3811 = vld [vmem:[#allocation3 + $0x19a] sm:$0xff]
        %v3812 = vld [vmem:[#allocation3 + $0x1a2] sm:$0xff]
        %v3813 = vpack.c.bf16 %v3777, %v3777
        %v3814 = vpack.c.bf16 %v3778, %v3778
        %v3815 = vpack.c.bf16 %v3779, %v3779
        %v3816 = vpack.c.bf16 %v3780, %v3780
        %v3817 = vpack.c.bf16 %v3781, %v3781
        %v3818 = vpack.c.bf16 %v3782, %v3782
        %v3819 = vpack.c.bf16 %v3783, %v3783
        %v3820 = vpack.c.bf16 %v3784, %v3784
        %v3821 = vpack.c.bf16 %v3785, %v3785
        %v3822 = vpack.c.bf16 %v3786, %v3786
        %v3823 = vpack.c.bf16 %v3787, %v3787
        %v3824 = vpack.c.bf16 %v3788, %v3788
        %v3825 = vpack.c.bf16 %v3789, %v3789
        %v3826 = vpack.c.bf16 %v3790, %v3790
        %v3827 = vpack.c.bf16 %v3791, %v3791
        %v3828 = vpack.c.bf16 %v3792, %v3792
        %v3829 = vpack.c.bf16 %v3793, %v3793
        %v3830 = vpack.c.bf16 %v3794, %v3794
        %v3831 = vpack.c.bf16 %v3795, %v3795
        %v3832 = vpack.c.bf16 %v3796, %v3796
        %v3833 = vpack.c.bf16 %v3797, %v3797
        %v3834 = vpack.c.bf16 %v3798, %v3798
        %v3835 = vpack.c.bf16 %v3799, %v3799
        %v3836 = vpack.c.bf16 %v3800, %v3800
        %v3837 = vpack.c.bf16 %v3801, %v3801
        %v3838 = vpack.c.bf16 %v3802, %v3802
        %v3839 = vpack.c.bf16 %v3803, %v3803
        %v3840 = vpack.c.bf16 %v3804, %v3804
        %v3841 = vpack.c.bf16 %v3805, %v3805
        %v3842 = vpack.c.bf16 %v3806, %v3806
        %v3843 = vpack.c.bf16 %v3807, %v3807
        %v3844 = vpack.c.bf16 %v3808, %v3808
        %v3845 = vpack.c.bf16 %v3809, %v3809
        %v3846 = vpack.c.bf16 %v3810, %v3810
        %v3847 = vpack.c.bf16 %v3811, %v3811
        %v3848 = vpack.c.bf16 %v3812, %v3812
        %3885 = vrot.lane.b32.xlu0 %v3813, 32
        %v3886 = vpop.permute.xlu0 %3885
        %3887 = vrot.lane.b32.xlu0 %v3814, 32
        %v3888 = vpop.permute.xlu0 %3887
        %3889 = vrot.lane.b32.xlu0 %v3815, 32
        %v3890 = vpop.permute.xlu0 %3889
        %3891 = vrot.lane.b32.xlu0 %v3816, 32
        %v3892 = vpop.permute.xlu0 %3891
        %3893 = vrot.lane.b32.xlu0 %v3817, 32
        %v3894 = vpop.permute.xlu0 %3893
        %3895 = vrot.lane.b32.xlu0 %v3818, 32
        %v3896 = vpop.permute.xlu0 %3895
        %3897 = vrot.lane.b32.xlu0 %v3819, 32
        %v3898 = vpop.permute.xlu0 %3897
        %3899 = vrot.lane.b32.xlu0 %v3820, 32
        %v3900 = vpop.permute.xlu0 %3899
        %3901 = vrot.lane.b32.xlu0 %v3821, 32
        %v3902 = vpop.permute.xlu0 %3901
        %3903 = vrot.lane.b32.xlu0 %v3822, 32
        %v3904 = vpop.permute.xlu0 %3903
        %3905 = vrot.lane.b32.xlu0 %v3823, 32
        %v3906 = vpop.permute.xlu0 %3905
        %3907 = vrot.lane.b32.xlu0 %v3824, 32
        %v3908 = vpop.permute.xlu0 %3907
        %3909 = vrot.lane.b32.xlu0 %v3825, 32
        %v3910 = vpop.permute.xlu0 %3909
        %3911 = vrot.lane.b32.xlu0 %v3826, 32
        %v3912 = vpop.permute.xlu0 %3911
        %3913 = vrot.lane.b32.xlu0 %v3827, 32
        %v3914 = vpop.permute.xlu0 %3913
        %3915 = vrot.lane.b32.xlu0 %v3828, 32
        %v3916 = vpop.permute.xlu0 %3915
        %3917 = vrot.lane.b32.xlu0 %v3829, 32
        %v3918 = vpop.permute.xlu0 %3917
        %3919 = vrot.lane.b32.xlu0 %v3830, 32
        %v3920 = vpop.permute.xlu0 %3919
        %3921 = vrot.lane.b32.xlu0 %v3831, 32
        %v3922 = vpop.permute.xlu0 %3921
        %3923 = vrot.lane.b32.xlu0 %v3832, 32
        %v3924 = vpop.permute.xlu0 %3923
        %3925 = vrot.lane.b32.xlu0 %v3833, 32
        %v3926 = vpop.permute.xlu0 %3925
        %3927 = vrot.lane.b32.xlu0 %v3834, 32
        %v3928 = vpop.permute.xlu0 %3927
        %3929 = vrot.lane.b32.xlu0 %v3835, 32
        %v3930 = vpop.permute.xlu0 %3929
        %3931 = vrot.lane.b32.xlu0 %v3836, 32
        %v3932 = vpop.permute.xlu0 %3931
        %3933 = vrot.lane.b32.xlu0 %v3837, 32
        %v3934 = vpop.permute.xlu0 %3933
        %3935 = vrot.lane.b32.xlu0 %v3838, 32
        %v3936 = vpop.permute.xlu0 %3935
        %3937 = vrot.lane.b32.xlu0 %v3839, 32
        %v3938 = vpop.permute.xlu0 %3937
        %3939 = vrot.lane.b32.xlu0 %v3840, 32
        %v3940 = vpop.permute.xlu0 %3939
        %3941 = vrot.lane.b32.xlu0 %v3841, 32
        %v3942 = vpop.permute.xlu0 %3941
        %3943 = vrot.lane.b32.xlu0 %v3842, 32
        %v3944 = vpop.permute.xlu0 %3943
        %3945 = vrot.lane.b32.xlu0 %v3843, 32
        %v3946 = vpop.permute.xlu0 %3945
        %3947 = vrot.lane.b32.xlu0 %v3844, 32
        %v3948 = vpop.permute.xlu0 %3947
        %3949 = vrot.lane.b32.xlu0 %v3845, 32
        %v3950 = vpop.permute.xlu0 %3949
        %3951 = vrot.lane.b32.xlu0 %v3846, 32
        %v3952 = vpop.permute.xlu0 %3951
        %3953 = vrot.lane.b32.xlu0 %v3847, 32
        %v3954 = vpop.permute.xlu0 %3953
        %3955 = vrot.lane.b32.xlu0 %v3848, 32
        %v3956 = vpop.permute.xlu0 %3955
        %3993 = vst.msk [vmem:[#allocation5] sm:$0xf] %vm1163, %v3886
        %3994 = vst.msk [vmem:[#allocation5 + $0x8] sm:$0xf] %vm1163, %v3888
        %3995 = vst.msk [vmem:[#allocation5 + $0x10] sm:$0xf] %vm1163, %v3890
        %3996 = vst.msk [vmem:[#allocation5 + $0x18] sm:$0xf] %vm1163, %v3892
        %3997 = vst.msk [vmem:[#allocation5 + $0x20] sm:$0xf] %vm1163, %v3894
        %3998 = vst.msk [vmem:[#allocation5 + $0x28] sm:$0xf] %vm1163, %v3896
        %3999 = vst.msk [vmem:[#allocation5 + $0x30] sm:$0xf] %vm1163, %v3898
        %4000 = vst.msk [vmem:[#allocation5 + $0x38] sm:$0xf] %vm1163, %v3900
        %4001 = vst.msk [vmem:[#allocation5 + $0x40] sm:$0xf] %vm1163, %v3902
        %4002 = vst.msk [vmem:[#allocation5 + $0x48] sm:$0xf] %vm1163, %v3904
        %4003 = vst.msk [vmem:[#allocation5 + $0x50] sm:$0xf] %vm1163, %v3906
        %4004 = vst.msk [vmem:[#allocation5 + $0x58] sm:$0xf] %vm1163, %v3908
        %4005 = vst.msk [vmem:[#allocation5 + $0x60] sm:$0xf] %vm1163, %v3910
        %4006 = vst.msk [vmem:[#allocation5 + $0x68] sm:$0xf] %vm1163, %v3912
        %4007 = vst.msk [vmem:[#allocation5 + $0x70] sm:$0xf] %vm1163, %v3914
        %4008 = vst.msk [vmem:[#allocation5 + $0x78] sm:$0xf] %vm1163, %v3916
        %4009 = vst.msk [vmem:[#allocation5 + $0x80] sm:$0xf] %vm1163, %v3918
        %4010 = vst.msk [vmem:[#allocation5 + $0x88] sm:$0xf] %vm1163, %v3920
        %4011 = vst.msk [vmem:[#allocation5 + $0x90] sm:$0xf] %vm1163, %v3922
        %4012 = vst.msk [vmem:[#allocation5 + $0x98] sm:$0xf] %vm1163, %v3924
        %4013 = vst.msk [vmem:[#allocation5 + $0xa0] sm:$0xf] %vm1163, %v3926
        %4014 = vst.msk [vmem:[#allocation5 + $0xa8] sm:$0xf] %vm1163, %v3928
        %4015 = vst.msk [vmem:[#allocation5 + $0xb0] sm:$0xf] %vm1163, %v3930
        %4016 = vst.msk [vmem:[#allocation5 + $0xb8] sm:$0xf] %vm1163, %v3932
        %4017 = vst.msk [vmem:[#allocation5 + $0xc0] sm:$0xf] %vm1163, %v3934
        %4018 = vst.msk [vmem:[#allocation5 + $0xc8] sm:$0xf] %vm1163, %v3936
        %4019 = vst.msk [vmem:[#allocation5 + $0xd0] sm:$0xf] %vm1163, %v3938
        %4020 = vst.msk [vmem:[#allocation5 + $0xd8] sm:$0xf] %vm1163, %v3940
        %4021 = vst.msk [vmem:[#allocation5 + $0xe0] sm:$0xf] %vm1163, %v3942
        %4022 = vst.msk [vmem:[#allocation5 + $0xe8] sm:$0xf] %vm1163, %v3944
        %4023 = vst.msk [vmem:[#allocation5 + $0xf0] sm:$0xf] %vm1163, %v3946
        %4024 = vst.msk [vmem:[#allocation5 + $0xf8] sm:$0xf] %vm1163, %v3948
        %4025 = vst.msk [vmem:[#allocation5 + $0x100] sm:$0xf] %vm1163, %v3950
        %4026 = vst.msk [vmem:[#allocation5 + $0x108] sm:$0xf] %vm1163, %v3952
        %4027 = vst.msk [vmem:[#allocation5 + $0x110] sm:$0xf] %vm1163, %v3954
        %4028 = vst.msk [vmem:[#allocation5 + $0x118] sm:$0xf] %vm1163, %v3956
        %v4029 = vld [vmem:[#allocation5] sm:$0xf]
        %v4030 = vld [vmem:[#allocation5 + $0x8] sm:$0xf]
        %v4031 = vld [vmem:[#allocation5 + $0x10] sm:$0xf]
        %v4032 = vld [vmem:[#allocation5 + $0x18] sm:$0xf]
        %v4033 = vld [vmem:[#allocation5 + $0x20] sm:$0xf]
        %v4034 = vld [vmem:[#allocation5 + $0x28] sm:$0xf]
        %v4035 = vld [vmem:[#allocation5 + $0x30] sm:$0xf]
        %v4036 = vld [vmem:[#allocation5 + $0x38] sm:$0xf]
        %v4037 = vld [vmem:[#allocation5 + $0x40] sm:$0xf]
        %v4038 = vld [vmem:[#allocation5 + $0x48] sm:$0xf]
        %v4039 = vld [vmem:[#allocation5 + $0x50] sm:$0xf]
        %v4040 = vld [vmem:[#allocation5 + $0x58] sm:$0xf]
        %v4041 = vld [vmem:[#allocation5 + $0x60] sm:$0xf]
        %v4042 = vld [vmem:[#allocation5 + $0x68] sm:$0xf]
        %v4043 = vld [vmem:[#allocation5 + $0x70] sm:$0xf]
        %v4044 = vld [vmem:[#allocation5 + $0x78] sm:$0xf]
        %v4045 = vld [vmem:[#allocation5 + $0x80] sm:$0xf]
        %v4046 = vld [vmem:[#allocation5 + $0x88] sm:$0xf]
        %v4047 = vld [vmem:[#allocation5 + $0x90] sm:$0xf]
        %v4048 = vld [vmem:[#allocation5 + $0x98] sm:$0xf]
        %v4049 = vld [vmem:[#allocation5 + $0xa0] sm:$0xf]
        %v4050 = vld [vmem:[#allocation5 + $0xa8] sm:$0xf]
        %v4051 = vld [vmem:[#allocation5 + $0xb0] sm:$0xf]
        %v4052 = vld [vmem:[#allocation5 + $0xb8] sm:$0xf]
        %v4053 = vld [vmem:[#allocation5 + $0xc0] sm:$0xf]
        %v4054 = vld [vmem:[#allocation5 + $0xc8] sm:$0xf]
        %v4055 = vld [vmem:[#allocation5 + $0xd0] sm:$0xf]
        %v4056 = vld [vmem:[#allocation5 + $0xd8] sm:$0xf]
        %v4057 = vld [vmem:[#allocation5 + $0xe0] sm:$0xf]
        %v4058 = vld [vmem:[#allocation5 + $0xe8] sm:$0xf]
        %v4059 = vld [vmem:[#allocation5 + $0xf0] sm:$0xf]
        %v4060 = vld [vmem:[#allocation5 + $0xf8] sm:$0xf]
        %v4061 = vld [vmem:[%s3] sm:$0xf]
        %v4062 = vld [vmem:[%s3 + $0x4] sm:$0xf]
        %v4063 = vld [vmem:[%s3 + $0x8] sm:$0xf]
        %v4064 = vld [vmem:[%s3 + $0xc] sm:$0xf]
        %v4065 = vld [vmem:[%s3 + $0x10] sm:$0xf]
        %v4066 = vld [vmem:[%s3 + $0x14] sm:$0xf]
        %v4067 = vld [vmem:[%s1808] sm:$0xf]
        %v4068 = vld [vmem:[%s1808 + $0x8] sm:$0xf]
        %v4069 = vld [vmem:[%s1808 + $0x10] sm:$0xf]
        %v4070 = vld [vmem:[%s1808 + $0x18] sm:$0xf]
        %v4071 = vld [vmem:[%s1808 + $0x20] sm:$0xf]
        %v4072 = vld [vmem:[%s1808 + $0x28] sm:$0xf]
        %v4073 = vld [vmem:[%s1808 + $0x30] sm:$0xf]
        %v4074 = vld [vmem:[%s1808 + $0x38] sm:$0xf]
        %v4075 = vld [vmem:[%s1808 + $0x40] sm:$0xf]
        %v4076 = vld [vmem:[%s1808 + $0x48] sm:$0xf]
        %v4077 = vld [vmem:[%s1808 + $0x50] sm:$0xf]
        %v4078 = vld [vmem:[%s1808 + $0x58] sm:$0xf]
        %v4079 = vld [vmem:[%s1808 + $0x60] sm:$0xf]
        %v4080 = vld [vmem:[%s1808 + $0x68] sm:$0xf]
        %v4081 = vld [vmem:[%s1808 + $0x70] sm:$0xf]
        %v4082 = vld [vmem:[%s1808 + $0x78] sm:$0xf]
        %v4083 = vld [vmem:[%s1808 + $0x80] sm:$0xf]
        %v4084 = vld [vmem:[%s1808 + $0x88] sm:$0xf]
        %v4085 = vld [vmem:[%s1808 + $0x90] sm:$0xf]
        %v4086 = vld [vmem:[%s1808 + $0x98] sm:$0xf]
        %v4087 = vld [vmem:[%s1808 + $0xa0] sm:$0xf]
        %v4088 = vld [vmem:[%s1808 + $0xa8] sm:$0xf]
        %v4089 = vld [vmem:[%s1808 + $0xb0] sm:$0xf]
        %v4090 = vld [vmem:[%s1808 + $0xb8] sm:$0xf]
        %v4091 = vld [vmem:[%s1808 + $0xc0] sm:$0xf]
        %v4092 = vld [vmem:[%s1808 + $0xc8] sm:$0xf]
        %v4093 = vld [vmem:[%s1808 + $0xd0] sm:$0xf]
        %v4094 = vld [vmem:[%s1808 + $0xd8] sm:$0xf]
        %v4095 = vld [vmem:[%s1808 + $0xe0] sm:$0xf]
        %v4096 = vld [vmem:[%s1808 + $0xe8] sm:$0xf]
        %v4097 = vld [vmem:[%s1808 + $0xf0] sm:$0xf]
        %v4098 = vld [vmem:[%s1808 + $0xf8] sm:$0xf]
        %s4099 = scalar_lea.vmem %s3, 24
        %v4100 = vld [vmem:[%s4099] sm:$0xf]
        %v4101 = vld [vmem:[%s4099 + $0x4] sm:$0xf]
        %v4102 = vld [vmem:[%s4099 + $0x8] sm:$0xf]
        %v4103 = vld [vmem:[%s4099 + $0xc] sm:$0xf]
        %v4104 = vld [vmem:[%s4099 + $0x10] sm:$0xf]
        %v4105 = vld [vmem:[%s4099 + $0x14] sm:$0xf]
        %v4138 = vunpack.c.l.b16 %v4067
        %v4139 = vunpack.c.l.b16 %v4068
        %v4140 = vunpack.c.l.b16 %v4069
        %v4141 = vunpack.c.l.b16 %v4070
        %v4142 = vunpack.c.l.b16 %v4071
        %v4143 = vunpack.c.l.b16 %v4072
        %v4144 = vunpack.c.l.b16 %v4073
        %v4145 = vunpack.c.l.b16 %v4074
        %v4146 = vunpack.c.l.b16 %v4075
        %v4147 = vunpack.c.l.b16 %v4076
        %v4148 = vunpack.c.l.b16 %v4077
        %v4149 = vunpack.c.l.b16 %v4078
        %v4150 = vunpack.c.l.b16 %v4079
        %v4151 = vunpack.c.l.b16 %v4080
        %v4152 = vunpack.c.l.b16 %v4081
        %v4153 = vunpack.c.l.b16 %v4082
        %v4154 = vunpack.c.l.b16 %v4083
        %v4155 = vunpack.c.l.b16 %v4084
        %v4156 = vunpack.c.l.b16 %v4085
        %v4157 = vunpack.c.l.b16 %v4086
        %v4158 = vunpack.c.l.b16 %v4087
        %v4159 = vunpack.c.l.b16 %v4088
        %v4160 = vunpack.c.l.b16 %v4089
        %v4161 = vunpack.c.l.b16 %v4090
        %v4162 = vunpack.c.l.b16 %v4091
        %v4163 = vunpack.c.l.b16 %v4092
        %v4164 = vunpack.c.l.b16 %v4093
        %v4165 = vunpack.c.l.b16 %v4094
        %v4166 = vunpack.c.l.b16 %v4095
        %v4167 = vunpack.c.l.b16 %v4096
        %v4168 = vunpack.c.l.b16 %v4097
        %v4169 = vunpack.c.l.b16 %v4098
        %v4170 = vpack.c.b16 %v4139, %v4138
        %v4171 = vpack.c.b16 %v4141, %v4140
        %v4172 = vpack.c.b16 %v4143, %v4142
        %v4173 = vpack.c.b16 %v4145, %v4144
        %v4174 = vpack.c.b16 %v4147, %v4146
        %v4175 = vpack.c.b16 %v4149, %v4148
        %v4176 = vpack.c.b16 %v4151, %v4150
        %v4177 = vpack.c.b16 %v4153, %v4152
        %v4178 = vpack.c.b16 %v4155, %v4154
        %v4179 = vpack.c.b16 %v4157, %v4156
        %v4180 = vpack.c.b16 %v4159, %v4158
        %v4181 = vpack.c.b16 %v4161, %v4160
        %v4182 = vpack.c.b16 %v4163, %v4162
        %v4183 = vpack.c.b16 %v4165, %v4164
        %v4184 = vpack.c.b16 %v4167, %v4166
        %v4185 = vpack.c.b16 %v4169, %v4168
        %v4192 = vunpack.c.l.b16 %v4100
        %v4193 = vunpack.c.l.b16 %v4101
        %v4194 = vunpack.c.l.b16 %v4102
        %v4195 = vunpack.c.l.b16 %v4103
        %v4196 = vunpack.c.l.b16 %v4104
        %v4197 = vunpack.c.l.b16 %v4105
        %v4198 = vpack.c.b16 %v4193, %v4192
        %v4199 = vpack.c.b16 %v4195, %v4194
        %v4200 = vpack.c.b16 %v4197, %v4196
        %vm4204 = vcmask 392192
        %v4206 = vsel %vm4204, %v4170, 0
        %v4209 = vsel %vm4204, %v4171, 0
        %v4212 = vsel %vm4204, %v4172, 0
        %v4215 = vsel %vm4204, %v4173, 0
        %v4218 = vsel %vm4204, %v4174, 0
        %v4221 = vsel %vm4204, %v4175, 0
        %v4224 = vsel %vm4204, %v4176, 0
        %v4227 = vsel %vm4204, %v4177, 0
        %v4230 = vsel %vm4204, %v4178, 0
        %v4233 = vsel %vm4204, %v4179, 0
        %v4236 = vsel %vm4204, %v4180, 0
        %v4239 = vsel %vm4204, %v4181, 0
        %v4242 = vsel %vm4204, %v4182, 0
        %v4245 = vsel %vm4204, %v4183, 0
        %v4248 = vsel %vm4204, %v4184, 0
        %v4251 = vsel %vm4204, %v4185, 0
        %4253 = vmatpush.bf16.msra.mxu0 0
        %4254 = vmatpush.bf16.msra.mxu0 0
        %4255 = vmatpush.bf16.msra.mxu0 0
        %4256 = vmatpush.bf16.msra.mxu0 0
        %4257 = vmatpush.bf16.msra.mxu0 0
        %4258 = vmatpush.bf16.msra.mxu0 %v4200
        %4259 = vmatpush.bf16.msra.mxu0 %v4199
        %4260 = vmatpush.bf16.msra.mxu0 %v4198
        %4261 = vmatmul.bf16.gmra.mxu0 %v4206
        %v4262 = vpop.f32.mrf.mxu0
        %v4263 = vadd.f32 0.0, %v4262
        %v4264 = vpop.f32.mrf.mxu0
        %v4265 = vadd.f32 0.0, %v4264
        %4266 = vmatmul.bf16.gmra.mxu0 %v4209
        %v4267 = vpop.f32.mrf.mxu0
        %v4268 = vadd.f32 0.0, %v4267
        %v4269 = vpop.f32.mrf.mxu0
        %v4270 = vadd.f32 0.0, %v4269
        %4271 = vmatmul.bf16.gmra.mxu0 %v4212
        %v4272 = vpop.f32.mrf.mxu0
        %v4273 = vadd.f32 0.0, %v4272
        %v4274 = vpop.f32.mrf.mxu0
        %v4275 = vadd.f32 0.0, %v4274
        %4276 = vmatmul.bf16.gmra.mxu0 %v4215
        %v4277 = vpop.f32.mrf.mxu0
        %v4278 = vadd.f32 0.0, %v4277
        %v4279 = vpop.f32.mrf.mxu0
        %v4280 = vadd.f32 0.0, %v4279
        %4281 = vmatmul.bf16.gmra.mxu0 %v4218
        %v4282 = vpop.f32.mrf.mxu0
        %v4283 = vadd.f32 0.0, %v4282
        %v4284 = vpop.f32.mrf.mxu0
        %v4285 = vadd.f32 0.0, %v4284
        %4286 = vmatmul.bf16.gmra.mxu0 %v4221
        %v4287 = vpop.f32.mrf.mxu0
        %v4288 = vadd.f32 0.0, %v4287
        %v4289 = vpop.f32.mrf.mxu0
        %v4290 = vadd.f32 0.0, %v4289
        %4291 = vmatmul.bf16.gmra.mxu0 %v4224
        %v4292 = vpop.f32.mrf.mxu0
        %v4293 = vadd.f32 0.0, %v4292
        %v4294 = vpop.f32.mrf.mxu0
        %v4295 = vadd.f32 0.0, %v4294
        %4296 = vmatmul.bf16.gmra.mxu0 %v4227
        %v4297 = vpop.f32.mrf.mxu0
        %v4298 = vadd.f32 0.0, %v4297
        %v4299 = vpop.f32.mrf.mxu0
        %v4300 = vadd.f32 0.0, %v4299
        %4301 = vmatmul.bf16.gmra.mxu0 %v4230
        %v4302 = vpop.f32.mrf.mxu0
        %v4303 = vadd.f32 0.0, %v4302
        %v4304 = vpop.f32.mrf.mxu0
        %v4305 = vadd.f32 0.0, %v4304
        %4306 = vmatmul.bf16.gmra.mxu0 %v4233
        %v4307 = vpop.f32.mrf.mxu0
        %v4308 = vadd.f32 0.0, %v4307
        %v4309 = vpop.f32.mrf.mxu0
        %v4310 = vadd.f32 0.0, %v4309
        %4311 = vmatmul.bf16.gmra.mxu0 %v4236
        %v4312 = vpop.f32.mrf.mxu0
        %v4313 = vadd.f32 0.0, %v4312
        %v4314 = vpop.f32.mrf.mxu0
        %v4315 = vadd.f32 0.0, %v4314
        %4316 = vmatmul.bf16.gmra.mxu0 %v4239
        %v4317 = vpop.f32.mrf.mxu0
        %v4318 = vadd.f32 0.0, %v4317
        %v4319 = vpop.f32.mrf.mxu0
        %v4320 = vadd.f32 0.0, %v4319
        %4321 = vmatmul.bf16.gmra.mxu0 %v4242
        %v4322 = vpop.f32.mrf.mxu0
        %v4323 = vadd.f32 0.0, %v4322
        %v4324 = vpop.f32.mrf.mxu0
        %v4325 = vadd.f32 0.0, %v4324
        %4326 = vmatmul.bf16.gmra.mxu0 %v4245
        %v4327 = vpop.f32.mrf.mxu0
        %v4328 = vadd.f32 0.0, %v4327
        %v4329 = vpop.f32.mrf.mxu0
        %v4330 = vadd.f32 0.0, %v4329
        %4331 = vmatmul.bf16.gmra.mxu0 %v4248
        %v4332 = vpop.f32.mrf.mxu0
        %v4333 = vadd.f32 0.0, %v4332
        %v4334 = vpop.f32.mrf.mxu0
        %v4335 = vadd.f32 0.0, %v4334
        %4336 = vmatmul.bf16.gmra.mxu0 %v4251
        %v4337 = vpop.f32.mrf.mxu0
        %v4338 = vadd.f32 0.0, %v4337
        %v4339 = vpop.f32.mrf.mxu0
        %v4340 = vadd.f32 0.0, %v4339
        %4341 = vdwg.mxu0
        %v4374 = vunpack.c.l.b16 %v4029
        %v4375 = vunpack.c.l.b16 %v4030
        %v4376 = vunpack.c.l.b16 %v4031
        %v4377 = vunpack.c.l.b16 %v4032
        %v4378 = vunpack.c.l.b16 %v4033
        %v4379 = vunpack.c.l.b16 %v4034
        %v4380 = vunpack.c.l.b16 %v4035
        %v4381 = vunpack.c.l.b16 %v4036
        %v4382 = vunpack.c.l.b16 %v4037
        %v4383 = vunpack.c.l.b16 %v4038
        %v4384 = vunpack.c.l.b16 %v4039
        %v4385 = vunpack.c.l.b16 %v4040
        %v4386 = vunpack.c.l.b16 %v4041
        %v4387 = vunpack.c.l.b16 %v4042
        %v4388 = vunpack.c.l.b16 %v4043
        %v4389 = vunpack.c.l.b16 %v4044
        %v4390 = vunpack.c.l.b16 %v4045
        %v4391 = vunpack.c.l.b16 %v4046
        %v4392 = vunpack.c.l.b16 %v4047
        %v4393 = vunpack.c.l.b16 %v4048
        %v4394 = vunpack.c.l.b16 %v4049
        %v4395 = vunpack.c.l.b16 %v4050
        %v4396 = vunpack.c.l.b16 %v4051
        %v4397 = vunpack.c.l.b16 %v4052
        %v4398 = vunpack.c.l.b16 %v4053
        %v4399 = vunpack.c.l.b16 %v4054
        %v4400 = vunpack.c.l.b16 %v4055
        %v4401 = vunpack.c.l.b16 %v4056
        %v4402 = vunpack.c.l.b16 %v4057
        %v4403 = vunpack.c.l.b16 %v4058
        %v4404 = vunpack.c.l.b16 %v4059
        %v4405 = vunpack.c.l.b16 %v4060
        %v4406 = vpack.c.b16 %v4375, %v4374
        %v4407 = vpack.c.b16 %v4377, %v4376
        %v4408 = vpack.c.b16 %v4379, %v4378
        %v4409 = vpack.c.b16 %v4381, %v4380
        %v4410 = vpack.c.b16 %v4383, %v4382
        %v4411 = vpack.c.b16 %v4385, %v4384
        %v4412 = vpack.c.b16 %v4387, %v4386
        %v4413 = vpack.c.b16 %v4389, %v4388
        %v4414 = vpack.c.b16 %v4391, %v4390
        %v4415 = vpack.c.b16 %v4393, %v4392
        %v4416 = vpack.c.b16 %v4395, %v4394
        %v4417 = vpack.c.b16 %v4397, %v4396
        %v4418 = vpack.c.b16 %v4399, %v4398
        %v4419 = vpack.c.b16 %v4401, %v4400
        %v4420 = vpack.c.b16 %v4403, %v4402
        %v4421 = vpack.c.b16 %v4405, %v4404
        %v4428 = vunpack.c.l.b16 %v4061
        %v4429 = vunpack.c.l.b16 %v4062
        %v4430 = vunpack.c.l.b16 %v4063
        %v4431 = vunpack.c.l.b16 %v4064
        %v4432 = vunpack.c.l.b16 %v4065
        %v4433 = vunpack.c.l.b16 %v4066
        %v4434 = vpack.c.b16 %v4429, %v4428
        %v4435 = vpack.c.b16 %v4431, %v4430
        %v4436 = vpack.c.b16 %v4433, %v4432
        %v4441 = vsel %vm4204, %v4406, 0
        %v4444 = vsel %vm4204, %v4407, 0
        %v4447 = vsel %vm4204, %v4408, 0
        %v4450 = vsel %vm4204, %v4409, 0
        %v4453 = vsel %vm4204, %v4410, 0
        %v4456 = vsel %vm4204, %v4411, 0
        %v4459 = vsel %vm4204, %v4412, 0
        %v4462 = vsel %vm4204, %v4413, 0
        %v4465 = vsel %vm4204, %v4414, 0
        %v4468 = vsel %vm4204, %v4415, 0
        %v4471 = vsel %vm4204, %v4416, 0
        %v4474 = vsel %vm4204, %v4417, 0
        %v4477 = vsel %vm4204, %v4418, 0
        %v4480 = vsel %vm4204, %v4419, 0
        %v4483 = vsel %vm4204, %v4420, 0
        %v4486 = vsel %vm4204, %v4421, 0
        %4488 = vmatpush.bf16.msra.mxu0 0
        %4489 = vmatpush.bf16.msra.mxu0 0
        %4490 = vmatpush.bf16.msra.mxu0 0
        %4491 = vmatpush.bf16.msra.mxu0 0
        %4492 = vmatpush.bf16.msra.mxu0 0
        %4493 = vmatpush.bf16.msra.mxu0 %v4436
        %4494 = vmatpush.bf16.msra.mxu0 %v4435
        %4495 = vmatpush.bf16.msra.mxu0 %v4434
        %4496 = vmatmul.bf16.gmra.mxu0 %v4441
        %v4497 = vpop.f32.mrf.mxu0
        %v4498 = vadd.f32 %v4263, %v4497
        %v4499 = vpop.f32.mrf.mxu0
        %v4500 = vadd.f32 %v4265, %v4499
        %4501 = vmatmul.bf16.gmra.mxu0 %v4444
        %v4502 = vpop.f32.mrf.mxu0
        %v4503 = vadd.f32 %v4268, %v4502
        %v4504 = vpop.f32.mrf.mxu0
        %v4505 = vadd.f32 %v4270, %v4504
        %4506 = vmatmul.bf16.gmra.mxu0 %v4447
        %v4507 = vpop.f32.mrf.mxu0
        %v4508 = vadd.f32 %v4273, %v4507
        %v4509 = vpop.f32.mrf.mxu0
        %v4510 = vadd.f32 %v4275, %v4509
        %4511 = vmatmul.bf16.gmra.mxu0 %v4450
        %v4512 = vpop.f32.mrf.mxu0
        %v4513 = vadd.f32 %v4278, %v4512
        %v4514 = vpop.f32.mrf.mxu0
        %v4515 = vadd.f32 %v4280, %v4514
        %4516 = vmatmul.bf16.gmra.mxu0 %v4453
        %v4517 = vpop.f32.mrf.mxu0
        %v4518 = vadd.f32 %v4283, %v4517
        %v4519 = vpop.f32.mrf.mxu0
        %v4520 = vadd.f32 %v4285, %v4519
        %4521 = vmatmul.bf16.gmra.mxu0 %v4456
        %v4522 = vpop.f32.mrf.mxu0
        %v4523 = vadd.f32 %v4288, %v4522
        %v4524 = vpop.f32.mrf.mxu0
        %v4525 = vadd.f32 %v4290, %v4524
        %4526 = vmatmul.bf16.gmra.mxu0 %v4459
        %v4527 = vpop.f32.mrf.mxu0
        %v4528 = vadd.f32 %v4293, %v4527
        %v4529 = vpop.f32.mrf.mxu0
        %v4530 = vadd.f32 %v4295, %v4529
        %4531 = vmatmul.bf16.gmra.mxu0 %v4462
        %v4532 = vpop.f32.mrf.mxu0
        %v4533 = vadd.f32 %v4298, %v4532
        %v4534 = vpop.f32.mrf.mxu0
        %v4535 = vadd.f32 %v4300, %v4534
        %4536 = vmatmul.bf16.gmra.mxu0 %v4465
        %v4537 = vpop.f32.mrf.mxu0
        %v4538 = vadd.f32 %v4303, %v4537
        %v4539 = vpop.f32.mrf.mxu0
        %v4540 = vadd.f32 %v4305, %v4539
        %4541 = vmatmul.bf16.gmra.mxu0 %v4468
        %v4542 = vpop.f32.mrf.mxu0
        %v4543 = vadd.f32 %v4308, %v4542
        %v4544 = vpop.f32.mrf.mxu0
        %v4545 = vadd.f32 %v4310, %v4544
        %4546 = vmatmul.bf16.gmra.mxu0 %v4471
        %v4547 = vpop.f32.mrf.mxu0
        %v4548 = vadd.f32 %v4313, %v4547
        %v4549 = vpop.f32.mrf.mxu0
        %v4550 = vadd.f32 %v4315, %v4549
        %4551 = vmatmul.bf16.gmra.mxu0 %v4474
        %v4552 = vpop.f32.mrf.mxu0
        %v4553 = vadd.f32 %v4318, %v4552
        %v4554 = vpop.f32.mrf.mxu0
        %v4555 = vadd.f32 %v4320, %v4554
        %4556 = vmatmul.bf16.gmra.mxu0 %v4477
        %v4557 = vpop.f32.mrf.mxu0
        %v4558 = vadd.f32 %v4323, %v4557
        %v4559 = vpop.f32.mrf.mxu0
        %v4560 = vadd.f32 %v4325, %v4559
        %4561 = vmatmul.bf16.gmra.mxu0 %v4480
        %v4562 = vpop.f32.mrf.mxu0
        %v4563 = vadd.f32 %v4328, %v4562
        %v4564 = vpop.f32.mrf.mxu0
        %v4565 = vadd.f32 %v4330, %v4564
        %4566 = vmatmul.bf16.gmra.mxu0 %v4483
        %v4567 = vpop.f32.mrf.mxu0
        %v4568 = vadd.f32 %v4333, %v4567
        %v4569 = vpop.f32.mrf.mxu0
        %v4570 = vadd.f32 %v4335, %v4569
        %4571 = vmatmul.bf16.gmra.mxu0 %v4486
        %v4572 = vpop.f32.mrf.mxu0
        %v4573 = vadd.f32 %v4338, %v4572
        %v4574 = vpop.f32.mrf.mxu0
        %v4575 = vadd.f32 %v4340, %v4574
        %4576 = vdwg.mxu0
        %v4577 = vld [vmem:[%s2347] sm:$0xf]
        %v4578 = vld [vmem:[%s2347 + $0x8] sm:$0xf]
        %v4579 = vld [vmem:[%s2347 + $0x10] sm:$0xf]
        %v4580 = vld [vmem:[%s2347 + $0x18] sm:$0xf]
        %v4581 = vld [vmem:[%s2347 + $0x20] sm:$0xf]
        %v4582 = vld [vmem:[%s2347 + $0x28] sm:$0xf]
        %v4583 = vld [vmem:[%s2347 + $0x30] sm:$0xf]
        %v4584 = vld [vmem:[%s2347 + $0x38] sm:$0xf]
        %v4585 = vld [vmem:[%s2347 + $0x40] sm:$0xf]
        %v4586 = vld [vmem:[%s2347 + $0x48] sm:$0xf]
        %v4587 = vld [vmem:[%s2347 + $0x50] sm:$0xf]
        %v4588 = vld [vmem:[%s2347 + $0x58] sm:$0xf]
        %v4589 = vld [vmem:[%s2347 + $0x60] sm:$0xf]
        %v4590 = vld [vmem:[%s2347 + $0x68] sm:$0xf]
        %v4591 = vld [vmem:[%s2347 + $0x70] sm:$0xf]
        %v4592 = vld [vmem:[%s2347 + $0x78] sm:$0xf]
        %v4593 = vld [vmem:[%s2347 + $0x80] sm:$0xf]
        %v4594 = vld [vmem:[%s2347 + $0x88] sm:$0xf]
        %v4595 = vld [vmem:[%s2347 + $0x90] sm:$0xf]
        %v4596 = vld [vmem:[%s2347 + $0x98] sm:$0xf]
        %v4597 = vld [vmem:[%s2347 + $0xa0] sm:$0xf]
        %v4598 = vld [vmem:[%s2347 + $0xa8] sm:$0xf]
        %v4599 = vld [vmem:[%s2347 + $0xb0] sm:$0xf]
        %v4600 = vld [vmem:[%s2347 + $0xb8] sm:$0xf]
        %v4601 = vld [vmem:[%s2347 + $0xc0] sm:$0xf]
        %v4602 = vld [vmem:[%s2347 + $0xc8] sm:$0xf]
        %v4603 = vld [vmem:[%s2347 + $0xd0] sm:$0xf]
        %v4604 = vld [vmem:[%s2347 + $0xd8] sm:$0xf]
        %v4605 = vld [vmem:[%s2347 + $0xe0] sm:$0xf]
        %v4606 = vld [vmem:[%s2347 + $0xe8] sm:$0xf]
        %v4607 = vld [vmem:[%s2347 + $0xf0] sm:$0xf]
        %v4608 = vld [vmem:[%s2347 + $0xf8] sm:$0xf]
        %s4609 = scalar_lea.vmem %s3, 48
        %v4610 = vld [vmem:[%s4609] sm:$0xf]
        %v4611 = vld [vmem:[%s4609 + $0x4] sm:$0xf]
        %v4612 = vld [vmem:[%s4609 + $0x8] sm:$0xf]
        %v4613 = vld [vmem:[%s4609 + $0xc] sm:$0xf]
        %v4614 = vld [vmem:[%s4609 + $0x10] sm:$0xf]
        %v4615 = vld [vmem:[%s4609 + $0x14] sm:$0xf]
        %v4648 = vunpack.c.l.b16 %v4577
        %v4649 = vunpack.c.l.b16 %v4578
        %v4650 = vunpack.c.l.b16 %v4579
        %v4651 = vunpack.c.l.b16 %v4580
        %v4652 = vunpack.c.l.b16 %v4581
        %v4653 = vunpack.c.l.b16 %v4582
        %v4654 = vunpack.c.l.b16 %v4583
        %v4655 = vunpack.c.l.b16 %v4584
        %v4656 = vunpack.c.l.b16 %v4585
        %v4657 = vunpack.c.l.b16 %v4586
        %v4658 = vunpack.c.l.b16 %v4587
        %v4659 = vunpack.c.l.b16 %v4588
        %v4660 = vunpack.c.l.b16 %v4589
        %v4661 = vunpack.c.l.b16 %v4590
        %v4662 = vunpack.c.l.b16 %v4591
        %v4663 = vunpack.c.l.b16 %v4592
        %v4664 = vunpack.c.l.b16 %v4593
        %v4665 = vunpack.c.l.b16 %v4594
        %v4666 = vunpack.c.l.b16 %v4595
        %v4667 = vunpack.c.l.b16 %v4596
        %v4668 = vunpack.c.l.b16 %v4597
        %v4669 = vunpack.c.l.b16 %v4598
        %v4670 = vunpack.c.l.b16 %v4599
        %v4671 = vunpack.c.l.b16 %v4600
        %v4672 = vunpack.c.l.b16 %v4601
        %v4673 = vunpack.c.l.b16 %v4602
        %v4674 = vunpack.c.l.b16 %v4603
        %v4675 = vunpack.c.l.b16 %v4604
        %v4676 = vunpack.c.l.b16 %v4605
        %v4677 = vunpack.c.l.b16 %v4606
        %v4678 = vunpack.c.l.b16 %v4607
        %v4679 = vunpack.c.l.b16 %v4608
        %v4680 = vpack.c.b16 %v4649, %v4648
        %v4681 = vpack.c.b16 %v4651, %v4650
        %v4682 = vpack.c.b16 %v4653, %v4652
        %v4683 = vpack.c.b16 %v4655, %v4654
        %v4684 = vpack.c.b16 %v4657, %v4656
        %v4685 = vpack.c.b16 %v4659, %v4658
        %v4686 = vpack.c.b16 %v4661, %v4660
        %v4687 = vpack.c.b16 %v4663, %v4662
        %v4688 = vpack.c.b16 %v4665, %v4664
        %v4689 = vpack.c.b16 %v4667, %v4666
        %v4690 = vpack.c.b16 %v4669, %v4668
        %v4691 = vpack.c.b16 %v4671, %v4670
        %v4692 = vpack.c.b16 %v4673, %v4672
        %v4693 = vpack.c.b16 %v4675, %v4674
        %v4694 = vpack.c.b16 %v4677, %v4676
        %v4695 = vpack.c.b16 %v4679, %v4678
        %v4702 = vunpack.c.l.b16 %v4610
        %v4703 = vunpack.c.l.b16 %v4611
        %v4704 = vunpack.c.l.b16 %v4612
        %v4705 = vunpack.c.l.b16 %v4613
        %v4706 = vunpack.c.l.b16 %v4614
        %v4707 = vunpack.c.l.b16 %v4615
        %v4708 = vpack.c.b16 %v4703, %v4702
        %v4709 = vpack.c.b16 %v4705, %v4704
        %v4710 = vpack.c.b16 %v4707, %v4706
        %v4715 = vsel %vm4204, %v4680, 0
        %v4718 = vsel %vm4204, %v4681, 0
        %v4721 = vsel %vm4204, %v4682, 0
        %v4724 = vsel %vm4204, %v4683, 0
        %v4727 = vsel %vm4204, %v4684, 0
        %v4730 = vsel %vm4204, %v4685, 0
        %v4733 = vsel %vm4204, %v4686, 0
        %v4736 = vsel %vm4204, %v4687, 0
        %v4739 = vsel %vm4204, %v4688, 0
        %v4742 = vsel %vm4204, %v4689, 0
        %v4745 = vsel %vm4204, %v4690, 0
        %v4748 = vsel %vm4204, %v4691, 0
        %v4751 = vsel %vm4204, %v4692, 0
        %v4754 = vsel %vm4204, %v4693, 0
        %v4757 = vsel %vm4204, %v4694, 0
        %v4760 = vsel %vm4204, %v4695, 0
        %4762 = vmatpush.bf16.msra.mxu0 0
        %4763 = vmatpush.bf16.msra.mxu0 0
        %4764 = vmatpush.bf16.msra.mxu0 0
        %4765 = vmatpush.bf16.msra.mxu0 0
        %4766 = vmatpush.bf16.msra.mxu0 0
        %4767 = vmatpush.bf16.msra.mxu0 %v4710
        %4768 = vmatpush.bf16.msra.mxu0 %v4709
        %4769 = vmatpush.bf16.msra.mxu0 %v4708
        %4770 = vmatmul.bf16.gmra.mxu0 %v4715
        %v4771 = vpop.f32.mrf.mxu0
        %v4772 = vadd.f32 0.0, %v4771
        %v4773 = vpop.f32.mrf.mxu0
        %v4774 = vadd.f32 0.0, %v4773
        %4775 = vmatmul.bf16.gmra.mxu0 %v4718
        %v4776 = vpop.f32.mrf.mxu0
        %v4777 = vadd.f32 0.0, %v4776
        %v4778 = vpop.f32.mrf.mxu0
        %v4779 = vadd.f32 0.0, %v4778
        %4780 = vmatmul.bf16.gmra.mxu0 %v4721
        %v4781 = vpop.f32.mrf.mxu0
        %v4782 = vadd.f32 0.0, %v4781
        %v4783 = vpop.f32.mrf.mxu0
        %v4784 = vadd.f32 0.0, %v4783
        %4785 = vmatmul.bf16.gmra.mxu0 %v4724
        %v4786 = vpop.f32.mrf.mxu0
        %v4787 = vadd.f32 0.0, %v4786
        %v4788 = vpop.f32.mrf.mxu0
        %v4789 = vadd.f32 0.0, %v4788
        %4790 = vmatmul.bf16.gmra.mxu0 %v4727
        %v4791 = vpop.f32.mrf.mxu0
        %v4792 = vadd.f32 0.0, %v4791
        %v4793 = vpop.f32.mrf.mxu0
        %v4794 = vadd.f32 0.0, %v4793
        %4795 = vmatmul.bf16.gmra.mxu0 %v4730
        %v4796 = vpop.f32.mrf.mxu0
        %v4797 = vadd.f32 0.0, %v4796
        %v4798 = vpop.f32.mrf.mxu0
        %v4799 = vadd.f32 0.0, %v4798
        %4800 = vmatmul.bf16.gmra.mxu0 %v4733
        %v4801 = vpop.f32.mrf.mxu0
        %v4802 = vadd.f32 0.0, %v4801
        %v4803 = vpop.f32.mrf.mxu0
        %v4804 = vadd.f32 0.0, %v4803
        %4805 = vmatmul.bf16.gmra.mxu0 %v4736
        %v4806 = vpop.f32.mrf.mxu0
        %v4807 = vadd.f32 0.0, %v4806
        %v4808 = vpop.f32.mrf.mxu0
        %v4809 = vadd.f32 0.0, %v4808
        %4810 = vmatmul.bf16.gmra.mxu0 %v4739
        %v4811 = vpop.f32.mrf.mxu0
        %v4812 = vadd.f32 0.0, %v4811
        %v4813 = vpop.f32.mrf.mxu0
        %v4814 = vadd.f32 0.0, %v4813
        %4815 = vmatmul.bf16.gmra.mxu0 %v4742
        %v4816 = vpop.f32.mrf.mxu0
        %v4817 = vadd.f32 0.0, %v4816
        %v4818 = vpop.f32.mrf.mxu0
        %v4819 = vadd.f32 0.0, %v4818
        %4820 = vmatmul.bf16.gmra.mxu0 %v4745
        %v4821 = vpop.f32.mrf.mxu0
        %v4822 = vadd.f32 0.0, %v4821
        %v4823 = vpop.f32.mrf.mxu0
        %v4824 = vadd.f32 0.0, %v4823
        %4825 = vmatmul.bf16.gmra.mxu0 %v4748
        %v4826 = vpop.f32.mrf.mxu0
        %v4827 = vadd.f32 0.0, %v4826
        %v4828 = vpop.f32.mrf.mxu0
        %v4829 = vadd.f32 0.0, %v4828
        %4830 = vmatmul.bf16.gmra.mxu0 %v4751
        %v4831 = vpop.f32.mrf.mxu0
        %v4832 = vadd.f32 0.0, %v4831
        %v4833 = vpop.f32.mrf.mxu0
        %v4834 = vadd.f32 0.0, %v4833
        %4835 = vmatmul.bf16.gmra.mxu0 %v4754
        %v4836 = vpop.f32.mrf.mxu0
        %v4837 = vadd.f32 0.0, %v4836
        %v4838 = vpop.f32.mrf.mxu0
        %v4839 = vadd.f32 0.0, %v4838
        %4840 = vmatmul.bf16.gmra.mxu0 %v4757
        %v4841 = vpop.f32.mrf.mxu0
        %v4842 = vadd.f32 0.0, %v4841
        %v4843 = vpop.f32.mrf.mxu0
        %v4844 = vadd.f32 0.0, %v4843
        %4845 = vmatmul.bf16.gmra.mxu0 %v4760
        %v4846 = vpop.f32.mrf.mxu0
        %v4847 = vadd.f32 0.0, %v4846
        %v4848 = vpop.f32.mrf.mxu0
        %v4849 = vadd.f32 0.0, %v4848
        %4850 = vdwg.mxu0
        %v4851 = vadd.f32 %v4498, %v4772
        %v4852 = vadd.f32 %v4500, %v4774
        %v4853 = vadd.f32 %v4503, %v4777
        %v4854 = vadd.f32 %v4505, %v4779
        %v4855 = vadd.f32 %v4508, %v4782
        %v4856 = vadd.f32 %v4510, %v4784
        %v4857 = vadd.f32 %v4513, %v4787
        %v4858 = vadd.f32 %v4515, %v4789
        %v4859 = vadd.f32 %v4518, %v4792
        %v4860 = vadd.f32 %v4520, %v4794
        %v4861 = vadd.f32 %v4523, %v4797
        %v4862 = vadd.f32 %v4525, %v4799
        %v4863 = vadd.f32 %v4528, %v4802
        %v4864 = vadd.f32 %v4530, %v4804
        %v4865 = vadd.f32 %v4533, %v4807
        %v4866 = vadd.f32 %v4535, %v4809
        %v4867 = vadd.f32 %v4538, %v4812
        %v4868 = vadd.f32 %v4540, %v4814
        %v4869 = vadd.f32 %v4543, %v4817
        %v4870 = vadd.f32 %v4545, %v4819
        %v4871 = vadd.f32 %v4548, %v4822
        %v4872 = vadd.f32 %v4550, %v4824
        %v4873 = vadd.f32 %v4553, %v4827
        %v4874 = vadd.f32 %v4555, %v4829
        %v4875 = vadd.f32 %v4558, %v4832
        %v4876 = vadd.f32 %v4560, %v4834
        %v4877 = vadd.f32 %v4563, %v4837
        %v4878 = vadd.f32 %v4565, %v4839
        %v4879 = vadd.f32 %v4568, %v4842
        %v4880 = vadd.f32 %v4570, %v4844
        %v4881 = vadd.f32 %v4573, %v4847
        %v4882 = vadd.f32 %v4575, %v4849
        %v4883 = vld [vmem:[%s4] sm:$0x1]
        %v4885 = vperm.slane %v4883, 0
        %v4887 = vadd.f32 %v4851, %v4885
        %v4888 = vadd.f32 %v4852, %v4885
        %v4889 = vadd.f32 %v4853, %v4885
        %v4890 = vadd.f32 %v4854, %v4885
        %v4891 = vadd.f32 %v4855, %v4885
        %v4892 = vadd.f32 %v4856, %v4885
        %v4893 = vadd.f32 %v4857, %v4885
        %v4894 = vadd.f32 %v4858, %v4885
        %v4895 = vadd.f32 %v4859, %v4885
        %v4896 = vadd.f32 %v4860, %v4885
        %v4897 = vadd.f32 %v4861, %v4885
        %v4898 = vadd.f32 %v4862, %v4885
        %v4899 = vadd.f32 %v4863, %v4885
        %v4900 = vadd.f32 %v4864, %v4885
        %v4901 = vadd.f32 %v4865, %v4885
        %v4902 = vadd.f32 %v4866, %v4885
        %v4903 = vadd.f32 %v4867, %v4885
        %v4904 = vadd.f32 %v4868, %v4885
        %v4905 = vadd.f32 %v4869, %v4885
        %v4906 = vadd.f32 %v4870, %v4885
        %v4907 = vadd.f32 %v4871, %v4885
        %v4908 = vadd.f32 %v4872, %v4885
        %v4909 = vadd.f32 %v4873, %v4885
        %v4910 = vadd.f32 %v4874, %v4885
        %v4911 = vadd.f32 %v4875, %v4885
        %v4912 = vadd.f32 %v4876, %v4885
        %v4913 = vadd.f32 %v4877, %v4885
        %v4914 = vadd.f32 %v4878, %v4885
        %v4915 = vadd.f32 %v4879, %v4885
        %v4916 = vadd.f32 %v4880, %v4885
        %v4917 = vadd.f32 %v4881, %v4885
        %v4918 = vadd.f32 %v4882, %v4885
        %v4919 = vmax.f32 %v4887, 0.0
        %v4920 = vmax.f32 %v4888, 0.0
        %v4921 = vmax.f32 %v4889, 0.0
        %v4922 = vmax.f32 %v4890, 0.0
        %v4923 = vmax.f32 %v4891, 0.0
        %v4924 = vmax.f32 %v4892, 0.0
        %v4925 = vmax.f32 %v4893, 0.0
        %v4926 = vmax.f32 %v4894, 0.0
        %v4927 = vmax.f32 %v4895, 0.0
        %v4928 = vmax.f32 %v4896, 0.0
        %v4929 = vmax.f32 %v4897, 0.0
        %v4930 = vmax.f32 %v4898, 0.0
        %v4931 = vmax.f32 %v4899, 0.0
        %v4932 = vmax.f32 %v4900, 0.0
        %v4933 = vmax.f32 %v4901, 0.0
        %v4934 = vmax.f32 %v4902, 0.0
        %v4935 = vmax.f32 %v4903, 0.0
        %v4936 = vmax.f32 %v4904, 0.0
        %v4937 = vmax.f32 %v4905, 0.0
        %v4938 = vmax.f32 %v4906, 0.0
        %v4939 = vmax.f32 %v4907, 0.0
        %v4940 = vmax.f32 %v4908, 0.0
        %v4941 = vmax.f32 %v4909, 0.0
        %v4942 = vmax.f32 %v4910, 0.0
        %v4943 = vmax.f32 %v4911, 0.0
        %v4944 = vmax.f32 %v4912, 0.0
        %v4945 = vmax.f32 %v4913, 0.0
        %v4946 = vmax.f32 %v4914, 0.0
        %v4947 = vmax.f32 %v4915, 0.0
        %v4948 = vmax.f32 %v4916, 0.0
        %v4949 = vmax.f32 %v4917, 0.0
        %v4950 = vmax.f32 %v4918, 0.0
        %s4951 = scalar_lea.vmem [#allocation4], 48
        %4952 = vst.msk [vmem:[%s4951 + $0x2] sm:$0xff] %vm395, %v4919
        %4953 = vst.msk [vmem:[%s4951 + $0xa] sm:$0xff] %vm395, %v4920
        %4954 = vst.msk [vmem:[%s4951 + $0x1a] sm:$0xff] %vm395, %v4921
        %4955 = vst.msk [vmem:[%s4951 + $0x22] sm:$0xff] %vm395, %v4922
        %4956 = vst.msk [vmem:[%s4951 + $0x32] sm:$0xff] %vm395, %v4923
        %4957 = vst.msk [vmem:[%s4951 + $0x3a] sm:$0xff] %vm395, %v4924
        %4958 = vst.msk [vmem:[%s4951 + $0x4a] sm:$0xff] %vm395, %v4925
        %4959 = vst.msk [vmem:[%s4951 + $0x52] sm:$0xff] %vm395, %v4926
        %4960 = vst.msk [vmem:[%s4951 + $0x62] sm:$0xff] %vm395, %v4927
        %4961 = vst.msk [vmem:[%s4951 + $0x6a] sm:$0xff] %vm395, %v4928
        %4962 = vst.msk [vmem:[%s4951 + $0x7a] sm:$0xff] %vm395, %v4929
        %4963 = vst.msk [vmem:[%s4951 + $0x82] sm:$0xff] %vm395, %v4930
        %4964 = vst.msk [vmem:[%s4951 + $0x92] sm:$0xff] %vm395, %v4931
        %4965 = vst.msk [vmem:[%s4951 + $0x9a] sm:$0xff] %vm395, %v4932
        %4966 = vst.msk [vmem:[%s4951 + $0xaa] sm:$0xff] %vm395, %v4933
        %4967 = vst.msk [vmem:[%s4951 + $0xb2] sm:$0xff] %vm395, %v4934
        %4968 = vst.msk [vmem:[%s4951 + $0xc2] sm:$0xff] %vm395, %v4935
        %4969 = vst.msk [vmem:[%s4951 + $0xca] sm:$0xff] %vm395, %v4936
        %4970 = vst.msk [vmem:[%s4951 + $0xda] sm:$0xff] %vm395, %v4937
        %4971 = vst.msk [vmem:[%s4951 + $0xe2] sm:$0xff] %vm395, %v4938
        %4972 = vst.msk [vmem:[%s4951 + $0xf2] sm:$0xff] %vm395, %v4939
        %4973 = vst.msk [vmem:[%s4951 + $0xfa] sm:$0xff] %vm395, %v4940
        %4974 = vst.msk [vmem:[%s4951 + $0x10a] sm:$0xff] %vm395, %v4941
        %4975 = vst.msk [vmem:[%s4951 + $0x112] sm:$0xff] %vm395, %v4942
        %4976 = vst.msk [vmem:[%s4951 + $0x122] sm:$0xff] %vm395, %v4943
        %4977 = vst.msk [vmem:[%s4951 + $0x12a] sm:$0xff] %vm395, %v4944
        %4978 = vst.msk [vmem:[%s4951 + $0x13a] sm:$0xff] %vm395, %v4945
        %4979 = vst.msk [vmem:[%s4951 + $0x142] sm:$0xff] %vm395, %v4946
        %4980 = vst.msk [vmem:[%s4951 + $0x152] sm:$0xff] %vm395, %v4947
        %4981 = vst.msk [vmem:[%s4951 + $0x15a] sm:$0xff] %vm395, %v4948
        %4982 = vst.msk [vmem:[%s4951 + $0x16a] sm:$0xff] %vm395, %v4949
        %4983 = vst.msk [vmem:[%s4951 + $0x172] sm:$0xff] %vm395, %v4950
        %v4984 = vld [vmem:[#allocation4] sm:$0xff]
        %v4985 = vld [vmem:[#allocation4 + $0x8] sm:$0xff]
        %v4986 = vld [vmem:[#allocation4 + $0x18] sm:$0xff]
        %v4987 = vld [vmem:[#allocation4 + $0x20] sm:$0xff]
        %v4988 = vld [vmem:[#allocation4 + $0x30] sm:$0xff]
        %v4989 = vld [vmem:[#allocation4 + $0x38] sm:$0xff]
        %v4990 = vld [vmem:[#allocation4 + $0x48] sm:$0xff]
        %v4991 = vld [vmem:[#allocation4 + $0x50] sm:$0xff]
        %v4992 = vld [vmem:[#allocation4 + $0x60] sm:$0xff]
        %v4993 = vld [vmem:[#allocation4 + $0x68] sm:$0xff]
        %v4994 = vld [vmem:[#allocation4 + $0x78] sm:$0xff]
        %v4995 = vld [vmem:[#allocation4 + $0x80] sm:$0xff]
        %v4996 = vld [vmem:[#allocation4 + $0x90] sm:$0xff]
        %v4997 = vld [vmem:[#allocation4 + $0x98] sm:$0xff]
        %v4998 = vld [vmem:[#allocation4 + $0xa8] sm:$0xff]
        %v4999 = vld [vmem:[#allocation4 + $0xb0] sm:$0xff]
        %v5000 = vld [vmem:[#allocation4 + $0xc0] sm:$0xff]
        %v5001 = vld [vmem:[#allocation4 + $0xc8] sm:$0xff]
        %v5002 = vld [vmem:[#allocation4 + $0xd8] sm:$0xff]
        %v5003 = vld [vmem:[#allocation4 + $0xe0] sm:$0xff]
        %v5004 = vld [vmem:[#allocation4 + $0xf0] sm:$0xff]
        %v5005 = vld [vmem:[#allocation4 + $0xf8] sm:$0xff]
        %v5006 = vld [vmem:[#allocation4 + $0x108] sm:$0xff]
        %v5007 = vld [vmem:[#allocation4 + $0x110] sm:$0xff]
        %v5008 = vld [vmem:[#allocation4 + $0x120] sm:$0xff]
        %v5009 = vld [vmem:[#allocation4 + $0x128] sm:$0xff]
        %v5010 = vld [vmem:[#allocation4 + $0x138] sm:$0xff]
        %v5011 = vld [vmem:[#allocation4 + $0x140] sm:$0xff]
        %v5012 = vld [vmem:[#allocation4 + $0x150] sm:$0xff]
        %v5013 = vld [vmem:[#allocation4 + $0x158] sm:$0xff]
        %v5014 = vld [vmem:[#allocation4 + $0x168] sm:$0xff]
        %v5015 = vld [vmem:[#allocation4 + $0x170] sm:$0xff]
        %v5016 = vld [vmem:[#allocation4 + $0x180] sm:$0xff]
        %v5017 = vld [vmem:[#allocation4 + $0x188] sm:$0xff]
        %v5018 = vld [vmem:[#allocation4 + $0x198] sm:$0xff]
        %v5019 = vld [vmem:[#allocation4 + $0x1a0] sm:$0xff]
        %v5020 = vld [vmem:[#allocation4 + $0x1b0] sm:$0xff]
        %v5021 = vld [vmem:[#allocation4 + $0x1b8] sm:$0xff]
        %v5022 = vld [vmem:[#allocation4 + $0x1c8] sm:$0xff]
        %v5023 = vld [vmem:[#allocation4 + $0x1d0] sm:$0xff]
        %v5024 = vpack.c.bf16 %v4984, %v4984
        %v5025 = vpack.c.bf16 %v4985, %v4985
        %v5026 = vpack.c.bf16 %v4986, %v4986
        %v5027 = vpack.c.bf16 %v4987, %v4987
        %v5028 = vpack.c.bf16 %v4988, %v4988
        %v5029 = vpack.c.bf16 %v4989, %v4989
        %v5030 = vpack.c.bf16 %v4990, %v4990
        %v5031 = vpack.c.bf16 %v4991, %v4991
        %v5032 = vpack.c.bf16 %v4992, %v4992
        %v5033 = vpack.c.bf16 %v4993, %v4993
        %v5034 = vpack.c.bf16 %v4994, %v4994
        %v5035 = vpack.c.bf16 %v4995, %v4995
        %v5036 = vpack.c.bf16 %v4996, %v4996
        %v5037 = vpack.c.bf16 %v4997, %v4997
        %v5038 = vpack.c.bf16 %v4998, %v4998
        %v5039 = vpack.c.bf16 %v4999, %v4999
        %v5040 = vpack.c.bf16 %v5000, %v5000
        %v5041 = vpack.c.bf16 %v5001, %v5001
        %v5042 = vpack.c.bf16 %v5002, %v5002
        %v5043 = vpack.c.bf16 %v5003, %v5003
        %v5044 = vpack.c.bf16 %v5004, %v5004
        %v5045 = vpack.c.bf16 %v5005, %v5005
        %v5046 = vpack.c.bf16 %v5006, %v5006
        %v5047 = vpack.c.bf16 %v5007, %v5007
        %v5048 = vpack.c.bf16 %v5008, %v5008
        %v5049 = vpack.c.bf16 %v5009, %v5009
        %v5050 = vpack.c.bf16 %v5010, %v5010
        %v5051 = vpack.c.bf16 %v5011, %v5011
        %v5052 = vpack.c.bf16 %v5012, %v5012
        %v5053 = vpack.c.bf16 %v5013, %v5013
        %v5054 = vpack.c.bf16 %v5014, %v5014
        %v5055 = vpack.c.bf16 %v5015, %v5015
        %v5056 = vpack.c.bf16 %v5016, %v5016
        %v5057 = vpack.c.bf16 %v5017, %v5017
        %v5058 = vpack.c.bf16 %v5018, %v5018
        %v5059 = vpack.c.bf16 %v5019, %v5019
        %v5060 = vpack.c.bf16 %v5020, %v5020
        %v5061 = vpack.c.bf16 %v5021, %v5021
        %v5062 = vpack.c.bf16 %v5022, %v5022
        %v5063 = vpack.c.bf16 %v5023, %v5023
        %5064 = vst.msk [vmem:[#allocation5] sm:$0xf] %vm398, %v5024
        %5065 = vst.msk [vmem:[#allocation5 + $0x8] sm:$0xf] %vm398, %v5025
        %5066 = vst.msk [vmem:[#allocation5 + $0x10] sm:$0xf] %vm398, %v5026
        %5067 = vst.msk [vmem:[#allocation5 + $0x18] sm:$0xf] %vm398, %v5027
        %5068 = vst.msk [vmem:[#allocation5 + $0x20] sm:$0xf] %vm398, %v5028
        %5069 = vst.msk [vmem:[#allocation5 + $0x28] sm:$0xf] %vm398, %v5029
        %5070 = vst.msk [vmem:[#allocation5 + $0x30] sm:$0xf] %vm398, %v5030
        %5071 = vst.msk [vmem:[#allocation5 + $0x38] sm:$0xf] %vm398, %v5031
        %5072 = vst.msk [vmem:[#allocation5 + $0x40] sm:$0xf] %vm398, %v5032
        %5073 = vst.msk [vmem:[#allocation5 + $0x48] sm:$0xf] %vm398, %v5033
        %5074 = vst.msk [vmem:[#allocation5 + $0x50] sm:$0xf] %vm398, %v5034
        %5075 = vst.msk [vmem:[#allocation5 + $0x58] sm:$0xf] %vm398, %v5035
        %5076 = vst.msk [vmem:[#allocation5 + $0x60] sm:$0xf] %vm398, %v5036
        %5077 = vst.msk [vmem:[#allocation5 + $0x68] sm:$0xf] %vm398, %v5037
        %5078 = vst.msk [vmem:[#allocation5 + $0x70] sm:$0xf] %vm398, %v5038
        %5079 = vst.msk [vmem:[#allocation5 + $0x78] sm:$0xf] %vm398, %v5039
        %5080 = vst.msk [vmem:[#allocation5 + $0x80] sm:$0xf] %vm398, %v5040
        %5081 = vst.msk [vmem:[#allocation5 + $0x88] sm:$0xf] %vm398, %v5041
        %5082 = vst.msk [vmem:[#allocation5 + $0x90] sm:$0xf] %vm398, %v5042
        %5083 = vst.msk [vmem:[#allocation5 + $0x98] sm:$0xf] %vm398, %v5043
        %5084 = vst.msk [vmem:[#allocation5 + $0xa0] sm:$0xf] %vm398, %v5044
        %5085 = vst.msk [vmem:[#allocation5 + $0xa8] sm:$0xf] %vm398, %v5045
        %5086 = vst.msk [vmem:[#allocation5 + $0xb0] sm:$0xf] %vm398, %v5046
        %5087 = vst.msk [vmem:[#allocation5 + $0xb8] sm:$0xf] %vm398, %v5047
        %5088 = vst.msk [vmem:[#allocation5 + $0xc0] sm:$0xf] %vm398, %v5048
        %5089 = vst.msk [vmem:[#allocation5 + $0xc8] sm:$0xf] %vm398, %v5049
        %5090 = vst.msk [vmem:[#allocation5 + $0xd0] sm:$0xf] %vm398, %v5050
        %5091 = vst.msk [vmem:[#allocation5 + $0xd8] sm:$0xf] %vm398, %v5051
        %5092 = vst.msk [vmem:[#allocation5 + $0xe0] sm:$0xf] %vm398, %v5052
        %5093 = vst.msk [vmem:[#allocation5 + $0xe8] sm:$0xf] %vm398, %v5053
        %5094 = vst.msk [vmem:[#allocation5 + $0xf0] sm:$0xf] %vm398, %v5054
        %5095 = vst.msk [vmem:[#allocation5 + $0xf8] sm:$0xf] %vm398, %v5055
        %5096 = vst.msk [vmem:[#allocation5 + $0x100] sm:$0xf] %vm398, %v5056
        %5097 = vst.msk [vmem:[#allocation5 + $0x108] sm:$0xf] %vm398, %v5057
        %5098 = vst.msk [vmem:[#allocation5 + $0x110] sm:$0xf] %vm398, %v5058
        %5099 = vst.msk [vmem:[#allocation5 + $0x118] sm:$0xf] %vm398, %v5059
        %5100 = vst.msk [vmem:[#allocation5 + $0x120] sm:$0xf] %vm398, %v5060
        %5101 = vst.msk [vmem:[#allocation5 + $0x128] sm:$0xf] %vm398, %v5061
        %5102 = vst.msk [vmem:[#allocation5 + $0x130] sm:$0xf] %vm398, %v5062
        %5103 = vst.msk [vmem:[#allocation5 + $0x138] sm:$0xf] %vm398, %v5063
        %v5104 = vld [vmem:[#allocation4 + $0x1] sm:$0xff]
        %v5105 = vld [vmem:[#allocation4 + $0x9] sm:$0xff]
        %v5106 = vld [vmem:[#allocation4 + $0x19] sm:$0xff]
        %v5107 = vld [vmem:[#allocation4 + $0x21] sm:$0xff]
        %v5108 = vld [vmem:[#allocation4 + $0x31] sm:$0xff]
        %v5109 = vld [vmem:[#allocation4 + $0x39] sm:$0xff]
        %v5110 = vld [vmem:[#allocation4 + $0x49] sm:$0xff]
        %v5111 = vld [vmem:[#allocation4 + $0x51] sm:$0xff]
        %v5112 = vld [vmem:[#allocation4 + $0x61] sm:$0xff]
        %v5113 = vld [vmem:[#allocation4 + $0x69] sm:$0xff]
        %v5114 = vld [vmem:[#allocation4 + $0x79] sm:$0xff]
        %v5115 = vld [vmem:[#allocation4 + $0x81] sm:$0xff]
        %v5116 = vld [vmem:[#allocation4 + $0x91] sm:$0xff]
        %v5117 = vld [vmem:[#allocation4 + $0x99] sm:$0xff]
        %v5118 = vld [vmem:[#allocation4 + $0xa9] sm:$0xff]
        %v5119 = vld [vmem:[#allocation4 + $0xb1] sm:$0xff]
        %v5120 = vld [vmem:[#allocation4 + $0xc1] sm:$0xff]
        %v5121 = vld [vmem:[#allocation4 + $0xc9] sm:$0xff]
        %v5122 = vld [vmem:[#allocation4 + $0xd9] sm:$0xff]
        %v5123 = vld [vmem:[#allocation4 + $0xe1] sm:$0xff]
        %v5124 = vld [vmem:[#allocation4 + $0xf1] sm:$0xff]
        %v5125 = vld [vmem:[#allocation4 + $0xf9] sm:$0xff]
        %v5126 = vld [vmem:[#allocation4 + $0x109] sm:$0xff]
        %v5127 = vld [vmem:[#allocation4 + $0x111] sm:$0xff]
        %v5128 = vld [vmem:[#allocation4 + $0x121] sm:$0xff]
        %v5129 = vld [vmem:[#allocation4 + $0x129] sm:$0xff]
        %v5130 = vld [vmem:[#allocation4 + $0x139] sm:$0xff]
        %v5131 = vld [vmem:[#allocation4 + $0x141] sm:$0xff]
        %v5132 = vld [vmem:[#allocation4 + $0x151] sm:$0xff]
        %v5133 = vld [vmem:[#allocation4 + $0x159] sm:$0xff]
        %v5134 = vld [vmem:[#allocation4 + $0x169] sm:$0xff]
        %v5135 = vld [vmem:[#allocation4 + $0x171] sm:$0xff]
        %v5136 = vld [vmem:[#allocation4 + $0x181] sm:$0xff]
        %v5137 = vld [vmem:[#allocation4 + $0x189] sm:$0xff]
        %v5138 = vld [vmem:[#allocation4 + $0x199] sm:$0xff]
        %v5139 = vld [vmem:[#allocation4 + $0x1a1] sm:$0xff]
        %v5140 = vld [vmem:[#allocation4 + $0x1b1] sm:$0xff]
        %v5141 = vld [vmem:[#allocation4 + $0x1b9] sm:$0xff]
        %v5142 = vld [vmem:[#allocation4 + $0x1c9] sm:$0xff]
        %v5143 = vld [vmem:[#allocation4 + $0x1d1] sm:$0xff]
        %v5144 = vpack.c.bf16 %v5104, %v5104
        %v5145 = vpack.c.bf16 %v5105, %v5105
        %v5146 = vpack.c.bf16 %v5106, %v5106
        %v5147 = vpack.c.bf16 %v5107, %v5107
        %v5148 = vpack.c.bf16 %v5108, %v5108
        %v5149 = vpack.c.bf16 %v5109, %v5109
        %v5150 = vpack.c.bf16 %v5110, %v5110
        %v5151 = vpack.c.bf16 %v5111, %v5111
        %v5152 = vpack.c.bf16 %v5112, %v5112
        %v5153 = vpack.c.bf16 %v5113, %v5113
        %v5154 = vpack.c.bf16 %v5114, %v5114
        %v5155 = vpack.c.bf16 %v5115, %v5115
        %v5156 = vpack.c.bf16 %v5116, %v5116
        %v5157 = vpack.c.bf16 %v5117, %v5117
        %v5158 = vpack.c.bf16 %v5118, %v5118
        %v5159 = vpack.c.bf16 %v5119, %v5119
        %v5160 = vpack.c.bf16 %v5120, %v5120
        %v5161 = vpack.c.bf16 %v5121, %v5121
        %v5162 = vpack.c.bf16 %v5122, %v5122
        %v5163 = vpack.c.bf16 %v5123, %v5123
        %v5164 = vpack.c.bf16 %v5124, %v5124
        %v5165 = vpack.c.bf16 %v5125, %v5125
        %v5166 = vpack.c.bf16 %v5126, %v5126
        %v5167 = vpack.c.bf16 %v5127, %v5127
        %v5168 = vpack.c.bf16 %v5128, %v5128
        %v5169 = vpack.c.bf16 %v5129, %v5129
        %v5170 = vpack.c.bf16 %v5130, %v5130
        %v5171 = vpack.c.bf16 %v5131, %v5131
        %v5172 = vpack.c.bf16 %v5132, %v5132
        %v5173 = vpack.c.bf16 %v5133, %v5133
        %v5174 = vpack.c.bf16 %v5134, %v5134
        %v5175 = vpack.c.bf16 %v5135, %v5135
        %v5176 = vpack.c.bf16 %v5136, %v5136
        %v5177 = vpack.c.bf16 %v5137, %v5137
        %v5178 = vpack.c.bf16 %v5138, %v5138
        %v5179 = vpack.c.bf16 %v5139, %v5139
        %v5180 = vpack.c.bf16 %v5140, %v5140
        %v5181 = vpack.c.bf16 %v5141, %v5141
        %v5182 = vpack.c.bf16 %v5142, %v5142
        %v5183 = vpack.c.bf16 %v5143, %v5143
        %5224 = vrot.lane.b32.xlu0 %v5144, 32
        %v5225 = vpop.permute.xlu0 %5224
        %5226 = vrot.lane.b32.xlu0 %v5145, 32
        %v5227 = vpop.permute.xlu0 %5226
        %5228 = vrot.lane.b32.xlu0 %v5146, 32
        %v5229 = vpop.permute.xlu0 %5228
        %5230 = vrot.lane.b32.xlu0 %v5147, 32
        %v5231 = vpop.permute.xlu0 %5230
        %5232 = vrot.lane.b32.xlu0 %v5148, 32
        %v5233 = vpop.permute.xlu0 %5232
        %5234 = vrot.lane.b32.xlu0 %v5149, 32
        %v5235 = vpop.permute.xlu0 %5234
        %5236 = vrot.lane.b32.xlu0 %v5150, 32
        %v5237 = vpop.permute.xlu0 %5236
        %5238 = vrot.lane.b32.xlu0 %v5151, 32
        %v5239 = vpop.permute.xlu0 %5238
        %5240 = vrot.lane.b32.xlu0 %v5152, 32
        %v5241 = vpop.permute.xlu0 %5240
        %5242 = vrot.lane.b32.xlu0 %v5153, 32
        %v5243 = vpop.permute.xlu0 %5242
        %5244 = vrot.lane.b32.xlu0 %v5154, 32
        %v5245 = vpop.permute.xlu0 %5244
        %5246 = vrot.lane.b32.xlu0 %v5155, 32
        %v5247 = vpop.permute.xlu0 %5246
        %5248 = vrot.lane.b32.xlu0 %v5156, 32
        %v5249 = vpop.permute.xlu0 %5248
        %5250 = vrot.lane.b32.xlu0 %v5157, 32
        %v5251 = vpop.permute.xlu0 %5250
        %5252 = vrot.lane.b32.xlu0 %v5158, 32
        %v5253 = vpop.permute.xlu0 %5252
        %5254 = vrot.lane.b32.xlu0 %v5159, 32
        %v5255 = vpop.permute.xlu0 %5254
        %5256 = vrot.lane.b32.xlu0 %v5160, 32
        %v5257 = vpop.permute.xlu0 %5256
        %5258 = vrot.lane.b32.xlu0 %v5161, 32
        %v5259 = vpop.permute.xlu0 %5258
        %5260 = vrot.lane.b32.xlu0 %v5162, 32
        %v5261 = vpop.permute.xlu0 %5260
        %5262 = vrot.lane.b32.xlu0 %v5163, 32
        %v5263 = vpop.permute.xlu0 %5262
        %5264 = vrot.lane.b32.xlu0 %v5164, 32
        %v5265 = vpop.permute.xlu0 %5264
        %5266 = vrot.lane.b32.xlu0 %v5165, 32
        %v5267 = vpop.permute.xlu0 %5266
        %5268 = vrot.lane.b32.xlu0 %v5166, 32
        %v5269 = vpop.permute.xlu0 %5268
        %5270 = vrot.lane.b32.xlu0 %v5167, 32
        %v5271 = vpop.permute.xlu0 %5270
        %5272 = vrot.lane.b32.xlu0 %v5168, 32
        %v5273 = vpop.permute.xlu0 %5272
        %5274 = vrot.lane.b32.xlu0 %v5169, 32
        %v5275 = vpop.permute.xlu0 %5274
        %5276 = vrot.lane.b32.xlu0 %v5170, 32
        %v5277 = vpop.permute.xlu0 %5276
        %5278 = vrot.lane.b32.xlu0 %v5171, 32
        %v5279 = vpop.permute.xlu0 %5278
        %5280 = vrot.lane.b32.xlu0 %v5172, 32
        %v5281 = vpop.permute.xlu0 %5280
        %5282 = vrot.lane.b32.xlu0 %v5173, 32
        %v5283 = vpop.permute.xlu0 %5282
        %5284 = vrot.lane.b32.xlu0 %v5174, 32
        %v5285 = vpop.permute.xlu0 %5284
        %5286 = vrot.lane.b32.xlu0 %v5175, 32
        %v5287 = vpop.permute.xlu0 %5286
        %5288 = vrot.lane.b32.xlu0 %v5176, 32
        %v5289 = vpop.permute.xlu0 %5288
        %5290 = vrot.lane.b32.xlu0 %v5177, 32
        %v5291 = vpop.permute.xlu0 %5290
        %5292 = vrot.lane.b32.xlu0 %v5178, 32
        %v5293 = vpop.permute.xlu0 %5292
        %5294 = vrot.lane.b32.xlu0 %v5179, 32
        %v5295 = vpop.permute.xlu0 %5294
        %5296 = vrot.lane.b32.xlu0 %v5180, 32
        %v5297 = vpop.permute.xlu0 %5296
        %5298 = vrot.lane.b32.xlu0 %v5181, 32
        %v5299 = vpop.permute.xlu0 %5298
        %5300 = vrot.lane.b32.xlu0 %v5182, 32
        %v5301 = vpop.permute.xlu0 %5300
        %5302 = vrot.lane.b32.xlu0 %v5183, 32
        %v5303 = vpop.permute.xlu0 %5302
        %vm5344 = vcmask 519424
        %5345 = vst.msk [vmem:[#allocation5] sm:$0xf] %vm5344, %v5225
        %5346 = vst.msk [vmem:[#allocation5 + $0x8] sm:$0xf] %vm5344, %v5227
        %5347 = vst.msk [vmem:[#allocation5 + $0x10] sm:$0xf] %vm5344, %v5229
        %5348 = vst.msk [vmem:[#allocation5 + $0x18] sm:$0xf] %vm5344, %v5231
        %5349 = vst.msk [vmem:[#allocation5 + $0x20] sm:$0xf] %vm5344, %v5233
        %5350 = vst.msk [vmem:[#allocation5 + $0x28] sm:$0xf] %vm5344, %v5235
        %5351 = vst.msk [vmem:[#allocation5 + $0x30] sm:$0xf] %vm5344, %v5237
        %5352 = vst.msk [vmem:[#allocation5 + $0x38] sm:$0xf] %vm5344, %v5239
        %5353 = vst.msk [vmem:[#allocation5 + $0x40] sm:$0xf] %vm5344, %v5241
        %5354 = vst.msk [vmem:[#allocation5 + $0x48] sm:$0xf] %vm5344, %v5243
        %5355 = vst.msk [vmem:[#allocation5 + $0x50] sm:$0xf] %vm5344, %v5245
        %5356 = vst.msk [vmem:[#allocation5 + $0x58] sm:$0xf] %vm5344, %v5247
        %5357 = vst.msk [vmem:[#allocation5 + $0x60] sm:$0xf] %vm5344, %v5249
        %5358 = vst.msk [vmem:[#allocation5 + $0x68] sm:$0xf] %vm5344, %v5251
        %5359 = vst.msk [vmem:[#allocation5 + $0x70] sm:$0xf] %vm5344, %v5253
        %5360 = vst.msk [vmem:[#allocation5 + $0x78] sm:$0xf] %vm5344, %v5255
        %5361 = vst.msk [vmem:[#allocation5 + $0x80] sm:$0xf] %vm5344, %v5257
        %5362 = vst.msk [vmem:[#allocation5 + $0x88] sm:$0xf] %vm5344, %v5259
        %5363 = vst.msk [vmem:[#allocation5 + $0x90] sm:$0xf] %vm5344, %v5261
        %5364 = vst.msk [vmem:[#allocation5 + $0x98] sm:$0xf] %vm5344, %v5263
        %5365 = vst.msk [vmem:[#allocation5 + $0xa0] sm:$0xf] %vm5344, %v5265
        %5366 = vst.msk [vmem:[#allocation5 + $0xa8] sm:$0xf] %vm5344, %v5267
        %5367 = vst.msk [vmem:[#allocation5 + $0xb0] sm:$0xf] %vm5344, %v5269
        %5368 = vst.msk [vmem:[#allocation5 + $0xb8] sm:$0xf] %vm5344, %v5271
        %5369 = vst.msk [vmem:[#allocation5 + $0xc0] sm:$0xf] %vm5344, %v5273
        %5370 = vst.msk [vmem:[#allocation5 + $0xc8] sm:$0xf] %vm5344, %v5275
        %5371 = vst.msk [vmem:[#allocation5 + $0xd0] sm:$0xf] %vm5344, %v5277
        %5372 = vst.msk [vmem:[#allocation5 + $0xd8] sm:$0xf] %vm5344, %v5279
        %5373 = vst.msk [vmem:[#allocation5 + $0xe0] sm:$0xf] %vm5344, %v5281
        %5374 = vst.msk [vmem:[#allocation5 + $0xe8] sm:$0xf] %vm5344, %v5283
        %5375 = vst.msk [vmem:[#allocation5 + $0xf0] sm:$0xf] %vm5344, %v5285
        %5376 = vst.msk [vmem:[#allocation5 + $0xf8] sm:$0xf] %vm5344, %v5287
        %5377 = vst.msk [vmem:[#allocation5 + $0x100] sm:$0xf] %vm5344, %v5289
        %5378 = vst.msk [vmem:[#allocation5 + $0x108] sm:$0xf] %vm5344, %v5291
        %5379 = vst.msk [vmem:[#allocation5 + $0x110] sm:$0xf] %vm5344, %v5293
        %5380 = vst.msk [vmem:[#allocation5 + $0x118] sm:$0xf] %vm5344, %v5295
        %5381 = vst.msk [vmem:[#allocation5 + $0x120] sm:$0xf] %vm5344, %v5297
        %5382 = vst.msk [vmem:[#allocation5 + $0x128] sm:$0xf] %vm5344, %v5299
        %5383 = vst.msk [vmem:[#allocation5 + $0x130] sm:$0xf] %vm5344, %v5301
        %5384 = vst.msk [vmem:[#allocation5 + $0x138] sm:$0xf] %vm5344, %v5303
        %v5385 = vld [vmem:[#allocation4 + $0x2] sm:$0xff]
        %v5386 = vld [vmem:[#allocation4 + $0xa] sm:$0xff]
        %v5387 = vld [vmem:[#allocation4 + $0x1a] sm:$0xff]
        %v5388 = vld [vmem:[#allocation4 + $0x22] sm:$0xff]
        %v5389 = vld [vmem:[#allocation4 + $0x32] sm:$0xff]
        %v5390 = vld [vmem:[#allocation4 + $0x3a] sm:$0xff]
        %v5391 = vld [vmem:[#allocation4 + $0x4a] sm:$0xff]
        %v5392 = vld [vmem:[#allocation4 + $0x52] sm:$0xff]
        %v5393 = vld [vmem:[#allocation4 + $0x62] sm:$0xff]
        %v5394 = vld [vmem:[#allocation4 + $0x6a] sm:$0xff]
        %v5395 = vld [vmem:[#allocation4 + $0x7a] sm:$0xff]
        %v5396 = vld [vmem:[#allocation4 + $0x82] sm:$0xff]
        %v5397 = vld [vmem:[#allocation4 + $0x92] sm:$0xff]
        %v5398 = vld [vmem:[#allocation4 + $0x9a] sm:$0xff]
        %v5399 = vld [vmem:[#allocation4 + $0xaa] sm:$0xff]
        %v5400 = vld [vmem:[#allocation4 + $0xb2] sm:$0xff]
        %v5401 = vld [vmem:[#allocation4 + $0xc2] sm:$0xff]
        %v5402 = vld [vmem:[#allocation4 + $0xca] sm:$0xff]
        %v5403 = vld [vmem:[#allocation4 + $0xda] sm:$0xff]
        %v5404 = vld [vmem:[#allocation4 + $0xe2] sm:$0xff]
        %v5405 = vld [vmem:[#allocation4 + $0xf2] sm:$0xff]
        %v5406 = vld [vmem:[#allocation4 + $0xfa] sm:$0xff]
        %v5407 = vld [vmem:[#allocation4 + $0x10a] sm:$0xff]
        %v5408 = vld [vmem:[#allocation4 + $0x112] sm:$0xff]
        %v5409 = vld [vmem:[#allocation4 + $0x122] sm:$0xff]
        %v5410 = vld [vmem:[#allocation4 + $0x12a] sm:$0xff]
        %v5411 = vld [vmem:[#allocation4 + $0x13a] sm:$0xff]
        %v5412 = vld [vmem:[#allocation4 + $0x142] sm:$0xff]
        %v5413 = vld [vmem:[#allocation4 + $0x152] sm:$0xff]
        %v5414 = vld [vmem:[#allocation4 + $0x15a] sm:$0xff]
        %v5415 = vld [vmem:[#allocation4 + $0x16a] sm:$0xff]
        %v5416 = vld [vmem:[#allocation4 + $0x172] sm:$0xff]
        %v5417 = vld [vmem:[#allocation4 + $0x182] sm:$0xff]
        %v5418 = vld [vmem:[#allocation4 + $0x18a] sm:$0xff]
        %v5419 = vld [vmem:[#allocation4 + $0x19a] sm:$0xff]
        %v5420 = vld [vmem:[#allocation4 + $0x1a2] sm:$0xff]
        %v5421 = vld [vmem:[#allocation4 + $0x1b2] sm:$0xff]
        %v5422 = vld [vmem:[#allocation4 + $0x1ba] sm:$0xff]
        %v5423 = vld [vmem:[#allocation4 + $0x1ca] sm:$0xff]
        %v5424 = vld [vmem:[#allocation4 + $0x1d2] sm:$0xff]
        %v5425 = vpack.c.bf16 %v5385, %v5385
        %v5426 = vpack.c.bf16 %v5386, %v5386
        %v5427 = vpack.c.bf16 %v5387, %v5387
        %v5428 = vpack.c.bf16 %v5388, %v5388
        %v5429 = vpack.c.bf16 %v5389, %v5389
        %v5430 = vpack.c.bf16 %v5390, %v5390
        %v5431 = vpack.c.bf16 %v5391, %v5391
        %v5432 = vpack.c.bf16 %v5392, %v5392
        %v5433 = vpack.c.bf16 %v5393, %v5393
        %v5434 = vpack.c.bf16 %v5394, %v5394
        %v5435 = vpack.c.bf16 %v5395, %v5395
        %v5436 = vpack.c.bf16 %v5396, %v5396
        %v5437 = vpack.c.bf16 %v5397, %v5397
        %v5438 = vpack.c.bf16 %v5398, %v5398
        %v5439 = vpack.c.bf16 %v5399, %v5399
        %v5440 = vpack.c.bf16 %v5400, %v5400
        %v5441 = vpack.c.bf16 %v5401, %v5401
        %v5442 = vpack.c.bf16 %v5402, %v5402
        %v5443 = vpack.c.bf16 %v5403, %v5403
        %v5444 = vpack.c.bf16 %v5404, %v5404
        %v5445 = vpack.c.bf16 %v5405, %v5405
        %v5446 = vpack.c.bf16 %v5406, %v5406
        %v5447 = vpack.c.bf16 %v5407, %v5407
        %v5448 = vpack.c.bf16 %v5408, %v5408
        %v5449 = vpack.c.bf16 %v5409, %v5409
        %v5450 = vpack.c.bf16 %v5410, %v5410
        %v5451 = vpack.c.bf16 %v5411, %v5411
        %v5452 = vpack.c.bf16 %v5412, %v5412
        %v5453 = vpack.c.bf16 %v5413, %v5413
        %v5454 = vpack.c.bf16 %v5414, %v5414
        %v5455 = vpack.c.bf16 %v5415, %v5415
        %v5456 = vpack.c.bf16 %v5416, %v5416
        %v5457 = vpack.c.bf16 %v5417, %v5417
        %v5458 = vpack.c.bf16 %v5418, %v5418
        %v5459 = vpack.c.bf16 %v5419, %v5419
        %v5460 = vpack.c.bf16 %v5420, %v5420
        %v5461 = vpack.c.bf16 %v5421, %v5421
        %v5462 = vpack.c.bf16 %v5422, %v5422
        %v5463 = vpack.c.bf16 %v5423, %v5423
        %v5464 = vpack.c.bf16 %v5424, %v5424
        %5505 = vrot.lane.b32.xlu0 %v5425, 64
        %v5506 = vpop.permute.xlu0 %5505
        %5507 = vrot.lane.b32.xlu0 %v5426, 64
        %v5508 = vpop.permute.xlu0 %5507
        %5509 = vrot.lane.b32.xlu0 %v5427, 64
        %v5510 = vpop.permute.xlu0 %5509
        %5511 = vrot.lane.b32.xlu0 %v5428, 64
        %v5512 = vpop.permute.xlu0 %5511
        %5513 = vrot.lane.b32.xlu0 %v5429, 64
        %v5514 = vpop.permute.xlu0 %5513
        %5515 = vrot.lane.b32.xlu0 %v5430, 64
        %v5516 = vpop.permute.xlu0 %5515
        %5517 = vrot.lane.b32.xlu0 %v5431, 64
        %v5518 = vpop.permute.xlu0 %5517
        %5519 = vrot.lane.b32.xlu0 %v5432, 64
        %v5520 = vpop.permute.xlu0 %5519
        %5521 = vrot.lane.b32.xlu0 %v5433, 64
        %v5522 = vpop.permute.xlu0 %5521
        %5523 = vrot.lane.b32.xlu0 %v5434, 64
        %v5524 = vpop.permute.xlu0 %5523
        %5525 = vrot.lane.b32.xlu0 %v5435, 64
        %v5526 = vpop.permute.xlu0 %5525
        %5527 = vrot.lane.b32.xlu0 %v5436, 64
        %v5528 = vpop.permute.xlu0 %5527
        %5529 = vrot.lane.b32.xlu0 %v5437, 64
        %v5530 = vpop.permute.xlu0 %5529
        %5531 = vrot.lane.b32.xlu0 %v5438, 64
        %v5532 = vpop.permute.xlu0 %5531
        %5533 = vrot.lane.b32.xlu0 %v5439, 64
        %v5534 = vpop.permute.xlu0 %5533
        %5535 = vrot.lane.b32.xlu0 %v5440, 64
        %v5536 = vpop.permute.xlu0 %5535
        %5537 = vrot.lane.b32.xlu0 %v5441, 64
        %v5538 = vpop.permute.xlu0 %5537
        %5539 = vrot.lane.b32.xlu0 %v5442, 64
        %v5540 = vpop.permute.xlu0 %5539
        %5541 = vrot.lane.b32.xlu0 %v5443, 64
        %v5542 = vpop.permute.xlu0 %5541
        %5543 = vrot.lane.b32.xlu0 %v5444, 64
        %v5544 = vpop.permute.xlu0 %5543
        %5545 = vrot.lane.b32.xlu0 %v5445, 64
        %v5546 = vpop.permute.xlu0 %5545
        %5547 = vrot.lane.b32.xlu0 %v5446, 64
        %v5548 = vpop.permute.xlu0 %5547
        %5549 = vrot.lane.b32.xlu0 %v5447, 64
        %v5550 = vpop.permute.xlu0 %5549
        %5551 = vrot.lane.b32.xlu0 %v5448, 64
        %v5552 = vpop.permute.xlu0 %5551
        %5553 = vrot.lane.b32.xlu0 %v5449, 64
        %v5554 = vpop.permute.xlu0 %5553
        %5555 = vrot.lane.b32.xlu0 %v5450, 64
        %v5556 = vpop.permute.xlu0 %5555
        %5557 = vrot.lane.b32.xlu0 %v5451, 64
        %v5558 = vpop.permute.xlu0 %5557
        %5559 = vrot.lane.b32.xlu0 %v5452, 64
        %v5560 = vpop.permute.xlu0 %5559
        %5561 = vrot.lane.b32.xlu0 %v5453, 64
        %v5562 = vpop.permute.xlu0 %5561
        %5563 = vrot.lane.b32.xlu0 %v5454, 64
        %v5564 = vpop.permute.xlu0 %5563
        %5565 = vrot.lane.b32.xlu0 %v5455, 64
        %v5566 = vpop.permute.xlu0 %5565
        %5567 = vrot.lane.b32.xlu0 %v5456, 64
        %v5568 = vpop.permute.xlu0 %5567
        %5569 = vrot.lane.b32.xlu0 %v5457, 64
        %v5570 = vpop.permute.xlu0 %5569
        %5571 = vrot.lane.b32.xlu0 %v5458, 64
        %v5572 = vpop.permute.xlu0 %5571
        %5573 = vrot.lane.b32.xlu0 %v5459, 64
        %v5574 = vpop.permute.xlu0 %5573
        %5575 = vrot.lane.b32.xlu0 %v5460, 64
        %v5576 = vpop.permute.xlu0 %5575
        %5577 = vrot.lane.b32.xlu0 %v5461, 64
        %v5578 = vpop.permute.xlu0 %5577
        %5579 = vrot.lane.b32.xlu0 %v5462, 64
        %v5580 = vpop.permute.xlu0 %5579
        %5581 = vrot.lane.b32.xlu0 %v5463, 64
        %v5582 = vpop.permute.xlu0 %5581
        %5583 = vrot.lane.b32.xlu0 %v5464, 64
        %v5584 = vpop.permute.xlu0 %5583
        %vm5625 = vcmask 781824
        %5626 = vst.msk [vmem:[#allocation5] sm:$0xf] %vm5625, %v5506
        %5627 = vst.msk [vmem:[#allocation5 + $0x8] sm:$0xf] %vm5625, %v5508
        %5628 = vst.msk [vmem:[#allocation5 + $0x10] sm:$0xf] %vm5625, %v5510
        %5629 = vst.msk [vmem:[#allocation5 + $0x18] sm:$0xf] %vm5625, %v5512
        %5630 = vst.msk [vmem:[#allocation5 + $0x20] sm:$0xf] %vm5625, %v5514
        %5631 = vst.msk [vmem:[#allocation5 + $0x28] sm:$0xf] %vm5625, %v5516
        %5632 = vst.msk [vmem:[#allocation5 + $0x30] sm:$0xf] %vm5625, %v5518
        %5633 = vst.msk [vmem:[#allocation5 + $0x38] sm:$0xf] %vm5625, %v5520
        %5634 = vst.msk [vmem:[#allocation5 + $0x40] sm:$0xf] %vm5625, %v5522
        %5635 = vst.msk [vmem:[#allocation5 + $0x48] sm:$0xf] %vm5625, %v5524
        %5636 = vst.msk [vmem:[#allocation5 + $0x50] sm:$0xf] %vm5625, %v5526
        %5637 = vst.msk [vmem:[#allocation5 + $0x58] sm:$0xf] %vm5625, %v5528
        %5638 = vst.msk [vmem:[#allocation5 + $0x60] sm:$0xf] %vm5625, %v5530
        %5639 = vst.msk [vmem:[#allocation5 + $0x68] sm:$0xf] %vm5625, %v5532
        %5640 = vst.msk [vmem:[#allocation5 + $0x70] sm:$0xf] %vm5625, %v5534
        %5641 = vst.msk [vmem:[#allocation5 + $0x78] sm:$0xf] %vm5625, %v5536
        %5642 = vst.msk [vmem:[#allocation5 + $0x80] sm:$0xf] %vm5625, %v5538
        %5643 = vst.msk [vmem:[#allocation5 + $0x88] sm:$0xf] %vm5625, %v5540
        %5644 = vst.msk [vmem:[#allocation5 + $0x90] sm:$0xf] %vm5625, %v5542
        %5645 = vst.msk [vmem:[#allocation5 + $0x98] sm:$0xf] %vm5625, %v5544
        %5646 = vst.msk [vmem:[#allocation5 + $0xa0] sm:$0xf] %vm5625, %v5546
        %5647 = vst.msk [vmem:[#allocation5 + $0xa8] sm:$0xf] %vm5625, %v5548
        %5648 = vst.msk [vmem:[#allocation5 + $0xb0] sm:$0xf] %vm5625, %v5550
        %5649 = vst.msk [vmem:[#allocation5 + $0xb8] sm:$0xf] %vm5625, %v5552
        %5650 = vst.msk [vmem:[#allocation5 + $0xc0] sm:$0xf] %vm5625, %v5554
        %5651 = vst.msk [vmem:[#allocation5 + $0xc8] sm:$0xf] %vm5625, %v5556
        %5652 = vst.msk [vmem:[#allocation5 + $0xd0] sm:$0xf] %vm5625, %v5558
        %5653 = vst.msk [vmem:[#allocation5 + $0xd8] sm:$0xf] %vm5625, %v5560
        %5654 = vst.msk [vmem:[#allocation5 + $0xe0] sm:$0xf] %vm5625, %v5562
        %5655 = vst.msk [vmem:[#allocation5 + $0xe8] sm:$0xf] %vm5625, %v5564
        %5656 = vst.msk [vmem:[#allocation5 + $0xf0] sm:$0xf] %vm5625, %v5566
        %5657 = vst.msk [vmem:[#allocation5 + $0xf8] sm:$0xf] %vm5625, %v5568
        %5658 = vst.msk [vmem:[#allocation5 + $0x100] sm:$0xf] %vm5625, %v5570
        %5659 = vst.msk [vmem:[#allocation5 + $0x108] sm:$0xf] %vm5625, %v5572
        %5660 = vst.msk [vmem:[#allocation5 + $0x110] sm:$0xf] %vm5625, %v5574
        %5661 = vst.msk [vmem:[#allocation5 + $0x118] sm:$0xf] %vm5625, %v5576
        %5662 = vst.msk [vmem:[#allocation5 + $0x120] sm:$0xf] %vm5625, %v5578
        %5663 = vst.msk [vmem:[#allocation5 + $0x128] sm:$0xf] %vm5625, %v5580
        %5664 = vst.msk [vmem:[#allocation5 + $0x130] sm:$0xf] %vm5625, %v5582
        %5665 = vst.msk [vmem:[#allocation5 + $0x138] sm:$0xf] %vm5625, %v5584
        %v5666 = vld [vmem:[#allocation4 + $0x3] sm:$0xff]
        %v5667 = vld [vmem:[#allocation4 + $0xb] sm:$0xff]
        %v5668 = vld [vmem:[#allocation4 + $0x1b] sm:$0xff]
        %v5669 = vld [vmem:[#allocation4 + $0x23] sm:$0xff]
        %v5670 = vld [vmem:[#allocation4 + $0x33] sm:$0xff]
        %v5671 = vld [vmem:[#allocation4 + $0x3b] sm:$0xff]
        %v5672 = vld [vmem:[#allocation4 + $0x4b] sm:$0xff]
        %v5673 = vld [vmem:[#allocation4 + $0x53] sm:$0xff]
        %v5674 = vld [vmem:[#allocation4 + $0x63] sm:$0xff]
        %v5675 = vld [vmem:[#allocation4 + $0x6b] sm:$0xff]
        %v5676 = vld [vmem:[#allocation4 + $0x7b] sm:$0xff]
        %v5677 = vld [vmem:[#allocation4 + $0x83] sm:$0xff]
        %v5678 = vld [vmem:[#allocation4 + $0x93] sm:$0xff]
        %v5679 = vld [vmem:[#allocation4 + $0x9b] sm:$0xff]
        %v5680 = vld [vmem:[#allocation4 + $0xab] sm:$0xff]
        %v5681 = vld [vmem:[#allocation4 + $0xb3] sm:$0xff]
        %v5682 = vld [vmem:[#allocation4 + $0xc3] sm:$0xff]
        %v5683 = vld [vmem:[#allocation4 + $0xcb] sm:$0xff]
        %v5684 = vld [vmem:[#allocation4 + $0xdb] sm:$0xff]
        %v5685 = vld [vmem:[#allocation4 + $0xe3] sm:$0xff]
        %v5686 = vld [vmem:[#allocation4 + $0xf3] sm:$0xff]
        %v5687 = vld [vmem:[#allocation4 + $0xfb] sm:$0xff]
        %v5688 = vld [vmem:[#allocation4 + $0x10b] sm:$0xff]
        %v5689 = vld [vmem:[#allocation4 + $0x113] sm:$0xff]
        %v5690 = vld [vmem:[#allocation4 + $0x123] sm:$0xff]
        %v5691 = vld [vmem:[#allocation4 + $0x12b] sm:$0xff]
        %v5692 = vld [vmem:[#allocation4 + $0x13b] sm:$0xff]
        %v5693 = vld [vmem:[#allocation4 + $0x143] sm:$0xff]
        %v5694 = vld [vmem:[#allocation4 + $0x153] sm:$0xff]
        %v5695 = vld [vmem:[#allocation4 + $0x15b] sm:$0xff]
        %v5696 = vld [vmem:[#allocation4 + $0x16b] sm:$0xff]
        %v5697 = vld [vmem:[#allocation4 + $0x173] sm:$0xff]
        %v5698 = vld [vmem:[#allocation4 + $0x183] sm:$0xff]
        %v5699 = vld [vmem:[#allocation4 + $0x18b] sm:$0xff]
        %v5700 = vld [vmem:[#allocation4 + $0x19b] sm:$0xff]
        %v5701 = vld [vmem:[#allocation4 + $0x1a3] sm:$0xff]
        %v5702 = vld [vmem:[#allocation4 + $0x1b3] sm:$0xff]
        %v5703 = vld [vmem:[#allocation4 + $0x1bb] sm:$0xff]
        %v5704 = vld [vmem:[#allocation4 + $0x1cb] sm:$0xff]
        %v5705 = vld [vmem:[#allocation4 + $0x1d3] sm:$0xff]
        %v5706 = vpack.c.bf16 %v5666, %v5666
        %v5707 = vpack.c.bf16 %v5667, %v5667
        %v5708 = vpack.c.bf16 %v5668, %v5668
        %v5709 = vpack.c.bf16 %v5669, %v5669
        %v5710 = vpack.c.bf16 %v5670, %v5670
        %v5711 = vpack.c.bf16 %v5671, %v5671
        %v5712 = vpack.c.bf16 %v5672, %v5672
        %v5713 = vpack.c.bf16 %v5673, %v5673
        %v5714 = vpack.c.bf16 %v5674, %v5674
        %v5715 = vpack.c.bf16 %v5675, %v5675
        %v5716 = vpack.c.bf16 %v5676, %v5676
        %v5717 = vpack.c.bf16 %v5677, %v5677
        %v5718 = vpack.c.bf16 %v5678, %v5678
        %v5719 = vpack.c.bf16 %v5679, %v5679
        %v5720 = vpack.c.bf16 %v5680, %v5680
        %v5721 = vpack.c.bf16 %v5681, %v5681
        %v5722 = vpack.c.bf16 %v5682, %v5682
        %v5723 = vpack.c.bf16 %v5683, %v5683
        %v5724 = vpack.c.bf16 %v5684, %v5684
        %v5725 = vpack.c.bf16 %v5685, %v5685
        %v5726 = vpack.c.bf16 %v5686, %v5686
        %v5727 = vpack.c.bf16 %v5687, %v5687
        %v5728 = vpack.c.bf16 %v5688, %v5688
        %v5729 = vpack.c.bf16 %v5689, %v5689
        %v5730 = vpack.c.bf16 %v5690, %v5690
        %v5731 = vpack.c.bf16 %v5691, %v5691
        %v5732 = vpack.c.bf16 %v5692, %v5692
        %v5733 = vpack.c.bf16 %v5693, %v5693
        %v5734 = vpack.c.bf16 %v5694, %v5694
        %v5735 = vpack.c.bf16 %v5695, %v5695
        %v5736 = vpack.c.bf16 %v5696, %v5696
        %v5737 = vpack.c.bf16 %v5697, %v5697
        %v5738 = vpack.c.bf16 %v5698, %v5698
        %v5739 = vpack.c.bf16 %v5699, %v5699
        %v5740 = vpack.c.bf16 %v5700, %v5700
        %v5741 = vpack.c.bf16 %v5701, %v5701
        %v5742 = vpack.c.bf16 %v5702, %v5702
        %v5743 = vpack.c.bf16 %v5703, %v5703
        %v5744 = vpack.c.bf16 %v5704, %v5704
        %v5745 = vpack.c.bf16 %v5705, %v5705
        %5786 = vrot.lane.b32.xlu0 %v5706, 96
        %v5787 = vpop.permute.xlu0 %5786
        %5788 = vrot.lane.b32.xlu0 %v5707, 96
        %v5789 = vpop.permute.xlu0 %5788
        %5790 = vrot.lane.b32.xlu0 %v5708, 96
        %v5791 = vpop.permute.xlu0 %5790
        %5792 = vrot.lane.b32.xlu0 %v5709, 96
        %v5793 = vpop.permute.xlu0 %5792
        %5794 = vrot.lane.b32.xlu0 %v5710, 96
        %v5795 = vpop.permute.xlu0 %5794
        %5796 = vrot.lane.b32.xlu0 %v5711, 96
        %v5797 = vpop.permute.xlu0 %5796
        %5798 = vrot.lane.b32.xlu0 %v5712, 96
        %v5799 = vpop.permute.xlu0 %5798
        %5800 = vrot.lane.b32.xlu0 %v5713, 96
        %v5801 = vpop.permute.xlu0 %5800
        %5802 = vrot.lane.b32.xlu0 %v5714, 96
        %v5803 = vpop.permute.xlu0 %5802
        %5804 = vrot.lane.b32.xlu0 %v5715, 96
        %v5805 = vpop.permute.xlu0 %5804
        %5806 = vrot.lane.b32.xlu0 %v5716, 96
        %v5807 = vpop.permute.xlu0 %5806
        %5808 = vrot.lane.b32.xlu0 %v5717, 96
        %v5809 = vpop.permute.xlu0 %5808
        %5810 = vrot.lane.b32.xlu0 %v5718, 96
        %v5811 = vpop.permute.xlu0 %5810
        %5812 = vrot.lane.b32.xlu0 %v5719, 96
        %v5813 = vpop.permute.xlu0 %5812
        %5814 = vrot.lane.b32.xlu0 %v5720, 96
        %v5815 = vpop.permute.xlu0 %5814
        %5816 = vrot.lane.b32.xlu0 %v5721, 96
        %v5817 = vpop.permute.xlu0 %5816
        %5818 = vrot.lane.b32.xlu0 %v5722, 96
        %v5819 = vpop.permute.xlu0 %5818
        %5820 = vrot.lane.b32.xlu0 %v5723, 96
        %v5821 = vpop.permute.xlu0 %5820
        %5822 = vrot.lane.b32.xlu0 %v5724, 96
        %v5823 = vpop.permute.xlu0 %5822
        %5824 = vrot.lane.b32.xlu0 %v5725, 96
        %v5825 = vpop.permute.xlu0 %5824
        %5826 = vrot.lane.b32.xlu0 %v5726, 96
        %v5827 = vpop.permute.xlu0 %5826
        %5828 = vrot.lane.b32.xlu0 %v5727, 96
        %v5829 = vpop.permute.xlu0 %5828
        %5830 = vrot.lane.b32.xlu0 %v5728, 96
        %v5831 = vpop.permute.xlu0 %5830
        %5832 = vrot.lane.b32.xlu0 %v5729, 96
        %v5833 = vpop.permute.xlu0 %5832
        %5834 = vrot.lane.b32.xlu0 %v5730, 96
        %v5835 = vpop.permute.xlu0 %5834
        %5836 = vrot.lane.b32.xlu0 %v5731, 96
        %v5837 = vpop.permute.xlu0 %5836
        %5838 = vrot.lane.b32.xlu0 %v5732, 96
        %v5839 = vpop.permute.xlu0 %5838
        %5840 = vrot.lane.b32.xlu0 %v5733, 96
        %v5841 = vpop.permute.xlu0 %5840
        %5842 = vrot.lane.b32.xlu0 %v5734, 96
        %v5843 = vpop.permute.xlu0 %5842
        %5844 = vrot.lane.b32.xlu0 %v5735, 96
        %v5845 = vpop.permute.xlu0 %5844
        %5846 = vrot.lane.b32.xlu0 %v5736, 96
        %v5847 = vpop.permute.xlu0 %5846
        %5848 = vrot.lane.b32.xlu0 %v5737, 96
        %v5849 = vpop.permute.xlu0 %5848
        %5850 = vrot.lane.b32.xlu0 %v5738, 96
        %v5851 = vpop.permute.xlu0 %5850
        %5852 = vrot.lane.b32.xlu0 %v5739, 96
        %v5853 = vpop.permute.xlu0 %5852
        %5854 = vrot.lane.b32.xlu0 %v5740, 96
        %v5855 = vpop.permute.xlu0 %5854
        %5856 = vrot.lane.b32.xlu0 %v5741, 96
        %v5857 = vpop.permute.xlu0 %5856
        %5858 = vrot.lane.b32.xlu0 %v5742, 96
        %v5859 = vpop.permute.xlu0 %5858
        %5860 = vrot.lane.b32.xlu0 %v5743, 96
        %v5861 = vpop.permute.xlu0 %5860
        %5862 = vrot.lane.b32.xlu0 %v5744, 96
        %v5863 = vpop.permute.xlu0 %5862
        %5864 = vrot.lane.b32.xlu0 %v5745, 96
        %v5865 = vpop.permute.xlu0 %5864
        %vm5906 = vcmask 1044224
        %5907 = vst.msk [vmem:[#allocation5] sm:$0xf] %vm5906, %v5787
        %5908 = vst.msk [vmem:[#allocation5 + $0x8] sm:$0xf] %vm5906, %v5789
        %5909 = vst.msk [vmem:[#allocation5 + $0x10] sm:$0xf] %vm5906, %v5791
        %5910 = vst.msk [vmem:[#allocation5 + $0x18] sm:$0xf] %vm5906, %v5793
        %5911 = vst.msk [vmem:[#allocation5 + $0x20] sm:$0xf] %vm5906, %v5795
        %5912 = vst.msk [vmem:[#allocation5 + $0x28] sm:$0xf] %vm5906, %v5797
        %5913 = vst.msk [vmem:[#allocation5 + $0x30] sm:$0xf] %vm5906, %v5799
        %5914 = vst.msk [vmem:[#allocation5 + $0x38] sm:$0xf] %vm5906, %v5801
        %5915 = vst.msk [vmem:[#allocation5 + $0x40] sm:$0xf] %vm5906, %v5803
        %5916 = vst.msk [vmem:[#allocation5 + $0x48] sm:$0xf] %vm5906, %v5805
        %5917 = vst.msk [vmem:[#allocation5 + $0x50] sm:$0xf] %vm5906, %v5807
        %5918 = vst.msk [vmem:[#allocation5 + $0x58] sm:$0xf] %vm5906, %v5809
        %5919 = vst.msk [vmem:[#allocation5 + $0x60] sm:$0xf] %vm5906, %v5811
        %5920 = vst.msk [vmem:[#allocation5 + $0x68] sm:$0xf] %vm5906, %v5813
        %5921 = vst.msk [vmem:[#allocation5 + $0x70] sm:$0xf] %vm5906, %v5815
        %5922 = vst.msk [vmem:[#allocation5 + $0x78] sm:$0xf] %vm5906, %v5817
        %5923 = vst.msk [vmem:[#allocation5 + $0x80] sm:$0xf] %vm5906, %v5819
        %5924 = vst.msk [vmem:[#allocation5 + $0x88] sm:$0xf] %vm5906, %v5821
        %5925 = vst.msk [vmem:[#allocation5 + $0x90] sm:$0xf] %vm5906, %v5823
        %5926 = vst.msk [vmem:[#allocation5 + $0x98] sm:$0xf] %vm5906, %v5825
        %5927 = vst.msk [vmem:[#allocation5 + $0xa0] sm:$0xf] %vm5906, %v5827
        %5928 = vst.msk [vmem:[#allocation5 + $0xa8] sm:$0xf] %vm5906, %v5829
        %5929 = vst.msk [vmem:[#allocation5 + $0xb0] sm:$0xf] %vm5906, %v5831
        %5930 = vst.msk [vmem:[#allocation5 + $0xb8] sm:$0xf] %vm5906, %v5833
        %5931 = vst.msk [vmem:[#allocation5 + $0xc0] sm:$0xf] %vm5906, %v5835
        %5932 = vst.msk [vmem:[#allocation5 + $0xc8] sm:$0xf] %vm5906, %v5837
        %5933 = vst.msk [vmem:[#allocation5 + $0xd0] sm:$0xf] %vm5906, %v5839
        %5934 = vst.msk [vmem:[#allocation5 + $0xd8] sm:$0xf] %vm5906, %v5841
        %5935 = vst.msk [vmem:[#allocation5 + $0xe0] sm:$0xf] %vm5906, %v5843
        %5936 = vst.msk [vmem:[#allocation5 + $0xe8] sm:$0xf] %vm5906, %v5845
        %5937 = vst.msk [vmem:[#allocation5 + $0xf0] sm:$0xf] %vm5906, %v5847
        %5938 = vst.msk [vmem:[#allocation5 + $0xf8] sm:$0xf] %vm5906, %v5849
        %5939 = vst.msk [vmem:[#allocation5 + $0x100] sm:$0xf] %vm5906, %v5851
        %5940 = vst.msk [vmem:[#allocation5 + $0x108] sm:$0xf] %vm5906, %v5853
        %5941 = vst.msk [vmem:[#allocation5 + $0x110] sm:$0xf] %vm5906, %v5855
        %5942 = vst.msk [vmem:[#allocation5 + $0x118] sm:$0xf] %vm5906, %v5857
        %5943 = vst.msk [vmem:[#allocation5 + $0x120] sm:$0xf] %vm5906, %v5859
        %5944 = vst.msk [vmem:[#allocation5 + $0x128] sm:$0xf] %vm5906, %v5861
        %5945 = vst.msk [vmem:[#allocation5 + $0x130] sm:$0xf] %vm5906, %v5863
        %5946 = vst.msk [vmem:[#allocation5 + $0x138] sm:$0xf] %vm5906, %v5865
        %v5947 = vld [vmem:[#allocation4 + $0x4] sm:$0xff]
        %v5948 = vld [vmem:[#allocation4 + $0xc] sm:$0xff]
        %v5949 = vld [vmem:[#allocation4 + $0x1c] sm:$0xff]
        %v5950 = vld [vmem:[#allocation4 + $0x24] sm:$0xff]
        %v5951 = vld [vmem:[#allocation4 + $0x34] sm:$0xff]
        %v5952 = vld [vmem:[#allocation4 + $0x3c] sm:$0xff]
        %v5953 = vld [vmem:[#allocation4 + $0x4c] sm:$0xff]
        %v5954 = vld [vmem:[#allocation4 + $0x54] sm:$0xff]
        %v5955 = vld [vmem:[#allocation4 + $0x64] sm:$0xff]
        %v5956 = vld [vmem:[#allocation4 + $0x6c] sm:$0xff]
        %v5957 = vld [vmem:[#allocation4 + $0x7c] sm:$0xff]
        %v5958 = vld [vmem:[#allocation4 + $0x84] sm:$0xff]
        %v5959 = vld [vmem:[#allocation4 + $0x94] sm:$0xff]
        %v5960 = vld [vmem:[#allocation4 + $0x9c] sm:$0xff]
        %v5961 = vld [vmem:[#allocation4 + $0xac] sm:$0xff]
        %v5962 = vld [vmem:[#allocation4 + $0xb4] sm:$0xff]
        %v5963 = vld [vmem:[#allocation4 + $0xc4] sm:$0xff]
        %v5964 = vld [vmem:[#allocation4 + $0xcc] sm:$0xff]
        %v5965 = vld [vmem:[#allocation4 + $0xdc] sm:$0xff]
        %v5966 = vld [vmem:[#allocation4 + $0xe4] sm:$0xff]
        %v5967 = vld [vmem:[#allocation4 + $0xf4] sm:$0xff]
        %v5968 = vld [vmem:[#allocation4 + $0xfc] sm:$0xff]
        %v5969 = vld [vmem:[#allocation4 + $0x10c] sm:$0xff]
        %v5970 = vld [vmem:[#allocation4 + $0x114] sm:$0xff]
        %v5971 = vld [vmem:[#allocation4 + $0x124] sm:$0xff]
        %v5972 = vld [vmem:[#allocation4 + $0x12c] sm:$0xff]
        %v5973 = vld [vmem:[#allocation4 + $0x13c] sm:$0xff]
        %v5974 = vld [vmem:[#allocation4 + $0x144] sm:$0xff]
        %v5975 = vld [vmem:[#allocation4 + $0x154] sm:$0xff]
        %v5976 = vld [vmem:[#allocation4 + $0x15c] sm:$0xff]
        %v5977 = vld [vmem:[#allocation4 + $0x16c] sm:$0xff]
        %v5978 = vld [vmem:[#allocation4 + $0x174] sm:$0xff]
        %v5979 = vld [vmem:[#allocation4 + $0x184] sm:$0xff]
        %v5980 = vld [vmem:[#allocation4 + $0x18c] sm:$0xff]
        %v5981 = vld [vmem:[#allocation4 + $0x19c] sm:$0xff]
        %v5982 = vld [vmem:[#allocation4 + $0x1a4] sm:$0xff]
        %v5983 = vld [vmem:[#allocation4 + $0x1b4] sm:$0xff]
        %v5984 = vld [vmem:[#allocation4 + $0x1bc] sm:$0xff]
        %v5985 = vld [vmem:[#allocation4 + $0x1cc] sm:$0xff]
        %v5986 = vld [vmem:[#allocation4 + $0x1d4] sm:$0xff]
        %v5987 = vpack.c.bf16 %v5947, %v5947
        %v5988 = vpack.c.bf16 %v5948, %v5948
        %v5989 = vpack.c.bf16 %v5949, %v5949
        %v5990 = vpack.c.bf16 %v5950, %v5950
        %v5991 = vpack.c.bf16 %v5951, %v5951
        %v5992 = vpack.c.bf16 %v5952, %v5952
        %v5993 = vpack.c.bf16 %v5953, %v5953
        %v5994 = vpack.c.bf16 %v5954, %v5954
        %v5995 = vpack.c.bf16 %v5955, %v5955
        %v5996 = vpack.c.bf16 %v5956, %v5956
        %v5997 = vpack.c.bf16 %v5957, %v5957
        %v5998 = vpack.c.bf16 %v5958, %v5958
        %v5999 = vpack.c.bf16 %v5959, %v5959
        %v6000 = vpack.c.bf16 %v5960, %v5960
        %v6001 = vpack.c.bf16 %v5961, %v5961
        %v6002 = vpack.c.bf16 %v5962, %v5962
        %v6003 = vpack.c.bf16 %v5963, %v5963
        %v6004 = vpack.c.bf16 %v5964, %v5964
        %v6005 = vpack.c.bf16 %v5965, %v5965
        %v6006 = vpack.c.bf16 %v5966, %v5966
        %v6007 = vpack.c.bf16 %v5967, %v5967
        %v6008 = vpack.c.bf16 %v5968, %v5968
        %v6009 = vpack.c.bf16 %v5969, %v5969
        %v6010 = vpack.c.bf16 %v5970, %v5970
        %v6011 = vpack.c.bf16 %v5971, %v5971
        %v6012 = vpack.c.bf16 %v5972, %v5972
        %v6013 = vpack.c.bf16 %v5973, %v5973
        %v6014 = vpack.c.bf16 %v5974, %v5974
        %v6015 = vpack.c.bf16 %v5975, %v5975
        %v6016 = vpack.c.bf16 %v5976, %v5976
        %v6017 = vpack.c.bf16 %v5977, %v5977
        %v6018 = vpack.c.bf16 %v5978, %v5978
        %v6019 = vpack.c.bf16 %v5979, %v5979
        %v6020 = vpack.c.bf16 %v5980, %v5980
        %v6021 = vpack.c.bf16 %v5981, %v5981
        %v6022 = vpack.c.bf16 %v5982, %v5982
        %v6023 = vpack.c.bf16 %v5983, %v5983
        %v6024 = vpack.c.bf16 %v5984, %v5984
        %v6025 = vpack.c.bf16 %v5985, %v5985
        %v6026 = vpack.c.bf16 %v5986, %v5986
        %6027 = vst.msk [vmem:[#allocation5 + $0x4] sm:$0xf] %vm398, %v5987
        %6028 = vst.msk [vmem:[#allocation5 + $0xc] sm:$0xf] %vm398, %v5988
        %6029 = vst.msk [vmem:[#allocation5 + $0x14] sm:$0xf] %vm398, %v5989
        %6030 = vst.msk [vmem:[#allocation5 + $0x1c] sm:$0xf] %vm398, %v5990
        %6031 = vst.msk [vmem:[#allocation5 + $0x24] sm:$0xf] %vm398, %v5991
        %6032 = vst.msk [vmem:[#allocation5 + $0x2c] sm:$0xf] %vm398, %v5992
        %6033 = vst.msk [vmem:[#allocation5 + $0x34] sm:$0xf] %vm398, %v5993
        %6034 = vst.msk [vmem:[#allocation5 + $0x3c] sm:$0xf] %vm398, %v5994
        %6035 = vst.msk [vmem:[#allocation5 + $0x44] sm:$0xf] %vm398, %v5995
        %6036 = vst.msk [vmem:[#allocation5 + $0x4c] sm:$0xf] %vm398, %v5996
        %6037 = vst.msk [vmem:[#allocation5 + $0x54] sm:$0xf] %vm398, %v5997
        %6038 = vst.msk [vmem:[#allocation5 + $0x5c] sm:$0xf] %vm398, %v5998
        %6039 = vst.msk [vmem:[#allocation5 + $0x64] sm:$0xf] %vm398, %v5999
        %6040 = vst.msk [vmem:[#allocation5 + $0x6c] sm:$0xf] %vm398, %v6000
        %6041 = vst.msk [vmem:[#allocation5 + $0x74] sm:$0xf] %vm398, %v6001
        %6042 = vst.msk [vmem:[#allocation5 + $0x7c] sm:$0xf] %vm398, %v6002
        %6043 = vst.msk [vmem:[#allocation5 + $0x84] sm:$0xf] %vm398, %v6003
        %6044 = vst.msk [vmem:[#allocation5 + $0x8c] sm:$0xf] %vm398, %v6004
        %6045 = vst.msk [vmem:[#allocation5 + $0x94] sm:$0xf] %vm398, %v6005
        %6046 = vst.msk [vmem:[#allocation5 + $0x9c] sm:$0xf] %vm398, %v6006
        %6047 = vst.msk [vmem:[#allocation5 + $0xa4] sm:$0xf] %vm398, %v6007
        %6048 = vst.msk [vmem:[#allocation5 + $0xac] sm:$0xf] %vm398, %v6008
        %6049 = vst.msk [vmem:[#allocation5 + $0xb4] sm:$0xf] %vm398, %v6009
        %6050 = vst.msk [vmem:[#allocation5 + $0xbc] sm:$0xf] %vm398, %v6010
        %6051 = vst.msk [vmem:[#allocation5 + $0xc4] sm:$0xf] %vm398, %v6011
        %6052 = vst.msk [vmem:[#allocation5 + $0xcc] sm:$0xf] %vm398, %v6012
        %6053 = vst.msk [vmem:[#allocation5 + $0xd4] sm:$0xf] %vm398, %v6013
        %6054 = vst.msk [vmem:[#allocation5 + $0xdc] sm:$0xf] %vm398, %v6014
        %6055 = vst.msk [vmem:[#allocation5 + $0xe4] sm:$0xf] %vm398, %v6015
        %6056 = vst.msk [vmem:[#allocation5 + $0xec] sm:$0xf] %vm398, %v6016
        %6057 = vst.msk [vmem:[#allocation5 + $0xf4] sm:$0xf] %vm398, %v6017
        %6058 = vst.msk [vmem:[#allocation5 + $0xfc] sm:$0xf] %vm398, %v6018
        %6059 = vst.msk [vmem:[#allocation5 + $0x104] sm:$0xf] %vm398, %v6019
        %6060 = vst.msk [vmem:[#allocation5 + $0x10c] sm:$0xf] %vm398, %v6020
        %6061 = vst.msk [vmem:[#allocation5 + $0x114] sm:$0xf] %vm398, %v6021
        %6062 = vst.msk [vmem:[#allocation5 + $0x11c] sm:$0xf] %vm398, %v6022
        %6063 = vst.msk [vmem:[#allocation5 + $0x124] sm:$0xf] %vm398, %v6023
        %6064 = vst.msk [vmem:[#allocation5 + $0x12c] sm:$0xf] %vm398, %v6024
        %6065 = vst.msk [vmem:[#allocation5 + $0x134] sm:$0xf] %vm398, %v6025
        %6066 = vst.msk [vmem:[#allocation5 + $0x13c] sm:$0xf] %vm398, %v6026
        %v6067 = vld [vmem:[#allocation5] sm:$0xff]
        %v6068 = vld [vmem:[#allocation5 + $0x8] sm:$0xff]
        %v6069 = vld [vmem:[#allocation5 + $0x10] sm:$0xff]
        %v6070 = vld [vmem:[#allocation5 + $0x18] sm:$0xff]
        %v6071 = vld [vmem:[#allocation5 + $0x20] sm:$0xff]
        %v6072 = vld [vmem:[#allocation5 + $0x28] sm:$0xff]
        %v6073 = vld [vmem:[#allocation5 + $0x30] sm:$0xff]
        %v6074 = vld [vmem:[#allocation5 + $0x38] sm:$0xff]
        %v6075 = vld [vmem:[#allocation5 + $0x40] sm:$0xff]
        %v6076 = vld [vmem:[#allocation5 + $0x48] sm:$0xff]
        %v6077 = vld [vmem:[#allocation5 + $0x50] sm:$0xff]
        %v6078 = vld [vmem:[#allocation5 + $0x58] sm:$0xff]
        %v6079 = vld [vmem:[#allocation5 + $0x60] sm:$0xff]
        %v6080 = vld [vmem:[#allocation5 + $0x68] sm:$0xff]
        %v6081 = vld [vmem:[#allocation5 + $0x70] sm:$0xff]
        %v6082 = vld [vmem:[#allocation5 + $0x78] sm:$0xff]
        %v6083 = vld [vmem:[#allocation5 + $0x80] sm:$0xff]
        %v6084 = vld [vmem:[#allocation5 + $0x88] sm:$0xff]
        %v6085 = vld [vmem:[#allocation5 + $0x90] sm:$0xff]
        %v6086 = vld [vmem:[#allocation5 + $0x98] sm:$0xff]
        %v6087 = vld [vmem:[#allocation5 + $0xa0] sm:$0xff]
        %v6088 = vld [vmem:[#allocation5 + $0xa8] sm:$0xff]
        %v6089 = vld [vmem:[#allocation5 + $0xb0] sm:$0xff]
        %v6090 = vld [vmem:[#allocation5 + $0xb8] sm:$0xff]
        %v6091 = vld [vmem:[#allocation5 + $0xc0] sm:$0xff]
        %v6092 = vld [vmem:[#allocation5 + $0xc8] sm:$0xff]
        %v6093 = vld [vmem:[#allocation5 + $0xd0] sm:$0xff]
        %v6094 = vld [vmem:[#allocation5 + $0xd8] sm:$0xff]
        %v6095 = vld [vmem:[#allocation5 + $0xe0] sm:$0xff]
        %v6096 = vld [vmem:[#allocation5 + $0xe8] sm:$0xff]
        %v6097 = vld [vmem:[#allocation5 + $0xf0] sm:$0xff]
        %v6098 = vld [vmem:[#allocation5 + $0xf8] sm:$0xff]
        %v6099 = vld [vmem:[%s5] sm:$0xf]
        %v6100 = vld [vmem:[%s5 + $0x4] sm:$0xf]
        %v6101 = vld [vmem:[%s5 + $0x8] sm:$0xf]
        %v6102 = vld [vmem:[%s5 + $0xc] sm:$0xf]
        %v6103 = vld [vmem:[%s5 + $0x10] sm:$0xf]
        %v6104 = vld [vmem:[%s5 + $0x14] sm:$0xf]
        %v6105 = vld [vmem:[%s5 + $0x18] sm:$0xf]
        %v6106 = vld [vmem:[%s5 + $0x1c] sm:$0xf]
        %v6107 = vld [vmem:[%s5 + $0x20] sm:$0xf]
        %v6108 = vld [vmem:[%s5 + $0x24] sm:$0xf]
        %v6109 = vld [vmem:[%s5 + $0x28] sm:$0xf]
        %v6110 = vld [vmem:[%s5 + $0x2c] sm:$0xf]
        %v6111 = vld [vmem:[%s5 + $0x30] sm:$0xf]
        %v6112 = vld [vmem:[%s5 + $0x34] sm:$0xf]
        %v6113 = vld [vmem:[%s5 + $0x38] sm:$0xf]
        %v6114 = vld [vmem:[%s5 + $0x3c] sm:$0xf]
        %v6115 = vld [vmem:[%s5 + $0x40] sm:$0xf]
        %v6116 = vld [vmem:[%s5 + $0x44] sm:$0xf]
        %v6117 = vld [vmem:[%s5 + $0x48] sm:$0xf]
        %v6118 = vld [vmem:[%s5 + $0x4c] sm:$0xf]
        %v6119 = vld [vmem:[%s1808] sm:$0xff]
        %v6120 = vld [vmem:[%s1808 + $0x8] sm:$0xff]
        %v6121 = vld [vmem:[%s1808 + $0x10] sm:$0xff]
        %v6122 = vld [vmem:[%s1808 + $0x18] sm:$0xff]
        %v6123 = vld [vmem:[%s1808 + $0x20] sm:$0xff]
        %v6124 = vld [vmem:[%s1808 + $0x28] sm:$0xff]
        %v6125 = vld [vmem:[%s1808 + $0x30] sm:$0xff]
        %v6126 = vld [vmem:[%s1808 + $0x38] sm:$0xff]
        %v6127 = vld [vmem:[%s1808 + $0x40] sm:$0xff]
        %v6128 = vld [vmem:[%s1808 + $0x48] sm:$0xff]
        %v6129 = vld [vmem:[%s1808 + $0x50] sm:$0xff]
        %v6130 = vld [vmem:[%s1808 + $0x58] sm:$0xff]
        %v6131 = vld [vmem:[%s1808 + $0x60] sm:$0xff]
        %v6132 = vld [vmem:[%s1808 + $0x68] sm:$0xff]
        %v6133 = vld [vmem:[%s1808 + $0x70] sm:$0xff]
        %v6134 = vld [vmem:[%s1808 + $0x78] sm:$0xff]
        %v6135 = vld [vmem:[%s1808 + $0x80] sm:$0xff]
        %v6136 = vld [vmem:[%s1808 + $0x88] sm:$0xff]
        %v6137 = vld [vmem:[%s1808 + $0x90] sm:$0xff]
        %v6138 = vld [vmem:[%s1808 + $0x98] sm:$0xff]
        %v6139 = vld [vmem:[%s1808 + $0xa0] sm:$0xff]
        %v6140 = vld [vmem:[%s1808 + $0xa8] sm:$0xff]
        %v6141 = vld [vmem:[%s1808 + $0xb0] sm:$0xff]
        %v6142 = vld [vmem:[%s1808 + $0xb8] sm:$0xff]
        %v6143 = vld [vmem:[%s1808 + $0xc0] sm:$0xff]
        %v6144 = vld [vmem:[%s1808 + $0xc8] sm:$0xff]
        %v6145 = vld [vmem:[%s1808 + $0xd0] sm:$0xff]
        %v6146 = vld [vmem:[%s1808 + $0xd8] sm:$0xff]
        %v6147 = vld [vmem:[%s1808 + $0xe0] sm:$0xff]
        %v6148 = vld [vmem:[%s1808 + $0xe8] sm:$0xff]
        %v6149 = vld [vmem:[%s1808 + $0xf0] sm:$0xff]
        %v6150 = vld [vmem:[%s1808 + $0xf8] sm:$0xff]
        %s6151 = scalar_lea.vmem %s5, 80
        %v6152 = vld [vmem:[%s6151] sm:$0xf]
        %v6153 = vld [vmem:[%s6151 + $0x4] sm:$0xf]
        %v6154 = vld [vmem:[%s6151 + $0x8] sm:$0xf]
        %v6155 = vld [vmem:[%s6151 + $0xc] sm:$0xf]
        %v6156 = vld [vmem:[%s6151 + $0x10] sm:$0xf]
        %v6157 = vld [vmem:[%s6151 + $0x14] sm:$0xf]
        %v6158 = vld [vmem:[%s6151 + $0x18] sm:$0xf]
        %v6159 = vld [vmem:[%s6151 + $0x1c] sm:$0xf]
        %v6160 = vld [vmem:[%s6151 + $0x20] sm:$0xf]
        %v6161 = vld [vmem:[%s6151 + $0x24] sm:$0xf]
        %v6162 = vld [vmem:[%s6151 + $0x28] sm:$0xf]
        %v6163 = vld [vmem:[%s6151 + $0x2c] sm:$0xf]
        %v6164 = vld [vmem:[%s6151 + $0x30] sm:$0xf]
        %v6165 = vld [vmem:[%s6151 + $0x34] sm:$0xf]
        %v6166 = vld [vmem:[%s6151 + $0x38] sm:$0xf]
        %v6167 = vld [vmem:[%s6151 + $0x3c] sm:$0xf]
        %v6168 = vld [vmem:[%s6151 + $0x40] sm:$0xf]
        %v6169 = vld [vmem:[%s6151 + $0x44] sm:$0xf]
        %v6170 = vld [vmem:[%s6151 + $0x48] sm:$0xf]
        %v6171 = vld [vmem:[%s6151 + $0x4c] sm:$0xf]
        %v6204 = vunpack.c.l.b16 %v6119
        %v6205 = vunpack.c.h.b16 %v6119
        %v6206 = vunpack.c.l.b16 %v6120
        %v6207 = vunpack.c.h.b16 %v6120
        %v6208 = vunpack.c.l.b16 %v6121
        %v6209 = vunpack.c.h.b16 %v6121
        %v6210 = vunpack.c.l.b16 %v6122
        %v6211 = vunpack.c.h.b16 %v6122
        %v6212 = vunpack.c.l.b16 %v6123
        %v6213 = vunpack.c.h.b16 %v6123
        %v6214 = vunpack.c.l.b16 %v6124
        %v6215 = vunpack.c.h.b16 %v6124
        %v6216 = vunpack.c.l.b16 %v6125
        %v6217 = vunpack.c.h.b16 %v6125
        %v6218 = vunpack.c.l.b16 %v6126
        %v6219 = vunpack.c.h.b16 %v6126
        %v6220 = vunpack.c.l.b16 %v6127
        %v6221 = vunpack.c.h.b16 %v6127
        %v6222 = vunpack.c.l.b16 %v6128
        %v6223 = vunpack.c.h.b16 %v6128
        %v6224 = vunpack.c.l.b16 %v6129
        %v6225 = vunpack.c.h.b16 %v6129
        %v6226 = vunpack.c.l.b16 %v6130
        %v6227 = vunpack.c.h.b16 %v6130
        %v6228 = vunpack.c.l.b16 %v6131
        %v6229 = vunpack.c.h.b16 %v6131
        %v6230 = vunpack.c.l.b16 %v6132
        %v6231 = vunpack.c.h.b16 %v6132
        %v6232 = vunpack.c.l.b16 %v6133
        %v6233 = vunpack.c.h.b16 %v6133
        %v6234 = vunpack.c.l.b16 %v6134
        %v6235 = vunpack.c.h.b16 %v6134
        %v6236 = vunpack.c.l.b16 %v6135
        %v6237 = vunpack.c.h.b16 %v6135
        %v6238 = vunpack.c.l.b16 %v6136
        %v6239 = vunpack.c.h.b16 %v6136
        %v6240 = vunpack.c.l.b16 %v6137
        %v6241 = vunpack.c.h.b16 %v6137
        %v6242 = vunpack.c.l.b16 %v6138
        %v6243 = vunpack.c.h.b16 %v6138
        %v6244 = vunpack.c.l.b16 %v6139
        %v6245 = vunpack.c.h.b16 %v6139
        %v6246 = vunpack.c.l.b16 %v6140
        %v6247 = vunpack.c.h.b16 %v6140
        %v6248 = vunpack.c.l.b16 %v6141
        %v6249 = vunpack.c.h.b16 %v6141
        %v6250 = vunpack.c.l.b16 %v6142
        %v6251 = vunpack.c.h.b16 %v6142
        %v6252 = vunpack.c.l.b16 %v6143
        %v6253 = vunpack.c.h.b16 %v6143
        %v6254 = vunpack.c.l.b16 %v6144
        %v6255 = vunpack.c.h.b16 %v6144
        %v6256 = vunpack.c.l.b16 %v6145
        %v6257 = vunpack.c.h.b16 %v6145
        %v6258 = vunpack.c.l.b16 %v6146
        %v6259 = vunpack.c.h.b16 %v6146
        %v6260 = vunpack.c.l.b16 %v6147
        %v6261 = vunpack.c.h.b16 %v6147
        %v6262 = vunpack.c.l.b16 %v6148
        %v6263 = vunpack.c.h.b16 %v6148
        %v6264 = vunpack.c.l.b16 %v6149
        %v6265 = vunpack.c.h.b16 %v6149
        %v6266 = vunpack.c.l.b16 %v6150
        %v6267 = vunpack.c.h.b16 %v6150
        %v6268 = vpack.c.b16 %v6206, %v6204
        %v6269 = vpack.c.b16 %v6207, %v6205
        %v6270 = vpack.c.b16 %v6210, %v6208
        %v6271 = vpack.c.b16 %v6211, %v6209
        %v6272 = vpack.c.b16 %v6214, %v6212
        %v6273 = vpack.c.b16 %v6215, %v6213
        %v6274 = vpack.c.b16 %v6218, %v6216
        %v6275 = vpack.c.b16 %v6219, %v6217
        %v6276 = vpack.c.b16 %v6222, %v6220
        %v6277 = vpack.c.b16 %v6223, %v6221
        %v6278 = vpack.c.b16 %v6226, %v6224
        %v6279 = vpack.c.b16 %v6227, %v6225
        %v6280 = vpack.c.b16 %v6230, %v6228
        %v6281 = vpack.c.b16 %v6231, %v6229
        %v6282 = vpack.c.b16 %v6234, %v6232
        %v6283 = vpack.c.b16 %v6235, %v6233
        %v6284 = vpack.c.b16 %v6238, %v6236
        %v6285 = vpack.c.b16 %v6239, %v6237
        %v6286 = vpack.c.b16 %v6242, %v6240
        %v6287 = vpack.c.b16 %v6243, %v6241
        %v6288 = vpack.c.b16 %v6246, %v6244
        %v6289 = vpack.c.b16 %v6247, %v6245
        %v6290 = vpack.c.b16 %v6250, %v6248
        %v6291 = vpack.c.b16 %v6251, %v6249
        %v6292 = vpack.c.b16 %v6254, %v6252
        %v6293 = vpack.c.b16 %v6255, %v6253
        %v6294 = vpack.c.b16 %v6258, %v6256
        %v6295 = vpack.c.b16 %v6259, %v6257
        %v6296 = vpack.c.b16 %v6262, %v6260
        %v6297 = vpack.c.b16 %v6263, %v6261
        %v6298 = vpack.c.b16 %v6266, %v6264
        %v6299 = vpack.c.b16 %v6267, %v6265
        %v6336 = vunpack.c.l.b16 %v6152
        %v6337 = vunpack.c.l.b16 %v6153
        %v6338 = vunpack.c.l.b16 %v6154
        %v6339 = vunpack.c.l.b16 %v6155
        %v6340 = vunpack.c.l.b16 %v6156
        %v6341 = vunpack.c.l.b16 %v6157
        %v6342 = vunpack.c.l.b16 %v6158
        %v6343 = vunpack.c.l.b16 %v6159
        %v6344 = vunpack.c.l.b16 %v6160
        %v6345 = vunpack.c.l.b16 %v6161
        %v6346 = vunpack.c.l.b16 %v6162
        %v6347 = vunpack.c.l.b16 %v6163
        %v6348 = vunpack.c.l.b16 %v6164
        %v6349 = vunpack.c.l.b16 %v6165
        %v6350 = vunpack.c.l.b16 %v6166
        %v6351 = vunpack.c.l.b16 %v6167
        %v6352 = vunpack.c.l.b16 %v6168
        %v6353 = vunpack.c.l.b16 %v6169
        %v6354 = vunpack.c.l.b16 %v6170
        %v6355 = vunpack.c.l.b16 %v6171
        %v6356 = vpack.c.b16 %v6337, %v6336
        %v6357 = vpack.c.b16 %v6339, %v6338
        %v6358 = vpack.c.b16 %v6341, %v6340
        %v6359 = vpack.c.b16 %v6343, %v6342
        %v6360 = vpack.c.b16 %v6345, %v6344
        %v6361 = vpack.c.b16 %v6347, %v6346
        %v6362 = vpack.c.b16 %v6349, %v6348
        %v6363 = vpack.c.b16 %v6351, %v6350
        %v6364 = vpack.c.b16 %v6353, %v6352
        %v6365 = vpack.c.b16 %v6355, %v6354
        %v6377 = vsel %vm395, %v6269, 0
        %v6380 = vsel %vm395, %v6271, 0
        %v6383 = vsel %vm395, %v6273, 0
        %v6386 = vsel %vm395, %v6275, 0
        %v6389 = vsel %vm395, %v6277, 0
        %v6392 = vsel %vm395, %v6279, 0
        %v6395 = vsel %vm395, %v6281, 0
        %v6398 = vsel %vm395, %v6283, 0
        %v6401 = vsel %vm395, %v6285, 0
        %v6404 = vsel %vm395, %v6287, 0
        %v6407 = vsel %vm395, %v6289, 0
        %v6410 = vsel %vm395, %v6291, 0
        %v6413 = vsel %vm395, %v6293, 0
        %v6416 = vsel %vm395, %v6295, 0
        %v6419 = vsel %vm395, %v6297, 0
        %v6422 = vsel %vm395, %v6299, 0
        %6424 = vmatpush.bf16.msra.mxu0 %v6363
        %6425 = vmatpush.bf16.msra.mxu0 %v6362
        %6426 = vmatpush.bf16.msra.mxu0 %v6361
        %6427 = vmatpush.bf16.msra.mxu0 %v6360
        %6428 = vmatpush.bf16.msra.mxu0 %v6359
        %6429 = vmatpush.bf16.msra.mxu0 %v6358
        %6430 = vmatpush.bf16.msra.mxu0 %v6357
        %6431 = vmatpush.bf16.msra.mxu0 %v6356
        %6432 = vmatmul.bf16.gmra.mxu0 %v6268
        %v6433 = vpop.f32.mrf.mxu0
        %v6434 = vadd.f32 0.0, %v6433
        %v6435 = vpop.f32.mrf.mxu0
        %v6436 = vadd.f32 0.0, %v6435
        %6437 = vmatmul.bf16.gmra.mxu0 %v6270
        %v6438 = vpop.f32.mrf.mxu0
        %v6439 = vadd.f32 0.0, %v6438
        %v6440 = vpop.f32.mrf.mxu0
        %v6441 = vadd.f32 0.0, %v6440
        %6442 = vmatmul.bf16.gmra.mxu0 %v6272
        %v6443 = vpop.f32.mrf.mxu0
        %v6444 = vadd.f32 0.0, %v6443
        %v6445 = vpop.f32.mrf.mxu0
        %v6446 = vadd.f32 0.0, %v6445
        %6447 = vmatmul.bf16.gmra.mxu0 %v6274
        %v6448 = vpop.f32.mrf.mxu0
        %v6449 = vadd.f32 0.0, %v6448
        %v6450 = vpop.f32.mrf.mxu0
        %v6451 = vadd.f32 0.0, %v6450
        %6452 = vmatmul.bf16.gmra.mxu0 %v6276
        %v6453 = vpop.f32.mrf.mxu0
        %v6454 = vadd.f32 0.0, %v6453
        %v6455 = vpop.f32.mrf.mxu0
        %v6456 = vadd.f32 0.0, %v6455
        %6457 = vmatmul.bf16.gmra.mxu0 %v6278
        %v6458 = vpop.f32.mrf.mxu0
        %v6459 = vadd.f32 0.0, %v6458
        %v6460 = vpop.f32.mrf.mxu0
        %v6461 = vadd.f32 0.0, %v6460
        %6462 = vmatmul.bf16.gmra.mxu0 %v6280
        %v6463 = vpop.f32.mrf.mxu0
        %v6464 = vadd.f32 0.0, %v6463
        %v6465 = vpop.f32.mrf.mxu0
        %v6466 = vadd.f32 0.0, %v6465
        %6467 = vmatmul.bf16.gmra.mxu0 %v6282
        %v6468 = vpop.f32.mrf.mxu0
        %v6469 = vadd.f32 0.0, %v6468
        %v6470 = vpop.f32.mrf.mxu0
        %v6471 = vadd.f32 0.0, %v6470
        %6472 = vmatmul.bf16.gmra.mxu0 %v6284
        %v6473 = vpop.f32.mrf.mxu0
        %v6474 = vadd.f32 0.0, %v6473
        %v6475 = vpop.f32.mrf.mxu0
        %v6476 = vadd.f32 0.0, %v6475
        %6477 = vmatmul.bf16.gmra.mxu0 %v6286
        %v6478 = vpop.f32.mrf.mxu0
        %v6479 = vadd.f32 0.0, %v6478
        %v6480 = vpop.f32.mrf.mxu0
        %v6481 = vadd.f32 0.0, %v6480
        %6482 = vmatmul.bf16.gmra.mxu0 %v6288
        %v6483 = vpop.f32.mrf.mxu0
        %v6484 = vadd.f32 0.0, %v6483
        %v6485 = vpop.f32.mrf.mxu0
        %v6486 = vadd.f32 0.0, %v6485
        %6487 = vmatmul.bf16.gmra.mxu0 %v6290
        %v6488 = vpop.f32.mrf.mxu0
        %v6489 = vadd.f32 0.0, %v6488
        %v6490 = vpop.f32.mrf.mxu0
        %v6491 = vadd.f32 0.0, %v6490
        %6492 = vmatmul.bf16.gmra.mxu0 %v6292
        %v6493 = vpop.f32.mrf.mxu0
        %v6494 = vadd.f32 0.0, %v6493
        %v6495 = vpop.f32.mrf.mxu0
        %v6496 = vadd.f32 0.0, %v6495
        %6497 = vmatmul.bf16.gmra.mxu0 %v6294
        %v6498 = vpop.f32.mrf.mxu0
        %v6499 = vadd.f32 0.0, %v6498
        %v6500 = vpop.f32.mrf.mxu0
        %v6501 = vadd.f32 0.0, %v6500
        %6502 = vmatmul.bf16.gmra.mxu0 %v6296
        %v6503 = vpop.f32.mrf.mxu0
        %v6504 = vadd.f32 0.0, %v6503
        %v6505 = vpop.f32.mrf.mxu0
        %v6506 = vadd.f32 0.0, %v6505
        %6507 = vmatmul.bf16.gmra.mxu0 %v6298
        %v6508 = vpop.f32.mrf.mxu0
        %v6509 = vadd.f32 0.0, %v6508
        %v6510 = vpop.f32.mrf.mxu0
        %v6511 = vadd.f32 0.0, %v6510
        %6512 = vdwg.mxu0
        %6513 = vmatpush.bf16.msra.mxu0 0
        %6514 = vmatpush.bf16.msra.mxu0 0
        %6515 = vmatpush.bf16.msra.mxu0 0
        %6516 = vmatpush.bf16.msra.mxu0 0
        %6517 = vmatpush.bf16.msra.mxu0 0
        %6518 = vmatpush.bf16.msra.mxu0 0
        %6519 = vmatpush.bf16.msra.mxu0 %v6365
        %6520 = vmatpush.bf16.msra.mxu0 %v6364
        %6521 = vmatmul.bf16.gmra.mxu0 %v6377
        %v6522 = vpop.f32.mrf.mxu0
        %v6523 = vadd.f32 %v6434, %v6522
        %v6524 = vpop.f32.mrf.mxu0
        %v6525 = vadd.f32 %v6436, %v6524
        %6526 = vmatmul.bf16.gmra.mxu0 %v6380
        %v6527 = vpop.f32.mrf.mxu0
        %v6528 = vadd.f32 %v6439, %v6527
        %v6529 = vpop.f32.mrf.mxu0
        %v6530 = vadd.f32 %v6441, %v6529
        %6531 = vmatmul.bf16.gmra.mxu0 %v6383
        %v6532 = vpop.f32.mrf.mxu0
        %v6533 = vadd.f32 %v6444, %v6532
        %v6534 = vpop.f32.mrf.mxu0
        %v6535 = vadd.f32 %v6446, %v6534
        %6536 = vmatmul.bf16.gmra.mxu0 %v6386
        %v6537 = vpop.f32.mrf.mxu0
        %v6538 = vadd.f32 %v6449, %v6537
        %v6539 = vpop.f32.mrf.mxu0
        %v6540 = vadd.f32 %v6451, %v6539
        %6541 = vmatmul.bf16.gmra.mxu0 %v6389
        %v6542 = vpop.f32.mrf.mxu0
        %v6543 = vadd.f32 %v6454, %v6542
        %v6544 = vpop.f32.mrf.mxu0
        %v6545 = vadd.f32 %v6456, %v6544
        %6546 = vmatmul.bf16.gmra.mxu0 %v6392
        %v6547 = vpop.f32.mrf.mxu0
        %v6548 = vadd.f32 %v6459, %v6547
        %v6549 = vpop.f32.mrf.mxu0
        %v6550 = vadd.f32 %v6461, %v6549
        %6551 = vmatmul.bf16.gmra.mxu0 %v6395
        %v6552 = vpop.f32.mrf.mxu0
        %v6553 = vadd.f32 %v6464, %v6552
        %v6554 = vpop.f32.mrf.mxu0
        %v6555 = vadd.f32 %v6466, %v6554
        %6556 = vmatmul.bf16.gmra.mxu0 %v6398
        %v6557 = vpop.f32.mrf.mxu0
        %v6558 = vadd.f32 %v6469, %v6557
        %v6559 = vpop.f32.mrf.mxu0
        %v6560 = vadd.f32 %v6471, %v6559
        %6561 = vmatmul.bf16.gmra.mxu0 %v6401
        %v6562 = vpop.f32.mrf.mxu0
        %v6563 = vadd.f32 %v6474, %v6562
        %v6564 = vpop.f32.mrf.mxu0
        %v6565 = vadd.f32 %v6476, %v6564
        %6566 = vmatmul.bf16.gmra.mxu0 %v6404
        %v6567 = vpop.f32.mrf.mxu0
        %v6568 = vadd.f32 %v6479, %v6567
        %v6569 = vpop.f32.mrf.mxu0
        %v6570 = vadd.f32 %v6481, %v6569
        %6571 = vmatmul.bf16.gmra.mxu0 %v6407
        %v6572 = vpop.f32.mrf.mxu0
        %v6573 = vadd.f32 %v6484, %v6572
        %v6574 = vpop.f32.mrf.mxu0
        %v6575 = vadd.f32 %v6486, %v6574
        %6576 = vmatmul.bf16.gmra.mxu0 %v6410
        %v6577 = vpop.f32.mrf.mxu0
        %v6578 = vadd.f32 %v6489, %v6577
        %v6579 = vpop.f32.mrf.mxu0
        %v6580 = vadd.f32 %v6491, %v6579
        %6581 = vmatmul.bf16.gmra.mxu0 %v6413
        %v6582 = vpop.f32.mrf.mxu0
        %v6583 = vadd.f32 %v6494, %v6582
        %v6584 = vpop.f32.mrf.mxu0
        %v6585 = vadd.f32 %v6496, %v6584
        %6586 = vmatmul.bf16.gmra.mxu0 %v6416
        %v6587 = vpop.f32.mrf.mxu0
        %v6588 = vadd.f32 %v6499, %v6587
        %v6589 = vpop.f32.mrf.mxu0
        %v6590 = vadd.f32 %v6501, %v6589
        %6591 = vmatmul.bf16.gmra.mxu0 %v6419
        %v6592 = vpop.f32.mrf.mxu0
        %v6593 = vadd.f32 %v6504, %v6592
        %v6594 = vpop.f32.mrf.mxu0
        %v6595 = vadd.f32 %v6506, %v6594
        %6596 = vmatmul.bf16.gmra.mxu0 %v6422
        %v6597 = vpop.f32.mrf.mxu0
        %v6598 = vadd.f32 %v6509, %v6597
        %v6599 = vpop.f32.mrf.mxu0
        %v6600 = vadd.f32 %v6511, %v6599
        %6601 = vdwg.mxu0
        %v6634 = vunpack.c.l.b16 %v6067
        %v6635 = vunpack.c.h.b16 %v6067
        %v6636 = vunpack.c.l.b16 %v6068
        %v6637 = vunpack.c.h.b16 %v6068
        %v6638 = vunpack.c.l.b16 %v6069
        %v6639 = vunpack.c.h.b16 %v6069
        %v6640 = vunpack.c.l.b16 %v6070
        %v6641 = vunpack.c.h.b16 %v6070
        %v6642 = vunpack.c.l.b16 %v6071
        %v6643 = vunpack.c.h.b16 %v6071
        %v6644 = vunpack.c.l.b16 %v6072
        %v6645 = vunpack.c.h.b16 %v6072
        %v6646 = vunpack.c.l.b16 %v6073
        %v6647 = vunpack.c.h.b16 %v6073
        %v6648 = vunpack.c.l.b16 %v6074
        %v6649 = vunpack.c.h.b16 %v6074
        %v6650 = vunpack.c.l.b16 %v6075
        %v6651 = vunpack.c.h.b16 %v6075
        %v6652 = vunpack.c.l.b16 %v6076
        %v6653 = vunpack.c.h.b16 %v6076
        %v6654 = vunpack.c.l.b16 %v6077
        %v6655 = vunpack.c.h.b16 %v6077
        %v6656 = vunpack.c.l.b16 %v6078
        %v6657 = vunpack.c.h.b16 %v6078
        %v6658 = vunpack.c.l.b16 %v6079
        %v6659 = vunpack.c.h.b16 %v6079
        %v6660 = vunpack.c.l.b16 %v6080
        %v6661 = vunpack.c.h.b16 %v6080
        %v6662 = vunpack.c.l.b16 %v6081
        %v6663 = vunpack.c.h.b16 %v6081
        %v6664 = vunpack.c.l.b16 %v6082
        %v6665 = vunpack.c.h.b16 %v6082
        %v6666 = vunpack.c.l.b16 %v6083
        %v6667 = vunpack.c.h.b16 %v6083
        %v6668 = vunpack.c.l.b16 %v6084
        %v6669 = vunpack.c.h.b16 %v6084
        %v6670 = vunpack.c.l.b16 %v6085
        %v6671 = vunpack.c.h.b16 %v6085
        %v6672 = vunpack.c.l.b16 %v6086
        %v6673 = vunpack.c.h.b16 %v6086
        %v6674 = vunpack.c.l.b16 %v6087
        %v6675 = vunpack.c.h.b16 %v6087
        %v6676 = vunpack.c.l.b16 %v6088
        %v6677 = vunpack.c.h.b16 %v6088
        %v6678 = vunpack.c.l.b16 %v6089
        %v6679 = vunpack.c.h.b16 %v6089
        %v6680 = vunpack.c.l.b16 %v6090
        %v6681 = vunpack.c.h.b16 %v6090
        %v6682 = vunpack.c.l.b16 %v6091
        %v6683 = vunpack.c.h.b16 %v6091
        %v6684 = vunpack.c.l.b16 %v6092
        %v6685 = vunpack.c.h.b16 %v6092
        %v6686 = vunpack.c.l.b16 %v6093
        %v6687 = vunpack.c.h.b16 %v6093
        %v6688 = vunpack.c.l.b16 %v6094
        %v6689 = vunpack.c.h.b16 %v6094
        %v6690 = vunpack.c.l.b16 %v6095
        %v6691 = vunpack.c.h.b16 %v6095
        %v6692 = vunpack.c.l.b16 %v6096
        %v6693 = vunpack.c.h.b16 %v6096
        %v6694 = vunpack.c.l.b16 %v6097
        %v6695 = vunpack.c.h.b16 %v6097
        %v6696 = vunpack.c.l.b16 %v6098
        %v6697 = vunpack.c.h.b16 %v6098
        %v6698 = vpack.c.b16 %v6636, %v6634
        %v6699 = vpack.c.b16 %v6637, %v6635
        %v6700 = vpack.c.b16 %v6640, %v6638
        %v6701 = vpack.c.b16 %v6641, %v6639
        %v6702 = vpack.c.b16 %v6644, %v6642
        %v6703 = vpack.c.b16 %v6645, %v6643
        %v6704 = vpack.c.b16 %v6648, %v6646
        %v6705 = vpack.c.b16 %v6649, %v6647
        %v6706 = vpack.c.b16 %v6652, %v6650
        %v6707 = vpack.c.b16 %v6653, %v6651
        %v6708 = vpack.c.b16 %v6656, %v6654
        %v6709 = vpack.c.b16 %v6657, %v6655
        %v6710 = vpack.c.b16 %v6660, %v6658
        %v6711 = vpack.c.b16 %v6661, %v6659
        %v6712 = vpack.c.b16 %v6664, %v6662
        %v6713 = vpack.c.b16 %v6665, %v6663
        %v6714 = vpack.c.b16 %v6668, %v6666
        %v6715 = vpack.c.b16 %v6669, %v6667
        %v6716 = vpack.c.b16 %v6672, %v6670
        %v6717 = vpack.c.b16 %v6673, %v6671
        %v6718 = vpack.c.b16 %v6676, %v6674
        %v6719 = vpack.c.b16 %v6677, %v6675
        %v6720 = vpack.c.b16 %v6680, %v6678
        %v6721 = vpack.c.b16 %v6681, %v6679
        %v6722 = vpack.c.b16 %v6684, %v6682
        %v6723 = vpack.c.b16 %v6685, %v6683
        %v6724 = vpack.c.b16 %v6688, %v6686
        %v6725 = vpack.c.b16 %v6689, %v6687
        %v6726 = vpack.c.b16 %v6692, %v6690
        %v6727 = vpack.c.b16 %v6693, %v6691
        %v6728 = vpack.c.b16 %v6696, %v6694
        %v6729 = vpack.c.b16 %v6697, %v6695
        %v6766 = vunpack.c.l.b16 %v6099
        %v6767 = vunpack.c.l.b16 %v6100
        %v6768 = vunpack.c.l.b16 %v6101
        %v6769 = vunpack.c.l.b16 %v6102
        %v6770 = vunpack.c.l.b16 %v6103
        %v6771 = vunpack.c.l.b16 %v6104
        %v6772 = vunpack.c.l.b16 %v6105
        %v6773 = vunpack.c.l.b16 %v6106
        %v6774 = vunpack.c.l.b16 %v6107
        %v6775 = vunpack.c.l.b16 %v6108
        %v6776 = vunpack.c.l.b16 %v6109
        %v6777 = vunpack.c.l.b16 %v6110
        %v6778 = vunpack.c.l.b16 %v6111
        %v6779 = vunpack.c.l.b16 %v6112
        %v6780 = vunpack.c.l.b16 %v6113
        %v6781 = vunpack.c.l.b16 %v6114
        %v6782 = vunpack.c.l.b16 %v6115
        %v6783 = vunpack.c.l.b16 %v6116
        %v6784 = vunpack.c.l.b16 %v6117
        %v6785 = vunpack.c.l.b16 %v6118
        %v6786 = vpack.c.b16 %v6767, %v6766
        %v6787 = vpack.c.b16 %v6769, %v6768
        %v6788 = vpack.c.b16 %v6771, %v6770
        %v6789 = vpack.c.b16 %v6773, %v6772
        %v6790 = vpack.c.b16 %v6775, %v6774
        %v6791 = vpack.c.b16 %v6777, %v6776
        %v6792 = vpack.c.b16 %v6779, %v6778
        %v6793 = vpack.c.b16 %v6781, %v6780
        %v6794 = vpack.c.b16 %v6783, %v6782
        %v6795 = vpack.c.b16 %v6785, %v6784
        %v6807 = vsel %vm395, %v6699, 0
        %v6810 = vsel %vm395, %v6701, 0
        %v6813 = vsel %vm395, %v6703, 0
        %v6816 = vsel %vm395, %v6705, 0
        %v6819 = vsel %vm395, %v6707, 0
        %v6822 = vsel %vm395, %v6709, 0
        %v6825 = vsel %vm395, %v6711, 0
        %v6828 = vsel %vm395, %v6713, 0
        %v6831 = vsel %vm395, %v6715, 0
        %v6834 = vsel %vm395, %v6717, 0
        %v6837 = vsel %vm395, %v6719, 0
        %v6840 = vsel %vm395, %v6721, 0
        %v6843 = vsel %vm395, %v6723, 0
        %v6846 = vsel %vm395, %v6725, 0
        %v6849 = vsel %vm395, %v6727, 0
        %v6852 = vsel %vm395, %v6729, 0
        %6854 = vmatpush.bf16.msra.mxu0 %v6793
        %6855 = vmatpush.bf16.msra.mxu0 %v6792
        %6856 = vmatpush.bf16.msra.mxu0 %v6791
        %6857 = vmatpush.bf16.msra.mxu0 %v6790
        %6858 = vmatpush.bf16.msra.mxu0 %v6789
        %6859 = vmatpush.bf16.msra.mxu0 %v6788
        %6860 = vmatpush.bf16.msra.mxu0 %v6787
        %6861 = vmatpush.bf16.msra.mxu0 %v6786
        %6862 = vmatmul.bf16.gmra.mxu0 %v6698
        %v6863 = vpop.f32.mrf.mxu0
        %v6864 = vadd.f32 %v6523, %v6863
        %v6865 = vpop.f32.mrf.mxu0
        %v6866 = vadd.f32 %v6525, %v6865
        %6867 = vmatmul.bf16.gmra.mxu0 %v6700
        %v6868 = vpop.f32.mrf.mxu0
        %v6869 = vadd.f32 %v6528, %v6868
        %v6870 = vpop.f32.mrf.mxu0
        %v6871 = vadd.f32 %v6530, %v6870
        %6872 = vmatmul.bf16.gmra.mxu0 %v6702
        %v6873 = vpop.f32.mrf.mxu0
        %v6874 = vadd.f32 %v6533, %v6873
        %v6875 = vpop.f32.mrf.mxu0
        %v6876 = vadd.f32 %v6535, %v6875
        %6877 = vmatmul.bf16.gmra.mxu0 %v6704
        %v6878 = vpop.f32.mrf.mxu0
        %v6879 = vadd.f32 %v6538, %v6878
        %v6880 = vpop.f32.mrf.mxu0
        %v6881 = vadd.f32 %v6540, %v6880
        %6882 = vmatmul.bf16.gmra.mxu0 %v6706
        %v6883 = vpop.f32.mrf.mxu0
        %v6884 = vadd.f32 %v6543, %v6883
        %v6885 = vpop.f32.mrf.mxu0
        %v6886 = vadd.f32 %v6545, %v6885
        %6887 = vmatmul.bf16.gmra.mxu0 %v6708
        %v6888 = vpop.f32.mrf.mxu0
        %v6889 = vadd.f32 %v6548, %v6888
        %v6890 = vpop.f32.mrf.mxu0
        %v6891 = vadd.f32 %v6550, %v6890
        %6892 = vmatmul.bf16.gmra.mxu0 %v6710
        %v6893 = vpop.f32.mrf.mxu0
        %v6894 = vadd.f32 %v6553, %v6893
        %v6895 = vpop.f32.mrf.mxu0
        %v6896 = vadd.f32 %v6555, %v6895
        %6897 = vmatmul.bf16.gmra.mxu0 %v6712
        %v6898 = vpop.f32.mrf.mxu0
        %v6899 = vadd.f32 %v6558, %v6898
        %v6900 = vpop.f32.mrf.mxu0
        %v6901 = vadd.f32 %v6560, %v6900
        %6902 = vmatmul.bf16.gmra.mxu0 %v6714
        %v6903 = vpop.f32.mrf.mxu0
        %v6904 = vadd.f32 %v6563, %v6903
        %v6905 = vpop.f32.mrf.mxu0
        %v6906 = vadd.f32 %v6565, %v6905
        %6907 = vmatmul.bf16.gmra.mxu0 %v6716
        %v6908 = vpop.f32.mrf.mxu0
        %v6909 = vadd.f32 %v6568, %v6908
        %v6910 = vpop.f32.mrf.mxu0
        %v6911 = vadd.f32 %v6570, %v6910
        %6912 = vmatmul.bf16.gmra.mxu0 %v6718
        %v6913 = vpop.f32.mrf.mxu0
        %v6914 = vadd.f32 %v6573, %v6913
        %v6915 = vpop.f32.mrf.mxu0
        %v6916 = vadd.f32 %v6575, %v6915
        %6917 = vmatmul.bf16.gmra.mxu0 %v6720
        %v6918 = vpop.f32.mrf.mxu0
        %v6919 = vadd.f32 %v6578, %v6918
        %v6920 = vpop.f32.mrf.mxu0
        %v6921 = vadd.f32 %v6580, %v6920
        %6922 = vmatmul.bf16.gmra.mxu0 %v6722
        %v6923 = vpop.f32.mrf.mxu0
        %v6924 = vadd.f32 %v6583, %v6923
        %v6925 = vpop.f32.mrf.mxu0
        %v6926 = vadd.f32 %v6585, %v6925
        %6927 = vmatmul.bf16.gmra.mxu0 %v6724
        %v6928 = vpop.f32.mrf.mxu0
        %v6929 = vadd.f32 %v6588, %v6928
        %v6930 = vpop.f32.mrf.mxu0
        %v6931 = vadd.f32 %v6590, %v6930
        %6932 = vmatmul.bf16.gmra.mxu0 %v6726
        %v6933 = vpop.f32.mrf.mxu0
        %v6934 = vadd.f32 %v6593, %v6933
        %v6935 = vpop.f32.mrf.mxu0
        %v6936 = vadd.f32 %v6595, %v6935
        %6937 = vmatmul.bf16.gmra.mxu0 %v6728
        %v6938 = vpop.f32.mrf.mxu0
        %v6939 = vadd.f32 %v6598, %v6938
        %v6940 = vpop.f32.mrf.mxu0
        %v6941 = vadd.f32 %v6600, %v6940
        %6942 = vdwg.mxu0
        %6943 = vmatpush.bf16.msra.mxu0 0
        %6944 = vmatpush.bf16.msra.mxu0 0
        %6945 = vmatpush.bf16.msra.mxu0 0
        %6946 = vmatpush.bf16.msra.mxu0 0
        %6947 = vmatpush.bf16.msra.mxu0 0
        %6948 = vmatpush.bf16.msra.mxu0 0
        %6949 = vmatpush.bf16.msra.mxu0 %v6795
        %6950 = vmatpush.bf16.msra.mxu0 %v6794
        %6951 = vmatmul.bf16.gmra.mxu0 %v6807
        %v6952 = vpop.f32.mrf.mxu0
        %v6953 = vadd.f32 %v6864, %v6952
        %v6954 = vpop.f32.mrf.mxu0
        %v6955 = vadd.f32 %v6866, %v6954
        %6956 = vmatmul.bf16.gmra.mxu0 %v6810
        %v6957 = vpop.f32.mrf.mxu0
        %v6958 = vadd.f32 %v6869, %v6957
        %v6959 = vpop.f32.mrf.mxu0
        %v6960 = vadd.f32 %v6871, %v6959
        %6961 = vmatmul.bf16.gmra.mxu0 %v6813
        %v6962 = vpop.f32.mrf.mxu0
        %v6963 = vadd.f32 %v6874, %v6962
        %v6964 = vpop.f32.mrf.mxu0
        %v6965 = vadd.f32 %v6876, %v6964
        %6966 = vmatmul.bf16.gmra.mxu0 %v6816
        %v6967 = vpop.f32.mrf.mxu0
        %v6968 = vadd.f32 %v6879, %v6967
        %v6969 = vpop.f32.mrf.mxu0
        %v6970 = vadd.f32 %v6881, %v6969
        %6971 = vmatmul.bf16.gmra.mxu0 %v6819
        %v6972 = vpop.f32.mrf.mxu0
        %v6973 = vadd.f32 %v6884, %v6972
        %v6974 = vpop.f32.mrf.mxu0
        %v6975 = vadd.f32 %v6886, %v6974
        %6976 = vmatmul.bf16.gmra.mxu0 %v6822
        %v6977 = vpop.f32.mrf.mxu0
        %v6978 = vadd.f32 %v6889, %v6977
        %v6979 = vpop.f32.mrf.mxu0
        %v6980 = vadd.f32 %v6891, %v6979
        %6981 = vmatmul.bf16.gmra.mxu0 %v6825
        %v6982 = vpop.f32.mrf.mxu0
        %v6983 = vadd.f32 %v6894, %v6982
        %v6984 = vpop.f32.mrf.mxu0
        %v6985 = vadd.f32 %v6896, %v6984
        %6986 = vmatmul.bf16.gmra.mxu0 %v6828
        %v6987 = vpop.f32.mrf.mxu0
        %v6988 = vadd.f32 %v6899, %v6987
        %v6989 = vpop.f32.mrf.mxu0
        %v6990 = vadd.f32 %v6901, %v6989
        %6991 = vmatmul.bf16.gmra.mxu0 %v6831
        %v6992 = vpop.f32.mrf.mxu0
        %v6993 = vadd.f32 %v6904, %v6992
        %v6994 = vpop.f32.mrf.mxu0
        %v6995 = vadd.f32 %v6906, %v6994
        %6996 = vmatmul.bf16.gmra.mxu0 %v6834
        %v6997 = vpop.f32.mrf.mxu0
        %v6998 = vadd.f32 %v6909, %v6997
        %v6999 = vpop.f32.mrf.mxu0
        %v7000 = vadd.f32 %v6911, %v6999
        %7001 = vmatmul.bf16.gmra.mxu0 %v6837
        %v7002 = vpop.f32.mrf.mxu0
        %v7003 = vadd.f32 %v6914, %v7002
        %v7004 = vpop.f32.mrf.mxu0
        %v7005 = vadd.f32 %v6916, %v7004
        %7006 = vmatmul.bf16.gmra.mxu0 %v6840
        %v7007 = vpop.f32.mrf.mxu0
        %v7008 = vadd.f32 %v6919, %v7007
        %v7009 = vpop.f32.mrf.mxu0
        %v7010 = vadd.f32 %v6921, %v7009
        %7011 = vmatmul.bf16.gmra.mxu0 %v6843
        %v7012 = vpop.f32.mrf.mxu0
        %v7013 = vadd.f32 %v6924, %v7012
        %v7014 = vpop.f32.mrf.mxu0
        %v7015 = vadd.f32 %v6926, %v7014
        %7016 = vmatmul.bf16.gmra.mxu0 %v6846
        %v7017 = vpop.f32.mrf.mxu0
        %v7018 = vadd.f32 %v6929, %v7017
        %v7019 = vpop.f32.mrf.mxu0
        %v7020 = vadd.f32 %v6931, %v7019
        %7021 = vmatmul.bf16.gmra.mxu0 %v6849
        %v7022 = vpop.f32.mrf.mxu0
        %v7023 = vadd.f32 %v6934, %v7022
        %v7024 = vpop.f32.mrf.mxu0
        %v7025 = vadd.f32 %v6936, %v7024
        %7026 = vmatmul.bf16.gmra.mxu0 %v6852
        %v7027 = vpop.f32.mrf.mxu0
        %v7028 = vadd.f32 %v6939, %v7027
        %v7029 = vpop.f32.mrf.mxu0
        %v7030 = vadd.f32 %v6941, %v7029
        %7031 = vdwg.mxu0
        %v7032 = vld [vmem:[%s2347] sm:$0xff]
        %v7033 = vld [vmem:[%s2347 + $0x8] sm:$0xff]
        %v7034 = vld [vmem:[%s2347 + $0x10] sm:$0xff]
        %v7035 = vld [vmem:[%s2347 + $0x18] sm:$0xff]
        %v7036 = vld [vmem:[%s2347 + $0x20] sm:$0xff]
        %v7037 = vld [vmem:[%s2347 + $0x28] sm:$0xff]
        %v7038 = vld [vmem:[%s2347 + $0x30] sm:$0xff]
        %v7039 = vld [vmem:[%s2347 + $0x38] sm:$0xff]
        %v7040 = vld [vmem:[%s2347 + $0x40] sm:$0xff]
        %v7041 = vld [vmem:[%s2347 + $0x48] sm:$0xff]
        %v7042 = vld [vmem:[%s2347 + $0x50] sm:$0xff]
        %v7043 = vld [vmem:[%s2347 + $0x58] sm:$0xff]
        %v7044 = vld [vmem:[%s2347 + $0x60] sm:$0xff]
        %v7045 = vld [vmem:[%s2347 + $0x68] sm:$0xff]
        %v7046 = vld [vmem:[%s2347 + $0x70] sm:$0xff]
        %v7047 = vld [vmem:[%s2347 + $0x78] sm:$0xff]
        %v7048 = vld [vmem:[%s2347 + $0x80] sm:$0xff]
        %v7049 = vld [vmem:[%s2347 + $0x88] sm:$0xff]
        %v7050 = vld [vmem:[%s2347 + $0x90] sm:$0xff]
        %v7051 = vld [vmem:[%s2347 + $0x98] sm:$0xff]
        %v7052 = vld [vmem:[%s2347 + $0xa0] sm:$0xff]
        %v7053 = vld [vmem:[%s2347 + $0xa8] sm:$0xff]
        %v7054 = vld [vmem:[%s2347 + $0xb0] sm:$0xff]
        %v7055 = vld [vmem:[%s2347 + $0xb8] sm:$0xff]
        %v7056 = vld [vmem:[%s2347 + $0xc0] sm:$0xff]
        %v7057 = vld [vmem:[%s2347 + $0xc8] sm:$0xff]
        %v7058 = vld [vmem:[%s2347 + $0xd0] sm:$0xff]
        %v7059 = vld [vmem:[%s2347 + $0xd8] sm:$0xff]
        %v7060 = vld [vmem:[%s2347 + $0xe0] sm:$0xff]
        %v7061 = vld [vmem:[%s2347 + $0xe8] sm:$0xff]
        %v7062 = vld [vmem:[%s2347 + $0xf0] sm:$0xff]
        %v7063 = vld [vmem:[%s2347 + $0xf8] sm:$0xff]
        %s7064 = scalar_lea.vmem %s5, 160
        %v7065 = vld [vmem:[%s7064] sm:$0xf]
        %v7066 = vld [vmem:[%s7064 + $0x4] sm:$0xf]
        %v7067 = vld [vmem:[%s7064 + $0x8] sm:$0xf]
        %v7068 = vld [vmem:[%s7064 + $0xc] sm:$0xf]
        %v7069 = vld [vmem:[%s7064 + $0x10] sm:$0xf]
        %v7070 = vld [vmem:[%s7064 + $0x14] sm:$0xf]
        %v7071 = vld [vmem:[%s7064 + $0x18] sm:$0xf]
        %v7072 = vld [vmem:[%s7064 + $0x1c] sm:$0xf]
        %v7073 = vld [vmem:[%s7064 + $0x20] sm:$0xf]
        %v7074 = vld [vmem:[%s7064 + $0x24] sm:$0xf]
        %v7075 = vld [vmem:[%s7064 + $0x28] sm:$0xf]
        %v7076 = vld [vmem:[%s7064 + $0x2c] sm:$0xf]
        %v7077 = vld [vmem:[%s7064 + $0x30] sm:$0xf]
        %v7078 = vld [vmem:[%s7064 + $0x34] sm:$0xf]
        %v7079 = vld [vmem:[%s7064 + $0x38] sm:$0xf]
        %v7080 = vld [vmem:[%s7064 + $0x3c] sm:$0xf]
        %v7081 = vld [vmem:[%s7064 + $0x40] sm:$0xf]
        %v7082 = vld [vmem:[%s7064 + $0x44] sm:$0xf]
        %v7083 = vld [vmem:[%s7064 + $0x48] sm:$0xf]
        %v7084 = vld [vmem:[%s7064 + $0x4c] sm:$0xf]
        %v7117 = vunpack.c.l.b16 %v7032
        %v7118 = vunpack.c.h.b16 %v7032
        %v7119 = vunpack.c.l.b16 %v7033
        %v7120 = vunpack.c.h.b16 %v7033
        %v7121 = vunpack.c.l.b16 %v7034
        %v7122 = vunpack.c.h.b16 %v7034
        %v7123 = vunpack.c.l.b16 %v7035
        %v7124 = vunpack.c.h.b16 %v7035
        %v7125 = vunpack.c.l.b16 %v7036
        %v7126 = vunpack.c.h.b16 %v7036
        %v7127 = vunpack.c.l.b16 %v7037
        %v7128 = vunpack.c.h.b16 %v7037
        %v7129 = vunpack.c.l.b16 %v7038
        %v7130 = vunpack.c.h.b16 %v7038
        %v7131 = vunpack.c.l.b16 %v7039
        %v7132 = vunpack.c.h.b16 %v7039
        %v7133 = vunpack.c.l.b16 %v7040
        %v7134 = vunpack.c.h.b16 %v7040
        %v7135 = vunpack.c.l.b16 %v7041
        %v7136 = vunpack.c.h.b16 %v7041
        %v7137 = vunpack.c.l.b16 %v7042
        %v7138 = vunpack.c.h.b16 %v7042
        %v7139 = vunpack.c.l.b16 %v7043
        %v7140 = vunpack.c.h.b16 %v7043
        %v7141 = vunpack.c.l.b16 %v7044
        %v7142 = vunpack.c.h.b16 %v7044
        %v7143 = vunpack.c.l.b16 %v7045
        %v7144 = vunpack.c.h.b16 %v7045
        %v7145 = vunpack.c.l.b16 %v7046
        %v7146 = vunpack.c.h.b16 %v7046
        %v7147 = vunpack.c.l.b16 %v7047
        %v7148 = vunpack.c.h.b16 %v7047
        %v7149 = vunpack.c.l.b16 %v7048
        %v7150 = vunpack.c.h.b16 %v7048
        %v7151 = vunpack.c.l.b16 %v7049
        %v7152 = vunpack.c.h.b16 %v7049
        %v7153 = vunpack.c.l.b16 %v7050
        %v7154 = vunpack.c.h.b16 %v7050
        %v7155 = vunpack.c.l.b16 %v7051
        %v7156 = vunpack.c.h.b16 %v7051
        %v7157 = vunpack.c.l.b16 %v7052
        %v7158 = vunpack.c.h.b16 %v7052
        %v7159 = vunpack.c.l.b16 %v7053
        %v7160 = vunpack.c.h.b16 %v7053
        %v7161 = vunpack.c.l.b16 %v7054
        %v7162 = vunpack.c.h.b16 %v7054
        %v7163 = vunpack.c.l.b16 %v7055
        %v7164 = vunpack.c.h.b16 %v7055
        %v7165 = vunpack.c.l.b16 %v7056
        %v7166 = vunpack.c.h.b16 %v7056
        %v7167 = vunpack.c.l.b16 %v7057
        %v7168 = vunpack.c.h.b16 %v7057
        %v7169 = vunpack.c.l.b16 %v7058
        %v7170 = vunpack.c.h.b16 %v7058
        %v7171 = vunpack.c.l.b16 %v7059
        %v7172 = vunpack.c.h.b16 %v7059
        %v7173 = vunpack.c.l.b16 %v7060
        %v7174 = vunpack.c.h.b16 %v7060
        %v7175 = vunpack.c.l.b16 %v7061
        %v7176 = vunpack.c.h.b16 %v7061
        %v7177 = vunpack.c.l.b16 %v7062
        %v7178 = vunpack.c.h.b16 %v7062
        %v7179 = vunpack.c.l.b16 %v7063
        %v7180 = vunpack.c.h.b16 %v7063
        %v7181 = vpack.c.b16 %v7119, %v7117
        %v7182 = vpack.c.b16 %v7120, %v7118
        %v7183 = vpack.c.b16 %v7123, %v7121
        %v7184 = vpack.c.b16 %v7124, %v7122
        %v7185 = vpack.c.b16 %v7127, %v7125
        %v7186 = vpack.c.b16 %v7128, %v7126
        %v7187 = vpack.c.b16 %v7131, %v7129
        %v7188 = vpack.c.b16 %v7132, %v7130
        %v7189 = vpack.c.b16 %v7135, %v7133
        %v7190 = vpack.c.b16 %v7136, %v7134
        %v7191 = vpack.c.b16 %v7139, %v7137
        %v7192 = vpack.c.b16 %v7140, %v7138
        %v7193 = vpack.c.b16 %v7143, %v7141
        %v7194 = vpack.c.b16 %v7144, %v7142
        %v7195 = vpack.c.b16 %v7147, %v7145
        %v7196 = vpack.c.b16 %v7148, %v7146
        %v7197 = vpack.c.b16 %v7151, %v7149
        %v7198 = vpack.c.b16 %v7152, %v7150
        %v7199 = vpack.c.b16 %v7155, %v7153
        %v7200 = vpack.c.b16 %v7156, %v7154
        %v7201 = vpack.c.b16 %v7159, %v7157
        %v7202 = vpack.c.b16 %v7160, %v7158
        %v7203 = vpack.c.b16 %v7163, %v7161
        %v7204 = vpack.c.b16 %v7164, %v7162
        %v7205 = vpack.c.b16 %v7167, %v7165
        %v7206 = vpack.c.b16 %v7168, %v7166
        %v7207 = vpack.c.b16 %v7171, %v7169
        %v7208 = vpack.c.b16 %v7172, %v7170
        %v7209 = vpack.c.b16 %v7175, %v7173
        %v7210 = vpack.c.b16 %v7176, %v7174
        %v7211 = vpack.c.b16 %v7179, %v7177
        %v7212 = vpack.c.b16 %v7180, %v7178
        %v7249 = vunpack.c.l.b16 %v7065
        %v7250 = vunpack.c.l.b16 %v7066
        %v7251 = vunpack.c.l.b16 %v7067
        %v7252 = vunpack.c.l.b16 %v7068
        %v7253 = vunpack.c.l.b16 %v7069
        %v7254 = vunpack.c.l.b16 %v7070
        %v7255 = vunpack.c.l.b16 %v7071
        %v7256 = vunpack.c.l.b16 %v7072
        %v7257 = vunpack.c.l.b16 %v7073
        %v7258 = vunpack.c.l.b16 %v7074
        %v7259 = vunpack.c.l.b16 %v7075
        %v7260 = vunpack.c.l.b16 %v7076
        %v7261 = vunpack.c.l.b16 %v7077
        %v7262 = vunpack.c.l.b16 %v7078
        %v7263 = vunpack.c.l.b16 %v7079
        %v7264 = vunpack.c.l.b16 %v7080
        %v7265 = vunpack.c.l.b16 %v7081
        %v7266 = vunpack.c.l.b16 %v7082
        %v7267 = vunpack.c.l.b16 %v7083
        %v7268 = vunpack.c.l.b16 %v7084
        %v7269 = vpack.c.b16 %v7250, %v7249
        %v7270 = vpack.c.b16 %v7252, %v7251
        %v7271 = vpack.c.b16 %v7254, %v7253
        %v7272 = vpack.c.b16 %v7256, %v7255
        %v7273 = vpack.c.b16 %v7258, %v7257
        %v7274 = vpack.c.b16 %v7260, %v7259
        %v7275 = vpack.c.b16 %v7262, %v7261
        %v7276 = vpack.c.b16 %v7264, %v7263
        %v7277 = vpack.c.b16 %v7266, %v7265
        %v7278 = vpack.c.b16 %v7268, %v7267
        %v7290 = vsel %vm395, %v7182, 0
        %v7293 = vsel %vm395, %v7184, 0
        %v7296 = vsel %vm395, %v7186, 0
        %v7299 = vsel %vm395, %v7188, 0
        %v7302 = vsel %vm395, %v7190, 0
        %v7305 = vsel %vm395, %v7192, 0
        %v7308 = vsel %vm395, %v7194, 0
        %v7311 = vsel %vm395, %v7196, 0
        %v7314 = vsel %vm395, %v7198, 0
        %v7317 = vsel %vm395, %v7200, 0
        %v7320 = vsel %vm395, %v7202, 0
        %v7323 = vsel %vm395, %v7204, 0
        %v7326 = vsel %vm395, %v7206, 0
        %v7329 = vsel %vm395, %v7208, 0
        %v7332 = vsel %vm395, %v7210, 0
        %v7335 = vsel %vm395, %v7212, 0
        %7337 = vmatpush.bf16.msra.mxu0 %v7276
        %7338 = vmatpush.bf16.msra.mxu0 %v7275
        %7339 = vmatpush.bf16.msra.mxu0 %v7274
        %7340 = vmatpush.bf16.msra.mxu0 %v7273
        %7341 = vmatpush.bf16.msra.mxu0 %v7272
        %7342 = vmatpush.bf16.msra.mxu0 %v7271
        %7343 = vmatpush.bf16.msra.mxu0 %v7270
        %7344 = vmatpush.bf16.msra.mxu0 %v7269
        %7345 = vmatmul.bf16.gmra.mxu0 %v7181
        %v7346 = vpop.f32.mrf.mxu0
        %v7347 = vadd.f32 0.0, %v7346
        %v7348 = vpop.f32.mrf.mxu0
        %v7349 = vadd.f32 0.0, %v7348
        %7350 = vmatmul.bf16.gmra.mxu0 %v7183
        %v7351 = vpop.f32.mrf.mxu0
        %v7352 = vadd.f32 0.0, %v7351
        %v7353 = vpop.f32.mrf.mxu0
        %v7354 = vadd.f32 0.0, %v7353
        %7355 = vmatmul.bf16.gmra.mxu0 %v7185
        %v7356 = vpop.f32.mrf.mxu0
        %v7357 = vadd.f32 0.0, %v7356
        %v7358 = vpop.f32.mrf.mxu0
        %v7359 = vadd.f32 0.0, %v7358
        %7360 = vmatmul.bf16.gmra.mxu0 %v7187
        %v7361 = vpop.f32.mrf.mxu0
        %v7362 = vadd.f32 0.0, %v7361
        %v7363 = vpop.f32.mrf.mxu0
        %v7364 = vadd.f32 0.0, %v7363
        %7365 = vmatmul.bf16.gmra.mxu0 %v7189
        %v7366 = vpop.f32.mrf.mxu0
        %v7367 = vadd.f32 0.0, %v7366
        %v7368 = vpop.f32.mrf.mxu0
        %v7369 = vadd.f32 0.0, %v7368
        %7370 = vmatmul.bf16.gmra.mxu0 %v7191
        %v7371 = vpop.f32.mrf.mxu0
        %v7372 = vadd.f32 0.0, %v7371
        %v7373 = vpop.f32.mrf.mxu0
        %v7374 = vadd.f32 0.0, %v7373
        %7375 = vmatmul.bf16.gmra.mxu0 %v7193
        %v7376 = vpop.f32.mrf.mxu0
        %v7377 = vadd.f32 0.0, %v7376
        %v7378 = vpop.f32.mrf.mxu0
        %v7379 = vadd.f32 0.0, %v7378
        %7380 = vmatmul.bf16.gmra.mxu0 %v7195
        %v7381 = vpop.f32.mrf.mxu0
        %v7382 = vadd.f32 0.0, %v7381
        %v7383 = vpop.f32.mrf.mxu0
        %v7384 = vadd.f32 0.0, %v7383
        %7385 = vmatmul.bf16.gmra.mxu0 %v7197
        %v7386 = vpop.f32.mrf.mxu0
        %v7387 = vadd.f32 0.0, %v7386
        %v7388 = vpop.f32.mrf.mxu0
        %v7389 = vadd.f32 0.0, %v7388
        %7390 = vmatmul.bf16.gmra.mxu0 %v7199
        %v7391 = vpop.f32.mrf.mxu0
        %v7392 = vadd.f32 0.0, %v7391
        %v7393 = vpop.f32.mrf.mxu0
        %v7394 = vadd.f32 0.0, %v7393
        %7395 = vmatmul.bf16.gmra.mxu0 %v7201
        %v7396 = vpop.f32.mrf.mxu0
        %v7397 = vadd.f32 0.0, %v7396
        %v7398 = vpop.f32.mrf.mxu0
        %v7399 = vadd.f32 0.0, %v7398
        %7400 = vmatmul.bf16.gmra.mxu0 %v7203
        %v7401 = vpop.f32.mrf.mxu0
        %v7402 = vadd.f32 0.0, %v7401
        %v7403 = vpop.f32.mrf.mxu0
        %v7404 = vadd.f32 0.0, %v7403
        %7405 = vmatmul.bf16.gmra.mxu0 %v7205
        %v7406 = vpop.f32.mrf.mxu0
        %v7407 = vadd.f32 0.0, %v7406
        %v7408 = vpop.f32.mrf.mxu0
        %v7409 = vadd.f32 0.0, %v7408
        %7410 = vmatmul.bf16.gmra.mxu0 %v7207
        %v7411 = vpop.f32.mrf.mxu0
        %v7412 = vadd.f32 0.0, %v7411
        %v7413 = vpop.f32.mrf.mxu0
        %v7414 = vadd.f32 0.0, %v7413
        %7415 = vmatmul.bf16.gmra.mxu0 %v7209
        %v7416 = vpop.f32.mrf.mxu0
        %v7417 = vadd.f32 0.0, %v7416
        %v7418 = vpop.f32.mrf.mxu0
        %v7419 = vadd.f32 0.0, %v7418
        %7420 = vmatmul.bf16.gmra.mxu0 %v7211
        %v7421 = vpop.f32.mrf.mxu0
        %v7422 = vadd.f32 0.0, %v7421
        %v7423 = vpop.f32.mrf.mxu0
        %v7424 = vadd.f32 0.0, %v7423
        %7425 = vdwg.mxu0
        %7426 = vmatpush.bf16.msra.mxu0 0
        %7427 = vmatpush.bf16.msra.mxu0 0
        %7428 = vmatpush.bf16.msra.mxu0 0
        %7429 = vmatpush.bf16.msra.mxu0 0
        %7430 = vmatpush.bf16.msra.mxu0 0
        %7431 = vmatpush.bf16.msra.mxu0 0
        %7432 = vmatpush.bf16.msra.mxu0 %v7278
        %7433 = vmatpush.bf16.msra.mxu0 %v7277
        %7434 = vmatmul.bf16.gmra.mxu0 %v7290
        %v7435 = vpop.f32.mrf.mxu0
        %v7436 = vadd.f32 %v7347, %v7435
        %v7437 = vpop.f32.mrf.mxu0
        %v7438 = vadd.f32 %v7349, %v7437
        %7439 = vmatmul.bf16.gmra.mxu0 %v7293
        %v7440 = vpop.f32.mrf.mxu0
        %v7441 = vadd.f32 %v7352, %v7440
        %v7442 = vpop.f32.mrf.mxu0
        %v7443 = vadd.f32 %v7354, %v7442
        %7444 = vmatmul.bf16.gmra.mxu0 %v7296
        %v7445 = vpop.f32.mrf.mxu0
        %v7446 = vadd.f32 %v7357, %v7445
        %v7447 = vpop.f32.mrf.mxu0
        %v7448 = vadd.f32 %v7359, %v7447
        %7449 = vmatmul.bf16.gmra.mxu0 %v7299
        %v7450 = vpop.f32.mrf.mxu0
        %v7451 = vadd.f32 %v7362, %v7450
        %v7452 = vpop.f32.mrf.mxu0
        %v7453 = vadd.f32 %v7364, %v7452
        %7454 = vmatmul.bf16.gmra.mxu0 %v7302
        %v7455 = vpop.f32.mrf.mxu0
        %v7456 = vadd.f32 %v7367, %v7455
        %v7457 = vpop.f32.mrf.mxu0
        %v7458 = vadd.f32 %v7369, %v7457
        %7459 = vmatmul.bf16.gmra.mxu0 %v7305
        %v7460 = vpop.f32.mrf.mxu0
        %v7461 = vadd.f32 %v7372, %v7460
        %v7462 = vpop.f32.mrf.mxu0
        %v7463 = vadd.f32 %v7374, %v7462
        %7464 = vmatmul.bf16.gmra.mxu0 %v7308
        %v7465 = vpop.f32.mrf.mxu0
        %v7466 = vadd.f32 %v7377, %v7465
        %v7467 = vpop.f32.mrf.mxu0
        %v7468 = vadd.f32 %v7379, %v7467
        %7469 = vmatmul.bf16.gmra.mxu0 %v7311
        %v7470 = vpop.f32.mrf.mxu0
        %v7471 = vadd.f32 %v7382, %v7470
        %v7472 = vpop.f32.mrf.mxu0
        %v7473 = vadd.f32 %v7384, %v7472
        %7474 = vmatmul.bf16.gmra.mxu0 %v7314
        %v7475 = vpop.f32.mrf.mxu0
        %v7476 = vadd.f32 %v7387, %v7475
        %v7477 = vpop.f32.mrf.mxu0
        %v7478 = vadd.f32 %v7389, %v7477
        %7479 = vmatmul.bf16.gmra.mxu0 %v7317
        %v7480 = vpop.f32.mrf.mxu0
        %v7481 = vadd.f32 %v7392, %v7480
        %v7482 = vpop.f32.mrf.mxu0
        %v7483 = vadd.f32 %v7394, %v7482
        %7484 = vmatmul.bf16.gmra.mxu0 %v7320
        %v7485 = vpop.f32.mrf.mxu0
        %v7486 = vadd.f32 %v7397, %v7485
        %v7487 = vpop.f32.mrf.mxu0
        %v7488 = vadd.f32 %v7399, %v7487
        %7489 = vmatmul.bf16.gmra.mxu0 %v7323
        %v7490 = vpop.f32.mrf.mxu0
        %v7491 = vadd.f32 %v7402, %v7490
        %v7492 = vpop.f32.mrf.mxu0
        %v7493 = vadd.f32 %v7404, %v7492
        %7494 = vmatmul.bf16.gmra.mxu0 %v7326
        %v7495 = vpop.f32.mrf.mxu0
        %v7496 = vadd.f32 %v7407, %v7495
        %v7497 = vpop.f32.mrf.mxu0
        %v7498 = vadd.f32 %v7409, %v7497
        %7499 = vmatmul.bf16.gmra.mxu0 %v7329
        %v7500 = vpop.f32.mrf.mxu0
        %v7501 = vadd.f32 %v7412, %v7500
        %v7502 = vpop.f32.mrf.mxu0
        %v7503 = vadd.f32 %v7414, %v7502
        %7504 = vmatmul.bf16.gmra.mxu0 %v7332
        %v7505 = vpop.f32.mrf.mxu0
        %v7506 = vadd.f32 %v7417, %v7505
        %v7507 = vpop.f32.mrf.mxu0
        %v7508 = vadd.f32 %v7419, %v7507
        %7509 = vmatmul.bf16.gmra.mxu0 %v7335
        %v7510 = vpop.f32.mrf.mxu0
        %v7511 = vadd.f32 %v7422, %v7510
        %v7512 = vpop.f32.mrf.mxu0
        %v7513 = vadd.f32 %v7424, %v7512
        %7514 = vdwg.mxu0
        %v7515 = vadd.f32 %v6953, %v7436
        %v7516 = vadd.f32 %v6955, %v7438
        %v7517 = vadd.f32 %v6958, %v7441
        %v7518 = vadd.f32 %v6960, %v7443
        %v7519 = vadd.f32 %v6963, %v7446
        %v7520 = vadd.f32 %v6965, %v7448
        %v7521 = vadd.f32 %v6968, %v7451
        %v7522 = vadd.f32 %v6970, %v7453
        %v7523 = vadd.f32 %v6973, %v7456
        %v7524 = vadd.f32 %v6975, %v7458
        %v7525 = vadd.f32 %v6978, %v7461
        %v7526 = vadd.f32 %v6980, %v7463
        %v7527 = vadd.f32 %v6983, %v7466
        %v7528 = vadd.f32 %v6985, %v7468
        %v7529 = vadd.f32 %v6988, %v7471
        %v7530 = vadd.f32 %v6990, %v7473
        %v7531 = vadd.f32 %v6993, %v7476
        %v7532 = vadd.f32 %v6995, %v7478
        %v7533 = vadd.f32 %v6998, %v7481
        %v7534 = vadd.f32 %v7000, %v7483
        %v7535 = vadd.f32 %v7003, %v7486
        %v7536 = vadd.f32 %v7005, %v7488
        %v7537 = vadd.f32 %v7008, %v7491
        %v7538 = vadd.f32 %v7010, %v7493
        %v7539 = vadd.f32 %v7013, %v7496
        %v7540 = vadd.f32 %v7015, %v7498
        %v7541 = vadd.f32 %v7018, %v7501
        %v7542 = vadd.f32 %v7020, %v7503
        %v7543 = vadd.f32 %v7023, %v7506
        %v7544 = vadd.f32 %v7025, %v7508
        %v7545 = vadd.f32 %v7028, %v7511
        %v7546 = vadd.f32 %v7030, %v7513
        %v7547 = vld [vmem:[%s2670] sm:$0xff]
        %v7548 = vld [vmem:[%s2670 + $0x8] sm:$0xff]
        %v7549 = vld [vmem:[%s2670 + $0x10] sm:$0xff]
        %v7550 = vld [vmem:[%s2670 + $0x18] sm:$0xff]
        %v7551 = vld [vmem:[%s2670 + $0x20] sm:$0xff]
        %v7552 = vld [vmem:[%s2670 + $0x28] sm:$0xff]
        %v7553 = vld [vmem:[%s2670 + $0x30] sm:$0xff]
        %v7554 = vld [vmem:[%s2670 + $0x38] sm:$0xff]
        %v7555 = vld [vmem:[%s2670 + $0x40] sm:$0xff]
        %v7556 = vld [vmem:[%s2670 + $0x48] sm:$0xff]
        %v7557 = vld [vmem:[%s2670 + $0x50] sm:$0xff]
        %v7558 = vld [vmem:[%s2670 + $0x58] sm:$0xff]
        %v7559 = vld [vmem:[%s2670 + $0x60] sm:$0xff]
        %v7560 = vld [vmem:[%s2670 + $0x68] sm:$0xff]
        %v7561 = vld [vmem:[%s2670 + $0x70] sm:$0xff]
        %v7562 = vld [vmem:[%s2670 + $0x78] sm:$0xff]
        %v7563 = vld [vmem:[%s2670 + $0x80] sm:$0xff]
        %v7564 = vld [vmem:[%s2670 + $0x88] sm:$0xff]
        %v7565 = vld [vmem:[%s2670 + $0x90] sm:$0xff]
        %v7566 = vld [vmem:[%s2670 + $0x98] sm:$0xff]
        %v7567 = vld [vmem:[%s2670 + $0xa0] sm:$0xff]
        %v7568 = vld [vmem:[%s2670 + $0xa8] sm:$0xff]
        %v7569 = vld [vmem:[%s2670 + $0xb0] sm:$0xff]
        %v7570 = vld [vmem:[%s2670 + $0xb8] sm:$0xff]
        %v7571 = vld [vmem:[%s2670 + $0xc0] sm:$0xff]
        %v7572 = vld [vmem:[%s2670 + $0xc8] sm:$0xff]
        %v7573 = vld [vmem:[%s2670 + $0xd0] sm:$0xff]
        %v7574 = vld [vmem:[%s2670 + $0xd8] sm:$0xff]
        %v7575 = vld [vmem:[%s2670 + $0xe0] sm:$0xff]
        %v7576 = vld [vmem:[%s2670 + $0xe8] sm:$0xff]
        %v7577 = vld [vmem:[%s2670 + $0xf0] sm:$0xff]
        %v7578 = vld [vmem:[%s2670 + $0xf8] sm:$0xff]
        %s7579 = scalar_lea.vmem %s5, 240
        %v7580 = vld [vmem:[%s7579] sm:$0xf]
        %v7581 = vld [vmem:[%s7579 + $0x4] sm:$0xf]
        %v7582 = vld [vmem:[%s7579 + $0x8] sm:$0xf]
        %v7583 = vld [vmem:[%s7579 + $0xc] sm:$0xf]
        %v7584 = vld [vmem:[%s7579 + $0x10] sm:$0xf]
        %v7585 = vld [vmem:[%s7579 + $0x14] sm:$0xf]
        %v7586 = vld [vmem:[%s7579 + $0x18] sm:$0xf]
        %v7587 = vld [vmem:[%s7579 + $0x1c] sm:$0xf]
        %v7588 = vld [vmem:[%s7579 + $0x20] sm:$0xf]
        %v7589 = vld [vmem:[%s7579 + $0x24] sm:$0xf]
        %v7590 = vld [vmem:[%s7579 + $0x28] sm:$0xf]
        %v7591 = vld [vmem:[%s7579 + $0x2c] sm:$0xf]
        %v7592 = vld [vmem:[%s7579 + $0x30] sm:$0xf]
        %v7593 = vld [vmem:[%s7579 + $0x34] sm:$0xf]
        %v7594 = vld [vmem:[%s7579 + $0x38] sm:$0xf]
        %v7595 = vld [vmem:[%s7579 + $0x3c] sm:$0xf]
        %v7596 = vld [vmem:[%s7579 + $0x40] sm:$0xf]
        %v7597 = vld [vmem:[%s7579 + $0x44] sm:$0xf]
        %v7598 = vld [vmem:[%s7579 + $0x48] sm:$0xf]
        %v7599 = vld [vmem:[%s7579 + $0x4c] sm:$0xf]
        %v7632 = vunpack.c.l.b16 %v7547
        %v7633 = vunpack.c.h.b16 %v7547
        %v7634 = vunpack.c.l.b16 %v7548
        %v7635 = vunpack.c.h.b16 %v7548
        %v7636 = vunpack.c.l.b16 %v7549
        %v7637 = vunpack.c.h.b16 %v7549
        %v7638 = vunpack.c.l.b16 %v7550
        %v7639 = vunpack.c.h.b16 %v7550
        %v7640 = vunpack.c.l.b16 %v7551
        %v7641 = vunpack.c.h.b16 %v7551
        %v7642 = vunpack.c.l.b16 %v7552
        %v7643 = vunpack.c.h.b16 %v7552
        %v7644 = vunpack.c.l.b16 %v7553
        %v7645 = vunpack.c.h.b16 %v7553
        %v7646 = vunpack.c.l.b16 %v7554
        %v7647 = vunpack.c.h.b16 %v7554
        %v7648 = vunpack.c.l.b16 %v7555
        %v7649 = vunpack.c.h.b16 %v7555
        %v7650 = vunpack.c.l.b16 %v7556
        %v7651 = vunpack.c.h.b16 %v7556
        %v7652 = vunpack.c.l.b16 %v7557
        %v7653 = vunpack.c.h.b16 %v7557
        %v7654 = vunpack.c.l.b16 %v7558
        %v7655 = vunpack.c.h.b16 %v7558
        %v7656 = vunpack.c.l.b16 %v7559
        %v7657 = vunpack.c.h.b16 %v7559
        %v7658 = vunpack.c.l.b16 %v7560
        %v7659 = vunpack.c.h.b16 %v7560
        %v7660 = vunpack.c.l.b16 %v7561
        %v7661 = vunpack.c.h.b16 %v7561
        %v7662 = vunpack.c.l.b16 %v7562
        %v7663 = vunpack.c.h.b16 %v7562
        %v7664 = vunpack.c.l.b16 %v7563
        %v7665 = vunpack.c.h.b16 %v7563
        %v7666 = vunpack.c.l.b16 %v7564
        %v7667 = vunpack.c.h.b16 %v7564
        %v7668 = vunpack.c.l.b16 %v7565
        %v7669 = vunpack.c.h.b16 %v7565
        %v7670 = vunpack.c.l.b16 %v7566
        %v7671 = vunpack.c.h.b16 %v7566
        %v7672 = vunpack.c.l.b16 %v7567
        %v7673 = vunpack.c.h.b16 %v7567
        %v7674 = vunpack.c.l.b16 %v7568
        %v7675 = vunpack.c.h.b16 %v7568
        %v7676 = vunpack.c.l.b16 %v7569
        %v7677 = vunpack.c.h.b16 %v7569
        %v7678 = vunpack.c.l.b16 %v7570
        %v7679 = vunpack.c.h.b16 %v7570
        %v7680 = vunpack.c.l.b16 %v7571
        %v7681 = vunpack.c.h.b16 %v7571
        %v7682 = vunpack.c.l.b16 %v7572
        %v7683 = vunpack.c.h.b16 %v7572
        %v7684 = vunpack.c.l.b16 %v7573
        %v7685 = vunpack.c.h.b16 %v7573
        %v7686 = vunpack.c.l.b16 %v7574
        %v7687 = vunpack.c.h.b16 %v7574
        %v7688 = vunpack.c.l.b16 %v7575
        %v7689 = vunpack.c.h.b16 %v7575
        %v7690 = vunpack.c.l.b16 %v7576
        %v7691 = vunpack.c.h.b16 %v7576
        %v7692 = vunpack.c.l.b16 %v7577
        %v7693 = vunpack.c.h.b16 %v7577
        %v7694 = vunpack.c.l.b16 %v7578
        %v7695 = vunpack.c.h.b16 %v7578
        %v7696 = vpack.c.b16 %v7634, %v7632
        %v7697 = vpack.c.b16 %v7635, %v7633
        %v7698 = vpack.c.b16 %v7638, %v7636
        %v7699 = vpack.c.b16 %v7639, %v7637
        %v7700 = vpack.c.b16 %v7642, %v7640
        %v7701 = vpack.c.b16 %v7643, %v7641
        %v7702 = vpack.c.b16 %v7646, %v7644
        %v7703 = vpack.c.b16 %v7647, %v7645
        %v7704 = vpack.c.b16 %v7650, %v7648
        %v7705 = vpack.c.b16 %v7651, %v7649
        %v7706 = vpack.c.b16 %v7654, %v7652
        %v7707 = vpack.c.b16 %v7655, %v7653
        %v7708 = vpack.c.b16 %v7658, %v7656
        %v7709 = vpack.c.b16 %v7659, %v7657
        %v7710 = vpack.c.b16 %v7662, %v7660
        %v7711 = vpack.c.b16 %v7663, %v7661
        %v7712 = vpack.c.b16 %v7666, %v7664
        %v7713 = vpack.c.b16 %v7667, %v7665
        %v7714 = vpack.c.b16 %v7670, %v7668
        %v7715 = vpack.c.b16 %v7671, %v7669
        %v7716 = vpack.c.b16 %v7674, %v7672
        %v7717 = vpack.c.b16 %v7675, %v7673
        %v7718 = vpack.c.b16 %v7678, %v7676
        %v7719 = vpack.c.b16 %v7679, %v7677
        %v7720 = vpack.c.b16 %v7682, %v7680
        %v7721 = vpack.c.b16 %v7683, %v7681
        %v7722 = vpack.c.b16 %v7686, %v7684
        %v7723 = vpack.c.b16 %v7687, %v7685
        %v7724 = vpack.c.b16 %v7690, %v7688
        %v7725 = vpack.c.b16 %v7691, %v7689
        %v7726 = vpack.c.b16 %v7694, %v7692
        %v7727 = vpack.c.b16 %v7695, %v7693
        %v7764 = vunpack.c.l.b16 %v7580
        %v7765 = vunpack.c.l.b16 %v7581
        %v7766 = vunpack.c.l.b16 %v7582
        %v7767 = vunpack.c.l.b16 %v7583
        %v7768 = vunpack.c.l.b16 %v7584
        %v7769 = vunpack.c.l.b16 %v7585
        %v7770 = vunpack.c.l.b16 %v7586
        %v7771 = vunpack.c.l.b16 %v7587
        %v7772 = vunpack.c.l.b16 %v7588
        %v7773 = vunpack.c.l.b16 %v7589
        %v7774 = vunpack.c.l.b16 %v7590
        %v7775 = vunpack.c.l.b16 %v7591
        %v7776 = vunpack.c.l.b16 %v7592
        %v7777 = vunpack.c.l.b16 %v7593
        %v7778 = vunpack.c.l.b16 %v7594
        %v7779 = vunpack.c.l.b16 %v7595
        %v7780 = vunpack.c.l.b16 %v7596
        %v7781 = vunpack.c.l.b16 %v7597
        %v7782 = vunpack.c.l.b16 %v7598
        %v7783 = vunpack.c.l.b16 %v7599
        %v7784 = vpack.c.b16 %v7765, %v7764
        %v7785 = vpack.c.b16 %v7767, %v7766
        %v7786 = vpack.c.b16 %v7769, %v7768
        %v7787 = vpack.c.b16 %v7771, %v7770
        %v7788 = vpack.c.b16 %v7773, %v7772
        %v7789 = vpack.c.b16 %v7775, %v7774
        %v7790 = vpack.c.b16 %v7777, %v7776
        %v7791 = vpack.c.b16 %v7779, %v7778
        %v7792 = vpack.c.b16 %v7781, %v7780
        %v7793 = vpack.c.b16 %v7783, %v7782
        %v7805 = vsel %vm395, %v7697, 0
        %v7808 = vsel %vm395, %v7699, 0
        %v7811 = vsel %vm395, %v7701, 0
        %v7814 = vsel %vm395, %v7703, 0
        %v7817 = vsel %vm395, %v7705, 0
        %v7820 = vsel %vm395, %v7707, 0
        %v7823 = vsel %vm395, %v7709, 0
        %v7826 = vsel %vm395, %v7711, 0
        %v7829 = vsel %vm395, %v7713, 0
        %v7832 = vsel %vm395, %v7715, 0
        %v7835 = vsel %vm395, %v7717, 0
        %v7838 = vsel %vm395, %v7719, 0
        %v7841 = vsel %vm395, %v7721, 0
        %v7844 = vsel %vm395, %v7723, 0
        %v7847 = vsel %vm395, %v7725, 0
        %v7850 = vsel %vm395, %v7727, 0
        %7852 = vmatpush.bf16.msra.mxu0 %v7791
        %7853 = vmatpush.bf16.msra.mxu0 %v7790
        %7854 = vmatpush.bf16.msra.mxu0 %v7789
        %7855 = vmatpush.bf16.msra.mxu0 %v7788
        %7856 = vmatpush.bf16.msra.mxu0 %v7787
        %7857 = vmatpush.bf16.msra.mxu0 %v7786
        %7858 = vmatpush.bf16.msra.mxu0 %v7785
        %7859 = vmatpush.bf16.msra.mxu0 %v7784
        %7860 = vmatmul.bf16.gmra.mxu0 %v7696
        %v7861 = vpop.f32.mrf.mxu0
        %v7862 = vadd.f32 0.0, %v7861
        %v7863 = vpop.f32.mrf.mxu0
        %v7864 = vadd.f32 0.0, %v7863
        %7865 = vmatmul.bf16.gmra.mxu0 %v7698
        %v7866 = vpop.f32.mrf.mxu0
        %v7867 = vadd.f32 0.0, %v7866
        %v7868 = vpop.f32.mrf.mxu0
        %v7869 = vadd.f32 0.0, %v7868
        %7870 = vmatmul.bf16.gmra.mxu0 %v7700
        %v7871 = vpop.f32.mrf.mxu0
        %v7872 = vadd.f32 0.0, %v7871
        %v7873 = vpop.f32.mrf.mxu0
        %v7874 = vadd.f32 0.0, %v7873
        %7875 = vmatmul.bf16.gmra.mxu0 %v7702
        %v7876 = vpop.f32.mrf.mxu0
        %v7877 = vadd.f32 0.0, %v7876
        %v7878 = vpop.f32.mrf.mxu0
        %v7879 = vadd.f32 0.0, %v7878
        %7880 = vmatmul.bf16.gmra.mxu0 %v7704
        %v7881 = vpop.f32.mrf.mxu0
        %v7882 = vadd.f32 0.0, %v7881
        %v7883 = vpop.f32.mrf.mxu0
        %v7884 = vadd.f32 0.0, %v7883
        %7885 = vmatmul.bf16.gmra.mxu0 %v7706
        %v7886 = vpop.f32.mrf.mxu0
        %v7887 = vadd.f32 0.0, %v7886
        %v7888 = vpop.f32.mrf.mxu0
        %v7889 = vadd.f32 0.0, %v7888
        %7890 = vmatmul.bf16.gmra.mxu0 %v7708
        %v7891 = vpop.f32.mrf.mxu0
        %v7892 = vadd.f32 0.0, %v7891
        %v7893 = vpop.f32.mrf.mxu0
        %v7894 = vadd.f32 0.0, %v7893
        %7895 = vmatmul.bf16.gmra.mxu0 %v7710
        %v7896 = vpop.f32.mrf.mxu0
        %v7897 = vadd.f32 0.0, %v7896
        %v7898 = vpop.f32.mrf.mxu0
        %v7899 = vadd.f32 0.0, %v7898
        %7900 = vmatmul.bf16.gmra.mxu0 %v7712
        %v7901 = vpop.f32.mrf.mxu0
        %v7902 = vadd.f32 0.0, %v7901
        %v7903 = vpop.f32.mrf.mxu0
        %v7904 = vadd.f32 0.0, %v7903
        %7905 = vmatmul.bf16.gmra.mxu0 %v7714
        %v7906 = vpop.f32.mrf.mxu0
        %v7907 = vadd.f32 0.0, %v7906
        %v7908 = vpop.f32.mrf.mxu0
        %v7909 = vadd.f32 0.0, %v7908
        %7910 = vmatmul.bf16.gmra.mxu0 %v7716
        %v7911 = vpop.f32.mrf.mxu0
        %v7912 = vadd.f32 0.0, %v7911
        %v7913 = vpop.f32.mrf.mxu0
        %v7914 = vadd.f32 0.0, %v7913
        %7915 = vmatmul.bf16.gmra.mxu0 %v7718
        %v7916 = vpop.f32.mrf.mxu0
        %v7917 = vadd.f32 0.0, %v7916
        %v7918 = vpop.f32.mrf.mxu0
        %v7919 = vadd.f32 0.0, %v7918
        %7920 = vmatmul.bf16.gmra.mxu0 %v7720
        %v7921 = vpop.f32.mrf.mxu0
        %v7922 = vadd.f32 0.0, %v7921
        %v7923 = vpop.f32.mrf.mxu0
        %v7924 = vadd.f32 0.0, %v7923
        %7925 = vmatmul.bf16.gmra.mxu0 %v7722
        %v7926 = vpop.f32.mrf.mxu0
        %v7927 = vadd.f32 0.0, %v7926
        %v7928 = vpop.f32.mrf.mxu0
        %v7929 = vadd.f32 0.0, %v7928
        %7930 = vmatmul.bf16.gmra.mxu0 %v7724
        %v7931 = vpop.f32.mrf.mxu0
        %v7932 = vadd.f32 0.0, %v7931
        %v7933 = vpop.f32.mrf.mxu0
        %v7934 = vadd.f32 0.0, %v7933
        %7935 = vmatmul.bf16.gmra.mxu0 %v7726
        %v7936 = vpop.f32.mrf.mxu0
        %v7937 = vadd.f32 0.0, %v7936
        %v7938 = vpop.f32.mrf.mxu0
        %v7939 = vadd.f32 0.0, %v7938
        %7940 = vdwg.mxu0
        %7941 = vmatpush.bf16.msra.mxu0 0
        %7942 = vmatpush.bf16.msra.mxu0 0
        %7943 = vmatpush.bf16.msra.mxu0 0
        %7944 = vmatpush.bf16.msra.mxu0 0
        %7945 = vmatpush.bf16.msra.mxu0 0
        %7946 = vmatpush.bf16.msra.mxu0 0
        %7947 = vmatpush.bf16.msra.mxu0 %v7793
        %7948 = vmatpush.bf16.msra.mxu0 %v7792
        %7949 = vmatmul.bf16.gmra.mxu0 %v7805
        %v7950 = vpop.f32.mrf.mxu0
        %v7951 = vadd.f32 %v7862, %v7950
        %v7952 = vpop.f32.mrf.mxu0
        %v7953 = vadd.f32 %v7864, %v7952
        %7954 = vmatmul.bf16.gmra.mxu0 %v7808
        %v7955 = vpop.f32.mrf.mxu0
        %v7956 = vadd.f32 %v7867, %v7955
        %v7957 = vpop.f32.mrf.mxu0
        %v7958 = vadd.f32 %v7869, %v7957
        %7959 = vmatmul.bf16.gmra.mxu0 %v7811
        %v7960 = vpop.f32.mrf.mxu0
        %v7961 = vadd.f32 %v7872, %v7960
        %v7962 = vpop.f32.mrf.mxu0
        %v7963 = vadd.f32 %v7874, %v7962
        %7964 = vmatmul.bf16.gmra.mxu0 %v7814
        %v7965 = vpop.f32.mrf.mxu0
        %v7966 = vadd.f32 %v7877, %v7965
        %v7967 = vpop.f32.mrf.mxu0
        %v7968 = vadd.f32 %v7879, %v7967
        %7969 = vmatmul.bf16.gmra.mxu0 %v7817
        %v7970 = vpop.f32.mrf.mxu0
        %v7971 = vadd.f32 %v7882, %v7970
        %v7972 = vpop.f32.mrf.mxu0
        %v7973 = vadd.f32 %v7884, %v7972
        %7974 = vmatmul.bf16.gmra.mxu0 %v7820
        %v7975 = vpop.f32.mrf.mxu0
        %v7976 = vadd.f32 %v7887, %v7975
        %v7977 = vpop.f32.mrf.mxu0
        %v7978 = vadd.f32 %v7889, %v7977
        %7979 = vmatmul.bf16.gmra.mxu0 %v7823
        %v7980 = vpop.f32.mrf.mxu0
        %v7981 = vadd.f32 %v7892, %v7980
        %v7982 = vpop.f32.mrf.mxu0
        %v7983 = vadd.f32 %v7894, %v7982
        %7984 = vmatmul.bf16.gmra.mxu0 %v7826
        %v7985 = vpop.f32.mrf.mxu0
        %v7986 = vadd.f32 %v7897, %v7985
        %v7987 = vpop.f32.mrf.mxu0
        %v7988 = vadd.f32 %v7899, %v7987
        %7989 = vmatmul.bf16.gmra.mxu0 %v7829
        %v7990 = vpop.f32.mrf.mxu0
        %v7991 = vadd.f32 %v7902, %v7990
        %v7992 = vpop.f32.mrf.mxu0
        %v7993 = vadd.f32 %v7904, %v7992
        %7994 = vmatmul.bf16.gmra.mxu0 %v7832
        %v7995 = vpop.f32.mrf.mxu0
        %v7996 = vadd.f32 %v7907, %v7995
        %v7997 = vpop.f32.mrf.mxu0
        %v7998 = vadd.f32 %v7909, %v7997
        %7999 = vmatmul.bf16.gmra.mxu0 %v7835
        %v8000 = vpop.f32.mrf.mxu0
        %v8001 = vadd.f32 %v7912, %v8000
        %v8002 = vpop.f32.mrf.mxu0
        %v8003 = vadd.f32 %v7914, %v8002
        %8004 = vmatmul.bf16.gmra.mxu0 %v7838
        %v8005 = vpop.f32.mrf.mxu0
        %v8006 = vadd.f32 %v7917, %v8005
        %v8007 = vpop.f32.mrf.mxu0
        %v8008 = vadd.f32 %v7919, %v8007
        %8009 = vmatmul.bf16.gmra.mxu0 %v7841
        %v8010 = vpop.f32.mrf.mxu0
        %v8011 = vadd.f32 %v7922, %v8010
        %v8012 = vpop.f32.mrf.mxu0
        %v8013 = vadd.f32 %v7924, %v8012
        %8014 = vmatmul.bf16.gmra.mxu0 %v7844
        %v8015 = vpop.f32.mrf.mxu0
        %v8016 = vadd.f32 %v7927, %v8015
        %v8017 = vpop.f32.mrf.mxu0
        %v8018 = vadd.f32 %v7929, %v8017
        %8019 = vmatmul.bf16.gmra.mxu0 %v7847
        %v8020 = vpop.f32.mrf.mxu0
        %v8021 = vadd.f32 %v7932, %v8020
        %v8022 = vpop.f32.mrf.mxu0
        %v8023 = vadd.f32 %v7934, %v8022
        %8024 = vmatmul.bf16.gmra.mxu0 %v7850
        %v8025 = vpop.f32.mrf.mxu0
        %v8026 = vadd.f32 %v7937, %v8025
        %v8027 = vpop.f32.mrf.mxu0
        %v8028 = vadd.f32 %v7939, %v8027
        %8029 = vdwg.mxu0
        %v8030 = vadd.f32 %v7515, %v7951
        %v8031 = vadd.f32 %v7516, %v7953
        %v8032 = vadd.f32 %v7517, %v7956
        %v8033 = vadd.f32 %v7518, %v7958
        %v8034 = vadd.f32 %v7519, %v7961
        %v8035 = vadd.f32 %v7520, %v7963
        %v8036 = vadd.f32 %v7521, %v7966
        %v8037 = vadd.f32 %v7522, %v7968
        %v8038 = vadd.f32 %v7523, %v7971
        %v8039 = vadd.f32 %v7524, %v7973
        %v8040 = vadd.f32 %v7525, %v7976
        %v8041 = vadd.f32 %v7526, %v7978
        %v8042 = vadd.f32 %v7527, %v7981
        %v8043 = vadd.f32 %v7528, %v7983
        %v8044 = vadd.f32 %v7529, %v7986
        %v8045 = vadd.f32 %v7530, %v7988
        %v8046 = vadd.f32 %v7531, %v7991
        %v8047 = vadd.f32 %v7532, %v7993
        %v8048 = vadd.f32 %v7533, %v7996
        %v8049 = vadd.f32 %v7534, %v7998
        %v8050 = vadd.f32 %v7535, %v8001
        %v8051 = vadd.f32 %v7536, %v8003
        %v8052 = vadd.f32 %v7537, %v8006
        %v8053 = vadd.f32 %v7538, %v8008
        %v8054 = vadd.f32 %v7539, %v8011
        %v8055 = vadd.f32 %v7540, %v8013
        %v8056 = vadd.f32 %v7541, %v8016
        %v8057 = vadd.f32 %v7542, %v8018
        %v8058 = vadd.f32 %v7543, %v8021
        %v8059 = vadd.f32 %v7544, %v8023
        %v8060 = vadd.f32 %v7545, %v8026
        %v8061 = vadd.f32 %v7546, %v8028
        %v8062 = vld [vmem:[%s2993] sm:$0xff]
        %v8063 = vld [vmem:[%s2993 + $0x8] sm:$0xff]
        %v8064 = vld [vmem:[%s2993 + $0x10] sm:$0xff]
        %v8065 = vld [vmem:[%s2993 + $0x18] sm:$0xff]
        %v8066 = vld [vmem:[%s2993 + $0x20] sm:$0xff]
        %v8067 = vld [vmem:[%s2993 + $0x28] sm:$0xff]
        %v8068 = vld [vmem:[%s2993 + $0x30] sm:$0xff]
        %v8069 = vld [vmem:[%s2993 + $0x38] sm:$0xff]
        %v8070 = vld [vmem:[%s2993 + $0x40] sm:$0xff]
        %v8071 = vld [vmem:[%s2993 + $0x48] sm:$0xff]
        %v8072 = vld [vmem:[%s2993 + $0x50] sm:$0xff]
        %v8073 = vld [vmem:[%s2993 + $0x58] sm:$0xff]
        %v8074 = vld [vmem:[%s2993 + $0x60] sm:$0xff]
        %v8075 = vld [vmem:[%s2993 + $0x68] sm:$0xff]
        %v8076 = vld [vmem:[%s2993 + $0x70] sm:$0xff]
        %v8077 = vld [vmem:[%s2993 + $0x78] sm:$0xff]
        %v8078 = vld [vmem:[%s2993 + $0x80] sm:$0xff]
        %v8079 = vld [vmem:[%s2993 + $0x88] sm:$0xff]
        %v8080 = vld [vmem:[%s2993 + $0x90] sm:$0xff]
        %v8081 = vld [vmem:[%s2993 + $0x98] sm:$0xff]
        %v8082 = vld [vmem:[%s2993 + $0xa0] sm:$0xff]
        %v8083 = vld [vmem:[%s2993 + $0xa8] sm:$0xff]
        %v8084 = vld [vmem:[%s2993 + $0xb0] sm:$0xff]
        %v8085 = vld [vmem:[%s2993 + $0xb8] sm:$0xff]
        %v8086 = vld [vmem:[%s2993 + $0xc0] sm:$0xff]
        %v8087 = vld [vmem:[%s2993 + $0xc8] sm:$0xff]
        %v8088 = vld [vmem:[%s2993 + $0xd0] sm:$0xff]
        %v8089 = vld [vmem:[%s2993 + $0xd8] sm:$0xff]
        %v8090 = vld [vmem:[%s2993 + $0xe0] sm:$0xff]
        %v8091 = vld [vmem:[%s2993 + $0xe8] sm:$0xff]
        %v8092 = vld [vmem:[%s2993 + $0xf0] sm:$0xff]
        %v8093 = vld [vmem:[%s2993 + $0xf8] sm:$0xff]
        %s8094 = scalar_lea.vmem %s5, 320
        %v8095 = vld [vmem:[%s8094] sm:$0xf]
        %v8096 = vld [vmem:[%s8094 + $0x4] sm:$0xf]
        %v8097 = vld [vmem:[%s8094 + $0x8] sm:$0xf]
        %v8098 = vld [vmem:[%s8094 + $0xc] sm:$0xf]
        %v8099 = vld [vmem:[%s8094 + $0x10] sm:$0xf]
        %v8100 = vld [vmem:[%s8094 + $0x14] sm:$0xf]
        %v8101 = vld [vmem:[%s8094 + $0x18] sm:$0xf]
        %v8102 = vld [vmem:[%s8094 + $0x1c] sm:$0xf]
        %v8103 = vld [vmem:[%s8094 + $0x20] sm:$0xf]
        %v8104 = vld [vmem:[%s8094 + $0x24] sm:$0xf]
        %v8105 = vld [vmem:[%s8094 + $0x28] sm:$0xf]
        %v8106 = vld [vmem:[%s8094 + $0x2c] sm:$0xf]
        %v8107 = vld [vmem:[%s8094 + $0x30] sm:$0xf]
        %v8108 = vld [vmem:[%s8094 + $0x34] sm:$0xf]
        %v8109 = vld [vmem:[%s8094 + $0x38] sm:$0xf]
        %v8110 = vld [vmem:[%s8094 + $0x3c] sm:$0xf]
        %v8111 = vld [vmem:[%s8094 + $0x40] sm:$0xf]
        %v8112 = vld [vmem:[%s8094 + $0x44] sm:$0xf]
        %v8113 = vld [vmem:[%s8094 + $0x48] sm:$0xf]
        %v8114 = vld [vmem:[%s8094 + $0x4c] sm:$0xf]
        %v8147 = vunpack.c.l.b16 %v8062
        %v8148 = vunpack.c.h.b16 %v8062
        %v8149 = vunpack.c.l.b16 %v8063
        %v8150 = vunpack.c.h.b16 %v8063
        %v8151 = vunpack.c.l.b16 %v8064
        %v8152 = vunpack.c.h.b16 %v8064
        %v8153 = vunpack.c.l.b16 %v8065
        %v8154 = vunpack.c.h.b16 %v8065
        %v8155 = vunpack.c.l.b16 %v8066
        %v8156 = vunpack.c.h.b16 %v8066
        %v8157 = vunpack.c.l.b16 %v8067
        %v8158 = vunpack.c.h.b16 %v8067
        %v8159 = vunpack.c.l.b16 %v8068
        %v8160 = vunpack.c.h.b16 %v8068
        %v8161 = vunpack.c.l.b16 %v8069
        %v8162 = vunpack.c.h.b16 %v8069
        %v8163 = vunpack.c.l.b16 %v8070
        %v8164 = vunpack.c.h.b16 %v8070
        %v8165 = vunpack.c.l.b16 %v8071
        %v8166 = vunpack.c.h.b16 %v8071
        %v8167 = vunpack.c.l.b16 %v8072
        %v8168 = vunpack.c.h.b16 %v8072
        %v8169 = vunpack.c.l.b16 %v8073
        %v8170 = vunpack.c.h.b16 %v8073
        %v8171 = vunpack.c.l.b16 %v8074
        %v8172 = vunpack.c.h.b16 %v8074
        %v8173 = vunpack.c.l.b16 %v8075
        %v8174 = vunpack.c.h.b16 %v8075
        %v8175 = vunpack.c.l.b16 %v8076
        %v8176 = vunpack.c.h.b16 %v8076
        %v8177 = vunpack.c.l.b16 %v8077
        %v8178 = vunpack.c.h.b16 %v8077
        %v8179 = vunpack.c.l.b16 %v8078
        %v8180 = vunpack.c.h.b16 %v8078
        %v8181 = vunpack.c.l.b16 %v8079
        %v8182 = vunpack.c.h.b16 %v8079
        %v8183 = vunpack.c.l.b16 %v8080
        %v8184 = vunpack.c.h.b16 %v8080
        %v8185 = vunpack.c.l.b16 %v8081
        %v8186 = vunpack.c.h.b16 %v8081
        %v8187 = vunpack.c.l.b16 %v8082
        %v8188 = vunpack.c.h.b16 %v8082
        %v8189 = vunpack.c.l.b16 %v8083
        %v8190 = vunpack.c.h.b16 %v8083
        %v8191 = vunpack.c.l.b16 %v8084
        %v8192 = vunpack.c.h.b16 %v8084
        %v8193 = vunpack.c.l.b16 %v8085
        %v8194 = vunpack.c.h.b16 %v8085
        %v8195 = vunpack.c.l.b16 %v8086
        %v8196 = vunpack.c.h.b16 %v8086
        %v8197 = vunpack.c.l.b16 %v8087
        %v8198 = vunpack.c.h.b16 %v8087
        %v8199 = vunpack.c.l.b16 %v8088
        %v8200 = vunpack.c.h.b16 %v8088
        %v8201 = vunpack.c.l.b16 %v8089
        %v8202 = vunpack.c.h.b16 %v8089
        %v8203 = vunpack.c.l.b16 %v8090
        %v8204 = vunpack.c.h.b16 %v8090
        %v8205 = vunpack.c.l.b16 %v8091
        %v8206 = vunpack.c.h.b16 %v8091
        %v8207 = vunpack.c.l.b16 %v8092
        %v8208 = vunpack.c.h.b16 %v8092
        %v8209 = vunpack.c.l.b16 %v8093
        %v8210 = vunpack.c.h.b16 %v8093
        %v8211 = vpack.c.b16 %v8149, %v8147
        %v8212 = vpack.c.b16 %v8150, %v8148
        %v8213 = vpack.c.b16 %v8153, %v8151
        %v8214 = vpack.c.b16 %v8154, %v8152
        %v8215 = vpack.c.b16 %v8157, %v8155
        %v8216 = vpack.c.b16 %v8158, %v8156
        %v8217 = vpack.c.b16 %v8161, %v8159
        %v8218 = vpack.c.b16 %v8162, %v8160
        %v8219 = vpack.c.b16 %v8165, %v8163
        %v8220 = vpack.c.b16 %v8166, %v8164
        %v8221 = vpack.c.b16 %v8169, %v8167
        %v8222 = vpack.c.b16 %v8170, %v8168
        %v8223 = vpack.c.b16 %v8173, %v8171
        %v8224 = vpack.c.b16 %v8174, %v8172
        %v8225 = vpack.c.b16 %v8177, %v8175
        %v8226 = vpack.c.b16 %v8178, %v8176
        %v8227 = vpack.c.b16 %v8181, %v8179
        %v8228 = vpack.c.b16 %v8182, %v8180
        %v8229 = vpack.c.b16 %v8185, %v8183
        %v8230 = vpack.c.b16 %v8186, %v8184
        %v8231 = vpack.c.b16 %v8189, %v8187
        %v8232 = vpack.c.b16 %v8190, %v8188
        %v8233 = vpack.c.b16 %v8193, %v8191
        %v8234 = vpack.c.b16 %v8194, %v8192
        %v8235 = vpack.c.b16 %v8197, %v8195
        %v8236 = vpack.c.b16 %v8198, %v8196
        %v8237 = vpack.c.b16 %v8201, %v8199
        %v8238 = vpack.c.b16 %v8202, %v8200
        %v8239 = vpack.c.b16 %v8205, %v8203
        %v8240 = vpack.c.b16 %v8206, %v8204
        %v8241 = vpack.c.b16 %v8209, %v8207
        %v8242 = vpack.c.b16 %v8210, %v8208
        %v8279 = vunpack.c.l.b16 %v8095
        %v8280 = vunpack.c.l.b16 %v8096
        %v8281 = vunpack.c.l.b16 %v8097
        %v8282 = vunpack.c.l.b16 %v8098
        %v8283 = vunpack.c.l.b16 %v8099
        %v8284 = vunpack.c.l.b16 %v8100
        %v8285 = vunpack.c.l.b16 %v8101
        %v8286 = vunpack.c.l.b16 %v8102
        %v8287 = vunpack.c.l.b16 %v8103
        %v8288 = vunpack.c.l.b16 %v8104
        %v8289 = vunpack.c.l.b16 %v8105
        %v8290 = vunpack.c.l.b16 %v8106
        %v8291 = vunpack.c.l.b16 %v8107
        %v8292 = vunpack.c.l.b16 %v8108
        %v8293 = vunpack.c.l.b16 %v8109
        %v8294 = vunpack.c.l.b16 %v8110
        %v8295 = vunpack.c.l.b16 %v8111
        %v8296 = vunpack.c.l.b16 %v8112
        %v8297 = vunpack.c.l.b16 %v8113
        %v8298 = vunpack.c.l.b16 %v8114
        %v8299 = vpack.c.b16 %v8280, %v8279
        %v8300 = vpack.c.b16 %v8282, %v8281
        %v8301 = vpack.c.b16 %v8284, %v8283
        %v8302 = vpack.c.b16 %v8286, %v8285
        %v8303 = vpack.c.b16 %v8288, %v8287
        %v8304 = vpack.c.b16 %v8290, %v8289
        %v8305 = vpack.c.b16 %v8292, %v8291
        %v8306 = vpack.c.b16 %v8294, %v8293
        %v8307 = vpack.c.b16 %v8296, %v8295
        %v8308 = vpack.c.b16 %v8298, %v8297
        %v8320 = vsel %vm395, %v8212, 0
        %v8323 = vsel %vm395, %v8214, 0
        %v8326 = vsel %vm395, %v8216, 0
        %v8329 = vsel %vm395, %v8218, 0
        %v8332 = vsel %vm395, %v8220, 0
        %v8335 = vsel %vm395, %v8222, 0
        %v8338 = vsel %vm395, %v8224, 0
        %v8341 = vsel %vm395, %v8226, 0
        %v8344 = vsel %vm395, %v8228, 0
        %v8347 = vsel %vm395, %v8230, 0
        %v8350 = vsel %vm395, %v8232, 0
        %v8353 = vsel %vm395, %v8234, 0
        %v8356 = vsel %vm395, %v8236, 0
        %v8359 = vsel %vm395, %v8238, 0
        %v8362 = vsel %vm395, %v8240, 0
        %v8365 = vsel %vm395, %v8242, 0
        %8367 = vmatpush.bf16.msra.mxu0 %v8306
        %8368 = vmatpush.bf16.msra.mxu0 %v8305
        %8369 = vmatpush.bf16.msra.mxu0 %v8304
        %8370 = vmatpush.bf16.msra.mxu0 %v8303
        %8371 = vmatpush.bf16.msra.mxu0 %v8302
        %8372 = vmatpush.bf16.msra.mxu0 %v8301
        %8373 = vmatpush.bf16.msra.mxu0 %v8300
        %8374 = vmatpush.bf16.msra.mxu0 %v8299
        %8375 = vmatmul.bf16.gmra.mxu0 %v8211
        %v8376 = vpop.f32.mrf.mxu0
        %v8377 = vadd.f32 0.0, %v8376
        %v8378 = vpop.f32.mrf.mxu0
        %v8379 = vadd.f32 0.0, %v8378
        %8380 = vmatmul.bf16.gmra.mxu0 %v8213
        %v8381 = vpop.f32.mrf.mxu0
        %v8382 = vadd.f32 0.0, %v8381
        %v8383 = vpop.f32.mrf.mxu0
        %v8384 = vadd.f32 0.0, %v8383
        %8385 = vmatmul.bf16.gmra.mxu0 %v8215
        %v8386 = vpop.f32.mrf.mxu0
        %v8387 = vadd.f32 0.0, %v8386
        %v8388 = vpop.f32.mrf.mxu0
        %v8389 = vadd.f32 0.0, %v8388
        %8390 = vmatmul.bf16.gmra.mxu0 %v8217
        %v8391 = vpop.f32.mrf.mxu0
        %v8392 = vadd.f32 0.0, %v8391
        %v8393 = vpop.f32.mrf.mxu0
        %v8394 = vadd.f32 0.0, %v8393
        %8395 = vmatmul.bf16.gmra.mxu0 %v8219
        %v8396 = vpop.f32.mrf.mxu0
        %v8397 = vadd.f32 0.0, %v8396
        %v8398 = vpop.f32.mrf.mxu0
        %v8399 = vadd.f32 0.0, %v8398
        %8400 = vmatmul.bf16.gmra.mxu0 %v8221
        %v8401 = vpop.f32.mrf.mxu0
        %v8402 = vadd.f32 0.0, %v8401
        %v8403 = vpop.f32.mrf.mxu0
        %v8404 = vadd.f32 0.0, %v8403
        %8405 = vmatmul.bf16.gmra.mxu0 %v8223
        %v8406 = vpop.f32.mrf.mxu0
        %v8407 = vadd.f32 0.0, %v8406
        %v8408 = vpop.f32.mrf.mxu0
        %v8409 = vadd.f32 0.0, %v8408
        %8410 = vmatmul.bf16.gmra.mxu0 %v8225
        %v8411 = vpop.f32.mrf.mxu0
        %v8412 = vadd.f32 0.0, %v8411
        %v8413 = vpop.f32.mrf.mxu0
        %v8414 = vadd.f32 0.0, %v8413
        %8415 = vmatmul.bf16.gmra.mxu0 %v8227
        %v8416 = vpop.f32.mrf.mxu0
        %v8417 = vadd.f32 0.0, %v8416
        %v8418 = vpop.f32.mrf.mxu0
        %v8419 = vadd.f32 0.0, %v8418
        %8420 = vmatmul.bf16.gmra.mxu0 %v8229
        %v8421 = vpop.f32.mrf.mxu0
        %v8422 = vadd.f32 0.0, %v8421
        %v8423 = vpop.f32.mrf.mxu0
        %v8424 = vadd.f32 0.0, %v8423
        %8425 = vmatmul.bf16.gmra.mxu0 %v8231
        %v8426 = vpop.f32.mrf.mxu0
        %v8427 = vadd.f32 0.0, %v8426
        %v8428 = vpop.f32.mrf.mxu0
        %v8429 = vadd.f32 0.0, %v8428
        %8430 = vmatmul.bf16.gmra.mxu0 %v8233
        %v8431 = vpop.f32.mrf.mxu0
        %v8432 = vadd.f32 0.0, %v8431
        %v8433 = vpop.f32.mrf.mxu0
        %v8434 = vadd.f32 0.0, %v8433
        %8435 = vmatmul.bf16.gmra.mxu0 %v8235
        %v8436 = vpop.f32.mrf.mxu0
        %v8437 = vadd.f32 0.0, %v8436
        %v8438 = vpop.f32.mrf.mxu0
        %v8439 = vadd.f32 0.0, %v8438
        %8440 = vmatmul.bf16.gmra.mxu0 %v8237
        %v8441 = vpop.f32.mrf.mxu0
        %v8442 = vadd.f32 0.0, %v8441
        %v8443 = vpop.f32.mrf.mxu0
        %v8444 = vadd.f32 0.0, %v8443
        %8445 = vmatmul.bf16.gmra.mxu0 %v8239
        %v8446 = vpop.f32.mrf.mxu0
        %v8447 = vadd.f32 0.0, %v8446
        %v8448 = vpop.f32.mrf.mxu0
        %v8449 = vadd.f32 0.0, %v8448
        %8450 = vmatmul.bf16.gmra.mxu0 %v8241
        %v8451 = vpop.f32.mrf.mxu0
        %v8452 = vadd.f32 0.0, %v8451
        %v8453 = vpop.f32.mrf.mxu0
        %v8454 = vadd.f32 0.0, %v8453
        %8455 = vdwg.mxu0
        %8456 = vmatpush.bf16.msra.mxu0 0
        %8457 = vmatpush.bf16.msra.mxu0 0
        %8458 = vmatpush.bf16.msra.mxu0 0
        %8459 = vmatpush.bf16.msra.mxu0 0
        %8460 = vmatpush.bf16.msra.mxu0 0
        %8461 = vmatpush.bf16.msra.mxu0 0
        %8462 = vmatpush.bf16.msra.mxu0 %v8308
        %8463 = vmatpush.bf16.msra.mxu0 %v8307
        %8464 = vmatmul.bf16.gmra.mxu0 %v8320
        %v8465 = vpop.f32.mrf.mxu0
        %v8466 = vadd.f32 %v8377, %v8465
        %v8467 = vpop.f32.mrf.mxu0
        %v8468 = vadd.f32 %v8379, %v8467
        %8469 = vmatmul.bf16.gmra.mxu0 %v8323
        %v8470 = vpop.f32.mrf.mxu0
        %v8471 = vadd.f32 %v8382, %v8470
        %v8472 = vpop.f32.mrf.mxu0
        %v8473 = vadd.f32 %v8384, %v8472
        %8474 = vmatmul.bf16.gmra.mxu0 %v8326
        %v8475 = vpop.f32.mrf.mxu0
        %v8476 = vadd.f32 %v8387, %v8475
        %v8477 = vpop.f32.mrf.mxu0
        %v8478 = vadd.f32 %v8389, %v8477
        %8479 = vmatmul.bf16.gmra.mxu0 %v8329
        %v8480 = vpop.f32.mrf.mxu0
        %v8481 = vadd.f32 %v8392, %v8480
        %v8482 = vpop.f32.mrf.mxu0
        %v8483 = vadd.f32 %v8394, %v8482
        %8484 = vmatmul.bf16.gmra.mxu0 %v8332
        %v8485 = vpop.f32.mrf.mxu0
        %v8486 = vadd.f32 %v8397, %v8485
        %v8487 = vpop.f32.mrf.mxu0
        %v8488 = vadd.f32 %v8399, %v8487
        %8489 = vmatmul.bf16.gmra.mxu0 %v8335
        %v8490 = vpop.f32.mrf.mxu0
        %v8491 = vadd.f32 %v8402, %v8490
        %v8492 = vpop.f32.mrf.mxu0
        %v8493 = vadd.f32 %v8404, %v8492
        %8494 = vmatmul.bf16.gmra.mxu0 %v8338
        %v8495 = vpop.f32.mrf.mxu0
        %v8496 = vadd.f32 %v8407, %v8495
        %v8497 = vpop.f32.mrf.mxu0
        %v8498 = vadd.f32 %v8409, %v8497
        %8499 = vmatmul.bf16.gmra.mxu0 %v8341
        %v8500 = vpop.f32.mrf.mxu0
        %v8501 = vadd.f32 %v8412, %v8500
        %v8502 = vpop.f32.mrf.mxu0
        %v8503 = vadd.f32 %v8414, %v8502
        %8504 = vmatmul.bf16.gmra.mxu0 %v8344
        %v8505 = vpop.f32.mrf.mxu0
        %v8506 = vadd.f32 %v8417, %v8505
        %v8507 = vpop.f32.mrf.mxu0
        %v8508 = vadd.f32 %v8419, %v8507
        %8509 = vmatmul.bf16.gmra.mxu0 %v8347
        %v8510 = vpop.f32.mrf.mxu0
        %v8511 = vadd.f32 %v8422, %v8510
        %v8512 = vpop.f32.mrf.mxu0
        %v8513 = vadd.f32 %v8424, %v8512
        %8514 = vmatmul.bf16.gmra.mxu0 %v8350
        %v8515 = vpop.f32.mrf.mxu0
        %v8516 = vadd.f32 %v8427, %v8515
        %v8517 = vpop.f32.mrf.mxu0
        %v8518 = vadd.f32 %v8429, %v8517
        %8519 = vmatmul.bf16.gmra.mxu0 %v8353
        %v8520 = vpop.f32.mrf.mxu0
        %v8521 = vadd.f32 %v8432, %v8520
        %v8522 = vpop.f32.mrf.mxu0
        %v8523 = vadd.f32 %v8434, %v8522
        %8524 = vmatmul.bf16.gmra.mxu0 %v8356
        %v8525 = vpop.f32.mrf.mxu0
        %v8526 = vadd.f32 %v8437, %v8525
        %v8527 = vpop.f32.mrf.mxu0
        %v8528 = vadd.f32 %v8439, %v8527
        %8529 = vmatmul.bf16.gmra.mxu0 %v8359
        %v8530 = vpop.f32.mrf.mxu0
        %v8531 = vadd.f32 %v8442, %v8530
        %v8532 = vpop.f32.mrf.mxu0
        %v8533 = vadd.f32 %v8444, %v8532
        %8534 = vmatmul.bf16.gmra.mxu0 %v8362
        %v8535 = vpop.f32.mrf.mxu0
        %v8536 = vadd.f32 %v8447, %v8535
        %v8537 = vpop.f32.mrf.mxu0
        %v8538 = vadd.f32 %v8449, %v8537
        %8539 = vmatmul.bf16.gmra.mxu0 %v8365
        %v8540 = vpop.f32.mrf.mxu0
        %v8541 = vadd.f32 %v8452, %v8540
        %v8542 = vpop.f32.mrf.mxu0
        %v8543 = vadd.f32 %v8454, %v8542
        %8544 = vdwg.mxu0
        %v8545 = vadd.f32 %v8030, %v8466
        %v8546 = vadd.f32 %v8031, %v8468
        %v8547 = vadd.f32 %v8032, %v8471
        %v8548 = vadd.f32 %v8033, %v8473
        %v8549 = vadd.f32 %v8034, %v8476
        %v8550 = vadd.f32 %v8035, %v8478
        %v8551 = vadd.f32 %v8036, %v8481
        %v8552 = vadd.f32 %v8037, %v8483
        %v8553 = vadd.f32 %v8038, %v8486
        %v8554 = vadd.f32 %v8039, %v8488
        %v8555 = vadd.f32 %v8040, %v8491
        %v8556 = vadd.f32 %v8041, %v8493
        %v8557 = vadd.f32 %v8042, %v8496
        %v8558 = vadd.f32 %v8043, %v8498
        %v8559 = vadd.f32 %v8044, %v8501
        %v8560 = vadd.f32 %v8045, %v8503
        %v8561 = vadd.f32 %v8046, %v8506
        %v8562 = vadd.f32 %v8047, %v8508
        %v8563 = vadd.f32 %v8048, %v8511
        %v8564 = vadd.f32 %v8049, %v8513
        %v8565 = vadd.f32 %v8050, %v8516
        %v8566 = vadd.f32 %v8051, %v8518
        %v8567 = vadd.f32 %v8052, %v8521
        %v8568 = vadd.f32 %v8053, %v8523
        %v8569 = vadd.f32 %v8054, %v8526
        %v8570 = vadd.f32 %v8055, %v8528
        %v8571 = vadd.f32 %v8056, %v8531
        %v8572 = vadd.f32 %v8057, %v8533
        %v8573 = vadd.f32 %v8058, %v8536
        %v8574 = vadd.f32 %v8059, %v8538
        %v8575 = vadd.f32 %v8060, %v8541
        %v8576 = vadd.f32 %v8061, %v8543
        %v8577 = vld [vmem:[%s6] sm:$0x1]
        %v8579 = vperm.slane %v8577, 0
        %v8581 = vadd.f32 %v8545, %v8579
        %v8582 = vadd.f32 %v8546, %v8579
        %v8583 = vadd.f32 %v8547, %v8579
        %v8584 = vadd.f32 %v8548, %v8579
        %v8585 = vadd.f32 %v8549, %v8579
        %v8586 = vadd.f32 %v8550, %v8579
        %v8587 = vadd.f32 %v8551, %v8579
        %v8588 = vadd.f32 %v8552, %v8579
        %v8589 = vadd.f32 %v8553, %v8579
        %v8590 = vadd.f32 %v8554, %v8579
        %v8591 = vadd.f32 %v8555, %v8579
        %v8592 = vadd.f32 %v8556, %v8579
        %v8593 = vadd.f32 %v8557, %v8579
        %v8594 = vadd.f32 %v8558, %v8579
        %v8595 = vadd.f32 %v8559, %v8579
        %v8596 = vadd.f32 %v8560, %v8579
        %v8597 = vadd.f32 %v8561, %v8579
        %v8598 = vadd.f32 %v8562, %v8579
        %v8599 = vadd.f32 %v8563, %v8579
        %v8600 = vadd.f32 %v8564, %v8579
        %v8601 = vadd.f32 %v8565, %v8579
        %v8602 = vadd.f32 %v8566, %v8579
        %v8603 = vadd.f32 %v8567, %v8579
        %v8604 = vadd.f32 %v8568, %v8579
        %v8605 = vadd.f32 %v8569, %v8579
        %v8606 = vadd.f32 %v8570, %v8579
        %v8607 = vadd.f32 %v8571, %v8579
        %v8608 = vadd.f32 %v8572, %v8579
        %v8609 = vadd.f32 %v8573, %v8579
        %v8610 = vadd.f32 %v8574, %v8579
        %v8611 = vadd.f32 %v8575, %v8579
        %v8612 = vadd.f32 %v8576, %v8579
        %v8613 = vmax.f32 %v8581, 0.0
        %v8614 = vmax.f32 %v8582, 0.0
        %v8615 = vmax.f32 %v8583, 0.0
        %v8616 = vmax.f32 %v8584, 0.0
        %v8617 = vmax.f32 %v8585, 0.0
        %v8618 = vmax.f32 %v8586, 0.0
        %v8619 = vmax.f32 %v8587, 0.0
        %v8620 = vmax.f32 %v8588, 0.0
        %v8621 = vmax.f32 %v8589, 0.0
        %v8622 = vmax.f32 %v8590, 0.0
        %v8623 = vmax.f32 %v8591, 0.0
        %v8624 = vmax.f32 %v8592, 0.0
        %v8625 = vmax.f32 %v8593, 0.0
        %v8626 = vmax.f32 %v8594, 0.0
        %v8627 = vmax.f32 %v8595, 0.0
        %v8628 = vmax.f32 %v8596, 0.0
        %v8629 = vmax.f32 %v8597, 0.0
        %v8630 = vmax.f32 %v8598, 0.0
        %v8631 = vmax.f32 %v8599, 0.0
        %v8632 = vmax.f32 %v8600, 0.0
        %v8633 = vmax.f32 %v8601, 0.0
        %v8634 = vmax.f32 %v8602, 0.0
        %v8635 = vmax.f32 %v8603, 0.0
        %v8636 = vmax.f32 %v8604, 0.0
        %v8637 = vmax.f32 %v8605, 0.0
        %v8638 = vmax.f32 %v8606, 0.0
        %v8639 = vmax.f32 %v8607, 0.0
        %v8640 = vmax.f32 %v8608, 0.0
        %v8641 = vmax.f32 %v8609, 0.0
        %v8642 = vmax.f32 %v8610, 0.0
        %v8643 = vmax.f32 %v8611, 0.0
        %v8644 = vmax.f32 %v8612, 0.0
        %8645 = vst.msk [vmem:[#allocation6] sm:$0xff] %vm395, %v8613
        %8646 = vst.msk [vmem:[#allocation6 + $0x8] sm:$0xff] %vm395, %v8614
        %8647 = vst.msk [vmem:[#allocation6 + $0x10] sm:$0xff] %vm395, %v8615
        %8648 = vst.msk [vmem:[#allocation6 + $0x18] sm:$0xff] %vm395, %v8616
        %8649 = vst.msk [vmem:[#allocation6 + $0x20] sm:$0xff] %vm395, %v8617
        %8650 = vst.msk [vmem:[#allocation6 + $0x28] sm:$0xff] %vm395, %v8618
        %8651 = vst.msk [vmem:[#allocation6 + $0x30] sm:$0xff] %vm395, %v8619
        %8652 = vst.msk [vmem:[#allocation6 + $0x38] sm:$0xff] %vm395, %v8620
        %8653 = vst.msk [vmem:[#allocation6 + $0x40] sm:$0xff] %vm395, %v8621
        %8654 = vst.msk [vmem:[#allocation6 + $0x48] sm:$0xff] %vm395, %v8622
        %8655 = vst.msk [vmem:[#allocation6 + $0x50] sm:$0xff] %vm395, %v8623
        %8656 = vst.msk [vmem:[#allocation6 + $0x58] sm:$0xff] %vm395, %v8624
        %8657 = vst.msk [vmem:[#allocation6 + $0x60] sm:$0xff] %vm395, %v8625
        %8658 = vst.msk [vmem:[#allocation6 + $0x68] sm:$0xff] %vm395, %v8626
        %8659 = vst.msk [vmem:[#allocation6 + $0x70] sm:$0xff] %vm395, %v8627
        %8660 = vst.msk [vmem:[#allocation6 + $0x78] sm:$0xff] %vm395, %v8628
        %8661 = vst.msk [vmem:[#allocation6 + $0x80] sm:$0xff] %vm395, %v8629
        %8662 = vst.msk [vmem:[#allocation6 + $0x88] sm:$0xff] %vm395, %v8630
        %8663 = vst.msk [vmem:[#allocation6 + $0x90] sm:$0xff] %vm395, %v8631
        %8664 = vst.msk [vmem:[#allocation6 + $0x98] sm:$0xff] %vm395, %v8632
        %8665 = vst.msk [vmem:[#allocation6 + $0xa0] sm:$0xff] %vm395, %v8633
        %8666 = vst.msk [vmem:[#allocation6 + $0xa8] sm:$0xff] %vm395, %v8634
        %8667 = vst.msk [vmem:[#allocation6 + $0xb0] sm:$0xff] %vm395, %v8635
        %8668 = vst.msk [vmem:[#allocation6 + $0xb8] sm:$0xff] %vm395, %v8636
        %8669 = vst.msk [vmem:[#allocation6 + $0xc0] sm:$0xff] %vm395, %v8637
        %8670 = vst.msk [vmem:[#allocation6 + $0xc8] sm:$0xff] %vm395, %v8638
        %8671 = vst.msk [vmem:[#allocation6 + $0xd0] sm:$0xff] %vm395, %v8639
        %8672 = vst.msk [vmem:[#allocation6 + $0xd8] sm:$0xff] %vm395, %v8640
        %8673 = vst.msk [vmem:[#allocation6 + $0xe0] sm:$0xff] %vm395, %v8641
        %8674 = vst.msk [vmem:[#allocation6 + $0xe8] sm:$0xff] %vm395, %v8642
        %8675 = vst.msk [vmem:[#allocation6 + $0xf0] sm:$0xff] %vm395, %v8643
        %8676 = vst.msk [vmem:[#allocation6 + $0xf8] sm:$0xff] %vm395, %v8644
        %v8677 = vld [vmem:[#allocation6] ss:$2 sm:$0xff]
        %s8678 = scalar_lea.vmem [#allocation6], 16
        %v8679 = vld [vmem:[%s8678] ss:$2 sm:$0xff]
        %s8680 = scalar_lea.vmem [#allocation6], 32
        %v8681 = vld [vmem:[%s8680] ss:$2 sm:$0xff]
        %s8682 = scalar_lea.vmem [#allocation6], 48
        %v8683 = vld [vmem:[%s8682] ss:$2 sm:$0xff]
        %s8684 = scalar_lea.vmem [#allocation6], 64
        %v8685 = vld [vmem:[%s8684] ss:$2 sm:$0xff]
        %s8686 = scalar_lea.vmem [#allocation6], 80
        %v8687 = vld [vmem:[%s8686] ss:$2 sm:$0xff]
        %s8688 = scalar_lea.vmem [#allocation6], 96
        %v8689 = vld [vmem:[%s8688] ss:$2 sm:$0xff]
        %s8690 = scalar_lea.vmem [#allocation6], 112
        %v8691 = vld [vmem:[%s8690] ss:$2 sm:$0xff]
        %s8692 = scalar_lea.vmem [#allocation6], 128
        %v8693 = vld [vmem:[%s8692] ss:$2 sm:$0xff]
        %s8694 = scalar_lea.vmem [#allocation6], 144
        %v8695 = vld [vmem:[%s8694] ss:$2 sm:$0xff]
        %s8696 = scalar_lea.vmem [#allocation6], 160
        %v8697 = vld [vmem:[%s8696] ss:$2 sm:$0xff]
        %s8698 = scalar_lea.vmem [#allocation6], 176
        %v8699 = vld [vmem:[%s8698] ss:$2 sm:$0xff]
        %s8700 = scalar_lea.vmem [#allocation6], 192
        %v8701 = vld [vmem:[%s8700] ss:$2 sm:$0xff]
        %s8702 = scalar_lea.vmem [#allocation6], 208
        %v8703 = vld [vmem:[%s8702] ss:$2 sm:$0xff]
        %s8704 = scalar_lea.vmem [#allocation6], 224
        %v8705 = vld [vmem:[%s8704] ss:$2 sm:$0xff]
        %s8706 = scalar_lea.vmem [#allocation6], 240
        %v8707 = vld [vmem:[%s8706] ss:$2 sm:$0xff]
        %s8708 = scalar_lea.vmem [#allocation6], 1
        %v8709 = vld [vmem:[%s8708] ss:$2 sm:$0xff]
        %s8710 = scalar_lea.vmem [#allocation6], 17
        %v8711 = vld [vmem:[%s8710] ss:$2 sm:$0xff]
        %s8712 = scalar_lea.vmem [#allocation6], 33
        %v8713 = vld [vmem:[%s8712] ss:$2 sm:$0xff]
        %s8714 = scalar_lea.vmem [#allocation6], 49
        %v8715 = vld [vmem:[%s8714] ss:$2 sm:$0xff]
        %s8716 = scalar_lea.vmem [#allocation6], 65
        %v8717 = vld [vmem:[%s8716] ss:$2 sm:$0xff]
        %s8718 = scalar_lea.vmem [#allocation6], 81
        %v8719 = vld [vmem:[%s8718] ss:$2 sm:$0xff]
        %s8720 = scalar_lea.vmem [#allocation6], 97
        %v8721 = vld [vmem:[%s8720] ss:$2 sm:$0xff]
        %s8722 = scalar_lea.vmem [#allocation6], 113
        %v8723 = vld [vmem:[%s8722] ss:$2 sm:$0xff]
        %s8724 = scalar_lea.vmem [#allocation6], 129
        %v8725 = vld [vmem:[%s8724] ss:$2 sm:$0xff]
        %s8726 = scalar_lea.vmem [#allocation6], 145
        %v8727 = vld [vmem:[%s8726] ss:$2 sm:$0xff]
        %s8728 = scalar_lea.vmem [#allocation6], 161
        %v8729 = vld [vmem:[%s8728] ss:$2 sm:$0xff]
        %s8730 = scalar_lea.vmem [#allocation6], 177
        %v8731 = vld [vmem:[%s8730] ss:$2 sm:$0xff]
        %s8732 = scalar_lea.vmem [#allocation6], 193
        %v8733 = vld [vmem:[%s8732] ss:$2 sm:$0xff]
        %s8734 = scalar_lea.vmem [#allocation6], 209
        %v8735 = vld [vmem:[%s8734] ss:$2 sm:$0xff]
        %s8736 = scalar_lea.vmem [#allocation6], 225
        %v8737 = vld [vmem:[%s8736] ss:$2 sm:$0xff]
        %s8738 = scalar_lea.vmem [#allocation6], 241
        %v8739 = vld [vmem:[%s8738] ss:$2 sm:$0xff]
        %v8740 = vmax.f32 %v8677, %v8709
        %v8741 = vmax.f32 %v8679, %v8711
        %v8742 = vmax.f32 %v8681, %v8713
        %v8743 = vmax.f32 %v8683, %v8715
        %v8744 = vmax.f32 %v8685, %v8717
        %v8745 = vmax.f32 %v8687, %v8719
        %v8746 = vmax.f32 %v8689, %v8721
        %v8747 = vmax.f32 %v8691, %v8723
        %v8748 = vmax.f32 %v8693, %v8725
        %v8749 = vmax.f32 %v8695, %v8727
        %v8750 = vmax.f32 %v8697, %v8729
        %v8751 = vmax.f32 %v8699, %v8731
        %v8752 = vmax.f32 %v8701, %v8733
        %v8753 = vmax.f32 %v8703, %v8735
        %v8754 = vmax.f32 %v8705, %v8737
        %v8755 = vmax.f32 %v8707, %v8739
        %8756 = vst.msk [vmem:[#allocation7] sm:$0xff] %vm395, %v8740
        %8757 = vst.msk [vmem:[#allocation7 + $0x8] sm:$0xff] %vm395, %v8741
        %8758 = vst.msk [vmem:[#allocation7 + $0x10] sm:$0xff] %vm395, %v8742
        %8759 = vst.msk [vmem:[#allocation7 + $0x18] sm:$0xff] %vm395, %v8743
        %8760 = vst.msk [vmem:[#allocation7 + $0x20] sm:$0xff] %vm395, %v8744
        %8761 = vst.msk [vmem:[#allocation7 + $0x28] sm:$0xff] %vm395, %v8745
        %8762 = vst.msk [vmem:[#allocation7 + $0x30] sm:$0xff] %vm395, %v8746
        %8763 = vst.msk [vmem:[#allocation7 + $0x38] sm:$0xff] %vm395, %v8747
        %8764 = vst.msk [vmem:[#allocation7 + $0x40] sm:$0xff] %vm395, %v8748
        %8765 = vst.msk [vmem:[#allocation7 + $0x48] sm:$0xff] %vm395, %v8749
        %8766 = vst.msk [vmem:[#allocation7 + $0x50] sm:$0xff] %vm395, %v8750
        %8767 = vst.msk [vmem:[#allocation7 + $0x58] sm:$0xff] %vm395, %v8751
        %8768 = vst.msk [vmem:[#allocation7 + $0x60] sm:$0xff] %vm395, %v8752
        %8769 = vst.msk [vmem:[#allocation7 + $0x68] sm:$0xff] %vm395, %v8753
        %8770 = vst.msk [vmem:[#allocation7 + $0x70] sm:$0xff] %vm395, %v8754
        %8771 = vst.msk [vmem:[#allocation7 + $0x78] sm:$0xff] %vm395, %v8755
        %v8772 = vld [vmem:[#allocation7] sm:$0xff]
        %v8773 = vld [vmem:[#allocation7 + $0x10] sm:$0xff]
        %v8774 = vld [vmem:[#allocation7 + $0x20] sm:$0xff]
        %v8775 = vld [vmem:[#allocation7 + $0x30] sm:$0xff]
        %v8776 = vld [vmem:[#allocation7 + $0x40] sm:$0xff]
        %v8777 = vld [vmem:[#allocation7 + $0x50] sm:$0xff]
        %v8778 = vld [vmem:[#allocation7 + $0x60] sm:$0xff]
        %v8779 = vld [vmem:[#allocation7 + $0x70] sm:$0xff]
        %s8780 = scalar_lea.vmem [#allocation7], 8
        %v8781 = vld [vmem:[%s8780] sm:$0xff]
        %v8782 = vld [vmem:[%s8780 + $0x10] sm:$0xff]
        %v8783 = vld [vmem:[%s8780 + $0x20] sm:$0xff]
        %v8784 = vld [vmem:[%s8780 + $0x30] sm:$0xff]
        %v8785 = vld [vmem:[%s8780 + $0x40] sm:$0xff]
        %v8786 = vld [vmem:[%s8780 + $0x50] sm:$0xff]
        %v8787 = vld [vmem:[%s8780 + $0x60] sm:$0xff]
        %v8788 = vld [vmem:[%s8780 + $0x70] sm:$0xff]
        %v8789 = vmax.f32 %v8772, %v8781
        %v8790 = vmax.f32 %v8773, %v8782
        %v8791 = vmax.f32 %v8774, %v8783
        %v8792 = vmax.f32 %v8775, %v8784
        %v8793 = vmax.f32 %v8776, %v8785
        %v8794 = vmax.f32 %v8777, %v8786
        %v8795 = vmax.f32 %v8778, %v8787
        %v8796 = vmax.f32 %v8779, %v8788
        %8797 = vst.msk [vmem:[%s271] sm:$0xff] %vm395, %v8789
        %8798 = vst.msk [vmem:[%s271 + $0x8] sm:$0xff] %vm395, %v8790
        %8799 = vst.msk [vmem:[%s271 + $0x10] sm:$0xff] %vm395, %v8791
        %8800 = vst.msk [vmem:[%s271 + $0x18] sm:$0xff] %vm395, %v8792
        %8801 = vst.msk [vmem:[%s271 + $0x20] sm:$0xff] %vm395, %v8793
        %8802 = vst.msk [vmem:[%s271 + $0x28] sm:$0xff] %vm395, %v8794
        %8803 = vst.msk [vmem:[%s271 + $0x30] sm:$0xff] %vm395, %v8795
        %8804 = vst.msk [vmem:[%s271 + $0x38] sm:$0xff] %vm395, %v8796
        %s8805 = sand.u32 %s181, 1
        %s8806 = scalar_lea.sflag [#allocation9], %s8805
        %s8807 = sand.u32 %s181, 1
        %s8808 = smul.addr %s8807, 64
        %s8809 = scalar_lea.vmem [#allocation8], %s8808
        // Predicated region
        $region49: #{down2_forward.1} parent=47 // pred_check
          %p8810 = pneg %p191
        $region50: #{down2_forward.1} parent=47 // pred_check_branch
          %8812 = sbr.rel (%p8810) target = $region52
        $region51: #{down2_forward.1} parent=47 // pred_region
          %8814 = vsyncadd %s8806, 0
          %s8815 = smul.addr %s21, 8
          %s8816 = smul.addr %s8815, 8
          %s8817 = scalar_lea.hbm %s7, %s8816
          %s8818 = sshll.u32 %s8809, 4
          %s8819 = int_to_ptr.vmem [resolvable:$true] %s8818
          %s8820 = sshll.u32 %s8817, 4
          %s8821 = int_to_ptr.hbm [resolvable:$true] %s8820
          %8826 = dma.vmem_to_hbm [thread:$0]  %s8819, 1024, %s8821, %s8806, 128, 128, 8
        $region52: #{down2_forward.1} parent=47 // pred_fallthru
          _
      $region48: #{down2_forward.1} parent=5 // pred_fallthru
        _
      %p8827 = scmp.le.s32.totalorder 2, %s16
      // Predicated region
      $region53: #{down2_forward.1} parent=5 // pred_check
        %p8828 = pneg %p8827
      $region54: #{down2_forward.1} parent=5 // pred_check_branch
        %8830 = sbr.rel (%p8828) target = $region56
      $region55: #{down2_forward.1} parent=5 // pred_region
        %s8831 = ssub.s32 %s16, 2
        // Predicated region
        $region57: #{down2_forward.1} parent=55 // pred_check
          %p8832 = pneg %p197
        $region58: #{down2_forward.1} parent=55 // pred_check_branch
          %8834 = sbr.rel (%p8832) target = $region60
        $region59: #{down2_forward.1} parent=55 // pred_region
          %s8835 = sand.u32 %s182, 1
          %s8836 = scalar_lea.sflag [#allocation9], %s8835
          %s8837 = sand.u32 %s182, 1
          %s8838 = smul.addr %s8837, 64
          %s8839 = scalar_lea.vmem [#allocation8], %s8838
          %8841 = dma.done %s8836, 1024
        $region60: #{down2_forward.1} parent=55 // pred_fallthru
          _
      $region56: #{down2_forward.1} parent=5 // pred_fallthru
        _
    $region6: #{down2_forward.1} parent=1 // loop_footer
      %s20 = sadd.s32 1, %s16
    $region7: #{down2_forward.1} parent=1 // loop_footer_branch
      %15 = sbr.rel target = $region3
    $region8: #{down2_forward.1} parent=1 // loop_exit
      _
    %8842 = vsyncpa [#allocation9], 1
    %s8843 = scalar_lea.sflag [#allocation9], 1
    %8844 = vsyncpa %s8843, 1

</llo_original>
